<compile_context>
chip_gen: v6e
topology: v6e:2x2x1
jax: 0.10.0
libtpu: 0.0.40
codegen_flags: <defaults>
</compile_context>

<pallas_src>
import math

import jax
import jax.numpy as jnp
from jax.experimental import pallas as pl
from jax.experimental.pallas import tpu as pltpu

# ----------------------------- configuration --------------------------------
ENC_IMG_SIZE = 16        # encoder.image_size
DEC_SIZE = 32            # decoder.size  (> encoder.image_size -> SR branch taken)
STYLE = 128              # w / style dimensionality
CH = 128                 # decoder feature channels
IMG_C = 3                # RGB
RGB_PAD = 8              # ToRGB channels padded 3 -> 8 for dense sublanes
N_LAT_ENC = 2 * int(math.log2(ENC_IMG_SIZE)) - 2      # 6 w+ rows predicted
N_LAT_DEC = 2 * int(math.log2(DEC_SIZE)) - 2          # 8 w+ rows required
ENC_NOISE_RES = [4] + [2 ** i for i in range(3, int(math.log2(ENC_IMG_SIZE)) + 1)
                       for _ in range(2)]             # [4, 8, 8, 16, 16]
DEC_NOISE_RES = [4] + [2 ** i for i in range(3, int(math.log2(DEC_SIZE)) + 1)
                       for _ in range(2)]             # [4, 8, 8, 16, 16, 32, 32]
N_CONV = 7               # conv1 + (conv_up, conv) x 3  (demod + noise + lrelu)
N_RGB = 4                # to_rgb1 + to_rgb x 3         (no demod / noise / act)
LRELU_SLOPE = 0.2
LRELU_SCALE = 2.0 ** 0.5   # FusedLeakyReLU scale (folded into d / bias / noise)
ENC_OUT_RAW = N_LAT_ENC * STYLE + sum(r * r for r in ENC_NOISE_RES)   # 1424
ENC_OUT_PAD = ((ENC_OUT_RAW + 127) // 128) * 128                      # 1536
ENC_TILE_N = 512

# lane-dense packed per-channel slabs (transposed once inside the decoder kernel)
VEC_ROWS = 24            # rows 0..6: s_c | 7..13: d_c*sqrt2 | 14..17: s_r | pad
BIAS_ROWS = 16           # rows 0..6: bias_c*sqrt2 | 7..10: bias_r (first RGB_PAD) | pad
S_OFF, D_OFF, R_OFF = 0, N_CONV, 2 * N_CONV
BC_OFF, BR_OFF = 0, N_CONV


# ------------------- optional single-buffering of invariants ------------------
def _probe_buffered_blockspec() -> bool:
    """pipeline_mode=pl.Buffered(1) single-buffers grid-invariant operands (halves
    their VMEM).  Probe once so a JAX/Mosaic build without the feature degrades to
    default double-buffering instead of failing to compile."""
    def _copy(x_ref, o_ref):
        o_ref[...] = x_ref[...]
    try:
        spec = pl.BlockSpec((8, 128), lambda i: (0, 0), pipeline_mode=pl.Buffered(1))
        out = pl.pallas_call(
            _copy,
            out_shape=jax.ShapeDtypeStruct((8, 128), jnp.float32),
            grid=(2,),
            in_specs=[spec],
            out_specs=pl.BlockSpec((8, 128), lambda i: (0, 0)),
        )(jnp.zeros((8, 128), jnp.float32))
        jax.block_until_ready(out)
        return True
    except Exception:   # feature probe: any failure -> fall back
        return False


_BUFFERED_OK = _probe_buffered_blockspec()


def _inv_spec(block_shape, index_map):
    """BlockSpec for a grid-invariant operand: single-buffered when supported."""
    if _BUFFERED_OK:
        return pl.BlockSpec(block_shape, index_map, pipeline_mode=pl.Buffered(1))
    return pl.BlockSpec(block_shape, index_map)


# ----------------------------- Pallas kernels --------------------------------
def _encoder_linear_kernel(x_ref, w_ref, b_ref, o_ref):
    # bf16 matmul operands, f32 accumulate / bias.
    o_ref[...] = (jnp.dot(x_ref[...].astype(jnp.bfloat16), w_ref[...],
                          preferred_element_type=jnp.float32) + b_ref[...])


def encoder_linear(feat, params):
    B, K = feat.shape
    N = params['w'].shape[1]
    tn = ENC_TILE_N
    # Tiled over the output dim: the 2.25 MB bf16 weight streams through VMEM in
    # pipelined 512-wide chunks, and the "parallel" N-grid can split across v7x's
    # two TensorCores.
    return pl.pallas_call(
        _encoder_linear_kernel,
        out_shape=jax.ShapeDtypeStruct((B, N), jnp.float32),
        grid=(N // tn,),
        in_specs=[pl.BlockSpec((B, K), lambda j: (0, 0)),
                  pl.BlockSpec((K, tn), lambda j: (0, j)),
                  pl.BlockSpec((1, tn), lambda j: (0, j))],
        out_specs=pl.BlockSpec((B, tn), lambda j: (0, j)),
        compiler_params=pltpu.CompilerParams(
            dimension_semantics=("parallel",)),
    )(feat, params['w'], params['b'].reshape(1, N))


def _decoder_kernel(const_ref, vec_ref, wc_ref, wr_ref, bias_ref,
                    n0_ref, n1_ref, n2_ref, n3_ref, n4_ref, n5_ref, n6_ref,
                    u8_ref, u16_ref, u32_ref, out_ref):
    """Fully fused StyleGAN2-style decoder for one batch element (grid over B)."""
    noise_refs = (n0_ref, n1_ref, n2_ref, n3_ref, n4_ref, n5_ref, n6_ref)
    up_refs = (u8_ref, u16_ref, u32_ref)

    # Lane-dense packed per-channel vectors -> per-channel (CH,1) columns via one
    # small XLU transpose each (instead of DMA-ing padded (CH,1) slabs from HBM).
    vecT = vec_ref[0].T          # (CH, VEC_ROWS): s_c | d_c*sqrt2 | s_r
    biasT = bias_ref[...].T      # (CH, BIAS_ROWS): bias_c*sqrt2 | bias_r

    def conv_mod(x, l):
        # input-side style modulation + shared matmul + demod (sqrt(2) folded in)
        xm = (x * vecT[:, S_OFF + l:S_OFF + l + 1]).astype(jnp.bfloat16)   # (CH, hw)
        y = jnp.dot(wc_ref[l], xm, preferred_element_type=jnp.float32)
        return y * vecT[:, D_OFF + l:D_OFF + l + 1]

    def post(y, l):
        # + pre-scaled noise + bias (both carry the fused-lrelu sqrt(2)),
        # leaky-relu (scale folded), bf16 carry between layers (MXU eats bf16 anyway)
        y = y + noise_refs[l][0] + biasT[:, BC_OFF + l:BC_OFF + l + 1]
        return jnp.where(y >= 0.0, y, LRELU_SLOPE * y).astype(jnp.bfloat16)

    def to_rgb(x, l, skip=None):
        # ToRGB: modulated 1x1 conv (no demod), bf16 operands, f32 accumulate
        xm = (x * vecT[:, R_OFF + l:R_OFF + l + 1]).astype(jnp.bfloat16)
        y = jnp.dot(wr_ref[l], xm, preferred_element_type=jnp.float32)
        y = y + biasT[:RGB_PAD, BR_OFF + l:BR_OFF + l + 1]
        return y if skip is None else y + skip

    # constant input, res 4
    x = post(conv_mod(const_ref[...], 0), 0)                          # (CH, 16) bf16
    rgb = to_rgb(x, 0)                                                # (RGB_PAD, 16) f32

    cl = 1
    for bi in range(3):                                               # res 8, 16, 32
        U = up_refs[bi][...]                                          # (hw_lo, hw_hi) 0/1 bf16
        # conv_up: 1x1 conv commutes with nearest upsample -> matmul at low res,
        # upsample the bf16-cast result on the MXU, noise/bias/lrelu at full res.
        z = jnp.dot(conv_mod(x, cl).astype(jnp.bfloat16), U,
                    preferred_element_type=jnp.float32)
        x = post(z, cl)
        # plain conv at full res
        x = post(conv_mod(x, cl + 1), cl + 1)
        # ToRGB with nearest-upsampled skip (bf16 operands, f32 accumulate)
        skip = jnp.dot(rgb.astype(jnp.bfloat16), U,
                       preferred_element_type=jnp.float32)
        rgb = to_rgb(x, bi + 1, skip=skip)
        cl += 2

    out_ref[0] = rgb                                  # (RGB_PAD, 1024) f32, lane-dense


# ----------------------------- parameters ------------------------------------
def init_encoder_params(key):
    in_dim = IMG_C * ENC_IMG_SIZE * ENC_IMG_SIZE
    w = (jax.random.normal(key, (in_dim, ENC_OUT_PAD), jnp.float32)
         / math.sqrt(in_dim)).astype(jnp.bfloat16)
    b = jnp.zeros((ENC_OUT_PAD,), jnp.float32)
    return {'w': w, 'b': b}


def _nearest_upsample_matrix(h):
    """(h*h, 4*h*h) 0/1 matrix implementing nearest 2x upsample on flattened HxW.
    Stored in bf16 (exact for 0/1) so the upsample matmuls run as pure bf16 MXU."""
    H = 2 * h
    src = (jnp.arange(H)[:, None] // 2) * h + (jnp.arange(H)[None, :] // 2)
    src = src.reshape(-1)
    return (jnp.arange(h * h)[:, None] == src[None, :]).astype(jnp.bfloat16)


def init_decoder_params(key):
    ks = jax.random.split(key, 5)
    wmod_c = jax.random.normal(ks[0], (N_CONV, STYLE, CH), jnp.float32) / math.sqrt(STYLE)
    wconv_c = jax.random.normal(ks[1], (N_CONV, CH, CH), jnp.float32) / math.sqrt(CH)
    wmod_r = jax.random.normal(ks[2], (N_RGB, STYLE, CH), jnp.float32) / math.sqrt(STYLE)
    wconv_r3 = jax.random.normal(ks[3], (N_RGB, IMG_C, CH), jnp.float32) / math.sqrt(CH)
    wconv_r = jnp.zeros((N_RGB, RGB_PAD, CH), jnp.float32).at[:, :IMG_C].set(wconv_r3)
    const = jax.random.normal(ks[4], (CH, 16), jnp.float32)
    return {
        'wmod_c': wmod_c,
        'bmod_c': jnp.ones((N_CONV, CH), jnp.float32),
        'wsq_c': wconv_c * wconv_c,                       # demod precompute (f32)
        'wconv_c': wconv_c.astype(jnp.bfloat16),          # MXU operand
        'bias_c': jnp.zeros((N_CONV, CH), jnp.float32),   # lane-dense
        'ns_c': jnp.full((N_CONV,), 0.1, jnp.float32),    # noise strengths
        'wmod_r': wmod_r,
        'bmod_r': jnp.ones((N_RGB, CH), jnp.float32),
        'wconv_r': wconv_r.astype(jnp.bfloat16),          # bf16 ToRGB path
        'bias_r': jnp.zeros((N_RGB, RGB_PAD), jnp.float32),  # lane-dense
        'const': const,
        'U8': _nearest_upsample_matrix(4),
        'U16': _nearest_upsample_matrix(8),
        'U32': _nearest_upsample_matrix(16),
    }


def decoder_make_noise(key):
    keys = jax.random.split(key, len(DEC_NOISE_RES))
    return [jax.random.normal(k, (1, 1, r * r), jnp.float32)
            for k, r in zip(keys, DEC_NOISE_RES)]


# ----------------------------- model glue -------------------------------------
def decoder_forward(params, latent, noises, B):
    # Per-layer style (s), demod (d, with the fused-lrelu sqrt(2) folded in) and the
    # pre-scaled noise are computed with tiny XLA einsums; per-channel vectors are
    # packed LANE-DENSE (CH last) and transposed once inside the kernel.
    lat_c = latent[:, :N_CONV]                 # conv layers use w+ rows 0..6
    lat_r = latent[:, 1::2]                    # to_rgb layers use rows 1,3,5,7
    s_c = jnp.einsum('bls,lsc->blc', lat_c, params['wmod_c']) + params['bmod_c'][None]
    d_c = LRELU_SCALE * jax.lax.rsqrt(
        jnp.einsum('loc,blc->blo', params['wsq_c'], s_c * s_c) + 1e-8)
    s_r = jnp.einsum('bls,lsc->blc', lat_r, params['wmod_r']) + params['bmod_r'][None]
    vec = jnp.concatenate(
        [s_c, d_c, s_r,
         jnp.zeros((B, VEC_ROWS - 2 * N_CONV - N_RGB, CH), jnp.float32)],
        axis=1)                                                      # (B, 24, CH)

    bias_pack = jnp.zeros((BIAS_ROWS, CH), jnp.float32)
    bias_pack = bias_pack.at[:N_CONV].set(params['bias_c'] * LRELU_SCALE)
    bias_pack = bias_pack.at[N_CONV:N_CONV + N_RGB, :RGB_PAD].set(params['bias_r'])

    noise_scale = params['ns_c'] * LRELU_SCALE
    noises_scaled = [noise_scale[i] * noises[i] for i in range(N_CONV)]   # (B,1,hw)

    hw_out = DEC_SIZE * DEC_SIZE
    # NOTE: for large batches, fold G=2-8 samples per grid step along the hw axis to
    # amortize the ~0.35us per-step overhead and fill the 128 lanes at res 4/8.
    in_specs = (
        [_inv_spec((CH, 16), lambda b: (0, 0)),                              # const
         pl.BlockSpec((1, VEC_ROWS, CH), lambda b: (b, 0, 0)),               # s/d/s_r pack
         _inv_spec((N_CONV, CH, CH), lambda b: (0, 0, 0)),                   # W_conv bf16
         _inv_spec((N_RGB, RGB_PAD, CH), lambda b: (0, 0, 0)),               # W_rgb bf16
         _inv_spec((BIAS_ROWS, CH), lambda b: (0, 0))]                       # bias pack
        + [pl.BlockSpec((1, 1, r * r), lambda b: (b, 0, 0))                  # noises
           for r in DEC_NOISE_RES]
        + [_inv_spec((h * h, 4 * h * h), lambda b: (0, 0))                   # upsample bf16
           for h in (4, 8, 16)])
    args = ([params['const'], vec, params['wconv_c'], params['wconv_r'], bias_pack]
            + noises_scaled
            + [params['U8'], params['U16'], params['U32']])

    rgb = pl.pallas_call(
        _decoder_kernel,
        out_shape=jax.ShapeDtypeStruct((B, RGB_PAD, hw_out), jnp.float32),
        grid=(B,),
        in_specs=in_specs,
        out_specs=pl.BlockSpec((1, RGB_PAD, hw_out), lambda b: (b, 0, 0)),
        compiler_params=pltpu.CompilerParams(
            dimension_semantics=("parallel",),
            vmem_limit_bytes=32 * 1024 * 1024),
    )(*args)
    return rgb[:, :IMG_C].reshape(B, IMG_C, DEC_SIZE, DEC_SIZE)


def forward(x, enc_params, dec_params, noise_key):
    """SuperResolutionStyleganAutoencoder.forward (extend_noise_with_random=True)."""
    B = x.shape[0]
    # 1) x = F.interpolate(x, (image_size, image_size), mode='area')  (integer factor
    #    area pooling == average pooling; done as a reshape-mean, fused by XLA).
    f = x.shape[2] // ENC_IMG_SIZE
    x_lr = x.reshape(B, IMG_C, ENC_IMG_SIZE, f, ENC_IMG_SIZE, f).mean(axis=(3, 5))

    # 2) latents = self.encode(x) — synthetic encoder: one tiled Pallas bf16 linear
    e = encoder_linear(x_lr.reshape(B, -1), enc_params)
    latent = e[:, :N_LAT_ENC * STYLE].reshape(B, N_LAT_ENC, STYLE)   # w+ codes
    noises, off = [], N_LAT_ENC * STYLE
    for r in ENC_NOISE_RES:
        noises.append(e[:, off:off + r * r].reshape(B, 1, r * r))
        off += r * r

    # 3) decoder.size > encoder.image_size: extend noise with random maps
    rand = decoder_make_noise(noise_key)
    for i in range(len(ENC_NOISE_RES), len(DEC_NOISE_RES)):
        noises.append(jnp.broadcast_to(rand[i], (B, 1, rand[i].shape[-1])))
    # TODO(synk): extend_noise_with_random=False branch (bilinear-resized last noise map) not implemented.

    # 4) pad w+ latents by repeating the last row up to decoder.n_latent
    pad = jnp.repeat(latent[:, -1:, :], N_LAT_DEC - N_LAT_ENC, axis=1)
    latent = jnp.concatenate([latent, pad], axis=1)                   # (B, 8, STYLE)

    # 5) reconstructed_x, _ = self.decoder([latent], input_is_latent=True, noise=noises)
    return decoder_forward(dec_params, latent, noises, B)


# ----------------------------- main -------------------------------------------
if __name__ == "__main__":
    key = jax.random.PRNGKey(0)
    kx, kenc, kdec, knoise = jax.random.split(key, 4)

    x = jax.random.normal(kx, (2, IMG_C, 32, 32), jnp.float32)   # NCHW input, B>=2
    enc_params = init_encoder_params(kenc)
    dec_params = init_decoder_params(kdec)

    fwd = jax.jit(forward)
    y = fwd(x, enc_params, dec_params, knoise)
    jax.block_until_ready(y)
    assert y.shape == (2, IMG_C, DEC_SIZE, DEC_SIZE) and y.dtype == jnp.float32
    print("KERNEL_OK")
</pallas_src>

<mosaic_0001>
module attributes {stable_mosaic.version = 11 : i64} {
  func.func @_copy(%arg0: i32, %arg1: memref<8x128xf32, #tpu.memory_space<vmem>>, %arg2: memref<8x128xf32, #tpu.memory_space<vmem>>) attributes {dimension_semantics = [#tpu.dimension_semantics<arbitrary>], iteration_bounds = array<i64: 2>, scalar_prefetch = 0 : i64, scratch_operands = 0 : i64, tpu.core_type = #tpu.core_type<tc>, window_params = [{pipeline_mode = #tpu.pipeline_mode<synchronous>, transform_indices = @transform_0, window_bounds = array<i64: 8, 128>}, {pipeline_mode = #tpu.pipeline_mode<synchronous>, transform_indices = @transform_1, window_bounds = array<i64: 8, 128>}]} {
    %c0 = arith.constant 0 : index
    %c0_0 = arith.constant 0 : index
    %0 = vector.load %arg1[%c0, %c0_0] : memref<8x128xf32, #tpu.memory_space<vmem>>, vector<8x128xf32>
    %c0_1 = arith.constant 0 : index
    %c0_2 = arith.constant 0 : index
    %1 = vector.load %arg2[%c0_1, %c0_2] : memref<8x128xf32, #tpu.memory_space<vmem>>, vector<8x128xf32>
    tpu.vector_store %arg2[%c0_1, %c0_2], %0 {strides = array<i32>} : memref<8x128xf32, #tpu.memory_space<vmem>>, vector<8x128xf32>,
    return
  }
  func.func @transform_0(%arg0: i32) -> (i32, i32) {
    %c0_i32 = arith.constant 0 : i32
    %c0_i32_0 = arith.constant 0 : i32
    %c0_i32_1 = arith.constant 0 : i32
    return %c0_i32, %c0_i32_0 : i32, i32
  }
  func.func @transform_1(%arg0: i32) -> (i32, i32) {
    %c0_i32 = arith.constant 0 : i32
    %c0_i32_0 = arith.constant 0 : i32
    %c0_i32_1 = arith.constant 0 : i32
    return %c0_i32, %c0_i32_0 : i32, i32
  }
}

module attributes {stable_mosaic.version = 11 : i64} {
  func.func @_encoder_linear_kernel(%arg0: i32, %arg1: memref<2x768xf32, #tpu.memory_space<vmem>>, %arg2: memref<768x512xbf16, #tpu.memory_space<vmem>>, %arg3: memref<1x512xf32, #tpu.memory_space<vmem>>, %arg4: memref<2x512xf32, #tpu.memory_space<vmem>>) attributes {dimension_semantics = [#tpu.dimension_semantics<parallel>], iteration_bounds = array<i64: 3>, scalar_prefetch = 0 : i64, scratch_operands = 0 : i64, tpu.core_type = #tpu.core_type<tc>, window_params = [{pipeline_mode = #tpu.pipeline_mode<synchronous>, transform_indices = @transform_0, window_bounds = array<i64: 2, 768>}, {transform_indices = @transform_1, window_bounds = array<i64: 768, 512>}, {transform_indices = @transform_2, window_bounds = array<i64: 1, 512>}, {transform_indices = @transform_3, window_bounds = array<i64: 2, 512>}]} {
    %c0 = arith.constant 0 : index
    %c0_0 = arith.constant 0 : index
    %0 = vector.load %arg1[%c0, %c0_0] : memref<2x768xf32, #tpu.memory_space<vmem>>, vector<2x768xf32>
    %1 = arith.truncf %0 : vector<2x768xf32> to vector<2x768xbf16>
    %c0_1 = arith.constant 0 : index
    %c0_2 = arith.constant 0 : index
    %2 = vector.load %arg2[%c0_1, %c0_2] : memref<768x512xbf16, #tpu.memory_space<vmem>>, vector<768x512xbf16>
    %cst = arith.constant dense<0.000000e+00> : vector<2x512xf32>
    %3 = tpu.matmul %1, %2, %cst {dimension_numbers = #tpu.dot_dimension_numbers<[1], [0], [0], [1], [0, 0, 1, 1], [], []>} : vector<2x768xbf16>, vector<768x512xbf16>, vector<2x512xf32> -> vector<2x512xf32>
    %c0_3 = arith.constant 0 : index
    %c0_4 = arith.constant 0 : index
    %4 = vector.load %arg3[%c0_3, %c0_4] : memref<1x512xf32, #tpu.memory_space<vmem>>, vector<1x512xf32>
    %5 = vector.broadcast %4 : vector<1x512xf32> to vector<2x512xf32>
    %6 = arith.addf %3, %5 : vector<2x512xf32>
    %c0_5 = arith.constant 0 : index
    %c0_6 = arith.constant 0 : index
    %7 = vector.load %arg4[%c0_5, %c0_6] : memref<2x512xf32, #tpu.memory_space<vmem>>, vector<2x512xf32>
    tpu.vector_store %arg4[%c0_5, %c0_6], %6 {strides = array<i32>} : memref<2x512xf32, #tpu.memory_space<vmem>>, vector<2x512xf32>,
    return
  }
  func.func @transform_0(%arg0: i32) -> (i32, i32) {
    %c0_i32 = arith.constant 0 : i32
    %c0_i32_0 = arith.constant 0 : i32
    %c0_i32_1 = arith.constant 0 : i32
    return %c0_i32, %c0_i32_0 : i32, i32
  }
  func.func @transform_1(%arg0: i32) -> (i32, i32) {
    %c0_i32 = arith.constant 0 : i32
    %c0_i32_0 = arith.constant 0 : i32
    return %c0_i32, %arg0 : i32, i32
  }
  func.func @transform_2(%arg0: i32) -> (i32, i32) {
    %c0_i32 = arith.constant 0 : i32
    %c0_i32_0 = arith.constant 0 : i32
    return %c0_i32, %arg0 : i32, i32
  }
  func.func @transform_3(%arg0: i32) -> (i32, i32) {
    %c0_i32 = arith.constant 0 : i32
    %c0_i32_0 = arith.constant 0 : i32
    return %c0_i32, %arg0 : i32, i32
  }
}

module attributes {stable_mosaic.version = 11 : i64} {
  func.func @_decoder_kernel(%arg0: i32, %arg1: memref<128x16xf32, #tpu.memory_space<vmem>>, %arg2: memref<1x24x128xf32, #tpu.memory_space<vmem>>, %arg3: memref<7x128x128xbf16, #tpu.memory_space<vmem>>, %arg4: memref<4x8x128xbf16, #tpu.memory_space<vmem>>, %arg5: memref<16x128xf32, #tpu.memory_space<vmem>>, %arg6: memref<1x1x16xf32, #tpu.memory_space<vmem>>, %arg7: memref<1x1x64xf32, #tpu.memory_space<vmem>>, %arg8: memref<1x1x64xf32, #tpu.memory_space<vmem>>, %arg9: memref<1x1x256xf32, #tpu.memory_space<vmem>>, %arg10: memref<1x1x256xf32, #tpu.memory_space<vmem>>, %arg11: memref<1x1x1024xf32, #tpu.memory_space<vmem>>, %arg12: memref<1x1x1024xf32, #tpu.memory_space<vmem>>, %arg13: memref<16x64xbf16, #tpu.memory_space<vmem>>, %arg14: memref<64x256xbf16, #tpu.memory_space<vmem>>, %arg15: memref<256x1024xbf16, #tpu.memory_space<vmem>>, %arg16: memref<1x8x1024xf32, #tpu.memory_space<vmem>>) attributes {dimension_semantics = [#tpu.dimension_semantics<parallel>], iteration_bounds = array<i64: 2>, scalar_prefetch = 0 : i64, scratch_operands = 0 : i64, tpu.core_type = #tpu.core_type<tc>, window_params = [{pipeline_mode = #tpu.pipeline_mode<synchronous>, transform_indices = @transform_0, window_bounds = array<i64: 128, 16>}, {transform_indices = @transform_1, window_bounds = array<i64: 1, 24, 128>}, {pipeline_mode = #tpu.pipeline_mode<synchronous>, transform_indices = @transform_2, window_bounds = array<i64: 7, 128, 128>}, {pipeline_mode = #tpu.pipeline_mode<synchronous>, transform_indices = @transform_3, window_bounds = array<i64: 4, 8, 128>}, {pipeline_mode = #tpu.pipeline_mode<synchronous>, transform_indices = @transform_4, window_bounds = array<i64: 16, 128>}, {transform_indices = @transform_5, window_bounds = array<i64: 1, 1, 16>}, {transform_indices = @transform_6, window_bounds = array<i64: 1, 1, 64>}, {transform_indices = @transform_7, window_bounds = array<i64: 1, 1, 64>}, {transform_indices = @transform_8, window_bounds = array<i64: 1, 1, 256>}, {transform_indices = @transform_9, window_bounds = array<i64: 1, 1, 256>}, {transform_indices = @transform_10, window_bounds = array<i64: 1, 1, 1024>}, {transform_indices = @transform_11, window_bounds = array<i64: 1, 1, 1024>}, {pipeline_mode = #tpu.pipeline_mode<synchronous>, transform_indices = @transform_12, window_bounds = array<i64: 16, 64>}, {pipeline_mode = #tpu.pipeline_mode<synchronous>, transform_indices = @transform_13, window_bounds = array<i64: 64, 256>}, {pipeline_mode = #tpu.pipeline_mode<synchronous>, transform_indices = @transform_14, window_bounds = array<i64: 256, 1024>}, {transform_indices = @transform_15, window_bounds = array<i64: 1, 8, 1024>}]} {
    %c0 = arith.constant 0 : index
    %c0_0 = arith.constant 0 : index
    %c0_1 = arith.constant 0 : index
    %0 = vector.load %arg2[%c0, %c0_0, %c0_1] : memref<1x24x128xf32, #tpu.memory_space<vmem>>, vector<1x24x128xf32>
    %1 = vector.shape_cast %0 : vector<1x24x128xf32> to vector<24x128xf32>
    %2 = tpu.transpose %1, [1, 0] : vector<24x128xf32> -> vector<128x24xf32>
    %c0_2 = arith.constant 0 : index
    %c0_3 = arith.constant 0 : index
    %3 = vector.load %arg5[%c0_2, %c0_3] : memref<16x128xf32, #tpu.memory_space<vmem>>, vector<16x128xf32>
    %4 = tpu.transpose %3, [1, 0] : vector<16x128xf32> -> vector<128x16xf32>
    %c0_4 = arith.constant 0 : index
    %c0_5 = arith.constant 0 : index
    %5 = vector.load %arg1[%c0_4, %c0_5] : memref<128x16xf32, #tpu.memory_space<vmem>>, vector<128x16xf32>
    %6 = vector.extract_strided_slice %2 {offsets = [0, 0], sizes = [128, 1], strides = [1, 1]} : vector<128x24xf32> to vector<128x1xf32>
    %7 = vector.broadcast %6 : vector<128x1xf32> to vector<128x16xf32>
    %8 = arith.mulf %5, %7 : vector<128x16xf32>
    %9 = arith.truncf %8 : vector<128x16xf32> to vector<128x16xbf16>
    %c0_6 = arith.constant 0 : index
    %c0_7 = arith.constant 0 : index
    %c0_8 = arith.constant 0 : index
    %10 = vector.load %arg3[%c0_6, %c0_7, %c0_8] : memref<7x128x128xbf16, #tpu.memory_space<vmem>>, vector<1x128x128xbf16>
    %11 = vector.shape_cast %10 : vector<1x128x128xbf16> to vector<128x128xbf16>
    %cst = arith.constant dense<0.000000e+00> : vector<128x16xf32>
    %12 = tpu.matmul %11, %9, %cst {dimension_numbers = #tpu.dot_dimension_numbers<[1], [0], [0], [1], [0, 0, 1, 1], [], []>} : vector<128x128xbf16>, vector<128x16xbf16>, vector<128x16xf32> -> vector<128x16xf32>
    %13 = vector.extract_strided_slice %2 {offsets = [0, 7], sizes = [128, 1], strides = [1, 1]} : vector<128x24xf32> to vector<128x1xf32>
    %14 = vector.broadcast %13 : vector<128x1xf32> to vector<128x16xf32>
    %15 = arith.mulf %12, %14 : vector<128x16xf32>
    %c0_9 = arith.constant 0 : index
    %c0_10 = arith.constant 0 : index
    %c0_11 = arith.constant 0 : index
    %16 = vector.load %arg6[%c0_9, %c0_10, %c0_11] : memref<1x1x16xf32, #tpu.memory_space<vmem>>, vector<1x1x16xf32>
    %17 = vector.shape_cast %16 : vector<1x1x16xf32> to vector<1x16xf32>
    %18 = vector.broadcast %17 : vector<1x16xf32> to vector<128x16xf32>
    %19 = arith.addf %15, %18 : vector<128x16xf32>
    %20 = vector.extract_strided_slice %4 {offsets = [0, 0], sizes = [128, 1], strides = [1, 1]} : vector<128x16xf32> to vector<128x1xf32>
    %21 = vector.broadcast %20 : vector<128x1xf32> to vector<128x16xf32>
    %22 = arith.addf %19, %21 : vector<128x16xf32>
    %cst_12 = arith.constant 0.000000e+00 : f32
    %23 = vector.broadcast %cst_12 : f32 to vector<128x16xf32>
    %24 = arith.cmpf oge, %22, %23 : vector<128x16xf32>
    %cst_13 = arith.constant 2.000000e-01 : f32
    %25 = vector.broadcast %cst_13 : f32 to vector<128x16xf32>
    %26 = arith.mulf %25, %22 : vector<128x16xf32>
    %27 = arith.select %24, %22, %26 : vector<128x16xi1>, vector<128x16xf32>
    %28 = arith.truncf %27 : vector<128x16xf32> to vector<128x16xbf16>
    %29 = vector.extract_strided_slice %2 {offsets = [0, 14], sizes = [128, 1], strides = [1, 1]} : vector<128x24xf32> to vector<128x1xf32>
    %30 = arith.extf %28 : vector<128x16xbf16> to vector<128x16xf32>
    %31 = vector.broadcast %29 : vector<128x1xf32> to vector<128x16xf32>
    %32 = arith.mulf %30, %31 : vector<128x16xf32>
    %33 = arith.truncf %32 : vector<128x16xf32> to vector<128x16xbf16>
    %c0_14 = arith.constant 0 : index
    %c0_15 = arith.constant 0 : index
    %c0_16 = arith.constant 0 : index
    %34 = vector.load %arg4[%c0_14, %c0_15, %c0_16] : memref<4x8x128xbf16, #tpu.memory_space<vmem>>, vector<1x8x128xbf16>
    %35 = vector.shape_cast %34 : vector<1x8x128xbf16> to vector<8x128xbf16>
    %cst_17 = arith.constant dense<0.000000e+00> : vector<8x16xf32>
    %36 = tpu.matmul %35, %33, %cst_17 {dimension_numbers = #tpu.dot_dimension_numbers<[1], [0], [0], [1], [0, 0, 1, 1], [], []>} : vector<8x128xbf16>, vector<128x16xbf16>, vector<8x16xf32> -> vector<8x16xf32>
    %37 = vector.extract_strided_slice %4 {offsets = [0, 7], sizes = [8, 1], strides = [1, 1]} : vector<128x16xf32> to vector<8x1xf32>
    %38 = vector.broadcast %37 : vector<8x1xf32> to vector<8x16xf32>
    %39 = arith.addf %36, %38 : vector<8x16xf32>
    %c0_18 = arith.constant 0 : index
    %c0_19 = arith.constant 0 : index
    %40 = vector.load %arg13[%c0_18, %c0_19] : memref<16x64xbf16, #tpu.memory_space<vmem>>, vector<16x64xbf16>
    %41 = vector.extract_strided_slice %2 {offsets = [0, 1], sizes = [128, 1], strides = [1, 1]} : vector<128x24xf32> to vector<128x1xf32>
    %42 = arith.extf %28 : vector<128x16xbf16> to vector<128x16xf32>
    %43 = vector.broadcast %41 : vector<128x1xf32> to vector<128x16xf32>
    %44 = arith.mulf %42, %43 : vector<128x16xf32>
    %45 = arith.truncf %44 : vector<128x16xf32> to vector<128x16xbf16>
    %c1 = arith.constant 1 : index
    %c0_20 = arith.constant 0 : index
    %c0_21 = arith.constant 0 : index
    %46 = vector.load %arg3[%c1, %c0_20, %c0_21] : memref<7x128x128xbf16, #tpu.memory_space<vmem>>, vector<1x128x128xbf16>
    %47 = vector.shape_cast %46 : vector<1x128x128xbf16> to vector<128x128xbf16>
    %cst_22 = arith.constant dense<0.000000e+00> : vector<128x16xf32>
    %48 = tpu.matmul %47, %45, %cst_22 {dimension_numbers = #tpu.dot_dimension_numbers<[1], [0], [0], [1], [0, 0, 1, 1], [], []>} : vector<128x128xbf16>, vector<128x16xbf16>, vector<128x16xf32> -> vector<128x16xf32>
    %49 = vector.extract_strided_slice %2 {offsets = [0, 8], sizes = [128, 1], strides = [1, 1]} : vector<128x24xf32> to vector<128x1xf32>
    %50 = vector.broadcast %49 : vector<128x1xf32> to vector<128x16xf32>
    %51 = arith.mulf %48, %50 : vector<128x16xf32>
    %52 = arith.truncf %51 : vector<128x16xf32> to vector<128x16xbf16>
    %cst_23 = arith.constant dense<0.000000e+00> : vector<128x64xf32>
    %53 = tpu.matmul %52, %40, %cst_23 {dimension_numbers = #tpu.dot_dimension_numbers<[1], [0], [0], [1], [0, 0, 1, 1], [], []>} : vector<128x16xbf16>, vector<16x64xbf16>, vector<128x64xf32> -> vector<128x64xf32>
    %c0_24 = arith.constant 0 : index
    %c0_25 = arith.constant 0 : index
    %c0_26 = arith.constant 0 : index
    %54 = vector.load %arg7[%c0_24, %c0_25, %c0_26] : memref<1x1x64xf32, #tpu.memory_space<vmem>>, vector<1x1x64xf32>
    %55 = vector.shape_cast %54 : vector<1x1x64xf32> to vector<1x64xf32>
    %56 = vector.broadcast %55 : vector<1x64xf32> to vector<128x64xf32>
    %57 = arith.addf %53, %56 : vector<128x64xf32>
    %58 = vector.extract_strided_slice %4 {offsets = [0, 1], sizes = [128, 1], strides = [1, 1]} : vector<128x16xf32> to vector<128x1xf32>
    %59 = vector.broadcast %58 : vector<128x1xf32> to vector<128x64xf32>
    %60 = arith.addf %57, %59 : vector<128x64xf32>
    %cst_27 = arith.constant 0.000000e+00 : f32
    %61 = vector.broadcast %cst_27 : f32 to vector<128x64xf32>
    %62 = arith.cmpf oge, %60, %61 : vector<128x64xf32>
    %cst_28 = arith.constant 2.000000e-01 : f32
    %63 = vector.broadcast %cst_28 : f32 to vector<128x64xf32>
    %64 = arith.mulf %63, %60 : vector<128x64xf32>
    %65 = arith.select %62, %60, %64 : vector<128x64xi1>, vector<128x64xf32>
    %66 = arith.truncf %65 : vector<128x64xf32> to vector<128x64xbf16>
    %67 = vector.extract_strided_slice %2 {offsets = [0, 2], sizes = [128, 1], strides = [1, 1]} : vector<128x24xf32> to vector<128x1xf32>
    %68 = arith.extf %66 : vector<128x64xbf16> to vector<128x64xf32>
    %69 = vector.broadcast %67 : vector<128x1xf32> to vector<128x64xf32>
    %70 = arith.mulf %68, %69 : vector<128x64xf32>
    %71 = arith.truncf %70 : vector<128x64xf32> to vector<128x64xbf16>
    %c2 = arith.constant 2 : index
    %c0_29 = arith.constant 0 : index
    %c0_30 = arith.constant 0 : index
    %72 = vector.load %arg3[%c2, %c0_29, %c0_30] : memref<7x128x128xbf16, #tpu.memory_space<vmem>>, vector<1x128x128xbf16>
    %73 = vector.shape_cast %72 : vector<1x128x128xbf16> to vector<128x128xbf16>
    %cst_31 = arith.constant dense<0.000000e+00> : vector<128x64xf32>
    %74 = tpu.matmul %73, %71, %cst_31 {dimension_numbers = #tpu.dot_dimension_numbers<[1], [0], [0], [1], [0, 0, 1, 1], [], []>} : vector<128x128xbf16>, vector<128x64xbf16>, vector<128x64xf32> -> vector<128x64xf32>
    %75 = vector.extract_strided_slice %2 {offsets = [0, 9], sizes = [128, 1], strides = [1, 1]} : vector<128x24xf32> to vector<128x1xf32>
    %76 = vector.broadcast %75 : vector<128x1xf32> to vector<128x64xf32>
    %77 = arith.mulf %74, %76 : vector<128x64xf32>
    %c0_32 = arith.constant 0 : index
    %c0_33 = arith.constant 0 : index
    %c0_34 = arith.constant 0 : index
    %78 = vector.load %arg8[%c0_32, %c0_33, %c0_34] : memref<1x1x64xf32, #tpu.memory_space<vmem>>, vector<1x1x64xf32>
    %79 = vector.shape_cast %78 : vector<1x1x64xf32> to vector<1x64xf32>
    %80 = vector.broadcast %79 : vector<1x64xf32> to vector<128x64xf32>
    %81 = arith.addf %77, %80 : vector<128x64xf32>
    %82 = vector.extract_strided_slice %4 {offsets = [0, 2], sizes = [128, 1], strides = [1, 1]} : vector<128x16xf32> to vector<128x1xf32>
    %83 = vector.broadcast %82 : vector<128x1xf32> to vector<128x64xf32>
    %84 = arith.addf %81, %83 : vector<128x64xf32>
    %cst_35 = arith.constant 0.000000e+00 : f32
    %85 = vector.broadcast %cst_35 : f32 to vector<128x64xf32>
    %86 = arith.cmpf oge, %84, %85 : vector<128x64xf32>
    %cst_36 = arith.constant 2.000000e-01 : f32
    %87 = vector.broadcast %cst_36 : f32 to vector<128x64xf32>
    %88 = arith.mulf %87, %84 : vector<128x64xf32>
    %89 = arith.select %86, %84, %88 : vector<128x64xi1>, vector<128x64xf32>
    %90 = arith.truncf %89 : vector<128x64xf32> to vector<128x64xbf16>
    %91 = arith.truncf %39 : vector<8x16xf32> to vector<8x16xbf16>
    %cst_37 = arith.constant dense<0.000000e+00> : vector<8x64xf32>
    %92 = tpu.matmul %91, %40, %cst_37 {dimension_numbers = #tpu.dot_dimension_numbers<[1], [0], [0], [1], [0, 0, 1, 1], [], []>} : vector<8x16xbf16>, vector<16x64xbf16>, vector<8x64xf32> -> vector<8x64xf32>
    %93 = vector.extract_strided_slice %2 {offsets = [0, 15], sizes = [128, 1], strides = [1, 1]} : vector<128x24xf32> to vector<128x1xf32>
    %94 = arith.extf %90 : vector<128x64xbf16> to vector<128x64xf32>
    %95 = vector.broadcast %93 : vector<128x1xf32> to vector<128x64xf32>
    %96 = arith.mulf %94, %95 : vector<128x64xf32>
    %97 = arith.truncf %96 : vector<128x64xf32> to vector<128x64xbf16>
    %c1_38 = arith.constant 1 : index
    %c0_39 = arith.constant 0 : index
    %c0_40 = arith.constant 0 : index
    %98 = vector.load %arg4[%c1_38, %c0_39, %c0_40] : memref<4x8x128xbf16, #tpu.memory_space<vmem>>, vector<1x8x128xbf16>
    %99 = vector.shape_cast %98 : vector<1x8x128xbf16> to vector<8x128xbf16>
    %cst_41 = arith.constant dense<0.000000e+00> : vector<8x64xf32>
    %100 = tpu.matmul %99, %97, %cst_41 {dimension_numbers = #tpu.dot_dimension_numbers<[1], [0], [0], [1], [0, 0, 1, 1], [], []>} : vector<8x128xbf16>, vector<128x64xbf16>, vector<8x64xf32> -> vector<8x64xf32>
    %101 = vector.extract_strided_slice %4 {offsets = [0, 8], sizes = [8, 1], strides = [1, 1]} : vector<128x16xf32> to vector<8x1xf32>
    %102 = vector.broadcast %101 : vector<8x1xf32> to vector<8x64xf32>
    %103 = arith.addf %100, %102 : vector<8x64xf32>
    %104 = arith.addf %103, %92 : vector<8x64xf32>
    %c0_42 = arith.constant 0 : index
    %c0_43 = arith.constant 0 : index
    %105 = vector.load %arg14[%c0_42, %c0_43] : memref<64x256xbf16, #tpu.memory_space<vmem>>, vector<64x256xbf16>
    %106 = vector.extract_strided_slice %2 {offsets = [0, 3], sizes = [128, 1], strides = [1, 1]} : vector<128x24xf32> to vector<128x1xf32>
    %107 = arith.extf %90 : vector<128x64xbf16> to vector<128x64xf32>
    %108 = vector.broadcast %106 : vector<128x1xf32> to vector<128x64xf32>
    %109 = arith.mulf %107, %108 : vector<128x64xf32>
    %110 = arith.truncf %109 : vector<128x64xf32> to vector<128x64xbf16>
    %c3 = arith.constant 3 : index
    %c0_44 = arith.constant 0 : index
    %c0_45 = arith.constant 0 : index
    %111 = vector.load %arg3[%c3, %c0_44, %c0_45] : memref<7x128x128xbf16, #tpu.memory_space<vmem>>, vector<1x128x128xbf16>
    %112 = vector.shape_cast %111 : vector<1x128x128xbf16> to vector<128x128xbf16>
    %cst_46 = arith.constant dense<0.000000e+00> : vector<128x64xf32>
    %113 = tpu.matmul %112, %110, %cst_46 {dimension_numbers = #tpu.dot_dimension_numbers<[1], [0], [0], [1], [0, 0, 1, 1], [], []>} : vector<128x128xbf16>, vector<128x64xbf16>, vector<128x64xf32> -> vector<128x64xf32>
    %114 = vector.extract_strided_slice %2 {offsets = [0, 10], sizes = [128, 1], strides = [1, 1]} : vector<128x24xf32> to vector<128x1xf32>
    %115 = vector.broadcast %114 : vector<128x1xf32> to vector<128x64xf32>
    %116 = arith.mulf %113, %115 : vector<128x64xf32>
    %117 = arith.truncf %116 : vector<128x64xf32> to vector<128x64xbf16>
    %cst_47 = arith.constant dense<0.000000e+00> : vector<128x256xf32>
    %118 = tpu.matmul %117, %105, %cst_47 {dimension_numbers = #tpu.dot_dimension_numbers<[1], [0], [0], [1], [0, 0, 1, 1], [], []>} : vector<128x64xbf16>, vector<64x256xbf16>, vector<128x256xf32> -> vector<128x256xf32>
    %c0_48 = arith.constant 0 : index
    %c0_49 = arith.constant 0 : index
    %c0_50 = arith.constant 0 : index
    %119 = vector.load %arg9[%c0_48, %c0_49, %c0_50] : memref<1x1x256xf32, #tpu.memory_space<vmem>>, vector<1x1x256xf32>
    %120 = vector.shape_cast %119 : vector<1x1x256xf32> to vector<1x256xf32>
    %121 = vector.broadcast %120 : vector<1x256xf32> to vector<128x256xf32>
    %122 = arith.addf %118, %121 : vector<128x256xf32>
    %123 = vector.extract_strided_slice %4 {offsets = [0, 3], sizes = [128, 1], strides = [1, 1]} : vector<128x16xf32> to vector<128x1xf32>
    %124 = vector.broadcast %123 : vector<128x1xf32> to vector<128x256xf32>
    %125 = arith.addf %122, %124 : vector<128x256xf32>
    %cst_51 = arith.constant 0.000000e+00 : f32
    %126 = vector.broadcast %cst_51 : f32 to vector<128x256xf32>
    %127 = arith.cmpf oge, %125, %126 : vector<128x256xf32>
    %cst_52 = arith.constant 2.000000e-01 : f32
    %128 = vector.broadcast %cst_52 : f32 to vector<128x256xf32>
    %129 = arith.mulf %128, %125 : vector<128x256xf32>
    %130 = arith.select %127, %125, %129 : vector<128x256xi1>, vector<128x256xf32>
    %131 = arith.truncf %130 : vector<128x256xf32> to vector<128x256xbf16>
    %132 = vector.extract_strided_slice %2 {offsets = [0, 4], sizes = [128, 1], strides = [1, 1]} : vector<128x24xf32> to vector<128x1xf32>
    %133 = arith.extf %131 : vector<128x256xbf16> to vector<128x256xf32>
    %134 = vector.broadcast %132 : vector<128x1xf32> to vector<128x256xf32>
    %135 = arith.mulf %133, %134 : vector<128x256xf32>
    %136 = arith.truncf %135 : vector<128x256xf32> to vector<128x256xbf16>
    %c4 = arith.constant 4 : index
    %c0_53 = arith.constant 0 : index
    %c0_54 = arith.constant 0 : index
    %137 = vector.load %arg3[%c4, %c0_53, %c0_54] : memref<7x128x128xbf16, #tpu.memory_space<vmem>>, vector<1x128x128xbf16>
    %138 = vector.shape_cast %137 : vector<1x128x128xbf16> to vector<128x128xbf16>
    %cst_55 = arith.constant dense<0.000000e+00> : vector<128x256xf32>
    %139 = tpu.matmul %138, %136, %cst_55 {dimension_numbers = #tpu.dot_dimension_numbers<[1], [0], [0], [1], [0, 0, 1, 1], [], []>} : vector<128x128xbf16>, vector<128x256xbf16>, vector<128x256xf32> -> vector<128x256xf32>
    %140 = vector.extract_strided_slice %2 {offsets = [0, 11], sizes = [128, 1], strides = [1, 1]} : vector<128x24xf32> to vector<128x1xf32>
    %141 = vector.broadcast %140 : vector<128x1xf32> to vector<128x256xf32>
    %142 = arith.mulf %139, %141 : vector<128x256xf32>
    %c0_56 = arith.constant 0 : index
    %c0_57 = arith.constant 0 : index
    %c0_58 = arith.constant 0 : index
    %143 = vector.load %arg10[%c0_56, %c0_57, %c0_58] : memref<1x1x256xf32, #tpu.memory_space<vmem>>, vector<1x1x256xf32>
    %144 = vector.shape_cast %143 : vector<1x1x256xf32> to vector<1x256xf32>
    %145 = vector.broadcast %144 : vector<1x256xf32> to vector<128x256xf32>
    %146 = arith.addf %142, %145 : vector<128x256xf32>
    %147 = vector.extract_strided_slice %4 {offsets = [0, 4], sizes = [128, 1], strides = [1, 1]} : vector<128x16xf32> to vector<128x1xf32>
    %148 = vector.broadcast %147 : vector<128x1xf32> to vector<128x256xf32>
    %149 = arith.addf %146, %148 : vector<128x256xf32>
    %cst_59 = arith.constant 0.000000e+00 : f32
    %150 = vector.broadcast %cst_59 : f32 to vector<128x256xf32>
    %151 = arith.cmpf oge, %149, %150 : vector<128x256xf32>
    %cst_60 = arith.constant 2.000000e-01 : f32
    %152 = vector.broadcast %cst_60 : f32 to vector<128x256xf32>
    %153 = arith.mulf %152, %149 : vector<128x256xf32>
    %154 = arith.select %151, %149, %153 : vector<128x256xi1>, vector<128x256xf32>
    %155 = arith.truncf %154 : vector<128x256xf32> to vector<128x256xbf16>
    %156 = arith.truncf %104 : vector<8x64xf32> to vector<8x64xbf16>
    %cst_61 = arith.constant dense<0.000000e+00> : vector<8x256xf32>
    %157 = tpu.matmul %156, %105, %cst_61 {dimension_numbers = #tpu.dot_dimension_numbers<[1], [0], [0], [1], [0, 0, 1, 1], [], []>} : vector<8x64xbf16>, vector<64x256xbf16>, vector<8x256xf32> -> vector<8x256xf32>
    %158 = vector.extract_strided_slice %2 {offsets = [0, 16], sizes = [128, 1], strides = [1, 1]} : vector<128x24xf32> to vector<128x1xf32>
    %159 = arith.extf %155 : vector<128x256xbf16> to vector<128x256xf32>
    %160 = vector.broadcast %158 : vector<128x1xf32> to vector<128x256xf32>
    %161 = arith.mulf %159, %160 : vector<128x256xf32>
    %162 = arith.truncf %161 : vector<128x256xf32> to vector<128x256xbf16>
    %c2_62 = arith.constant 2 : index
    %c0_63 = arith.constant 0 : index
    %c0_64 = arith.constant 0 : index
    %163 = vector.load %arg4[%c2_62, %c0_63, %c0_64] : memref<4x8x128xbf16, #tpu.memory_space<vmem>>, vector<1x8x128xbf16>
    %164 = vector.shape_cast %163 : vector<1x8x128xbf16> to vector<8x128xbf16>
    %cst_65 = arith.constant dense<0.000000e+00> : vector<8x256xf32>
    %165 = tpu.matmul %164, %162, %cst_65 {dimension_numbers = #tpu.dot_dimension_numbers<[1], [0], [0], [1], [0, 0, 1, 1], [], []>} : vector<8x128xbf16>, vector<128x256xbf16>, vector<8x256xf32> -> vector<8x256xf32>
    %166 = vector.extract_strided_slice %4 {offsets = [0, 9], sizes = [8, 1], strides = [1, 1]} : vector<128x16xf32> to vector<8x1xf32>
    %167 = vector.broadcast %166 : vector<8x1xf32> to vector<8x256xf32>
    %168 = arith.addf %165, %167 : vector<8x256xf32>
    %169 = arith.addf %168, %157 : vector<8x256xf32>
    %c0_66 = arith.constant 0 : index
    %c0_67 = arith.constant 0 : index
    %170 = vector.load %arg15[%c0_66, %c0_67] : memref<256x1024xbf16, #tpu.memory_space<vmem>>, vector<256x1024xbf16>
    %171 = vector.extract_strided_slice %2 {offsets = [0, 5], sizes = [128, 1], strides = [1, 1]} : vector<128x24xf32> to vector<128x1xf32>
    %172 = arith.extf %155 : vector<128x256xbf16> to vector<128x256xf32>
    %173 = vector.broadcast %171 : vector<128x1xf32> to vector<128x256xf32>
    %174 = arith.mulf %172, %173 : vector<128x256xf32>
    %175 = arith.truncf %174 : vector<128x256xf32> to vector<128x256xbf16>
    %c5 = arith.constant 5 : index
    %c0_68 = arith.constant 0 : index
    %c0_69 = arith.constant 0 : index
    %176 = vector.load %arg3[%c5, %c0_68, %c0_69] : memref<7x128x128xbf16, #tpu.memory_space<vmem>>, vector<1x128x128xbf16>
    %177 = vector.shape_cast %176 : vector<1x128x128xbf16> to vector<128x128xbf16>
    %cst_70 = arith.constant dense<0.000000e+00> : vector<128x256xf32>
    %178 = tpu.matmul %177, %175, %cst_70 {dimension_numbers = #tpu.dot_dimension_numbers<[1], [0], [0], [1], [0, 0, 1, 1], [], []>} : vector<128x128xbf16>, vector<128x256xbf16>, vector<128x256xf32> -> vector<128x256xf32>
    %179 = vector.extract_strided_slice %2 {offsets = [0, 12], sizes = [128, 1], strides = [1, 1]} : vector<128x24xf32> to vector<128x1xf32>
    %180 = vector.broadcast %179 : vector<128x1xf32> to vector<128x256xf32>
    %181 = arith.mulf %178, %180 : vector<128x256xf32>
    %182 = arith.truncf %181 : vector<128x256xf32> to vector<128x256xbf16>
    %cst_71 = arith.constant dense<0.000000e+00> : vector<128x1024xf32>
    %183 = tpu.matmul %182, %170, %cst_71 {dimension_numbers = #tpu.dot_dimension_numbers<[1], [0], [0], [1], [0, 0, 1, 1], [], []>} : vector<128x256xbf16>, vector<256x1024xbf16>, vector<128x1024xf32> -> vector<128x1024xf32>
    %c0_72 = arith.constant 0 : index
    %c0_73 = arith.constant 0 : index
    %c0_74 = arith.constant 0 : index
    %184 = vector.load %arg11[%c0_72, %c0_73, %c0_74] : memref<1x1x1024xf32, #tpu.memory_space<vmem>>, vector<1x1x1024xf32>
    %185 = vector.shape_cast %184 : vector<1x1x1024xf32> to vector<1x1024xf32>
    %186 = vector.broadcast %185 : vector<1x1024xf32> to vector<128x1024xf32>
    %187 = arith.addf %183, %186 : vector<128x1024xf32>
    %188 = vector.extract_strided_slice %4 {offsets = [0, 5], sizes = [128, 1], strides = [1, 1]} : vector<128x16xf32> to vector<128x1xf32>
    %189 = vector.broadcast %188 : vector<128x1xf32> to vector<128x1024xf32>
    %190 = arith.addf %187, %189 : vector<128x1024xf32>
    %cst_75 = arith.constant 0.000000e+00 : f32
    %191 = vector.broadcast %cst_75 : f32 to vector<128x1024xf32>
    %192 = arith.cmpf oge, %190, %191 : vector<128x1024xf32>
    %cst_76 = arith.constant 2.000000e-01 : f32
    %193 = vector.broadcast %cst_76 : f32 to vector<128x1024xf32>
    %194 = arith.mulf %193, %190 : vector<128x1024xf32>
    %195 = arith.select %192, %190, %194 : vector<128x1024xi1>, vector<128x1024xf32>
    %196 = arith.truncf %195 : vector<128x1024xf32> to vector<128x1024xbf16>
    %197 = vector.extract_strided_slice %2 {offsets = [0, 6], sizes = [128, 1], strides = [1, 1]} : vector<128x24xf32> to vector<128x1xf32>
    %198 = arith.extf %196 : vector<128x1024xbf16> to vector<128x1024xf32>
    %199 = vector.broadcast %197 : vector<128x1xf32> to vector<128x1024xf32>
    %200 = arith.mulf %198, %199 : vector<128x1024xf32>
    %201 = arith.truncf %200 : vector<128x1024xf32> to vector<128x1024xbf16>
    %c6 = arith.constant 6 : index
    %c0_77 = arith.constant 0 : index
    %c0_78 = arith.constant 0 : index
    %202 = vector.load %arg3[%c6, %c0_77, %c0_78] : memref<7x128x128xbf16, #tpu.memory_space<vmem>>, vector<1x128x128xbf16>
    %203 = vector.shape_cast %202 : vector<1x128x128xbf16> to vector<128x128xbf16>
    %cst_79 = arith.constant dense<0.000000e+00> : vector<128x1024xf32>
    %204 = tpu.matmul %203, %201, %cst_79 {dimension_numbers = #tpu.dot_dimension_numbers<[1], [0], [0], [1], [0, 0, 1, 1], [], []>} : vector<128x128xbf16>, vector<128x1024xbf16>, vector<128x1024xf32> -> vector<128x1024xf32>
    %205 = vector.extract_strided_slice %2 {offsets = [0, 13], sizes = [128, 1], strides = [1, 1]} : vector<128x24xf32> to vector<128x1xf32>
    %206 = vector.broadcast %205 : vector<128x1xf32> to vector<128x1024xf32>
    %207 = arith.mulf %204, %206 : vector<128x1024xf32>
    %c0_80 = arith.constant 0 : index
    %c0_81 = arith.constant 0 : index
    %c0_82 = arith.constant 0 : index
    %208 = vector.load %arg12[%c0_80, %c0_81, %c0_82] : memref<1x1x1024xf32, #tpu.memory_space<vmem>>, vector<1x1x1024xf32>
    %209 = vector.shape_cast %208 : vector<1x1x1024xf32> to vector<1x1024xf32>
    %210 = vector.broadcast %209 : vector<1x1024xf32> to vector<128x1024xf32>
    %211 = arith.addf %207, %210 : vector<128x1024xf32>
    %212 = vector.extract_strided_slice %4 {offsets = [0, 6], sizes = [128, 1], strides = [1, 1]} : vector<128x16xf32> to vector<128x1xf32>
    %213 = vector.broadcast %212 : vector<128x1xf32> to vector<128x1024xf32>
    %214 = arith.addf %211, %213 : vector<128x1024xf32>
    %cst_83 = arith.constant 0.000000e+00 : f32
    %215 = vector.broadcast %cst_83 : f32 to vector<128x1024xf32>
    %216 = arith.cmpf oge, %214, %215 : vector<128x1024xf32>
    %cst_84 = arith.constant 2.000000e-01 : f32
    %217 = vector.broadcast %cst_84 : f32 to vector<128x1024xf32>
    %218 = arith.mulf %217, %214 : vector<128x1024xf32>
    %219 = arith.select %216, %214, %218 : vector<128x1024xi1>, vector<128x1024xf32>
    %220 = arith.truncf %219 : vector<128x1024xf32> to vector<128x1024xbf16>
    %221 = arith.truncf %169 : vector<8x256xf32> to vector<8x256xbf16>
    %cst_85 = arith.constant dense<0.000000e+00> : vector<8x1024xf32>
    %222 = tpu.matmul %221, %170, %cst_85 {dimension_numbers = #tpu.dot_dimension_numbers<[1], [0], [0], [1], [0, 0, 1, 1], [], []>} : vector<8x256xbf16>, vector<256x1024xbf16>, vector<8x1024xf32> -> vector<8x1024xf32>
    %223 = vector.extract_strided_slice %2 {offsets = [0, 17], sizes = [128, 1], strides = [1, 1]} : vector<128x24xf32> to vector<128x1xf32>
    %224 = arith.extf %220 : vector<128x1024xbf16> to vector<128x1024xf32>
    %225 = vector.broadcast %223 : vector<128x1xf32> to vector<128x1024xf32>
    %226 = arith.mulf %224, %225 : vector<128x1024xf32>
    %227 = arith.truncf %226 : vector<128x1024xf32> to vector<128x1024xbf16>
    %c3_86 = arith.constant 3 : index
    %c0_87 = arith.constant 0 : index
    %c0_88 = arith.constant 0 : index
    %228 = vector.load %arg4[%c3_86, %c0_87, %c0_88] : memref<4x8x128xbf16, #tpu.memory_space<vmem>>, vector<1x8x128xbf16>
    %229 = vector.shape_cast %228 : vector<1x8x128xbf16> to vector<8x128xbf16>
    %cst_89 = arith.constant dense<0.000000e+00> : vector<8x1024xf32>
    %230 = tpu.matmul %229, %227, %cst_89 {dimension_numbers = #tpu.dot_dimension_numbers<[1], [0], [0], [1], [0, 0, 1, 1], [], []>} : vector<8x128xbf16>, vector<128x1024xbf16>, vector<8x1024xf32> -> vector<8x1024xf32>
    %231 = vector.extract_strided_slice %4 {offsets = [0, 10], sizes = [8, 1], strides = [1, 1]} : vector<128x16xf32> to vector<8x1xf32>
    %232 = vector.broadcast %231 : vector<8x1xf32> to vector<8x1024xf32>
    %233 = arith.addf %230, %232 : vector<8x1024xf32>
    %234 = arith.addf %233, %222 : vector<8x1024xf32>
    %c0_90 = arith.constant 0 : index
    %c0_91 = arith.constant 0 : index
    %c0_92 = arith.constant 0 : index
    %235 = vector.load %arg16[%c0_90, %c0_91, %c0_92] : memref<1x8x1024xf32, #tpu.memory_space<vmem>>, vector<1x8x1024xf32>
    %236 = vector.shape_cast %235 : vector<1x8x1024xf32> to vector<8x1024xf32>
    %237 = vector.shape_cast %234 : vector<8x1024xf32> to vector<1x8x1024xf32>
    tpu.vector_store %arg16[%c0_90, %c0_91, %c0_92], %237 {strides = array<i32>} : memref<1x8x1024xf32, #tpu.memory_space<vmem>>, vector<1x8x1024xf32>,
    return
  }
  func.func @transform_0(%arg0: i32) -> (i32, i32) {
    %c0_i32 = arith.constant 0 : i32
    %c0_i32_0 = arith.constant 0 : i32
    %c0_i32_1 = arith.constant 0 : i32
    return %c0_i32, %c0_i32_0 : i32, i32
  }
  func.func @transform_1(%arg0: i32) -> (i32, i32, i32) {
    %c0_i32 = arith.constant 0 : i32
    %c0_i32_0 = arith.constant 0 : i32
    %c0_i32_1 = arith.constant 0 : i32
    return %arg0, %c0_i32, %c0_i32_0 : i32, i32, i32
  }
  func.func @transform_2(%arg0: i32) -> (i32, i32, i32) {
    %c0_i32 = arith.constant 0 : i32
    %c0_i32_0 = arith.constant 0 : i32
    %c0_i32_1 = arith.constant 0 : i32
    %c0_i32_2 = arith.constant 0 : i32
    return %c0_i32, %c0_i32_0, %c0_i32_1 : i32, i32, i32
  }
  func.func @transform_3(%arg0: i32) -> (i32, i32, i32) {
    %c0_i32 = arith.constant 0 : i32
    %c0_i32_0 = arith.constant 0 : i32
    %c0_i32_1 = arith.constant 0 : i32
    %c0_i32_2 = arith.constant 0 : i32
    return %c0_i32, %c0_i32_0, %c0_i32_1 : i32, i32, i32
  }
  func.func @transform_4(%arg0: i32) -> (i32, i32) {
    %c0_i32 = arith.constant 0 : i32
    %c0_i32_0 = arith.constant 0 : i32
    %c0_i32_1 = arith.constant 0 : i32
    return %c0_i32, %c0_i32_0 : i32, i32
  }
  func.func @transform_5(%arg0: i32) -> (i32, i32, i32) {
    %c0_i32 = arith.constant 0 : i32
    %c0_i32_0 = arith.constant 0 : i32
    %c0_i32_1 = arith.constant 0 : i32
    return %arg0, %c0_i32, %c0_i32_0 : i32, i32, i32
  }
  func.func @transform_6(%arg0: i32) -> (i32, i32, i32) {
    %c0_i32 = arith.constant 0 : i32
    %c0_i32_0 = arith.constant 0 : i32
    %c0_i32_1 = arith.constant 0 : i32
    return %arg0, %c0_i32, %c0_i32_0 : i32, i32, i32
  }
  func.func @transform_7(%arg0: i32) -> (i32, i32, i32) {
    %c0_i32 = arith.constant 0 : i32
    %c0_i32_0 = arith.constant 0 : i32
    %c0_i32_1 = arith.constant 0 : i32
    return %arg0, %c0_i32, %c0_i32_0 : i32, i32, i32
  }
  func.func @transform_8(%arg0: i32) -> (i32, i32, i32) {
    %c0_i32 = arith.constant 0 : i32
    %c0_i32_0 = arith.constant 0 : i32
    %c0_i32_1 = arith.constant 0 : i32
    return %arg0, %c0_i32, %c0_i32_0 : i32, i32, i32
  }
  func.func @transform_9(%arg0: i32) -> (i32, i32, i32) {
    %c0_i32 = arith.constant 0 : i32
    %c0_i32_0 = arith.constant 0 : i32
    %c0_i32_1 = arith.constant 0 : i32
    return %arg0, %c0_i32, %c0_i32_0 : i32, i32, i32
  }
  func.func @transform_10(%arg0: i32) -> (i32, i32, i32) {
    %c0_i32 = arith.constant 0 : i32
    %c0_i32_0 = arith.constant 0 : i32
    %c0_i32_1 = arith.constant 0 : i32
    return %arg0, %c0_i32, %c0_i32_0 : i32, i32, i32
  }
  func.func @transform_11(%arg0: i32) -> (i32, i32, i32) {
    %c0_i32 = arith.constant 0 : i32
    %c0_i32_0 = arith.constant 0 : i32
    %c0_i32_1 = arith.constant 0 : i32
    return %arg0, %c0_i32, %c0_i32_0 : i32, i32, i32
  }
  func.func @transform_12(%arg0: i32) -> (i32, i32) {
    %c0_i32 = arith.constant 0 : i32
    %c0_i32_0 = arith.constant 0 : i32
    %c0_i32_1 = arith.constant 0 : i32
    return %c0_i32, %c0_i32_0 : i32, i32
  }
  func.func @transform_13(%arg0: i32) -> (i32, i32) {
    %c0_i32 = arith.constant 0 : i32
    %c0_i32_0 = arith.constant 0 : i32
    %c0_i32_1 = arith.constant 0 : i32
    return %c0_i32, %c0_i32_0 : i32, i32
  }
  func.func @transform_14(%arg0: i32) -> (i32, i32) {
    %c0_i32 = arith.constant 0 : i32
    %c0_i32_0 = arith.constant 0 : i32
    %c0_i32_1 = arith.constant 0 : i32
    return %c0_i32, %c0_i32_0 : i32, i32
  }
  func.func @transform_15(%arg0: i32) -> (i32, i32, i32) {
    %c0_i32 = arith.constant 0 : i32
    %c0_i32_0 = arith.constant 0 : i32
    %c0_i32_1 = arith.constant 0 : i32
    return %arg0, %c0_i32, %c0_i32_0 : i32, i32, i32
  }
}

</mosaic_0001>

<llo_original>
// kernel: tpu_custom_call.1
$region0: #{tpu_custom_call.1}
  #allocation0 [shape = 'u32[]', space=smem, size = 0x4, offset = 0x4, fixed_abs, tag = 'smem constant byte address 0x4 - core index']
  #allocation1 [shape = 'u32[144,128]{1,0:T(1,128)}', space=vmem, size = 0x12000, scoped, tag = 'internal scratch']
  %s0 = inlined_call_operand.hbm [shape: f32[8,128], index: 0, kind: input, shape index: {}]
  %s1 = inlined_call_operand.hbm [shape: f32[8,128], index: 1, kind: output, shape index: {}]
  %s2 = sld [smem:[#allocation0]]
  $region41: #{tpu_custom_call.1} parent=0
    _
  %s4 = ssub.s32 1, %s2
  %s5 = scalar_select 0, %s4, %s2
  $region1: #{tpu_custom_call.1} parent=0
    #allocation2 [shape = 'u8[4096]{0}', space=vmem, size = 0x1000, scoped, tag = 'input window, operand 0, single buffered']
    #allocation3 [shape = 's32[2]{0}', space=sflag, size = 0x8, scoped, tag = 'scoped memory for tpu_custom_call.1']
    #allocation4 [shape = 's32[2]{0}', space=sflag, size = 0x8, scoped, tag = 'scoped memory for tpu_custom_call.1']
    #allocation5 [shape = 'u8[4096]{0}', space=vmem, size = 0x1000, scoped, tag = 'output window, operand 0, single buffered']
    %6 = vsyncpa [#allocation3], 0
    %7 = vsyncpa [#allocation4], 0
    loop: start=0, step=1, limit=4
    $region2: #{tpu_custom_call.1} parent=1 // loop_pre_header
      _
    $region3: #{tpu_custom_call.1} parent=1 // loop_header
      %s9 = sphi 0, %s13
      %p10 = scmp.ge.s32.totalorder %s9, 4
      %s17 = sphi 0, %s17
      %s19 = sphi 0, %s17
      %s20 = sphi 0, %s19
      %s34 = sphi 0, %s20
      %s38 = sphi 0, %s38
      %s40 = sphi 0, %s38
      %s41 = sphi 0, %s40
      %s55 = sphi 0, %s41
    $region4: #{tpu_custom_call.1} parent=1 // loop_header_branch
      %12 = sbr.rel (%p10) target = $region8
    $region5: #{tpu_custom_call.1} parent=1 // loop_body
      %s14 = ssub.s32 %s9, 1
      %s15 = ssub.s32 %s9, 2
      %s16 = sadd.s32 %s9, 1
      %s18 = sadd.s32 %s17, 1
      %p21 = scmp.eq.s32.totalorder %s9, 1
      %p22 = scmp.ne.s32.totalorder %s17, %s19
      %p23 = scmp.eq.s32.totalorder %s9, 0
      %p24 = por %p22, %p23
      %p25 = scmp.ne.s32.totalorder %s17, %s19
      %p26 = scmp.eq.s32.totalorder %s14, 1
      %p27 = por %p25, %p26
      %p28 = scmp.ne.s32.totalorder %s19, %s20
      %p29 = scmp.eq.s32.totalorder %s14, 0
      %p30 = por %p28, %p29
      %p31 = scmp.ne.s32.totalorder %s19, %s20
      %p32 = scmp.eq.s32.totalorder %s15, 1
      %p33 = por %p31, %p32
      %p35 = scmp.ne.s32.totalorder %s20, %s34
      %p36 = scmp.eq.s32.totalorder %s15, 0
      %p37 = por %p35, %p36
      %s39 = sadd.s32 %s38, 1
      %p42 = scmp.eq.s32.totalorder %s9, 1
      %p43 = scmp.ne.s32.totalorder %s38, %s40
      %p44 = scmp.eq.s32.totalorder %s9, 0
      %p45 = por %p43, %p44
      %p46 = scmp.ne.s32.totalorder %s38, %s40
      %p47 = scmp.eq.s32.totalorder %s14, 1
      %p48 = por %p46, %p47
      %p49 = scmp.ne.s32.totalorder %s40, %s41
      %p50 = scmp.eq.s32.totalorder %s14, 0
      %p51 = por %p49, %p50
      %p52 = scmp.ne.s32.totalorder %s40, %s41
      %p53 = scmp.eq.s32.totalorder %s15, 1
      %p54 = por %p52, %p53
      %p56 = scmp.ne.s32.totalorder %s41, %s55
      %p57 = scmp.eq.s32.totalorder %s15, 0
      %p58 = por %p56, %p57
      %p59 = scmp.le.s32.totalorder 1, %s9
      %p60 = scmp.lt.s32.totalorder %s9, 3
      %p61 = pnand %p59, %p60
      %p62 = pneg %p61
      // Predicated region
      $region9: #{tpu_custom_call.1} parent=5 // pred_check
        _
      $region10: #{tpu_custom_call.1} parent=5 // pred_check_branch
        %64 = sbr.rel (%p61) target = $region12
      $region11: #{tpu_custom_call.1} parent=5 // pred_region
        %s65 = ssub.s32 %s9, 1
        // Predicated region
        $region13: #{tpu_custom_call.1} parent=11 // pred_check
          %p66 = pneg %p30
        $region14: #{tpu_custom_call.1} parent=11 // pred_check_branch
          %68 = sbr.rel (%p66) target = $region16
        $region15: #{tpu_custom_call.1} parent=11 // pred_region
          %s70 = ssub.s32 128, 128
          %71 = vsyncadd [#allocation3], %s70
          %s73 = sshll.u32 [#allocation2], 4
          %s74 = int_to_ptr.vmem [resolvable:$true] %s73
          %76 = dma.hbm_to_vmem [thread:$0]  %s0, 128, %s74, [#allocation3]
        $region16: #{tpu_custom_call.1} parent=11 // pred_fallthru
          _
      $region12: #{tpu_custom_call.1} parent=5 // pred_fallthru
        _
      %p77 = scmp.lt.s32.totalorder %s9, 2
      // Predicated region
      $region17: #{tpu_custom_call.1} parent=5 // pred_check
        %p78 = pneg %p77
      $region18: #{tpu_custom_call.1} parent=5 // pred_check_branch
        %80 = sbr.rel (%p78) target = $region20
      $region19: #{tpu_custom_call.1} parent=5 // pred_region
        _
      $region20: #{tpu_custom_call.1} parent=5 // pred_fallthru
        _
      %p81 = scmp.le.s32.totalorder 1, %s9
      %p82 = scmp.lt.s32.totalorder %s9, 3
      %p83 = pnand %p81, %p82
      %p84 = pneg %p83
      // Predicated region
      $region21: #{tpu_custom_call.1} parent=5 // pred_check
        _
      $region22: #{tpu_custom_call.1} parent=5 // pred_check_branch
        %86 = sbr.rel (%p83) target = $region24
      $region23: #{tpu_custom_call.1} parent=5 // pred_region
        %s87 = ssub.s32 %s9, 1
        // Predicated region
        $region25: #{tpu_custom_call.1} parent=23 // pred_check
          %p88 = pneg %p30
        $region26: #{tpu_custom_call.1} parent=23 // pred_check_branch
          %90 = sbr.rel (%p88) target = $region28
        $region27: #{tpu_custom_call.1} parent=23 // pred_region
          %91 = dma.done [#allocation3], 128
        $region28: #{tpu_custom_call.1} parent=23 // pred_fallthru
          _
        %p92 = pneg %p30
        %p93 = pneg %p27
        %p94 = pneg %p51
        %p95 = pneg %p48
        %v96 = vld [vmem:[#allocation2] sm:$0xff]
        %97 = vst [vmem:[#allocation5] sm:$0xff] %v96
        // Predicated region
        $region29: #{tpu_custom_call.1} parent=23 // pred_check
          %p98 = pneg %p48
        $region30: #{tpu_custom_call.1} parent=23 // pred_check_branch
          %100 = sbr.rel (%p98) target = $region32
        $region31: #{tpu_custom_call.1} parent=23 // pred_region
          %s102 = ssub.s32 128, 128
          %103 = vsyncadd [#allocation4], %s102
          %s105 = sshll.u32 [#allocation5], 4
          %s106 = int_to_ptr.vmem [resolvable:$true] %s105
          %108 = dma.vmem_to_hbm [thread:$0]  %s106, 128, %s1, [#allocation4]
        $region32: #{tpu_custom_call.1} parent=23 // pred_fallthru
          _
        // Predicated region
        $region33: #{tpu_custom_call.1} parent=23 // pred_check
          %p109 = pneg %p48
        $region34: #{tpu_custom_call.1} parent=23 // pred_check_branch
          %111 = sbr.rel (%p109) target = $region36
        $region35: #{tpu_custom_call.1} parent=23 // pred_region
          %112 = dma.done [#allocation4], 128
        $region36: #{tpu_custom_call.1} parent=23 // pred_fallthru
          _
      $region24: #{tpu_custom_call.1} parent=5 // pred_fallthru
        _
      %p113 = scmp.le.s32.totalorder 2, %s9
      // Predicated region
      $region37: #{tpu_custom_call.1} parent=5 // pred_check
        %p114 = pneg %p113
      $region38: #{tpu_custom_call.1} parent=5 // pred_check_branch
        %116 = sbr.rel (%p114) target = $region40
      $region39: #{tpu_custom_call.1} parent=5 // pred_region
        %s117 = ssub.s32 %s9, 2
      $region40: #{tpu_custom_call.1} parent=5 // pred_fallthru
        _
    $region6: #{tpu_custom_call.1} parent=1 // loop_footer
      %s13 = sadd.s32 1, %s9
    $region7: #{tpu_custom_call.1} parent=1 // loop_footer_branch
      %8 = sbr.rel target = $region3
    $region8: #{tpu_custom_call.1} parent=1 // loop_exit
      _
    %118 = vsyncpa [#allocation3], 1
    %s119 = scalar_lea.sflag [#allocation3], 1
    %120 = vsyncpa %s119, 1
    %121 = vsyncpa [#allocation4], 1
    %s122 = scalar_lea.sflag [#allocation4], 1
    %123 = vsyncpa %s122, 1

// kernel: forward.2
$region0: #{forward.2}
  #allocation0 [shape = 'u32[]', space=smem, size = 0x4, offset = 0x4, fixed_abs, tag = 'smem constant byte address 0x4 - core index']
  #allocation1 [shape = 'u32[144,128]{1,0:T(1,128)}', space=vmem, size = 0x12000, scoped, tag = 'internal scratch']
  %s0 = inlined_call_operand.vmem [shape: f32[2,768], index: 0, kind: input, shape index: {}]
  %s1 = inlined_call_operand.vmem [shape: bf16[768,1536], index: 1, kind: input, shape index: {}]
  %s2 = inlined_call_operand.vmem [shape: f32[1,1536], index: 2, kind: input, shape index: {}]
  %s3 = inlined_call_operand.vmem [shape: f32[2,1536], index: 3, kind: output, shape index: {}]
  %s4 = sld [smem:[#allocation0]]
  $region68: #{forward.2} parent=0
    _
  %s6 = ssub.s32 1, %s4
  %s7 = scalar_select 0, %s6, %s4
  $region1: #{forward.2} parent=0
    #allocation2 [shape = 'u8[1572864]{0}', space=vmem, size = 0x180000, scoped, tag = 'input window, operand 1']
    loop: start=0, step=1, limit=5
    $region2: #{forward.2} parent=1 // loop_pre_header
      _
    $region3: #{forward.2} parent=1 // loop_header
      %s9 = sphi 0, %s13
      %p10 = scmp.ge.s32.totalorder %s9, 5
      %s17 = sphi 0, %s17
      %s19 = sphi 0, %s17
      %s20 = sphi 0, %s19
      %s34 = sphi 0, %s20
      %s40 = sphi 0, %s42
      %s43 = sphi 0, %s40
      %s44 = sphi 0, %s43
      %s60 = sphi 0, %s44
      %s66 = sphi 0, %s68
      %s69 = sphi 0, %s66
      %s70 = sphi 0, %s69
      %s86 = sphi 0, %s70
      %s92 = sphi 0, %s94
      %s95 = sphi 0, %s92
      %s96 = sphi 0, %s95
      %s112 = sphi 0, %s96
    $region4: #{forward.2} parent=1 // loop_header_branch
      %12 = sbr.rel (%p10) target = $region8
    $region5: #{forward.2} parent=1 // loop_body
      %s14 = ssub.s32 %s9, 1
      %s15 = ssub.s32 %s9, 2
      %s16 = sadd.s32 %s9, 1
      %s18 = sadd.s32 %s17, 1
      %p21 = scmp.eq.s32.totalorder %s9, 2
      %p22 = scmp.ne.s32.totalorder %s17, %s19
      %p23 = scmp.eq.s32.totalorder %s9, 0
      %p24 = por %p22, %p23
      %p25 = scmp.ne.s32.totalorder %s17, %s19
      %p26 = scmp.eq.s32.totalorder %s14, 2
      %p27 = por %p25, %p26
      %p28 = scmp.ne.s32.totalorder %s19, %s20
      %p29 = scmp.eq.s32.totalorder %s14, 0
      %p30 = por %p28, %p29
      %p31 = scmp.ne.s32.totalorder %s19, %s20
      %p32 = scmp.eq.s32.totalorder %s15, 2
      %p33 = por %p31, %p32
      %p35 = scmp.ne.s32.totalorder %s20, %s34
      %p36 = scmp.eq.s32.totalorder %s15, 0
      %p37 = por %p35, %p36
      %s38 = ssub.s32 %s9, %s16
      %p39 = scmp.eq.s32.totalorder %s38, 0
      %s41 = sadd.s32 %s40, 1
      %s42 = scalar_select %p39, %s40, %s41
      %p45 = pneg %p39
      %p46 = scmp.eq.s32.totalorder %s9, 2
      %p47 = por %p45, %p46
      %p48 = scmp.ne.s32.totalorder %s40, %s43
      %p49 = scmp.eq.s32.totalorder %s9, 0
      %p50 = por %p48, %p49
      %p51 = scmp.ne.s32.totalorder %s40, %s43
      %p52 = scmp.eq.s32.totalorder %s14, 2
      %p53 = por %p51, %p52
      %p54 = scmp.ne.s32.totalorder %s43, %s44
      %p55 = scmp.eq.s32.totalorder %s14, 0
      %p56 = por %p54, %p55
      %p57 = scmp.ne.s32.totalorder %s43, %s44
      %p58 = scmp.eq.s32.totalorder %s15, 2
      %p59 = por %p57, %p58
      %p61 = scmp.ne.s32.totalorder %s44, %s60
      %p62 = scmp.eq.s32.totalorder %s15, 0
      %p63 = por %p61, %p62
      %s64 = ssub.s32 %s9, %s16
      %p65 = scmp.eq.s32.totalorder %s64, 0
      %s67 = sadd.s32 %s66, 1
      %s68 = scalar_select %p65, %s66, %s67
      %p71 = pneg %p65
      %p72 = scmp.eq.s32.totalorder %s9, 2
      %p73 = por %p71, %p72
      %p74 = scmp.ne.s32.totalorder %s66, %s69
      %p75 = scmp.eq.s32.totalorder %s9, 0
      %p76 = por %p74, %p75
      %p77 = scmp.ne.s32.totalorder %s66, %s69
      %p78 = scmp.eq.s32.totalorder %s14, 2
      %p79 = por %p77, %p78
      %p80 = scmp.ne.s32.totalorder %s69, %s70
      %p81 = scmp.eq.s32.totalorder %s14, 0
      %p82 = por %p80, %p81
      %p83 = scmp.ne.s32.totalorder %s69, %s70
      %p84 = scmp.eq.s32.totalorder %s15, 2
      %p85 = por %p83, %p84
      %p87 = scmp.ne.s32.totalorder %s70, %s86
      %p88 = scmp.eq.s32.totalorder %s15, 0
      %p89 = por %p87, %p88
      %s90 = ssub.s32 %s9, %s16
      %p91 = scmp.eq.s32.totalorder %s90, 0
      %s93 = sadd.s32 %s92, 1
      %s94 = scalar_select %p91, %s92, %s93
      %p97 = pneg %p91
      %p98 = scmp.eq.s32.totalorder %s9, 2
      %p99 = por %p97, %p98
      %p100 = scmp.ne.s32.totalorder %s92, %s95
      %p101 = scmp.eq.s32.totalorder %s9, 0
      %p102 = por %p100, %p101
      %p103 = scmp.ne.s32.totalorder %s92, %s95
      %p104 = scmp.eq.s32.totalorder %s14, 2
      %p105 = por %p103, %p104
      %p106 = scmp.ne.s32.totalorder %s95, %s96
      %p107 = scmp.eq.s32.totalorder %s14, 0
      %p108 = por %p106, %p107
      %p109 = scmp.ne.s32.totalorder %s95, %s96
      %p110 = scmp.eq.s32.totalorder %s15, 2
      %p111 = por %p109, %p110
      %p113 = scmp.ne.s32.totalorder %s96, %s112
      %p114 = scmp.eq.s32.totalorder %s15, 0
      %p115 = por %p113, %p114
      %p116 = scmp.le.s32.totalorder 1, %s9
      %p117 = scmp.lt.s32.totalorder %s9, 4
      %p118 = pnand %p116, %p117
      %p119 = pneg %p118
      // Predicated region
      $region9: #{forward.2} parent=5 // pred_check
        _
      $region10: #{forward.2} parent=5 // pred_check_branch
        %121 = sbr.rel (%p118) target = $region12
      $region11: #{forward.2} parent=5 // pred_region
        %s122 = ssub.s32 %s9, 1
        // Predicated region
        $region13: #{forward.2} parent=11 // pred_check
          %p123 = pneg %p30
        $region14: #{forward.2} parent=11 // pred_check_branch
          %125 = sbr.rel (%p123) target = $region16
        $region15: #{forward.2} parent=11 // pred_region
          _
        $region16: #{forward.2} parent=11 // pred_fallthru
          _
      $region12: #{forward.2} parent=5 // pred_fallthru
        _
      %p126 = scmp.lt.s32.totalorder %s9, 3
      // Predicated region
      $region17: #{forward.2} parent=5 // pred_check
        %p127 = pneg %p126
      $region18: #{forward.2} parent=5 // pred_check_branch
        %129 = sbr.rel (%p127) target = $region20
      $region19: #{forward.2} parent=5 // pred_region
        // Predicated region
        $region21: #{forward.2} parent=19 // pred_check
          %p130 = pneg %p50
        $region22: #{forward.2} parent=19 // pred_check_branch
          %132 = sbr.rel (%p130) target = $region24
        $region23: #{forward.2} parent=19 // pred_region
          %s133 = sand.u32 %s40, 1
          %s134 = sand.u32 %s40, 1
          %s135 = smul.addr %s134, 1536
          %s136 = scalar_lea.vmem [#allocation2], %s135
          %s137 = smul.u32 4, %s9
          %s138 = smul.addr %s137, 4
          %s139 = scalar_lea.vmem %s1, %s138
          // Predicated region
          $region25: #{forward.2} parent=23 // pred_check
            _
          $region26: #{forward.2} parent=23 // pred_check_branch
            %141 = sbr.rel (0) target = $region28
          $region27: #{forward.2} parent=23 // pred_region
            // Predicated region
            $region29: #{forward.2} parent=27 // pred_check
              _
            $region30: #{forward.2} parent=27 // pred_check_branch
              %143 = sbr.rel (0) target = $region32
            $region31: #{forward.2} parent=27 // pred_region
              loop: start=0, step=1, limit=1
              $region33: #{forward.2} parent=31 // loop_pre_header
                _
              $region34: #{forward.2} parent=31 // loop_header
                %s145 = sphi 0, %s149
                %p146 = scmp.ge.s32.totalorder %s145, 1
                %s150 = sphi %s139, %s139
                %s151 = sphi %s136, %s136
              $region35: #{forward.2} parent=31 // loop_header_branch
                %148 = sbr.rel (%p146) target = $region39
              $region36: #{forward.2} parent=31 // loop_body
                %v152 = vld [vmem:[%s150] sm:$0xff]
                %153 = vst [vmem:[%s151] sm:$0xff] %v152
                %v154 = vld [vmem:[%s150 + $0x8] sm:$0xff]
                %155 = vst [vmem:[%s151 + $0x8] sm:$0xff] %v154
                %v156 = vld [vmem:[%s150 + $0x30] sm:$0xff]
                %157 = vst [vmem:[%s151 + $0x10] sm:$0xff] %v156
                %v158 = vld [vmem:[%s150 + $0x38] sm:$0xff]
                %159 = vst [vmem:[%s151 + $0x18] sm:$0xff] %v158
                %v160 = vld [vmem:[%s150 + $0x60] sm:$0xff]
                %161 = vst [vmem:[%s151 + $0x20] sm:$0xff] %v160
                %v162 = vld [vmem:[%s150 + $0x68] sm:$0xff]
                %163 = vst [vmem:[%s151 + $0x28] sm:$0xff] %v162
                %v164 = vld [vmem:[%s150 + $0x90] sm:$0xff]
                %165 = vst [vmem:[%s151 + $0x30] sm:$0xff] %v164
                %v166 = vld [vmem:[%s150 + $0x98] sm:$0xff]
                %167 = vst [vmem:[%s151 + $0x38] sm:$0xff] %v166
                %v168 = vld [vmem:[%s150 + $0xc0] sm:$0xff]
                %169 = vst [vmem:[%s151 + $0x40] sm:$0xff] %v168
                %v170 = vld [vmem:[%s150 + $0xc8] sm:$0xff]
                %171 = vst [vmem:[%s151 + $0x48] sm:$0xff] %v170
                %v172 = vld [vmem:[%s150 + $0xf0] sm:$0xff]
                %173 = vst [vmem:[%s151 + $0x50] sm:$0xff] %v172
                %v174 = vld [vmem:[%s150 + $0xf8] sm:$0xff]
                %175 = vst [vmem:[%s151 + $0x58] sm:$0xff] %v174
                %v176 = vld [vmem:[%s150 + $0x120] sm:$0xff]
                %177 = vst [vmem:[%s151 + $0x60] sm:$0xff] %v176
                %v178 = vld [vmem:[%s150 + $0x128] sm:$0xff]
                %179 = vst [vmem:[%s151 + $0x68] sm:$0xff] %v178
                %v180 = vld [vmem:[%s150 + $0x150] sm:$0xff]
                %181 = vst [vmem:[%s151 + $0x70] sm:$0xff] %v180
                %v182 = vld [vmem:[%s150 + $0x158] sm:$0xff]
                %183 = vst [vmem:[%s151 + $0x78] sm:$0xff] %v182
                %v184 = vld [vmem:[%s150 + $0x180] sm:$0xff]
                %185 = vst [vmem:[%s151 + $0x80] sm:$0xff] %v184
                %v186 = vld [vmem:[%s150 + $0x188] sm:$0xff]
                %187 = vst [vmem:[%s151 + $0x88] sm:$0xff] %v186
                %v188 = vld [vmem:[%s150 + $0x1b0] sm:$0xff]
                %189 = vst [vmem:[%s151 + $0x90] sm:$0xff] %v188
                %v190 = vld [vmem:[%s150 + $0x1b8] sm:$0xff]
                %191 = vst [vmem:[%s151 + $0x98] sm:$0xff] %v190
                %v192 = vld [vmem:[%s150 + $0x1e0] sm:$0xff]
                %193 = vst [vmem:[%s151 + $0xa0] sm:$0xff] %v192
                %v194 = vld [vmem:[%s150 + $0x1e8] sm:$0xff]
                %195 = vst [vmem:[%s151 + $0xa8] sm:$0xff] %v194
                %v196 = vld [vmem:[%s150 + $0x210] sm:$0xff]
                %197 = vst [vmem:[%s151 + $0xb0] sm:$0xff] %v196
                %v198 = vld [vmem:[%s150 + $0x218] sm:$0xff]
                %199 = vst [vmem:[%s151 + $0xb8] sm:$0xff] %v198
                %v200 = vld [vmem:[%s150 + $0x240] sm:$0xff]
                %201 = vst [vmem:[%s151 + $0xc0] sm:$0xff] %v200
                %v202 = vld [vmem:[%s150 + $0x248] sm:$0xff]
                %203 = vst [vmem:[%s151 + $0xc8] sm:$0xff] %v202
                %v204 = vld [vmem:[%s150 + $0x270] sm:$0xff]
                %205 = vst [vmem:[%s151 + $0xd0] sm:$0xff] %v204
                %v206 = vld [vmem:[%s150 + $0x278] sm:$0xff]
                %207 = vst [vmem:[%s151 + $0xd8] sm:$0xff] %v206
                %v208 = vld [vmem:[%s150 + $0x2a0] sm:$0xff]
                %209 = vst [vmem:[%s151 + $0xe0] sm:$0xff] %v208
                %v210 = vld [vmem:[%s150 + $0x2a8] sm:$0xff]
                %211 = vst [vmem:[%s151 + $0xe8] sm:$0xff] %v210
                %v212 = vld [vmem:[%s150 + $0x2d0] sm:$0xff]
                %213 = vst [vmem:[%s151 + $0xf0] sm:$0xff] %v212
                %v214 = vld [vmem:[%s150 + $0x2d8] sm:$0xff]
                %215 = vst [vmem:[%s151 + $0xf8] sm:$0xff] %v214
                %v216 = vld [vmem:[%s150 + $0x300] sm:$0xff]
                %217 = vst [vmem:[%s151 + $0x100] sm:$0xff] %v216
                %v218 = vld [vmem:[%s150 + $0x308] sm:$0xff]
                %219 = vst [vmem:[%s151 + $0x108] sm:$0xff] %v218
                %v220 = vld [vmem:[%s150 + $0x330] sm:$0xff]
                %221 = vst [vmem:[%s151 + $0x110] sm:$0xff] %v220
                %v222 = vld [vmem:[%s150 + $0x338] sm:$0xff]
                %223 = vst [vmem:[%s151 + $0x118] sm:$0xff] %v222
                %v224 = vld [vmem:[%s150 + $0x360] sm:$0xff]
                %225 = vst [vmem:[%s151 + $0x120] sm:$0xff] %v224
                %v226 = vld [vmem:[%s150 + $0x368] sm:$0xff]
                %227 = vst [vmem:[%s151 + $0x128] sm:$0xff] %v226
                %v228 = vld [vmem:[%s150 + $0x390] sm:$0xff]
                %229 = vst [vmem:[%s151 + $0x130] sm:$0xff] %v228
                %v230 = vld [vmem:[%s150 + $0x398] sm:$0xff]
                %231 = vst [vmem:[%s151 + $0x138] sm:$0xff] %v230
                %v232 = vld [vmem:[%s150 + $0x3c0] sm:$0xff]
                %233 = vst [vmem:[%s151 + $0x140] sm:$0xff] %v232
                %v234 = vld [vmem:[%s150 + $0x3c8] sm:$0xff]
                %235 = vst [vmem:[%s151 + $0x148] sm:$0xff] %v234
                %v236 = vld [vmem:[%s150 + $0x3f0] sm:$0xff]
                %237 = vst [vmem:[%s151 + $0x150] sm:$0xff] %v236
                %v238 = vld [vmem:[%s150 + $0x3f8] sm:$0xff]
                %239 = vst [vmem:[%s151 + $0x158] sm:$0xff] %v238
                %v240 = vld [vmem:[%s150 + $0x420] sm:$0xff]
                %241 = vst [vmem:[%s151 + $0x160] sm:$0xff] %v240
                %v242 = vld [vmem:[%s150 + $0x428] sm:$0xff]
                %243 = vst [vmem:[%s151 + $0x168] sm:$0xff] %v242
                %v244 = vld [vmem:[%s150 + $0x450] sm:$0xff]
                %245 = vst [vmem:[%s151 + $0x170] sm:$0xff] %v244
                %v246 = vld [vmem:[%s150 + $0x458] sm:$0xff]
                %247 = vst [vmem:[%s151 + $0x178] sm:$0xff] %v246
                %v248 = vld [vmem:[%s150 + $0x480] sm:$0xff]
                %249 = vst [vmem:[%s151 + $0x180] sm:$0xff] %v248
                %v250 = vld [vmem:[%s150 + $0x488] sm:$0xff]
                %251 = vst [vmem:[%s151 + $0x188] sm:$0xff] %v250
                %v252 = vld [vmem:[%s150 + $0x4b0] sm:$0xff]
                %253 = vst [vmem:[%s151 + $0x190] sm:$0xff] %v252
                %v254 = vld [vmem:[%s150 + $0x4b8] sm:$0xff]
                %255 = vst [vmem:[%s151 + $0x198] sm:$0xff] %v254
                %v256 = vld [vmem:[%s150 + $0x4e0] sm:$0xff]
                %257 = vst [vmem:[%s151 + $0x1a0] sm:$0xff] %v256
                %v258 = vld [vmem:[%s150 + $0x4e8] sm:$0xff]
                %259 = vst [vmem:[%s151 + $0x1a8] sm:$0xff] %v258
                %v260 = vld [vmem:[%s150 + $0x510] sm:$0xff]
                %261 = vst [vmem:[%s151 + $0x1b0] sm:$0xff] %v260
                %v262 = vld [vmem:[%s150 + $0x518] sm:$0xff]
                %263 = vst [vmem:[%s151 + $0x1b8] sm:$0xff] %v262
                %v264 = vld [vmem:[%s150 + $0x540] sm:$0xff]
                %265 = vst [vmem:[%s151 + $0x1c0] sm:$0xff] %v264
                %v266 = vld [vmem:[%s150 + $0x548] sm:$0xff]
                %267 = vst [vmem:[%s151 + $0x1c8] sm:$0xff] %v266
                %v268 = vld [vmem:[%s150 + $0x570] sm:$0xff]
                %269 = vst [vmem:[%s151 + $0x1d0] sm:$0xff] %v268
                %v270 = vld [vmem:[%s150 + $0x578] sm:$0xff]
                %271 = vst [vmem:[%s151 + $0x1d8] sm:$0xff] %v270
                %v272 = vld [vmem:[%s150 + $0x5a0] sm:$0xff]
                %273 = vst [vmem:[%s151 + $0x1e0] sm:$0xff] %v272
                %v274 = vld [vmem:[%s150 + $0x5a8] sm:$0xff]
                %275 = vst [vmem:[%s151 + $0x1e8] sm:$0xff] %v274
                %v276 = vld [vmem:[%s150 + $0x5d0] sm:$0xff]
                %277 = vst [vmem:[%s151 + $0x1f0] sm:$0xff] %v276
                %v278 = vld [vmem:[%s150 + $0x5d8] sm:$0xff]
                %279 = vst [vmem:[%s151 + $0x1f8] sm:$0xff] %v278
                %v280 = vld [vmem:[%s150 + $0x600] sm:$0xff]
                %281 = vst [vmem:[%s151 + $0x200] sm:$0xff] %v280
                %v282 = vld [vmem:[%s150 + $0x608] sm:$0xff]
                %283 = vst [vmem:[%s151 + $0x208] sm:$0xff] %v282
                %v284 = vld [vmem:[%s150 + $0x630] sm:$0xff]
                %285 = vst [vmem:[%s151 + $0x210] sm:$0xff] %v284
                %v286 = vld [vmem:[%s150 + $0x638] sm:$0xff]
                %287 = vst [vmem:[%s151 + $0x218] sm:$0xff] %v286
                %v288 = vld [vmem:[%s150 + $0x660] sm:$0xff]
                %289 = vst [vmem:[%s151 + $0x220] sm:$0xff] %v288
                %v290 = vld [vmem:[%s150 + $0x668] sm:$0xff]
                %291 = vst [vmem:[%s151 + $0x228] sm:$0xff] %v290
                %v292 = vld [vmem:[%s150 + $0x690] sm:$0xff]
                %293 = vst [vmem:[%s151 + $0x230] sm:$0xff] %v292
                %v294 = vld [vmem:[%s150 + $0x698] sm:$0xff]
                %295 = vst [vmem:[%s151 + $0x238] sm:$0xff] %v294
                %v296 = vld [vmem:[%s150 + $0x6c0] sm:$0xff]
                %297 = vst [vmem:[%s151 + $0x240] sm:$0xff] %v296
                %v298 = vld [vmem:[%s150 + $0x6c8] sm:$0xff]
                %299 = vst [vmem:[%s151 + $0x248] sm:$0xff] %v298
                %v300 = vld [vmem:[%s150 + $0x6f0] sm:$0xff]
                %301 = vst [vmem:[%s151 + $0x250] sm:$0xff] %v300
                %v302 = vld [vmem:[%s150 + $0x6f8] sm:$0xff]
                %303 = vst [vmem:[%s151 + $0x258] sm:$0xff] %v302
                %v304 = vld [vmem:[%s150 + $0x720] sm:$0xff]
                %305 = vst [vmem:[%s151 + $0x260] sm:$0xff] %v304
                %v306 = vld [vmem:[%s150 + $0x728] sm:$0xff]
                %307 = vst [vmem:[%s151 + $0x268] sm:$0xff] %v306
                %v308 = vld [vmem:[%s150 + $0x750] sm:$0xff]
                %309 = vst [vmem:[%s151 + $0x270] sm:$0xff] %v308
                %v310 = vld [vmem:[%s150 + $0x758] sm:$0xff]
                %311 = vst [vmem:[%s151 + $0x278] sm:$0xff] %v310
                %v312 = vld [vmem:[%s150 + $0x780] sm:$0xff]
                %313 = vst [vmem:[%s151 + $0x280] sm:$0xff] %v312
                %v314 = vld [vmem:[%s150 + $0x788] sm:$0xff]
                %315 = vst [vmem:[%s151 + $0x288] sm:$0xff] %v314
                %v316 = vld [vmem:[%s150 + $0x7b0] sm:$0xff]
                %317 = vst [vmem:[%s151 + $0x290] sm:$0xff] %v316
                %v318 = vld [vmem:[%s150 + $0x7b8] sm:$0xff]
                %319 = vst [vmem:[%s151 + $0x298] sm:$0xff] %v318
                %v320 = vld [vmem:[%s150 + $0x7e0] sm:$0xff]
                %321 = vst [vmem:[%s151 + $0x2a0] sm:$0xff] %v320
                %v322 = vld [vmem:[%s150 + $0x7e8] sm:$0xff]
                %323 = vst [vmem:[%s151 + $0x2a8] sm:$0xff] %v322
                %v324 = vld [vmem:[%s150 + $0x810] sm:$0xff]
                %325 = vst [vmem:[%s151 + $0x2b0] sm:$0xff] %v324
                %v326 = vld [vmem:[%s150 + $0x818] sm:$0xff]
                %327 = vst [vmem:[%s151 + $0x2b8] sm:$0xff] %v326
                %v328 = vld [vmem:[%s150 + $0x840] sm:$0xff]
                %329 = vst [vmem:[%s151 + $0x2c0] sm:$0xff] %v328
                %v330 = vld [vmem:[%s150 + $0x848] sm:$0xff]
                %331 = vst [vmem:[%s151 + $0x2c8] sm:$0xff] %v330
                %v332 = vld [vmem:[%s150 + $0x870] sm:$0xff]
                %333 = vst [vmem:[%s151 + $0x2d0] sm:$0xff] %v332
                %v334 = vld [vmem:[%s150 + $0x878] sm:$0xff]
                %335 = vst [vmem:[%s151 + $0x2d8] sm:$0xff] %v334
                %v336 = vld [vmem:[%s150 + $0x8a0] sm:$0xff]
                %337 = vst [vmem:[%s151 + $0x2e0] sm:$0xff] %v336
                %v338 = vld [vmem:[%s150 + $0x8a8] sm:$0xff]
                %339 = vst [vmem:[%s151 + $0x2e8] sm:$0xff] %v338
                %v340 = vld [vmem:[%s150 + $0x8d0] sm:$0xff]
                %341 = vst [vmem:[%s151 + $0x2f0] sm:$0xff] %v340
                %v342 = vld [vmem:[%s150 + $0x8d8] sm:$0xff]
                %343 = vst [vmem:[%s151 + $0x2f8] sm:$0xff] %v342
                %v344 = vld [vmem:[%s150 + $0x900] sm:$0xff]
                %345 = vst [vmem:[%s151 + $0x300] sm:$0xff] %v344
                %v346 = vld [vmem:[%s150 + $0x908] sm:$0xff]
                %347 = vst [vmem:[%s151 + $0x308] sm:$0xff] %v346
                %v348 = vld [vmem:[%s150 + $0x930] sm:$0xff]
                %349 = vst [vmem:[%s151 + $0x310] sm:$0xff] %v348
                %v350 = vld [vmem:[%s150 + $0x938] sm:$0xff]
                %351 = vst [vmem:[%s151 + $0x318] sm:$0xff] %v350
                %v352 = vld [vmem:[%s150 + $0x960] sm:$0xff]
                %353 = vst [vmem:[%s151 + $0x320] sm:$0xff] %v352
                %v354 = vld [vmem:[%s150 + $0x968] sm:$0xff]
                %355 = vst [vmem:[%s151 + $0x328] sm:$0xff] %v354
                %v356 = vld [vmem:[%s150 + $0x990] sm:$0xff]
                %357 = vst [vmem:[%s151 + $0x330] sm:$0xff] %v356
                %v358 = vld [vmem:[%s150 + $0x998] sm:$0xff]
                %359 = vst [vmem:[%s151 + $0x338] sm:$0xff] %v358
                %v360 = vld [vmem:[%s150 + $0x9c0] sm:$0xff]
                %361 = vst [vmem:[%s151 + $0x340] sm:$0xff] %v360
                %v362 = vld [vmem:[%s150 + $0x9c8] sm:$0xff]
                %363 = vst [vmem:[%s151 + $0x348] sm:$0xff] %v362
                %v364 = vld [vmem:[%s150 + $0x9f0] sm:$0xff]
                %365 = vst [vmem:[%s151 + $0x350] sm:$0xff] %v364
                %v366 = vld [vmem:[%s150 + $0x9f8] sm:$0xff]
                %367 = vst [vmem:[%s151 + $0x358] sm:$0xff] %v366
                %v368 = vld [vmem:[%s150 + $0xa20] sm:$0xff]
                %369 = vst [vmem:[%s151 + $0x360] sm:$0xff] %v368
                %v370 = vld [vmem:[%s150 + $0xa28] sm:$0xff]
                %371 = vst [vmem:[%s151 + $0x368] sm:$0xff] %v370
                %v372 = vld [vmem:[%s150 + $0xa50] sm:$0xff]
                %373 = vst [vmem:[%s151 + $0x370] sm:$0xff] %v372
                %v374 = vld [vmem:[%s150 + $0xa58] sm:$0xff]
                %375 = vst [vmem:[%s151 + $0x378] sm:$0xff] %v374
                %v376 = vld [vmem:[%s150 + $0xa80] sm:$0xff]
                %377 = vst [vmem:[%s151 + $0x380] sm:$0xff] %v376
                %v378 = vld [vmem:[%s150 + $0xa88] sm:$0xff]
                %379 = vst [vmem:[%s151 + $0x388] sm:$0xff] %v378
                %v380 = vld [vmem:[%s150 + $0xab0] sm:$0xff]
                %381 = vst [vmem:[%s151 + $0x390] sm:$0xff] %v380
                %v382 = vld [vmem:[%s150 + $0xab8] sm:$0xff]
                %383 = vst [vmem:[%s151 + $0x398] sm:$0xff] %v382
                %v384 = vld [vmem:[%s150 + $0xae0] sm:$0xff]
                %385 = vst [vmem:[%s151 + $0x3a0] sm:$0xff] %v384
                %v386 = vld [vmem:[%s150 + $0xae8] sm:$0xff]
                %387 = vst [vmem:[%s151 + $0x3a8] sm:$0xff] %v386
                %v388 = vld [vmem:[%s150 + $0xb10] sm:$0xff]
                %389 = vst [vmem:[%s151 + $0x3b0] sm:$0xff] %v388
                %v390 = vld [vmem:[%s150 + $0xb18] sm:$0xff]
                %391 = vst [vmem:[%s151 + $0x3b8] sm:$0xff] %v390
                %v392 = vld [vmem:[%s150 + $0xb40] sm:$0xff]
                %393 = vst [vmem:[%s151 + $0x3c0] sm:$0xff] %v392
                %v394 = vld [vmem:[%s150 + $0xb48] sm:$0xff]
                %395 = vst [vmem:[%s151 + $0x3c8] sm:$0xff] %v394
                %v396 = vld [vmem:[%s150 + $0xb70] sm:$0xff]
                %397 = vst [vmem:[%s151 + $0x3d0] sm:$0xff] %v396
                %v398 = vld [vmem:[%s150 + $0xb78] sm:$0xff]
                %399 = vst [vmem:[%s151 + $0x3d8] sm:$0xff] %v398
                %v400 = vld [vmem:[%s150 + $0xba0] sm:$0xff]
                %401 = vst [vmem:[%s151 + $0x3e0] sm:$0xff] %v400
                %v402 = vld [vmem:[%s150 + $0xba8] sm:$0xff]
                %403 = vst [vmem:[%s151 + $0x3e8] sm:$0xff] %v402
                %v404 = vld [vmem:[%s150 + $0xbd0] sm:$0xff]
                %405 = vst [vmem:[%s151 + $0x3f0] sm:$0xff] %v404
                %v406 = vld [vmem:[%s150 + $0xbd8] sm:$0xff]
                %407 = vst [vmem:[%s151 + $0x3f8] sm:$0xff] %v406
                %v408 = vld [vmem:[%s150 + $0xc00] sm:$0xff]
                %409 = vst [vmem:[%s151 + $0x400] sm:$0xff] %v408
                %v410 = vld [vmem:[%s150 + $0xc08] sm:$0xff]
                %411 = vst [vmem:[%s151 + $0x408] sm:$0xff] %v410
                %v412 = vld [vmem:[%s150 + $0xc30] sm:$0xff]
                %413 = vst [vmem:[%s151 + $0x410] sm:$0xff] %v412
                %v414 = vld [vmem:[%s150 + $0xc38] sm:$0xff]
                %415 = vst [vmem:[%s151 + $0x418] sm:$0xff] %v414
                %v416 = vld [vmem:[%s150 + $0xc60] sm:$0xff]
                %417 = vst [vmem:[%s151 + $0x420] sm:$0xff] %v416
                %v418 = vld [vmem:[%s150 + $0xc68] sm:$0xff]
                %419 = vst [vmem:[%s151 + $0x428] sm:$0xff] %v418
                %v420 = vld [vmem:[%s150 + $0xc90] sm:$0xff]
                %421 = vst [vmem:[%s151 + $0x430] sm:$0xff] %v420
                %v422 = vld [vmem:[%s150 + $0xc98] sm:$0xff]
                %423 = vst [vmem:[%s151 + $0x438] sm:$0xff] %v422
                %v424 = vld [vmem:[%s150 + $0xcc0] sm:$0xff]
                %425 = vst [vmem:[%s151 + $0x440] sm:$0xff] %v424
                %v426 = vld [vmem:[%s150 + $0xcc8] sm:$0xff]
                %427 = vst [vmem:[%s151 + $0x448] sm:$0xff] %v426
                %v428 = vld [vmem:[%s150 + $0xcf0] sm:$0xff]
                %429 = vst [vmem:[%s151 + $0x450] sm:$0xff] %v428
                %v430 = vld [vmem:[%s150 + $0xcf8] sm:$0xff]
                %431 = vst [vmem:[%s151 + $0x458] sm:$0xff] %v430
                %v432 = vld [vmem:[%s150 + $0xd20] sm:$0xff]
                %433 = vst [vmem:[%s151 + $0x460] sm:$0xff] %v432
                %v434 = vld [vmem:[%s150 + $0xd28] sm:$0xff]
                %435 = vst [vmem:[%s151 + $0x468] sm:$0xff] %v434
                %v436 = vld [vmem:[%s150 + $0xd50] sm:$0xff]
                %437 = vst [vmem:[%s151 + $0x470] sm:$0xff] %v436
                %v438 = vld [vmem:[%s150 + $0xd58] sm:$0xff]
                %439 = vst [vmem:[%s151 + $0x478] sm:$0xff] %v438
                %v440 = vld [vmem:[%s150 + $0xd80] sm:$0xff]
                %441 = vst [vmem:[%s151 + $0x480] sm:$0xff] %v440
                %v442 = vld [vmem:[%s150 + $0xd88] sm:$0xff]
                %443 = vst [vmem:[%s151 + $0x488] sm:$0xff] %v442
                %v444 = vld [vmem:[%s150 + $0xdb0] sm:$0xff]
                %445 = vst [vmem:[%s151 + $0x490] sm:$0xff] %v444
                %v446 = vld [vmem:[%s150 + $0xdb8] sm:$0xff]
                %447 = vst [vmem:[%s151 + $0x498] sm:$0xff] %v446
                %v448 = vld [vmem:[%s150 + $0xde0] sm:$0xff]
                %449 = vst [vmem:[%s151 + $0x4a0] sm:$0xff] %v448
                %v450 = vld [vmem:[%s150 + $0xde8] sm:$0xff]
                %451 = vst [vmem:[%s151 + $0x4a8] sm:$0xff] %v450
                %v452 = vld [vmem:[%s150 + $0xe10] sm:$0xff]
                %453 = vst [vmem:[%s151 + $0x4b0] sm:$0xff] %v452
                %v454 = vld [vmem:[%s150 + $0xe18] sm:$0xff]
                %455 = vst [vmem:[%s151 + $0x4b8] sm:$0xff] %v454
                %v456 = vld [vmem:[%s150 + $0xe40] sm:$0xff]
                %457 = vst [vmem:[%s151 + $0x4c0] sm:$0xff] %v456
                %v458 = vld [vmem:[%s150 + $0xe48] sm:$0xff]
                %459 = vst [vmem:[%s151 + $0x4c8] sm:$0xff] %v458
                %v460 = vld [vmem:[%s150 + $0xe70] sm:$0xff]
                %461 = vst [vmem:[%s151 + $0x4d0] sm:$0xff] %v460
                %v462 = vld [vmem:[%s150 + $0xe78] sm:$0xff]
                %463 = vst [vmem:[%s151 + $0x4d8] sm:$0xff] %v462
                %v464 = vld [vmem:[%s150 + $0xea0] sm:$0xff]
                %465 = vst [vmem:[%s151 + $0x4e0] sm:$0xff] %v464
                %v466 = vld [vmem:[%s150 + $0xea8] sm:$0xff]
                %467 = vst [vmem:[%s151 + $0x4e8] sm:$0xff] %v466
                %v468 = vld [vmem:[%s150 + $0xed0] sm:$0xff]
                %469 = vst [vmem:[%s151 + $0x4f0] sm:$0xff] %v468
                %v470 = vld [vmem:[%s150 + $0xed8] sm:$0xff]
                %471 = vst [vmem:[%s151 + $0x4f8] sm:$0xff] %v470
                %v472 = vld [vmem:[%s150 + $0xf00] sm:$0xff]
                %473 = vst [vmem:[%s151 + $0x500] sm:$0xff] %v472
                %v474 = vld [vmem:[%s150 + $0xf08] sm:$0xff]
                %475 = vst [vmem:[%s151 + $0x508] sm:$0xff] %v474
                %v476 = vld [vmem:[%s150 + $0xf30] sm:$0xff]
                %477 = vst [vmem:[%s151 + $0x510] sm:$0xff] %v476
                %v478 = vld [vmem:[%s150 + $0xf38] sm:$0xff]
                %479 = vst [vmem:[%s151 + $0x518] sm:$0xff] %v478
                %v480 = vld [vmem:[%s150 + $0xf60] sm:$0xff]
                %481 = vst [vmem:[%s151 + $0x520] sm:$0xff] %v480
                %v482 = vld [vmem:[%s150 + $0xf68] sm:$0xff]
                %483 = vst [vmem:[%s151 + $0x528] sm:$0xff] %v482
                %v484 = vld [vmem:[%s150 + $0xf90] sm:$0xff]
                %485 = vst [vmem:[%s151 + $0x530] sm:$0xff] %v484
                %v486 = vld [vmem:[%s150 + $0xf98] sm:$0xff]
                %487 = vst [vmem:[%s151 + $0x538] sm:$0xff] %v486
                %v488 = vld [vmem:[%s150 + $0xfc0] sm:$0xff]
                %489 = vst [vmem:[%s151 + $0x540] sm:$0xff] %v488
                %v490 = vld [vmem:[%s150 + $0xfc8] sm:$0xff]
                %491 = vst [vmem:[%s151 + $0x548] sm:$0xff] %v490
                %v492 = vld [vmem:[%s150 + $0xff0] sm:$0xff]
                %493 = vst [vmem:[%s151 + $0x550] sm:$0xff] %v492
                %v494 = vld [vmem:[%s150 + $0xff8] sm:$0xff]
                %495 = vst [vmem:[%s151 + $0x558] sm:$0xff] %v494
                %v496 = vld [vmem:[%s150 + $0x1020] sm:$0xff]
                %497 = vst [vmem:[%s151 + $0x560] sm:$0xff] %v496
                %v498 = vld [vmem:[%s150 + $0x1028] sm:$0xff]
                %499 = vst [vmem:[%s151 + $0x568] sm:$0xff] %v498
                %v500 = vld [vmem:[%s150 + $0x1050] sm:$0xff]
                %501 = vst [vmem:[%s151 + $0x570] sm:$0xff] %v500
                %v502 = vld [vmem:[%s150 + $0x1058] sm:$0xff]
                %503 = vst [vmem:[%s151 + $0x578] sm:$0xff] %v502
                %v504 = vld [vmem:[%s150 + $0x1080] sm:$0xff]
                %505 = vst [vmem:[%s151 + $0x580] sm:$0xff] %v504
                %v506 = vld [vmem:[%s150 + $0x1088] sm:$0xff]
                %507 = vst [vmem:[%s151 + $0x588] sm:$0xff] %v506
                %v508 = vld [vmem:[%s150 + $0x10b0] sm:$0xff]
                %509 = vst [vmem:[%s151 + $0x590] sm:$0xff] %v508
                %v510 = vld [vmem:[%s150 + $0x10b8] sm:$0xff]
                %511 = vst [vmem:[%s151 + $0x598] sm:$0xff] %v510
                %v512 = vld [vmem:[%s150 + $0x10e0] sm:$0xff]
                %513 = vst [vmem:[%s151 + $0x5a0] sm:$0xff] %v512
                %v514 = vld [vmem:[%s150 + $0x10e8] sm:$0xff]
                %515 = vst [vmem:[%s151 + $0x5a8] sm:$0xff] %v514
                %v516 = vld [vmem:[%s150 + $0x1110] sm:$0xff]
                %517 = vst [vmem:[%s151 + $0x5b0] sm:$0xff] %v516
                %v518 = vld [vmem:[%s150 + $0x1118] sm:$0xff]
                %519 = vst [vmem:[%s151 + $0x5b8] sm:$0xff] %v518
                %v520 = vld [vmem:[%s150 + $0x1140] sm:$0xff]
                %521 = vst [vmem:[%s151 + $0x5c0] sm:$0xff] %v520
                %v522 = vld [vmem:[%s150 + $0x1148] sm:$0xff]
                %523 = vst [vmem:[%s151 + $0x5c8] sm:$0xff] %v522
                %v524 = vld [vmem:[%s150 + $0x1170] sm:$0xff]
                %525 = vst [vmem:[%s151 + $0x5d0] sm:$0xff] %v524
                %v526 = vld [vmem:[%s150 + $0x1178] sm:$0xff]
                %527 = vst [vmem:[%s151 + $0x5d8] sm:$0xff] %v526
                %v528 = vld [vmem:[%s150 + $0x11a0] sm:$0xff]
                %529 = vst [vmem:[%s151 + $0x5e0] sm:$0xff] %v528
                %v530 = vld [vmem:[%s150 + $0x11a8] sm:$0xff]
                %531 = vst [vmem:[%s151 + $0x5e8] sm:$0xff] %v530
                %v532 = vld [vmem:[%s150 + $0x11d0] sm:$0xff]
                %533 = vst [vmem:[%s151 + $0x5f0] sm:$0xff] %v532
                %v534 = vld [vmem:[%s150 + $0x11d8] sm:$0xff]
                %535 = vst [vmem:[%s151 + $0x5f8] sm:$0xff] %v534
              $region37: #{forward.2} parent=31 // loop_footer
                %s149 = sadd.s32 1, %s145
              $region38: #{forward.2} parent=31 // loop_footer_branch
                %144 = sbr.rel target = $region34
              $region39: #{forward.2} parent=31 // loop_exit
                _
            $region32: #{forward.2} parent=27 // pred_fallthru
              _
            // Predicated region
            $region40: #{forward.2} parent=27 // pred_check
              _
            $region41: #{forward.2} parent=27 // pred_check_branch
              %537 = sbr.rel target = $region43
            $region42: #{forward.2} parent=27 // pred_region
              _
            $region43: #{forward.2} parent=27 // pred_fallthru
              _
          $region28: #{forward.2} parent=23 // pred_fallthru
            _
          %538 = vnop
        $region24: #{forward.2} parent=19 // pred_fallthru
          _
        // Predicated region
        $region44: #{forward.2} parent=19 // pred_check
          %p539 = pneg %p76
        $region45: #{forward.2} parent=19 // pred_check_branch
          %541 = sbr.rel (%p539) target = $region47
        $region46: #{forward.2} parent=19 // pred_region
          %s542 = smul.u32 4, %s9
          %p543 = scmp.lt.s32.totalorder %s542, 11
          %s544 = scalar_select %p543, %s542, 11
          %s545 = scalar_lea.vmem %s2, %s544
          %s546 = smul.u32 4, %s9
        $region47: #{forward.2} parent=19 // pred_fallthru
          _
      $region20: #{forward.2} parent=5 // pred_fallthru
        _
      %p547 = scmp.le.s32.totalorder 1, %s9
      %p548 = scmp.lt.s32.totalorder %s9, 4
      %p549 = pnand %p547, %p548
      %p550 = pneg %p549
      // Predicated region
      $region48: #{forward.2} parent=5 // pred_check
        _
      $region49: #{forward.2} parent=5 // pred_check_branch
        %552 = sbr.rel (%p549) target = $region51
      $region50: #{forward.2} parent=5 // pred_region
        %s553 = ssub.s32 %s9, 1
        %s554 = sand.u32 %s43, 1
        %s555 = sand.u32 %s43, 1
        %s556 = smul.addr %s555, 1536
        %s557 = scalar_lea.vmem [#allocation2], %s556
        // Predicated region
        $region52: #{forward.2} parent=50 // pred_check
          %p558 = pneg %p56
        $region53: #{forward.2} parent=50 // pred_check_branch
          %560 = sbr.rel (%p558) target = $region55
        $region54: #{forward.2} parent=50 // pred_region
          _
        $region55: #{forward.2} parent=50 // pred_fallthru
          _
        %p561 = pneg %p30
        %p562 = pneg %p27
        %s563 = sand.u32 %s43, 1
        %s564 = sand.u32 %s43, 1
        %s565 = smul.addr %s564, 1536
        %s566 = scalar_lea.vmem [#allocation2], %s565
        %p567 = pneg %p56
        %p568 = pneg %p53
        %s569 = smul.u32 4, %s14
        %p570 = scmp.lt.s32.totalorder %s569, 11
        %s571 = scalar_select %p570, %s569, 11
        %s572 = scalar_lea.vmem %s2, %s571
        %p573 = pneg %p82
        %p574 = pneg %p79
        %p575 = pneg %p108
        %p576 = pneg %p105
        %s577 = smul.u32 4, %s14
        %p578 = scmp.lt.s32.totalorder %s577, 11
        %s579 = scalar_select %p578, %s577, 11
        %s580 = smul.addr %s579, 2
        %s581 = scalar_lea.vmem %s3, %s580
        %s582 = smul.u32 4, %s14
        %s583 = smul.u32 4, %s14
        %p584 = scmp.lt.s32.totalorder %s583, 11
        %s585 = scalar_select %p584, %s583, 11
        %s586 = scalar_lea.vmem %s2, %s585
        %s587 = smul.u32 4, %s14
        %s588 = smul.u32 4, %s14
        %p589 = scmp.lt.s32.totalorder %s588, 11
        %s590 = scalar_select %p589, %s588, 11
        %s591 = smul.addr %s590, 2
        %s592 = scalar_lea.vmem %s3, %s591
        %s593 = smul.u32 4, %s14
        %v594 = vld [vmem:[%s0] sm:$0xff]
        %v595 = vld [vmem:[%s0 + $0x8] sm:$0xf]
        %v598 = vcombine.high %v594, %v594
        %v600 = vunpack.c.l.s4 1983009808
        %v601 = vunpack.c.0.s8 %v600
        %v602 = vlaneseq
        %v603 = vshrl.u32 %v602, 7
        %v604 = vsub.s32 %v601, %v603
        %v605 = vrot.slane %v594, %v604
        %v607 = vunpack.c.l.s4 1983009808
        %v608 = vunpack.c.0.s8 %v607
        %v609 = vlaneseq
        %v610 = vshrl.u32 %v609, 7
        %v611 = vsub.s32 %v608, %v610
        %v612 = vrot.slane %v598, %v611
        %v613 = vcombine.high %v605, %v605
        %v614 = vcombine.high %v612, %v612
        %v616 = vunpack.c.l.s4 1983009808
        %v617 = vunpack.c.0.s8 %v616
        %v618 = vlaneseq
        %v619 = vshrl.u32 %v618, 7
        %v620 = vsub.s32 %v617, %v619
        %v621 = vrot.slane %v595, %v620
        %v622 = vcombine.high %v621, %v621
        %v629 = vpack.c.bf16 %v605, %v605
        %v630 = vpack.c.bf16 %v613, %v613
        %v631 = vpack.c.bf16 %v612, %v612
        %v632 = vpack.c.bf16 %v614, %v614
        %v633 = vpack.c.bf16 %v621, %v621
        %v634 = vpack.c.bf16 %v622, %v622
        %v635 = vld [vmem:[%s557] sm:$0xff]
        %v636 = vld [vmem:[%s557 + $0x8] sm:$0xff]
        %v637 = vld [vmem:[%s557 + $0x10] sm:$0xff]
        %v638 = vld [vmem:[%s557 + $0x18] sm:$0xff]
        %v639 = vld [vmem:[%s557 + $0x20] sm:$0xff]
        %v640 = vld [vmem:[%s557 + $0x28] sm:$0xff]
        %v641 = vld [vmem:[%s557 + $0x30] sm:$0xff]
        %v642 = vld [vmem:[%s557 + $0x38] sm:$0xff]
        %v643 = vld [vmem:[%s557 + $0x40] sm:$0xff]
        %v644 = vld [vmem:[%s557 + $0x48] sm:$0xff]
        %v645 = vld [vmem:[%s557 + $0x50] sm:$0xff]
        %v646 = vld [vmem:[%s557 + $0x58] sm:$0xff]
        %v647 = vld [vmem:[%s557 + $0x60] sm:$0xff]
        %v648 = vld [vmem:[%s557 + $0x68] sm:$0xff]
        %v649 = vld [vmem:[%s557 + $0x70] sm:$0xff]
        %v650 = vld [vmem:[%s557 + $0x78] sm:$0xff]
        %v651 = vld [vmem:[%s557 + $0x80] sm:$0xff]
        %v652 = vld [vmem:[%s557 + $0x88] sm:$0xff]
        %v653 = vld [vmem:[%s557 + $0x90] sm:$0xff]
        %v654 = vld [vmem:[%s557 + $0x98] sm:$0xff]
        %v655 = vld [vmem:[%s557 + $0xa0] sm:$0xff]
        %v656 = vld [vmem:[%s557 + $0xa8] sm:$0xff]
        %v657 = vld [vmem:[%s557 + $0xb0] sm:$0xff]
        %v658 = vld [vmem:[%s557 + $0xb8] sm:$0xff]
        %v659 = vld [vmem:[%s557 + $0xc0] sm:$0xff]
        %v660 = vld [vmem:[%s557 + $0xc8] sm:$0xff]
        %v661 = vld [vmem:[%s557 + $0xd0] sm:$0xff]
        %v662 = vld [vmem:[%s557 + $0xd8] sm:$0xff]
        %v663 = vld [vmem:[%s557 + $0xe0] sm:$0xff]
        %v664 = vld [vmem:[%s557 + $0xe8] sm:$0xff]
        %v665 = vld [vmem:[%s557 + $0xf0] sm:$0xff]
        %v666 = vld [vmem:[%s557 + $0xf8] sm:$0xff]
        %v667 = vld [vmem:[%s557 + $0x100] sm:$0xff]
        %v668 = vld [vmem:[%s557 + $0x108] sm:$0xff]
        %v669 = vld [vmem:[%s557 + $0x110] sm:$0xff]
        %v670 = vld [vmem:[%s557 + $0x118] sm:$0xff]
        %v671 = vld [vmem:[%s557 + $0x120] sm:$0xff]
        %v672 = vld [vmem:[%s557 + $0x128] sm:$0xff]
        %v673 = vld [vmem:[%s557 + $0x130] sm:$0xff]
        %v674 = vld [vmem:[%s557 + $0x138] sm:$0xff]
        %v675 = vld [vmem:[%s557 + $0x140] sm:$0xff]
        %v676 = vld [vmem:[%s557 + $0x148] sm:$0xff]
        %v677 = vld [vmem:[%s557 + $0x150] sm:$0xff]
        %v678 = vld [vmem:[%s557 + $0x158] sm:$0xff]
        %v679 = vld [vmem:[%s557 + $0x160] sm:$0xff]
        %v680 = vld [vmem:[%s557 + $0x168] sm:$0xff]
        %v681 = vld [vmem:[%s557 + $0x170] sm:$0xff]
        %v682 = vld [vmem:[%s557 + $0x178] sm:$0xff]
        %v683 = vld [vmem:[%s557 + $0x180] sm:$0xff]
        %v684 = vld [vmem:[%s557 + $0x188] sm:$0xff]
        %v685 = vld [vmem:[%s557 + $0x190] sm:$0xff]
        %v686 = vld [vmem:[%s557 + $0x198] sm:$0xff]
        %v687 = vld [vmem:[%s557 + $0x1a0] sm:$0xff]
        %v688 = vld [vmem:[%s557 + $0x1a8] sm:$0xff]
        %v689 = vld [vmem:[%s557 + $0x1b0] sm:$0xff]
        %v690 = vld [vmem:[%s557 + $0x1b8] sm:$0xff]
        %v691 = vld [vmem:[%s557 + $0x1c0] sm:$0xff]
        %v692 = vld [vmem:[%s557 + $0x1c8] sm:$0xff]
        %v693 = vld [vmem:[%s557 + $0x1d0] sm:$0xff]
        %v694 = vld [vmem:[%s557 + $0x1d8] sm:$0xff]
        %v695 = vld [vmem:[%s557 + $0x1e0] sm:$0xff]
        %v696 = vld [vmem:[%s557 + $0x1e8] sm:$0xff]
        %v697 = vld [vmem:[%s557 + $0x1f0] sm:$0xff]
        %v698 = vld [vmem:[%s557 + $0x1f8] sm:$0xff]
        %v699 = vld [vmem:[%s557 + $0x200] sm:$0xff]
        %v700 = vld [vmem:[%s557 + $0x208] sm:$0xff]
        %v701 = vld [vmem:[%s557 + $0x210] sm:$0xff]
        %v702 = vld [vmem:[%s557 + $0x218] sm:$0xff]
        %v703 = vld [vmem:[%s557 + $0x220] sm:$0xff]
        %v704 = vld [vmem:[%s557 + $0x228] sm:$0xff]
        %v705 = vld [vmem:[%s557 + $0x230] sm:$0xff]
        %v706 = vld [vmem:[%s557 + $0x238] sm:$0xff]
        %v707 = vld [vmem:[%s557 + $0x240] sm:$0xff]
        %v708 = vld [vmem:[%s557 + $0x248] sm:$0xff]
        %v709 = vld [vmem:[%s557 + $0x250] sm:$0xff]
        %v710 = vld [vmem:[%s557 + $0x258] sm:$0xff]
        %v711 = vld [vmem:[%s557 + $0x260] sm:$0xff]
        %v712 = vld [vmem:[%s557 + $0x268] sm:$0xff]
        %v713 = vld [vmem:[%s557 + $0x270] sm:$0xff]
        %v714 = vld [vmem:[%s557 + $0x278] sm:$0xff]
        %v715 = vld [vmem:[%s557 + $0x280] sm:$0xff]
        %v716 = vld [vmem:[%s557 + $0x288] sm:$0xff]
        %v717 = vld [vmem:[%s557 + $0x290] sm:$0xff]
        %v718 = vld [vmem:[%s557 + $0x298] sm:$0xff]
        %v719 = vld [vmem:[%s557 + $0x2a0] sm:$0xff]
        %v720 = vld [vmem:[%s557 + $0x2a8] sm:$0xff]
        %v721 = vld [vmem:[%s557 + $0x2b0] sm:$0xff]
        %v722 = vld [vmem:[%s557 + $0x2b8] sm:$0xff]
        %v723 = vld [vmem:[%s557 + $0x2c0] sm:$0xff]
        %v724 = vld [vmem:[%s557 + $0x2c8] sm:$0xff]
        %v725 = vld [vmem:[%s557 + $0x2d0] sm:$0xff]
        %v726 = vld [vmem:[%s557 + $0x2d8] sm:$0xff]
        %v727 = vld [vmem:[%s557 + $0x2e0] sm:$0xff]
        %v728 = vld [vmem:[%s557 + $0x2e8] sm:$0xff]
        %v729 = vld [vmem:[%s557 + $0x2f0] sm:$0xff]
        %v730 = vld [vmem:[%s557 + $0x2f8] sm:$0xff]
        %v731 = vld [vmem:[%s557 + $0x300] sm:$0xff]
        %v732 = vld [vmem:[%s557 + $0x308] sm:$0xff]
        %v733 = vld [vmem:[%s557 + $0x310] sm:$0xff]
        %v734 = vld [vmem:[%s557 + $0x318] sm:$0xff]
        %v735 = vld [vmem:[%s557 + $0x320] sm:$0xff]
        %v736 = vld [vmem:[%s557 + $0x328] sm:$0xff]
        %v737 = vld [vmem:[%s557 + $0x330] sm:$0xff]
        %v738 = vld [vmem:[%s557 + $0x338] sm:$0xff]
        %v739 = vld [vmem:[%s557 + $0x340] sm:$0xff]
        %v740 = vld [vmem:[%s557 + $0x348] sm:$0xff]
        %v741 = vld [vmem:[%s557 + $0x350] sm:$0xff]
        %v742 = vld [vmem:[%s557 + $0x358] sm:$0xff]
        %v743 = vld [vmem:[%s557 + $0x360] sm:$0xff]
        %v744 = vld [vmem:[%s557 + $0x368] sm:$0xff]
        %v745 = vld [vmem:[%s557 + $0x370] sm:$0xff]
        %v746 = vld [vmem:[%s557 + $0x378] sm:$0xff]
        %v747 = vld [vmem:[%s557 + $0x380] sm:$0xff]
        %v748 = vld [vmem:[%s557 + $0x388] sm:$0xff]
        %v749 = vld [vmem:[%s557 + $0x390] sm:$0xff]
        %v750 = vld [vmem:[%s557 + $0x398] sm:$0xff]
        %v751 = vld [vmem:[%s557 + $0x3a0] sm:$0xff]
        %v752 = vld [vmem:[%s557 + $0x3a8] sm:$0xff]
        %v753 = vld [vmem:[%s557 + $0x3b0] sm:$0xff]
        %v754 = vld [vmem:[%s557 + $0x3b8] sm:$0xff]
        %v755 = vld [vmem:[%s557 + $0x3c0] sm:$0xff]
        %v756 = vld [vmem:[%s557 + $0x3c8] sm:$0xff]
        %v757 = vld [vmem:[%s557 + $0x3d0] sm:$0xff]
        %v758 = vld [vmem:[%s557 + $0x3d8] sm:$0xff]
        %v759 = vld [vmem:[%s557 + $0x3e0] sm:$0xff]
        %v760 = vld [vmem:[%s557 + $0x3e8] sm:$0xff]
        %v761 = vld [vmem:[%s557 + $0x3f0] sm:$0xff]
        %v762 = vld [vmem:[%s557 + $0x3f8] sm:$0xff]
        %v763 = vld [vmem:[%s557 + $0x400] sm:$0xff]
        %v764 = vld [vmem:[%s557 + $0x408] sm:$0xff]
        %v765 = vld [vmem:[%s557 + $0x410] sm:$0xff]
        %v766 = vld [vmem:[%s557 + $0x418] sm:$0xff]
        %v767 = vld [vmem:[%s557 + $0x420] sm:$0xff]
        %v768 = vld [vmem:[%s557 + $0x428] sm:$0xff]
        %v769 = vld [vmem:[%s557 + $0x430] sm:$0xff]
        %v770 = vld [vmem:[%s557 + $0x438] sm:$0xff]
        %v771 = vld [vmem:[%s557 + $0x440] sm:$0xff]
        %v772 = vld [vmem:[%s557 + $0x448] sm:$0xff]
        %v773 = vld [vmem:[%s557 + $0x450] sm:$0xff]
        %v774 = vld [vmem:[%s557 + $0x458] sm:$0xff]
        %v775 = vld [vmem:[%s557 + $0x460] sm:$0xff]
        %v776 = vld [vmem:[%s557 + $0x468] sm:$0xff]
        %v777 = vld [vmem:[%s557 + $0x470] sm:$0xff]
        %v778 = vld [vmem:[%s557 + $0x478] sm:$0xff]
        %v779 = vld [vmem:[%s557 + $0x480] sm:$0xff]
        %v780 = vld [vmem:[%s557 + $0x488] sm:$0xff]
        %v781 = vld [vmem:[%s557 + $0x490] sm:$0xff]
        %v782 = vld [vmem:[%s557 + $0x498] sm:$0xff]
        %v783 = vld [vmem:[%s557 + $0x4a0] sm:$0xff]
        %v784 = vld [vmem:[%s557 + $0x4a8] sm:$0xff]
        %v785 = vld [vmem:[%s557 + $0x4b0] sm:$0xff]
        %v786 = vld [vmem:[%s557 + $0x4b8] sm:$0xff]
        %v787 = vld [vmem:[%s557 + $0x4c0] sm:$0xff]
        %v788 = vld [vmem:[%s557 + $0x4c8] sm:$0xff]
        %v789 = vld [vmem:[%s557 + $0x4d0] sm:$0xff]
        %v790 = vld [vmem:[%s557 + $0x4d8] sm:$0xff]
        %v791 = vld [vmem:[%s557 + $0x4e0] sm:$0xff]
        %v792 = vld [vmem:[%s557 + $0x4e8] sm:$0xff]
        %v793 = vld [vmem:[%s557 + $0x4f0] sm:$0xff]
        %v794 = vld [vmem:[%s557 + $0x4f8] sm:$0xff]
        %v795 = vld [vmem:[%s557 + $0x500] sm:$0xff]
        %v796 = vld [vmem:[%s557 + $0x508] sm:$0xff]
        %v797 = vld [vmem:[%s557 + $0x510] sm:$0xff]
        %v798 = vld [vmem:[%s557 + $0x518] sm:$0xff]
        %v799 = vld [vmem:[%s557 + $0x520] sm:$0xff]
        %v800 = vld [vmem:[%s557 + $0x528] sm:$0xff]
        %v801 = vld [vmem:[%s557 + $0x530] sm:$0xff]
        %v802 = vld [vmem:[%s557 + $0x538] sm:$0xff]
        %v803 = vld [vmem:[%s557 + $0x540] sm:$0xff]
        %v804 = vld [vmem:[%s557 + $0x548] sm:$0xff]
        %v805 = vld [vmem:[%s557 + $0x550] sm:$0xff]
        %v806 = vld [vmem:[%s557 + $0x558] sm:$0xff]
        %v807 = vld [vmem:[%s557 + $0x560] sm:$0xff]
        %v808 = vld [vmem:[%s557 + $0x568] sm:$0xff]
        %v809 = vld [vmem:[%s557 + $0x570] sm:$0xff]
        %v810 = vld [vmem:[%s557 + $0x578] sm:$0xff]
        %v811 = vld [vmem:[%s557 + $0x580] sm:$0xff]
        %v812 = vld [vmem:[%s557 + $0x588] sm:$0xff]
        %v813 = vld [vmem:[%s557 + $0x590] sm:$0xff]
        %v814 = vld [vmem:[%s557 + $0x598] sm:$0xff]
        %v815 = vld [vmem:[%s557 + $0x5a0] sm:$0xff]
        %v816 = vld [vmem:[%s557 + $0x5a8] sm:$0xff]
        %v817 = vld [vmem:[%s557 + $0x5b0] sm:$0xff]
        %v818 = vld [vmem:[%s557 + $0x5b8] sm:$0xff]
        %v819 = vld [vmem:[%s557 + $0x5c0] sm:$0xff]
        %v820 = vld [vmem:[%s557 + $0x5c8] sm:$0xff]
        %v821 = vld [vmem:[%s557 + $0x5d0] sm:$0xff]
        %v822 = vld [vmem:[%s557 + $0x5d8] sm:$0xff]
        %v823 = vld [vmem:[%s557 + $0x5e0] sm:$0xff]
        %v824 = vld [vmem:[%s557 + $0x5e8] sm:$0xff]
        %v825 = vld [vmem:[%s557 + $0x5f0] sm:$0xff]
        %v826 = vld [vmem:[%s557 + $0x5f8] sm:$0xff]
        %v827 = vld [vmem:[%s586] sm:$0xf]
        %v829 = vlaneseq
        %v830 = vshrl.u32 %v829, 7
        %v831 = vsub.s32 0, %v830
        %v832 = vrot.slane %v827, %v831
        %v833 = vlaneseq
        %v834 = vshrl.u32 %v833, 7
        %v835 = vsub.s32 1, %v834
        %v836 = vrot.slane %v827, %v835
        %v837 = vlaneseq
        %v838 = vshrl.u32 %v837, 7
        %v839 = vsub.s32 2, %v838
        %v840 = vrot.slane %v827, %v839
        %v841 = vlaneseq
        %v842 = vshrl.u32 %v841, 7
        %v843 = vsub.s32 3, %v842
        %v844 = vrot.slane %v827, %v843
        %v1041 = vunpack.c.l.b16 %v635
        %v1042 = vunpack.c.h.b16 %v635
        %v1043 = vunpack.c.l.b16 %v636
        %v1044 = vunpack.c.h.b16 %v636
        %v1045 = vunpack.c.l.b16 %v637
        %v1046 = vunpack.c.h.b16 %v637
        %v1047 = vunpack.c.l.b16 %v638
        %v1048 = vunpack.c.h.b16 %v638
        %v1049 = vunpack.c.l.b16 %v639
        %v1050 = vunpack.c.h.b16 %v639
        %v1051 = vunpack.c.l.b16 %v640
        %v1052 = vunpack.c.h.b16 %v640
        %v1053 = vunpack.c.l.b16 %v641
        %v1054 = vunpack.c.h.b16 %v641
        %v1055 = vunpack.c.l.b16 %v642
        %v1056 = vunpack.c.h.b16 %v642
        %v1057 = vunpack.c.l.b16 %v643
        %v1058 = vunpack.c.h.b16 %v643
        %v1059 = vunpack.c.l.b16 %v644
        %v1060 = vunpack.c.h.b16 %v644
        %v1061 = vunpack.c.l.b16 %v645
        %v1062 = vunpack.c.h.b16 %v645
        %v1063 = vunpack.c.l.b16 %v646
        %v1064 = vunpack.c.h.b16 %v646
        %v1065 = vunpack.c.l.b16 %v647
        %v1066 = vunpack.c.h.b16 %v647
        %v1067 = vunpack.c.l.b16 %v648
        %v1068 = vunpack.c.h.b16 %v648
        %v1069 = vunpack.c.l.b16 %v649
        %v1070 = vunpack.c.h.b16 %v649
        %v1071 = vunpack.c.l.b16 %v650
        %v1072 = vunpack.c.h.b16 %v650
        %v1073 = vunpack.c.l.b16 %v651
        %v1074 = vunpack.c.h.b16 %v651
        %v1075 = vunpack.c.l.b16 %v652
        %v1076 = vunpack.c.h.b16 %v652
        %v1077 = vunpack.c.l.b16 %v653
        %v1078 = vunpack.c.h.b16 %v653
        %v1079 = vunpack.c.l.b16 %v654
        %v1080 = vunpack.c.h.b16 %v654
        %v1081 = vunpack.c.l.b16 %v655
        %v1082 = vunpack.c.h.b16 %v655
        %v1083 = vunpack.c.l.b16 %v656
        %v1084 = vunpack.c.h.b16 %v656
        %v1085 = vunpack.c.l.b16 %v657
        %v1086 = vunpack.c.h.b16 %v657
        %v1087 = vunpack.c.l.b16 %v658
        %v1088 = vunpack.c.h.b16 %v658
        %v1089 = vunpack.c.l.b16 %v659
        %v1090 = vunpack.c.h.b16 %v659
        %v1091 = vunpack.c.l.b16 %v660
        %v1092 = vunpack.c.h.b16 %v660
        %v1093 = vunpack.c.l.b16 %v661
        %v1094 = vunpack.c.h.b16 %v661
        %v1095 = vunpack.c.l.b16 %v662
        %v1096 = vunpack.c.h.b16 %v662
        %v1097 = vunpack.c.l.b16 %v663
        %v1098 = vunpack.c.h.b16 %v663
        %v1099 = vunpack.c.l.b16 %v664
        %v1100 = vunpack.c.h.b16 %v664
        %v1101 = vunpack.c.l.b16 %v665
        %v1102 = vunpack.c.h.b16 %v665
        %v1103 = vunpack.c.l.b16 %v666
        %v1104 = vunpack.c.h.b16 %v666
        %v1105 = vunpack.c.l.b16 %v667
        %v1106 = vunpack.c.h.b16 %v667
        %v1107 = vunpack.c.l.b16 %v668
        %v1108 = vunpack.c.h.b16 %v668
        %v1109 = vunpack.c.l.b16 %v669
        %v1110 = vunpack.c.h.b16 %v669
        %v1111 = vunpack.c.l.b16 %v670
        %v1112 = vunpack.c.h.b16 %v670
        %v1113 = vunpack.c.l.b16 %v671
        %v1114 = vunpack.c.h.b16 %v671
        %v1115 = vunpack.c.l.b16 %v672
        %v1116 = vunpack.c.h.b16 %v672
        %v1117 = vunpack.c.l.b16 %v673
        %v1118 = vunpack.c.h.b16 %v673
        %v1119 = vunpack.c.l.b16 %v674
        %v1120 = vunpack.c.h.b16 %v674
        %v1121 = vunpack.c.l.b16 %v675
        %v1122 = vunpack.c.h.b16 %v675
        %v1123 = vunpack.c.l.b16 %v676
        %v1124 = vunpack.c.h.b16 %v676
        %v1125 = vunpack.c.l.b16 %v677
        %v1126 = vunpack.c.h.b16 %v677
        %v1127 = vunpack.c.l.b16 %v678
        %v1128 = vunpack.c.h.b16 %v678
        %v1129 = vunpack.c.l.b16 %v679
        %v1130 = vunpack.c.h.b16 %v679
        %v1131 = vunpack.c.l.b16 %v680
        %v1132 = vunpack.c.h.b16 %v680
        %v1133 = vunpack.c.l.b16 %v681
        %v1134 = vunpack.c.h.b16 %v681
        %v1135 = vunpack.c.l.b16 %v682
        %v1136 = vunpack.c.h.b16 %v682
        %v1137 = vunpack.c.l.b16 %v683
        %v1138 = vunpack.c.h.b16 %v683
        %v1139 = vunpack.c.l.b16 %v684
        %v1140 = vunpack.c.h.b16 %v684
        %v1141 = vunpack.c.l.b16 %v685
        %v1142 = vunpack.c.h.b16 %v685
        %v1143 = vunpack.c.l.b16 %v686
        %v1144 = vunpack.c.h.b16 %v686
        %v1145 = vunpack.c.l.b16 %v687
        %v1146 = vunpack.c.h.b16 %v687
        %v1147 = vunpack.c.l.b16 %v688
        %v1148 = vunpack.c.h.b16 %v688
        %v1149 = vunpack.c.l.b16 %v689
        %v1150 = vunpack.c.h.b16 %v689
        %v1151 = vunpack.c.l.b16 %v690
        %v1152 = vunpack.c.h.b16 %v690
        %v1153 = vunpack.c.l.b16 %v691
        %v1154 = vunpack.c.h.b16 %v691
        %v1155 = vunpack.c.l.b16 %v692
        %v1156 = vunpack.c.h.b16 %v692
        %v1157 = vunpack.c.l.b16 %v693
        %v1158 = vunpack.c.h.b16 %v693
        %v1159 = vunpack.c.l.b16 %v694
        %v1160 = vunpack.c.h.b16 %v694
        %v1161 = vunpack.c.l.b16 %v695
        %v1162 = vunpack.c.h.b16 %v695
        %v1163 = vunpack.c.l.b16 %v696
        %v1164 = vunpack.c.h.b16 %v696
        %v1165 = vunpack.c.l.b16 %v697
        %v1166 = vunpack.c.h.b16 %v697
        %v1167 = vunpack.c.l.b16 %v698
        %v1168 = vunpack.c.h.b16 %v698
        %v1169 = vunpack.c.l.b16 %v699
        %v1170 = vunpack.c.h.b16 %v699
        %v1171 = vunpack.c.l.b16 %v700
        %v1172 = vunpack.c.h.b16 %v700
        %v1173 = vunpack.c.l.b16 %v701
        %v1174 = vunpack.c.h.b16 %v701
        %v1175 = vunpack.c.l.b16 %v702
        %v1176 = vunpack.c.h.b16 %v702
        %v1177 = vunpack.c.l.b16 %v703
        %v1178 = vunpack.c.h.b16 %v703
        %v1179 = vunpack.c.l.b16 %v704
        %v1180 = vunpack.c.h.b16 %v704
        %v1181 = vunpack.c.l.b16 %v705
        %v1182 = vunpack.c.h.b16 %v705
        %v1183 = vunpack.c.l.b16 %v706
        %v1184 = vunpack.c.h.b16 %v706
        %v1185 = vunpack.c.l.b16 %v707
        %v1186 = vunpack.c.h.b16 %v707
        %v1187 = vunpack.c.l.b16 %v708
        %v1188 = vunpack.c.h.b16 %v708
        %v1189 = vunpack.c.l.b16 %v709
        %v1190 = vunpack.c.h.b16 %v709
        %v1191 = vunpack.c.l.b16 %v710
        %v1192 = vunpack.c.h.b16 %v710
        %v1193 = vunpack.c.l.b16 %v711
        %v1194 = vunpack.c.h.b16 %v711
        %v1195 = vunpack.c.l.b16 %v712
        %v1196 = vunpack.c.h.b16 %v712
        %v1197 = vunpack.c.l.b16 %v713
        %v1198 = vunpack.c.h.b16 %v713
        %v1199 = vunpack.c.l.b16 %v714
        %v1200 = vunpack.c.h.b16 %v714
        %v1201 = vunpack.c.l.b16 %v715
        %v1202 = vunpack.c.h.b16 %v715
        %v1203 = vunpack.c.l.b16 %v716
        %v1204 = vunpack.c.h.b16 %v716
        %v1205 = vunpack.c.l.b16 %v717
        %v1206 = vunpack.c.h.b16 %v717
        %v1207 = vunpack.c.l.b16 %v718
        %v1208 = vunpack.c.h.b16 %v718
        %v1209 = vunpack.c.l.b16 %v719
        %v1210 = vunpack.c.h.b16 %v719
        %v1211 = vunpack.c.l.b16 %v720
        %v1212 = vunpack.c.h.b16 %v720
        %v1213 = vunpack.c.l.b16 %v721
        %v1214 = vunpack.c.h.b16 %v721
        %v1215 = vunpack.c.l.b16 %v722
        %v1216 = vunpack.c.h.b16 %v722
        %v1217 = vunpack.c.l.b16 %v723
        %v1218 = vunpack.c.h.b16 %v723
        %v1219 = vunpack.c.l.b16 %v724
        %v1220 = vunpack.c.h.b16 %v724
        %v1221 = vunpack.c.l.b16 %v725
        %v1222 = vunpack.c.h.b16 %v725
        %v1223 = vunpack.c.l.b16 %v726
        %v1224 = vunpack.c.h.b16 %v726
        %v1225 = vunpack.c.l.b16 %v727
        %v1226 = vunpack.c.h.b16 %v727
        %v1227 = vunpack.c.l.b16 %v728
        %v1228 = vunpack.c.h.b16 %v728
        %v1229 = vunpack.c.l.b16 %v729
        %v1230 = vunpack.c.h.b16 %v729
        %v1231 = vunpack.c.l.b16 %v730
        %v1232 = vunpack.c.h.b16 %v730
        %v1233 = vunpack.c.l.b16 %v731
        %v1234 = vunpack.c.h.b16 %v731
        %v1235 = vunpack.c.l.b16 %v732
        %v1236 = vunpack.c.h.b16 %v732
        %v1237 = vunpack.c.l.b16 %v733
        %v1238 = vunpack.c.h.b16 %v733
        %v1239 = vunpack.c.l.b16 %v734
        %v1240 = vunpack.c.h.b16 %v734
        %v1241 = vunpack.c.l.b16 %v735
        %v1242 = vunpack.c.h.b16 %v735
        %v1243 = vunpack.c.l.b16 %v736
        %v1244 = vunpack.c.h.b16 %v736
        %v1245 = vunpack.c.l.b16 %v737
        %v1246 = vunpack.c.h.b16 %v737
        %v1247 = vunpack.c.l.b16 %v738
        %v1248 = vunpack.c.h.b16 %v738
        %v1249 = vunpack.c.l.b16 %v739
        %v1250 = vunpack.c.h.b16 %v739
        %v1251 = vunpack.c.l.b16 %v740
        %v1252 = vunpack.c.h.b16 %v740
        %v1253 = vunpack.c.l.b16 %v741
        %v1254 = vunpack.c.h.b16 %v741
        %v1255 = vunpack.c.l.b16 %v742
        %v1256 = vunpack.c.h.b16 %v742
        %v1257 = vunpack.c.l.b16 %v743
        %v1258 = vunpack.c.h.b16 %v743
        %v1259 = vunpack.c.l.b16 %v744
        %v1260 = vunpack.c.h.b16 %v744
        %v1261 = vunpack.c.l.b16 %v745
        %v1262 = vunpack.c.h.b16 %v745
        %v1263 = vunpack.c.l.b16 %v746
        %v1264 = vunpack.c.h.b16 %v746
        %v1265 = vunpack.c.l.b16 %v747
        %v1266 = vunpack.c.h.b16 %v747
        %v1267 = vunpack.c.l.b16 %v748
        %v1268 = vunpack.c.h.b16 %v748
        %v1269 = vunpack.c.l.b16 %v749
        %v1270 = vunpack.c.h.b16 %v749
        %v1271 = vunpack.c.l.b16 %v750
        %v1272 = vunpack.c.h.b16 %v750
        %v1273 = vunpack.c.l.b16 %v751
        %v1274 = vunpack.c.h.b16 %v751
        %v1275 = vunpack.c.l.b16 %v752
        %v1276 = vunpack.c.h.b16 %v752
        %v1277 = vunpack.c.l.b16 %v753
        %v1278 = vunpack.c.h.b16 %v753
        %v1279 = vunpack.c.l.b16 %v754
        %v1280 = vunpack.c.h.b16 %v754
        %v1281 = vunpack.c.l.b16 %v755
        %v1282 = vunpack.c.h.b16 %v755
        %v1283 = vunpack.c.l.b16 %v756
        %v1284 = vunpack.c.h.b16 %v756
        %v1285 = vunpack.c.l.b16 %v757
        %v1286 = vunpack.c.h.b16 %v757
        %v1287 = vunpack.c.l.b16 %v758
        %v1288 = vunpack.c.h.b16 %v758
        %v1289 = vunpack.c.l.b16 %v759
        %v1290 = vunpack.c.h.b16 %v759
        %v1291 = vunpack.c.l.b16 %v760
        %v1292 = vunpack.c.h.b16 %v760
        %v1293 = vunpack.c.l.b16 %v761
        %v1294 = vunpack.c.h.b16 %v761
        %v1295 = vunpack.c.l.b16 %v762
        %v1296 = vunpack.c.h.b16 %v762
        %v1297 = vunpack.c.l.b16 %v763
        %v1298 = vunpack.c.h.b16 %v763
        %v1299 = vunpack.c.l.b16 %v764
        %v1300 = vunpack.c.h.b16 %v764
        %v1301 = vunpack.c.l.b16 %v765
        %v1302 = vunpack.c.h.b16 %v765
        %v1303 = vunpack.c.l.b16 %v766
        %v1304 = vunpack.c.h.b16 %v766
        %v1305 = vunpack.c.l.b16 %v767
        %v1306 = vunpack.c.h.b16 %v767
        %v1307 = vunpack.c.l.b16 %v768
        %v1308 = vunpack.c.h.b16 %v768
        %v1309 = vunpack.c.l.b16 %v769
        %v1310 = vunpack.c.h.b16 %v769
        %v1311 = vunpack.c.l.b16 %v770
        %v1312 = vunpack.c.h.b16 %v770
        %v1313 = vunpack.c.l.b16 %v771
        %v1314 = vunpack.c.h.b16 %v771
        %v1315 = vunpack.c.l.b16 %v772
        %v1316 = vunpack.c.h.b16 %v772
        %v1317 = vunpack.c.l.b16 %v773
        %v1318 = vunpack.c.h.b16 %v773
        %v1319 = vunpack.c.l.b16 %v774
        %v1320 = vunpack.c.h.b16 %v774
        %v1321 = vunpack.c.l.b16 %v775
        %v1322 = vunpack.c.h.b16 %v775
        %v1323 = vunpack.c.l.b16 %v776
        %v1324 = vunpack.c.h.b16 %v776
        %v1325 = vunpack.c.l.b16 %v777
        %v1326 = vunpack.c.h.b16 %v777
        %v1327 = vunpack.c.l.b16 %v778
        %v1328 = vunpack.c.h.b16 %v778
        %v1329 = vunpack.c.l.b16 %v779
        %v1330 = vunpack.c.h.b16 %v779
        %v1331 = vunpack.c.l.b16 %v780
        %v1332 = vunpack.c.h.b16 %v780
        %v1333 = vunpack.c.l.b16 %v781
        %v1334 = vunpack.c.h.b16 %v781
        %v1335 = vunpack.c.l.b16 %v782
        %v1336 = vunpack.c.h.b16 %v782
        %v1337 = vunpack.c.l.b16 %v783
        %v1338 = vunpack.c.h.b16 %v783
        %v1339 = vunpack.c.l.b16 %v784
        %v1340 = vunpack.c.h.b16 %v784
        %v1341 = vunpack.c.l.b16 %v785
        %v1342 = vunpack.c.h.b16 %v785
        %v1343 = vunpack.c.l.b16 %v786
        %v1344 = vunpack.c.h.b16 %v786
        %v1345 = vunpack.c.l.b16 %v787
        %v1346 = vunpack.c.h.b16 %v787
        %v1347 = vunpack.c.l.b16 %v788
        %v1348 = vunpack.c.h.b16 %v788
        %v1349 = vunpack.c.l.b16 %v789
        %v1350 = vunpack.c.h.b16 %v789
        %v1351 = vunpack.c.l.b16 %v790
        %v1352 = vunpack.c.h.b16 %v790
        %v1353 = vunpack.c.l.b16 %v791
        %v1354 = vunpack.c.h.b16 %v791
        %v1355 = vunpack.c.l.b16 %v792
        %v1356 = vunpack.c.h.b16 %v792
        %v1357 = vunpack.c.l.b16 %v793
        %v1358 = vunpack.c.h.b16 %v793
        %v1359 = vunpack.c.l.b16 %v794
        %v1360 = vunpack.c.h.b16 %v794
        %v1361 = vunpack.c.l.b16 %v795
        %v1362 = vunpack.c.h.b16 %v795
        %v1363 = vunpack.c.l.b16 %v796
        %v1364 = vunpack.c.h.b16 %v796
        %v1365 = vunpack.c.l.b16 %v797
        %v1366 = vunpack.c.h.b16 %v797
        %v1367 = vunpack.c.l.b16 %v798
        %v1368 = vunpack.c.h.b16 %v798
        %v1369 = vunpack.c.l.b16 %v799
        %v1370 = vunpack.c.h.b16 %v799
        %v1371 = vunpack.c.l.b16 %v800
        %v1372 = vunpack.c.h.b16 %v800
        %v1373 = vunpack.c.l.b16 %v801
        %v1374 = vunpack.c.h.b16 %v801
        %v1375 = vunpack.c.l.b16 %v802
        %v1376 = vunpack.c.h.b16 %v802
        %v1377 = vunpack.c.l.b16 %v803
        %v1378 = vunpack.c.h.b16 %v803
        %v1379 = vunpack.c.l.b16 %v804
        %v1380 = vunpack.c.h.b16 %v804
        %v1381 = vunpack.c.l.b16 %v805
        %v1382 = vunpack.c.h.b16 %v805
        %v1383 = vunpack.c.l.b16 %v806
        %v1384 = vunpack.c.h.b16 %v806
        %v1385 = vunpack.c.l.b16 %v807
        %v1386 = vunpack.c.h.b16 %v807
        %v1387 = vunpack.c.l.b16 %v808
        %v1388 = vunpack.c.h.b16 %v808
        %v1389 = vunpack.c.l.b16 %v809
        %v1390 = vunpack.c.h.b16 %v809
        %v1391 = vunpack.c.l.b16 %v810
        %v1392 = vunpack.c.h.b16 %v810
        %v1393 = vunpack.c.l.b16 %v811
        %v1394 = vunpack.c.h.b16 %v811
        %v1395 = vunpack.c.l.b16 %v812
        %v1396 = vunpack.c.h.b16 %v812
        %v1397 = vunpack.c.l.b16 %v813
        %v1398 = vunpack.c.h.b16 %v813
        %v1399 = vunpack.c.l.b16 %v814
        %v1400 = vunpack.c.h.b16 %v814
        %v1401 = vunpack.c.l.b16 %v815
        %v1402 = vunpack.c.h.b16 %v815
        %v1403 = vunpack.c.l.b16 %v816
        %v1404 = vunpack.c.h.b16 %v816
        %v1405 = vunpack.c.l.b16 %v817
        %v1406 = vunpack.c.h.b16 %v817
        %v1407 = vunpack.c.l.b16 %v818
        %v1408 = vunpack.c.h.b16 %v818
        %v1409 = vunpack.c.l.b16 %v819
        %v1410 = vunpack.c.h.b16 %v819
        %v1411 = vunpack.c.l.b16 %v820
        %v1412 = vunpack.c.h.b16 %v820
        %v1413 = vunpack.c.l.b16 %v821
        %v1414 = vunpack.c.h.b16 %v821
        %v1415 = vunpack.c.l.b16 %v822
        %v1416 = vunpack.c.h.b16 %v822
        %v1417 = vunpack.c.l.b16 %v823
        %v1418 = vunpack.c.h.b16 %v823
        %v1419 = vunpack.c.l.b16 %v824
        %v1420 = vunpack.c.h.b16 %v824
        %v1421 = vunpack.c.l.b16 %v825
        %v1422 = vunpack.c.h.b16 %v825
        %v1423 = vunpack.c.l.b16 %v826
        %v1424 = vunpack.c.h.b16 %v826
        %v1425 = vpack.c.b16 %v1045, %v1041
        %v1426 = vpack.c.b16 %v1046, %v1042
        %v1427 = vpack.c.b16 %v1047, %v1043
        %v1428 = vpack.c.b16 %v1048, %v1044
        %v1429 = vpack.c.b16 %v1053, %v1049
        %v1430 = vpack.c.b16 %v1054, %v1050
        %v1431 = vpack.c.b16 %v1055, %v1051
        %v1432 = vpack.c.b16 %v1056, %v1052
        %v1433 = vpack.c.b16 %v1061, %v1057
        %v1434 = vpack.c.b16 %v1062, %v1058
        %v1435 = vpack.c.b16 %v1063, %v1059
        %v1436 = vpack.c.b16 %v1064, %v1060
        %v1437 = vpack.c.b16 %v1069, %v1065
        %v1438 = vpack.c.b16 %v1070, %v1066
        %v1439 = vpack.c.b16 %v1071, %v1067
        %v1440 = vpack.c.b16 %v1072, %v1068
        %v1441 = vpack.c.b16 %v1077, %v1073
        %v1442 = vpack.c.b16 %v1078, %v1074
        %v1443 = vpack.c.b16 %v1079, %v1075
        %v1444 = vpack.c.b16 %v1080, %v1076
        %v1445 = vpack.c.b16 %v1085, %v1081
        %v1446 = vpack.c.b16 %v1086, %v1082
        %v1447 = vpack.c.b16 %v1087, %v1083
        %v1448 = vpack.c.b16 %v1088, %v1084
        %v1449 = vpack.c.b16 %v1093, %v1089
        %v1450 = vpack.c.b16 %v1094, %v1090
        %v1451 = vpack.c.b16 %v1095, %v1091
        %v1452 = vpack.c.b16 %v1096, %v1092
        %v1453 = vpack.c.b16 %v1101, %v1097
        %v1454 = vpack.c.b16 %v1102, %v1098
        %v1455 = vpack.c.b16 %v1103, %v1099
        %v1456 = vpack.c.b16 %v1104, %v1100
        %v1457 = vpack.c.b16 %v1109, %v1105
        %v1458 = vpack.c.b16 %v1110, %v1106
        %v1459 = vpack.c.b16 %v1111, %v1107
        %v1460 = vpack.c.b16 %v1112, %v1108
        %v1461 = vpack.c.b16 %v1117, %v1113
        %v1462 = vpack.c.b16 %v1118, %v1114
        %v1463 = vpack.c.b16 %v1119, %v1115
        %v1464 = vpack.c.b16 %v1120, %v1116
        %v1465 = vpack.c.b16 %v1125, %v1121
        %v1466 = vpack.c.b16 %v1126, %v1122
        %v1467 = vpack.c.b16 %v1127, %v1123
        %v1468 = vpack.c.b16 %v1128, %v1124
        %v1469 = vpack.c.b16 %v1133, %v1129
        %v1470 = vpack.c.b16 %v1134, %v1130
        %v1471 = vpack.c.b16 %v1135, %v1131
        %v1472 = vpack.c.b16 %v1136, %v1132
        %v1473 = vpack.c.b16 %v1141, %v1137
        %v1474 = vpack.c.b16 %v1142, %v1138
        %v1475 = vpack.c.b16 %v1143, %v1139
        %v1476 = vpack.c.b16 %v1144, %v1140
        %v1477 = vpack.c.b16 %v1149, %v1145
        %v1478 = vpack.c.b16 %v1150, %v1146
        %v1479 = vpack.c.b16 %v1151, %v1147
        %v1480 = vpack.c.b16 %v1152, %v1148
        %v1481 = vpack.c.b16 %v1157, %v1153
        %v1482 = vpack.c.b16 %v1158, %v1154
        %v1483 = vpack.c.b16 %v1159, %v1155
        %v1484 = vpack.c.b16 %v1160, %v1156
        %v1485 = vpack.c.b16 %v1165, %v1161
        %v1486 = vpack.c.b16 %v1166, %v1162
        %v1487 = vpack.c.b16 %v1167, %v1163
        %v1488 = vpack.c.b16 %v1168, %v1164
        %v1489 = vpack.c.b16 %v1173, %v1169
        %v1490 = vpack.c.b16 %v1174, %v1170
        %v1491 = vpack.c.b16 %v1175, %v1171
        %v1492 = vpack.c.b16 %v1176, %v1172
        %v1493 = vpack.c.b16 %v1181, %v1177
        %v1494 = vpack.c.b16 %v1182, %v1178
        %v1495 = vpack.c.b16 %v1183, %v1179
        %v1496 = vpack.c.b16 %v1184, %v1180
        %v1497 = vpack.c.b16 %v1189, %v1185
        %v1498 = vpack.c.b16 %v1190, %v1186
        %v1499 = vpack.c.b16 %v1191, %v1187
        %v1500 = vpack.c.b16 %v1192, %v1188
        %v1501 = vpack.c.b16 %v1197, %v1193
        %v1502 = vpack.c.b16 %v1198, %v1194
        %v1503 = vpack.c.b16 %v1199, %v1195
        %v1504 = vpack.c.b16 %v1200, %v1196
        %v1505 = vpack.c.b16 %v1205, %v1201
        %v1506 = vpack.c.b16 %v1206, %v1202
        %v1507 = vpack.c.b16 %v1207, %v1203
        %v1508 = vpack.c.b16 %v1208, %v1204
        %v1509 = vpack.c.b16 %v1213, %v1209
        %v1510 = vpack.c.b16 %v1214, %v1210
        %v1511 = vpack.c.b16 %v1215, %v1211
        %v1512 = vpack.c.b16 %v1216, %v1212
        %v1513 = vpack.c.b16 %v1221, %v1217
        %v1514 = vpack.c.b16 %v1222, %v1218
        %v1515 = vpack.c.b16 %v1223, %v1219
        %v1516 = vpack.c.b16 %v1224, %v1220
        %v1517 = vpack.c.b16 %v1229, %v1225
        %v1518 = vpack.c.b16 %v1230, %v1226
        %v1519 = vpack.c.b16 %v1231, %v1227
        %v1520 = vpack.c.b16 %v1232, %v1228
        %v1521 = vpack.c.b16 %v1237, %v1233
        %v1522 = vpack.c.b16 %v1238, %v1234
        %v1523 = vpack.c.b16 %v1239, %v1235
        %v1524 = vpack.c.b16 %v1240, %v1236
        %v1525 = vpack.c.b16 %v1245, %v1241
        %v1526 = vpack.c.b16 %v1246, %v1242
        %v1527 = vpack.c.b16 %v1247, %v1243
        %v1528 = vpack.c.b16 %v1248, %v1244
        %v1529 = vpack.c.b16 %v1253, %v1249
        %v1530 = vpack.c.b16 %v1254, %v1250
        %v1531 = vpack.c.b16 %v1255, %v1251
        %v1532 = vpack.c.b16 %v1256, %v1252
        %v1533 = vpack.c.b16 %v1261, %v1257
        %v1534 = vpack.c.b16 %v1262, %v1258
        %v1535 = vpack.c.b16 %v1263, %v1259
        %v1536 = vpack.c.b16 %v1264, %v1260
        %v1537 = vpack.c.b16 %v1269, %v1265
        %v1538 = vpack.c.b16 %v1270, %v1266
        %v1539 = vpack.c.b16 %v1271, %v1267
        %v1540 = vpack.c.b16 %v1272, %v1268
        %v1541 = vpack.c.b16 %v1277, %v1273
        %v1542 = vpack.c.b16 %v1278, %v1274
        %v1543 = vpack.c.b16 %v1279, %v1275
        %v1544 = vpack.c.b16 %v1280, %v1276
        %v1545 = vpack.c.b16 %v1285, %v1281
        %v1546 = vpack.c.b16 %v1286, %v1282
        %v1547 = vpack.c.b16 %v1287, %v1283
        %v1548 = vpack.c.b16 %v1288, %v1284
        %v1549 = vpack.c.b16 %v1293, %v1289
        %v1550 = vpack.c.b16 %v1294, %v1290
        %v1551 = vpack.c.b16 %v1295, %v1291
        %v1552 = vpack.c.b16 %v1296, %v1292
        %v1553 = vpack.c.b16 %v1301, %v1297
        %v1554 = vpack.c.b16 %v1302, %v1298
        %v1555 = vpack.c.b16 %v1303, %v1299
        %v1556 = vpack.c.b16 %v1304, %v1300
        %v1557 = vpack.c.b16 %v1309, %v1305
        %v1558 = vpack.c.b16 %v1310, %v1306
        %v1559 = vpack.c.b16 %v1311, %v1307
        %v1560 = vpack.c.b16 %v1312, %v1308
        %v1561 = vpack.c.b16 %v1317, %v1313
        %v1562 = vpack.c.b16 %v1318, %v1314
        %v1563 = vpack.c.b16 %v1319, %v1315
        %v1564 = vpack.c.b16 %v1320, %v1316
        %v1565 = vpack.c.b16 %v1325, %v1321
        %v1566 = vpack.c.b16 %v1326, %v1322
        %v1567 = vpack.c.b16 %v1327, %v1323
        %v1568 = vpack.c.b16 %v1328, %v1324
        %v1569 = vpack.c.b16 %v1333, %v1329
        %v1570 = vpack.c.b16 %v1334, %v1330
        %v1571 = vpack.c.b16 %v1335, %v1331
        %v1572 = vpack.c.b16 %v1336, %v1332
        %v1573 = vpack.c.b16 %v1341, %v1337
        %v1574 = vpack.c.b16 %v1342, %v1338
        %v1575 = vpack.c.b16 %v1343, %v1339
        %v1576 = vpack.c.b16 %v1344, %v1340
        %v1577 = vpack.c.b16 %v1349, %v1345
        %v1578 = vpack.c.b16 %v1350, %v1346
        %v1579 = vpack.c.b16 %v1351, %v1347
        %v1580 = vpack.c.b16 %v1352, %v1348
        %v1581 = vpack.c.b16 %v1357, %v1353
        %v1582 = vpack.c.b16 %v1358, %v1354
        %v1583 = vpack.c.b16 %v1359, %v1355
        %v1584 = vpack.c.b16 %v1360, %v1356
        %v1585 = vpack.c.b16 %v1365, %v1361
        %v1586 = vpack.c.b16 %v1366, %v1362
        %v1587 = vpack.c.b16 %v1367, %v1363
        %v1588 = vpack.c.b16 %v1368, %v1364
        %v1589 = vpack.c.b16 %v1373, %v1369
        %v1590 = vpack.c.b16 %v1374, %v1370
        %v1591 = vpack.c.b16 %v1375, %v1371
        %v1592 = vpack.c.b16 %v1376, %v1372
        %v1593 = vpack.c.b16 %v1381, %v1377
        %v1594 = vpack.c.b16 %v1382, %v1378
        %v1595 = vpack.c.b16 %v1383, %v1379
        %v1596 = vpack.c.b16 %v1384, %v1380
        %v1597 = vpack.c.b16 %v1389, %v1385
        %v1598 = vpack.c.b16 %v1390, %v1386
        %v1599 = vpack.c.b16 %v1391, %v1387
        %v1600 = vpack.c.b16 %v1392, %v1388
        %v1601 = vpack.c.b16 %v1397, %v1393
        %v1602 = vpack.c.b16 %v1398, %v1394
        %v1603 = vpack.c.b16 %v1399, %v1395
        %v1604 = vpack.c.b16 %v1400, %v1396
        %v1605 = vpack.c.b16 %v1405, %v1401
        %v1606 = vpack.c.b16 %v1406, %v1402
        %v1607 = vpack.c.b16 %v1407, %v1403
        %v1608 = vpack.c.b16 %v1408, %v1404
        %v1609 = vpack.c.b16 %v1413, %v1409
        %v1610 = vpack.c.b16 %v1414, %v1410
        %v1611 = vpack.c.b16 %v1415, %v1411
        %v1612 = vpack.c.b16 %v1416, %v1412
        %v1613 = vpack.c.b16 %v1421, %v1417
        %v1614 = vpack.c.b16 %v1422, %v1418
        %v1615 = vpack.c.b16 %v1423, %v1419
        %v1616 = vpack.c.b16 %v1424, %v1420
        %1809 = vmatprep.subr.bf16.mxu0 %v1454
        %1810 = vmatpush1.bf16.msra.mxu0 %v1453
        %1811 = vmatprep.subr.bf16.mxu0 %v1450
        %1812 = vmatpush1.bf16.msra.mxu0 %v1449
        %1813 = vmatprep.subr.bf16.mxu0 %v1446
        %1814 = vmatpush1.bf16.msra.mxu0 %v1445
        %1815 = vmatprep.subr.bf16.mxu0 %v1442
        %1816 = vmatpush1.bf16.msra.mxu0 %v1441
        %1817 = vmatprep.subr.bf16.mxu0 %v1438
        %1818 = vmatpush1.bf16.msra.mxu0 %v1437
        %1819 = vmatprep.subr.bf16.mxu0 %v1434
        %1820 = vmatpush1.bf16.msra.mxu0 %v1433
        %1821 = vmatprep.subr.bf16.mxu0 %v1430
        %1822 = vmatpush1.bf16.msra.mxu0 %v1429
        %1823 = vmatprep.subr.bf16.mxu0 %v1426
        %1824 = vmatpush1.bf16.msra.mxu0 %v1425
        %1825 = vmatprep.subr.bf16.mxu0 %v1486
        %1826 = vmatpush2.bf16.msra.mxu0 %v1485
        %1827 = vmatprep.subr.bf16.mxu0 %v1482
        %1828 = vmatpush2.bf16.msra.mxu0 %v1481
        %1829 = vmatprep.subr.bf16.mxu0 %v1478
        %1830 = vmatpush2.bf16.msra.mxu0 %v1477
        %1831 = vmatprep.subr.bf16.mxu0 %v1474
        %1832 = vmatpush2.bf16.msra.mxu0 %v1473
        %1833 = vmatprep.subr.bf16.mxu0 %v1470
        %1834 = vmatpush2.bf16.msra.mxu0 %v1469
        %1835 = vmatprep.subr.bf16.mxu0 %v1466
        %1836 = vmatpush2.bf16.msra.mxu0 %v1465
        %1837 = vmatprep.subr.bf16.mxu0 %v1462
        %1838 = vmatpush2.bf16.msra.mxu0 %v1461
        %1839 = vmatprep.subr.bf16.mxu0 %v1458
        %1840 = vmatpush2.bf16.msra.mxu0 %v1457
        %1841 = vmatprep.mubr.bf16.mxu0 %v630
        %1842 = vmatmul.mubr.bf16.gmra.mxu0 %v629
        %v1843 = vpop.f32.mrf.mxu0
        %v1844 = vadd.f32 %v832, %v1843
        %v1845 = vpop.f32.mrf.mxu0
        %v1846 = vadd.f32 %v836, %v1845
        %v1847 = vpop.f32.mrf.mxu0
        %v1848 = vpop.f32.mrf.mxu0
        %1849 = vdwg.mxu0
        %1850 = vmatprep.subr.bf16.mxu0 %v1518
        %1851 = vmatpush1.bf16.msra.mxu0 %v1517
        %1852 = vmatprep.subr.bf16.mxu0 %v1514
        %1853 = vmatpush1.bf16.msra.mxu0 %v1513
        %1854 = vmatprep.subr.bf16.mxu0 %v1510
        %1855 = vmatpush1.bf16.msra.mxu0 %v1509
        %1856 = vmatprep.subr.bf16.mxu0 %v1506
        %1857 = vmatpush1.bf16.msra.mxu0 %v1505
        %1858 = vmatprep.subr.bf16.mxu0 %v1502
        %1859 = vmatpush1.bf16.msra.mxu0 %v1501
        %1860 = vmatprep.subr.bf16.mxu0 %v1498
        %1861 = vmatpush1.bf16.msra.mxu0 %v1497
        %1862 = vmatprep.subr.bf16.mxu0 %v1494
        %1863 = vmatpush1.bf16.msra.mxu0 %v1493
        %1864 = vmatprep.subr.bf16.mxu0 %v1490
        %1865 = vmatpush1.bf16.msra.mxu0 %v1489
        %1866 = vmatprep.subr.bf16.mxu0 %v1550
        %1867 = vmatpush2.bf16.msra.mxu0 %v1549
        %1868 = vmatprep.subr.bf16.mxu0 %v1546
        %1869 = vmatpush2.bf16.msra.mxu0 %v1545
        %1870 = vmatprep.subr.bf16.mxu0 %v1542
        %1871 = vmatpush2.bf16.msra.mxu0 %v1541
        %1872 = vmatprep.subr.bf16.mxu0 %v1538
        %1873 = vmatpush2.bf16.msra.mxu0 %v1537
        %1874 = vmatprep.subr.bf16.mxu0 %v1534
        %1875 = vmatpush2.bf16.msra.mxu0 %v1533
        %1876 = vmatprep.subr.bf16.mxu0 %v1530
        %1877 = vmatpush2.bf16.msra.mxu0 %v1529
        %1878 = vmatprep.subr.bf16.mxu0 %v1526
        %1879 = vmatpush2.bf16.msra.mxu0 %v1525
        %1880 = vmatprep.subr.bf16.mxu0 %v1522
        %1881 = vmatpush2.bf16.msra.mxu0 %v1521
        %1882 = vmatprep.mubr.bf16.mxu0 %v632
        %1883 = vmatmul.mubr.bf16.gmra.mxu0 %v631
        %v1884 = vpop.f32.mrf.mxu0
        %v1885 = vadd.f32 %v1844, %v1884
        %v1886 = vpop.f32.mrf.mxu0
        %v1887 = vadd.f32 %v1846, %v1886
        %v1888 = vpop.f32.mrf.mxu0
        %v1889 = vpop.f32.mrf.mxu0
        %1890 = vdwg.mxu0
        %1891 = vmatprep.subr.bf16.mxu0 %v1582
        %1892 = vmatpush1.bf16.msra.mxu0 %v1581
        %1893 = vmatprep.subr.bf16.mxu0 %v1578
        %1894 = vmatpush1.bf16.msra.mxu0 %v1577
        %1895 = vmatprep.subr.bf16.mxu0 %v1574
        %1896 = vmatpush1.bf16.msra.mxu0 %v1573
        %1897 = vmatprep.subr.bf16.mxu0 %v1570
        %1898 = vmatpush1.bf16.msra.mxu0 %v1569
        %1899 = vmatprep.subr.bf16.mxu0 %v1566
        %1900 = vmatpush1.bf16.msra.mxu0 %v1565
        %1901 = vmatprep.subr.bf16.mxu0 %v1562
        %1902 = vmatpush1.bf16.msra.mxu0 %v1561
        %1903 = vmatprep.subr.bf16.mxu0 %v1558
        %1904 = vmatpush1.bf16.msra.mxu0 %v1557
        %1905 = vmatprep.subr.bf16.mxu0 %v1554
        %1906 = vmatpush1.bf16.msra.mxu0 %v1553
        %1907 = vmatprep.subr.bf16.mxu0 %v1614
        %1908 = vmatpush2.bf16.msra.mxu0 %v1613
        %1909 = vmatprep.subr.bf16.mxu0 %v1610
        %1910 = vmatpush2.bf16.msra.mxu0 %v1609
        %1911 = vmatprep.subr.bf16.mxu0 %v1606
        %1912 = vmatpush2.bf16.msra.mxu0 %v1605
        %1913 = vmatprep.subr.bf16.mxu0 %v1602
        %1914 = vmatpush2.bf16.msra.mxu0 %v1601
        %1915 = vmatprep.subr.bf16.mxu0 %v1598
        %1916 = vmatpush2.bf16.msra.mxu0 %v1597
        %1917 = vmatprep.subr.bf16.mxu0 %v1594
        %1918 = vmatpush2.bf16.msra.mxu0 %v1593
        %1919 = vmatprep.subr.bf16.mxu0 %v1590
        %1920 = vmatpush2.bf16.msra.mxu0 %v1589
        %1921 = vmatprep.subr.bf16.mxu0 %v1586
        %1922 = vmatpush2.bf16.msra.mxu0 %v1585
        %1923 = vmatprep.mubr.bf16.mxu0 %v634
        %1924 = vmatmul.mubr.bf16.gmra.mxu0 %v633
        %v1925 = vpop.f32.mrf.mxu0
        %v1926 = vadd.f32 %v1885, %v1925
        %v1927 = vpop.f32.mrf.mxu0
        %v1928 = vadd.f32 %v1887, %v1927
        %v1929 = vpop.f32.mrf.mxu0
        %v1930 = vpop.f32.mrf.mxu0
        %1931 = vdwg.mxu0
        %1932 = vmatprep.subr.bf16.mxu0 %v1456
        %1933 = vmatpush1.bf16.msra.mxu0 %v1455
        %1934 = vmatprep.subr.bf16.mxu0 %v1452
        %1935 = vmatpush1.bf16.msra.mxu0 %v1451
        %1936 = vmatprep.subr.bf16.mxu0 %v1448
        %1937 = vmatpush1.bf16.msra.mxu0 %v1447
        %1938 = vmatprep.subr.bf16.mxu0 %v1444
        %1939 = vmatpush1.bf16.msra.mxu0 %v1443
        %1940 = vmatprep.subr.bf16.mxu0 %v1440
        %1941 = vmatpush1.bf16.msra.mxu0 %v1439
        %1942 = vmatprep.subr.bf16.mxu0 %v1436
        %1943 = vmatpush1.bf16.msra.mxu0 %v1435
        %1944 = vmatprep.subr.bf16.mxu0 %v1432
        %1945 = vmatpush1.bf16.msra.mxu0 %v1431
        %1946 = vmatprep.subr.bf16.mxu0 %v1428
        %1947 = vmatpush1.bf16.msra.mxu0 %v1427
        %1948 = vmatprep.subr.bf16.mxu0 %v1488
        %1949 = vmatpush2.bf16.msra.mxu0 %v1487
        %1950 = vmatprep.subr.bf16.mxu0 %v1484
        %1951 = vmatpush2.bf16.msra.mxu0 %v1483
        %1952 = vmatprep.subr.bf16.mxu0 %v1480
        %1953 = vmatpush2.bf16.msra.mxu0 %v1479
        %1954 = vmatprep.subr.bf16.mxu0 %v1476
        %1955 = vmatpush2.bf16.msra.mxu0 %v1475
        %1956 = vmatprep.subr.bf16.mxu0 %v1472
        %1957 = vmatpush2.bf16.msra.mxu0 %v1471
        %1958 = vmatprep.subr.bf16.mxu0 %v1468
        %1959 = vmatpush2.bf16.msra.mxu0 %v1467
        %1960 = vmatprep.subr.bf16.mxu0 %v1464
        %1961 = vmatpush2.bf16.msra.mxu0 %v1463
        %1962 = vmatprep.subr.bf16.mxu0 %v1460
        %1963 = vmatpush2.bf16.msra.mxu0 %v1459
        %1964 = vmatprep.mubr.bf16.mxu0 %v630
        %1965 = vmatmul.mubr.bf16.gmra.mxu0 %v629
        %v1966 = vpop.f32.mrf.mxu0
        %v1967 = vadd.f32 %v840, %v1966
        %v1968 = vpop.f32.mrf.mxu0
        %v1969 = vadd.f32 %v844, %v1968
        %v1970 = vpop.f32.mrf.mxu0
        %v1971 = vpop.f32.mrf.mxu0
        %1972 = vdwg.mxu0
        %1973 = vmatprep.subr.bf16.mxu0 %v1520
        %1974 = vmatpush1.bf16.msra.mxu0 %v1519
        %1975 = vmatprep.subr.bf16.mxu0 %v1516
        %1976 = vmatpush1.bf16.msra.mxu0 %v1515
        %1977 = vmatprep.subr.bf16.mxu0 %v1512
        %1978 = vmatpush1.bf16.msra.mxu0 %v1511
        %1979 = vmatprep.subr.bf16.mxu0 %v1508
        %1980 = vmatpush1.bf16.msra.mxu0 %v1507
        %1981 = vmatprep.subr.bf16.mxu0 %v1504
        %1982 = vmatpush1.bf16.msra.mxu0 %v1503
        %1983 = vmatprep.subr.bf16.mxu0 %v1500
        %1984 = vmatpush1.bf16.msra.mxu0 %v1499
        %1985 = vmatprep.subr.bf16.mxu0 %v1496
        %1986 = vmatpush1.bf16.msra.mxu0 %v1495
        %1987 = vmatprep.subr.bf16.mxu0 %v1492
        %1988 = vmatpush1.bf16.msra.mxu0 %v1491
        %1989 = vmatprep.subr.bf16.mxu0 %v1552
        %1990 = vmatpush2.bf16.msra.mxu0 %v1551
        %1991 = vmatprep.subr.bf16.mxu0 %v1548
        %1992 = vmatpush2.bf16.msra.mxu0 %v1547
        %1993 = vmatprep.subr.bf16.mxu0 %v1544
        %1994 = vmatpush2.bf16.msra.mxu0 %v1543
        %1995 = vmatprep.subr.bf16.mxu0 %v1540
        %1996 = vmatpush2.bf16.msra.mxu0 %v1539
        %1997 = vmatprep.subr.bf16.mxu0 %v1536
        %1998 = vmatpush2.bf16.msra.mxu0 %v1535
        %1999 = vmatprep.subr.bf16.mxu0 %v1532
        %2000 = vmatpush2.bf16.msra.mxu0 %v1531
        %2001 = vmatprep.subr.bf16.mxu0 %v1528
        %2002 = vmatpush2.bf16.msra.mxu0 %v1527
        %2003 = vmatprep.subr.bf16.mxu0 %v1524
        %2004 = vmatpush2.bf16.msra.mxu0 %v1523
        %2005 = vmatprep.mubr.bf16.mxu0 %v632
        %2006 = vmatmul.mubr.bf16.gmra.mxu0 %v631
        %v2007 = vpop.f32.mrf.mxu0
        %v2008 = vadd.f32 %v1967, %v2007
        %v2009 = vpop.f32.mrf.mxu0
        %v2010 = vadd.f32 %v1969, %v2009
        %v2011 = vpop.f32.mrf.mxu0
        %v2012 = vpop.f32.mrf.mxu0
        %2013 = vdwg.mxu0
        %2014 = vmatprep.subr.bf16.mxu0 %v1584
        %2015 = vmatpush1.bf16.msra.mxu0 %v1583
        %2016 = vmatprep.subr.bf16.mxu0 %v1580
        %2017 = vmatpush1.bf16.msra.mxu0 %v1579
        %2018 = vmatprep.subr.bf16.mxu0 %v1576
        %2019 = vmatpush1.bf16.msra.mxu0 %v1575
        %2020 = vmatprep.subr.bf16.mxu0 %v1572
        %2021 = vmatpush1.bf16.msra.mxu0 %v1571
        %2022 = vmatprep.subr.bf16.mxu0 %v1568
        %2023 = vmatpush1.bf16.msra.mxu0 %v1567
        %2024 = vmatprep.subr.bf16.mxu0 %v1564
        %2025 = vmatpush1.bf16.msra.mxu0 %v1563
        %2026 = vmatprep.subr.bf16.mxu0 %v1560
        %2027 = vmatpush1.bf16.msra.mxu0 %v1559
        %2028 = vmatprep.subr.bf16.mxu0 %v1556
        %2029 = vmatpush1.bf16.msra.mxu0 %v1555
        %2030 = vmatprep.subr.bf16.mxu0 %v1616
        %2031 = vmatpush2.bf16.msra.mxu0 %v1615
        %2032 = vmatprep.subr.bf16.mxu0 %v1612
        %2033 = vmatpush2.bf16.msra.mxu0 %v1611
        %2034 = vmatprep.subr.bf16.mxu0 %v1608
        %2035 = vmatpush2.bf16.msra.mxu0 %v1607
        %2036 = vmatprep.subr.bf16.mxu0 %v1604
        %2037 = vmatpush2.bf16.msra.mxu0 %v1603
        %2038 = vmatprep.subr.bf16.mxu0 %v1600
        %2039 = vmatpush2.bf16.msra.mxu0 %v1599
        %2040 = vmatprep.subr.bf16.mxu0 %v1596
        %2041 = vmatpush2.bf16.msra.mxu0 %v1595
        %2042 = vmatprep.subr.bf16.mxu0 %v1592
        %2043 = vmatpush2.bf16.msra.mxu0 %v1591
        %2044 = vmatprep.subr.bf16.mxu0 %v1588
        %2045 = vmatpush2.bf16.msra.mxu0 %v1587
        %2046 = vmatprep.mubr.bf16.mxu0 %v634
        %2047 = vmatmul.mubr.bf16.gmra.mxu0 %v633
        %v2048 = vpop.f32.mrf.mxu0
        %v2049 = vadd.f32 %v2008, %v2048
        %v2050 = vpop.f32.mrf.mxu0
        %v2051 = vadd.f32 %v2010, %v2050
        %v2052 = vpop.f32.mrf.mxu0
        %v2053 = vpop.f32.mrf.mxu0
        %2054 = vdwg.mxu0
        %v2059 = vcombine.low %v1926, %v1928
        %v2060 = vcombine.low %v2049, %v2051
        %v2062 = vunpack.c.l.s4 1983009808
        %v2063 = vunpack.c.0.s8 %v2062
        %v2064 = vlaneseq
        %v2065 = vshrl.u32 %v2064, 7
        %v2066 = vsub.s32 %v2063, %v2065
        %v2067 = vrot.slane %v2059, %v2066
        %v2069 = vunpack.c.l.s4 1983009808
        %v2070 = vunpack.c.0.s8 %v2069
        %v2071 = vlaneseq
        %v2072 = vshrl.u32 %v2071, 7
        %v2073 = vsub.s32 %v2070, %v2072
        %v2074 = vrot.slane %v2060, %v2073
        %v2075 = vcombine.low %v2067, %v2074
        %2077 = vst [vmem:[%s592] sm:$0xff] %v2075
        %s2078 = smul.u32 4, %s14
        %p2079 = scmp.lt.s32.totalorder %s2078, 11
        %s2080 = scalar_select %p2079, %s2078, 11
        %s2081 = smul.addr %s2080, 2
        %s2082 = scalar_lea.vmem %s3, %s2081
        // Predicated region
        $region56: #{forward.2} parent=50 // pred_check
          %p2083 = pneg %p105
        $region57: #{forward.2} parent=50 // pred_check_branch
          %2085 = sbr.rel (%p2083) target = $region59
        $region58: #{forward.2} parent=50 // pred_region
          %s2086 = smul.u32 4, %s14
        $region59: #{forward.2} parent=50 // pred_fallthru
          _
      $region51: #{forward.2} parent=5 // pred_fallthru
        _
      %p2087 = scmp.le.s32.totalorder 2, %s9
      // Predicated region
      $region60: #{forward.2} parent=5 // pred_check
        %p2088 = pneg %p2087
      $region61: #{forward.2} parent=5 // pred_check_branch
        %2090 = sbr.rel (%p2088) target = $region63
      $region62: #{forward.2} parent=5 // pred_region
        %s2091 = ssub.s32 %s9, 2
        // Predicated region
        $region64: #{forward.2} parent=62 // pred_check
          %p2092 = pneg %p111
        $region65: #{forward.2} parent=62 // pred_check_branch
          %2094 = sbr.rel (%p2092) target = $region67
        $region66: #{forward.2} parent=62 // pred_region
          %s2095 = smul.u32 4, %s15
          %p2096 = scmp.lt.s32.totalorder %s2095, 11
          %s2097 = scalar_select %p2096, %s2095, 11
          %s2098 = smul.addr %s2097, 2
          %s2099 = scalar_lea.vmem %s3, %s2098
        $region67: #{forward.2} parent=62 // pred_fallthru
          _
      $region63: #{forward.2} parent=5 // pred_fallthru
        _
    $region6: #{forward.2} parent=1 // loop_footer
      %s13 = sadd.s32 1, %s9
    $region7: #{forward.2} parent=1 // loop_footer_branch
      %8 = sbr.rel target = $region3
    $region8: #{forward.2} parent=1 // loop_exit
      _

// kernel: forward.3
$region0: #{forward.3}
  #allocation0 [shape = 'u32[]', space=smem, size = 0x4, offset = 0x4, fixed_abs, tag = 'smem constant byte address 0x4 - core index']
  #allocation1 [shape = 'u32[144,128]{1,0:T(1,128)}', space=vmem, size = 0x12000, scoped, tag = 'internal scratch']
  %s0 = inlined_call_operand.vmem [shape: f32[128,16], index: 0, kind: input, shape index: {}]
  %s1 = inlined_call_operand.vmem [shape: f32[2,24,128], index: 1, kind: input, shape index: {}]
  %s2 = inlined_call_operand.vmem [shape: bf16[7,128,128], index: 2, kind: input, shape index: {}]
  %s3 = inlined_call_operand.vmem [shape: bf16[4,8,128], index: 3, kind: input, shape index: {}]
  %s4 = inlined_call_operand.vmem [shape: f32[16,128], index: 4, kind: input, shape index: {}]
  %s5 = inlined_call_operand.vmem [shape: f32[2,1,16], index: 5, kind: input, shape index: {}]
  %s6 = inlined_call_operand.vmem [shape: f32[2,1,64], index: 6, kind: input, shape index: {}]
  %s7 = inlined_call_operand.vmem [shape: f32[2,1,64], index: 7, kind: input, shape index: {}]
  %s8 = inlined_call_operand.vmem [shape: f32[2,1,256], index: 8, kind: input, shape index: {}]
  %s9 = inlined_call_operand.vmem [shape: f32[2,1,256], index: 9, kind: input, shape index: {}]
  %s10 = inlined_call_operand.vmem [shape: f32[2,1,1024], index: 10, kind: input, shape index: {}]
  %s11 = inlined_call_operand.vmem [shape: f32[2,1,1024], index: 11, kind: input, shape index: {}]
  %s12 = inlined_call_operand.vmem [shape: bf16[16,64], index: 12, kind: input, shape index: {}]
  %s13 = inlined_call_operand.vmem [shape: bf16[64,256], index: 13, kind: input, shape index: {}]
  %s14 = inlined_call_operand.vmem [shape: bf16[256,1024], index: 14, kind: input, shape index: {}]
  %s15 = inlined_call_operand.vmem [shape: f32[2,8,1024], index: 15, kind: output, shape index: {}]
  %s16 = sld [smem:[#allocation0]]
  $region93: #{forward.3} parent=0
    _
  %s18 = ssub.s32 1, %s16
  %s19 = scalar_select 0, %s18, %s16
  loop: start=0, step=1, limit=4
  $region2: #{forward.3} parent=0 // loop_pre_header
    _
  $region3: #{forward.3} parent=0 // loop_header
    %s21 = sphi 0, %s25
    %p22 = scmp.ge.s32.totalorder %s21, 4
    %s29 = sphi 0, %s29
    %s31 = sphi 0, %s29
    %s32 = sphi 0, %s31
    %s46 = sphi 0, %s32
    %s52 = sphi 0, %s54
    %s55 = sphi 0, %s52
    %s56 = sphi 0, %s55
    %s72 = sphi 0, %s56
    %s76 = sphi 0, %s76
    %s78 = sphi 0, %s76
    %s79 = sphi 0, %s78
    %s93 = sphi 0, %s79
    %s97 = sphi 0, %s97
    %s99 = sphi 0, %s97
    %s100 = sphi 0, %s99
    %s114 = sphi 0, %s100
    %s118 = sphi 0, %s118
    %s120 = sphi 0, %s118
    %s121 = sphi 0, %s120
    %s135 = sphi 0, %s121
    %s141 = sphi 0, %s143
    %s144 = sphi 0, %s141
    %s145 = sphi 0, %s144
    %s161 = sphi 0, %s145
    %s167 = sphi 0, %s169
    %s170 = sphi 0, %s167
    %s171 = sphi 0, %s170
    %s187 = sphi 0, %s171
    %s193 = sphi 0, %s195
    %s196 = sphi 0, %s193
    %s197 = sphi 0, %s196
    %s213 = sphi 0, %s197
    %s219 = sphi 0, %s221
    %s222 = sphi 0, %s219
    %s223 = sphi 0, %s222
    %s239 = sphi 0, %s223
    %s245 = sphi 0, %s247
    %s248 = sphi 0, %s245
    %s249 = sphi 0, %s248
    %s265 = sphi 0, %s249
    %s271 = sphi 0, %s273
    %s274 = sphi 0, %s271
    %s275 = sphi 0, %s274
    %s291 = sphi 0, %s275
    %s297 = sphi 0, %s299
    %s300 = sphi 0, %s297
    %s301 = sphi 0, %s300
    %s317 = sphi 0, %s301
    %s321 = sphi 0, %s321
    %s323 = sphi 0, %s321
    %s324 = sphi 0, %s323
    %s338 = sphi 0, %s324
    %s342 = sphi 0, %s342
    %s344 = sphi 0, %s342
    %s345 = sphi 0, %s344
    %s359 = sphi 0, %s345
    %s363 = sphi 0, %s363
    %s365 = sphi 0, %s363
    %s366 = sphi 0, %s365
    %s380 = sphi 0, %s366
    %s386 = sphi 0, %s388
    %s389 = sphi 0, %s386
    %s390 = sphi 0, %s389
    %s406 = sphi 0, %s390
  $region4: #{forward.3} parent=0 // loop_header_branch
    %24 = sbr.rel (%p22) target = $region8
  $region5: #{forward.3} parent=0 // loop_body
    %s26 = ssub.s32 %s21, 1
    %s27 = ssub.s32 %s21, 2
    %s28 = sadd.s32 %s21, 1
    %s30 = sadd.s32 %s29, 1
    %p33 = scmp.eq.s32.totalorder %s21, 1
    %p34 = scmp.ne.s32.totalorder %s29, %s31
    %p35 = scmp.eq.s32.totalorder %s21, 0
    %p36 = por %p34, %p35
    %p37 = scmp.ne.s32.totalorder %s29, %s31
    %p38 = scmp.eq.s32.totalorder %s26, 1
    %p39 = por %p37, %p38
    %p40 = scmp.ne.s32.totalorder %s31, %s32
    %p41 = scmp.eq.s32.totalorder %s26, 0
    %p42 = por %p40, %p41
    %p43 = scmp.ne.s32.totalorder %s31, %s32
    %p44 = scmp.eq.s32.totalorder %s27, 1
    %p45 = por %p43, %p44
    %p47 = scmp.ne.s32.totalorder %s32, %s46
    %p48 = scmp.eq.s32.totalorder %s27, 0
    %p49 = por %p47, %p48
    %s50 = ssub.s32 %s21, %s28
    %p51 = scmp.eq.s32.totalorder %s50, 0
    %s53 = sadd.s32 %s52, 1
    %s54 = scalar_select %p51, %s52, %s53
    %p57 = pneg %p51
    %p58 = scmp.eq.s32.totalorder %s21, 1
    %p59 = por %p57, %p58
    %p60 = scmp.ne.s32.totalorder %s52, %s55
    %p61 = scmp.eq.s32.totalorder %s21, 0
    %p62 = por %p60, %p61
    %p63 = scmp.ne.s32.totalorder %s52, %s55
    %p64 = scmp.eq.s32.totalorder %s26, 1
    %p65 = por %p63, %p64
    %p66 = scmp.ne.s32.totalorder %s55, %s56
    %p67 = scmp.eq.s32.totalorder %s26, 0
    %p68 = por %p66, %p67
    %p69 = scmp.ne.s32.totalorder %s55, %s56
    %p70 = scmp.eq.s32.totalorder %s27, 1
    %p71 = por %p69, %p70
    %p73 = scmp.ne.s32.totalorder %s56, %s72
    %p74 = scmp.eq.s32.totalorder %s27, 0
    %p75 = por %p73, %p74
    %s77 = sadd.s32 %s76, 1
    %p80 = scmp.eq.s32.totalorder %s21, 1
    %p81 = scmp.ne.s32.totalorder %s76, %s78
    %p82 = scmp.eq.s32.totalorder %s21, 0
    %p83 = por %p81, %p82
    %p84 = scmp.ne.s32.totalorder %s76, %s78
    %p85 = scmp.eq.s32.totalorder %s26, 1
    %p86 = por %p84, %p85
    %p87 = scmp.ne.s32.totalorder %s78, %s79
    %p88 = scmp.eq.s32.totalorder %s26, 0
    %p89 = por %p87, %p88
    %p90 = scmp.ne.s32.totalorder %s78, %s79
    %p91 = scmp.eq.s32.totalorder %s27, 1
    %p92 = por %p90, %p91
    %p94 = scmp.ne.s32.totalorder %s79, %s93
    %p95 = scmp.eq.s32.totalorder %s27, 0
    %p96 = por %p94, %p95
    %s98 = sadd.s32 %s97, 1
    %p101 = scmp.eq.s32.totalorder %s21, 1
    %p102 = scmp.ne.s32.totalorder %s97, %s99
    %p103 = scmp.eq.s32.totalorder %s21, 0
    %p104 = por %p102, %p103
    %p105 = scmp.ne.s32.totalorder %s97, %s99
    %p106 = scmp.eq.s32.totalorder %s26, 1
    %p107 = por %p105, %p106
    %p108 = scmp.ne.s32.totalorder %s99, %s100
    %p109 = scmp.eq.s32.totalorder %s26, 0
    %p110 = por %p108, %p109
    %p111 = scmp.ne.s32.totalorder %s99, %s100
    %p112 = scmp.eq.s32.totalorder %s27, 1
    %p113 = por %p111, %p112
    %p115 = scmp.ne.s32.totalorder %s100, %s114
    %p116 = scmp.eq.s32.totalorder %s27, 0
    %p117 = por %p115, %p116
    %s119 = sadd.s32 %s118, 1
    %p122 = scmp.eq.s32.totalorder %s21, 1
    %p123 = scmp.ne.s32.totalorder %s118, %s120
    %p124 = scmp.eq.s32.totalorder %s21, 0
    %p125 = por %p123, %p124
    %p126 = scmp.ne.s32.totalorder %s118, %s120
    %p127 = scmp.eq.s32.totalorder %s26, 1
    %p128 = por %p126, %p127
    %p129 = scmp.ne.s32.totalorder %s120, %s121
    %p130 = scmp.eq.s32.totalorder %s26, 0
    %p131 = por %p129, %p130
    %p132 = scmp.ne.s32.totalorder %s120, %s121
    %p133 = scmp.eq.s32.totalorder %s27, 1
    %p134 = por %p132, %p133
    %p136 = scmp.ne.s32.totalorder %s121, %s135
    %p137 = scmp.eq.s32.totalorder %s27, 0
    %p138 = por %p136, %p137
    %s139 = ssub.s32 %s21, %s28
    %p140 = scmp.eq.s32.totalorder %s139, 0
    %s142 = sadd.s32 %s141, 1
    %s143 = scalar_select %p140, %s141, %s142
    %p146 = pneg %p140
    %p147 = scmp.eq.s32.totalorder %s21, 1
    %p148 = por %p146, %p147
    %p149 = scmp.ne.s32.totalorder %s141, %s144
    %p150 = scmp.eq.s32.totalorder %s21, 0
    %p151 = por %p149, %p150
    %p152 = scmp.ne.s32.totalorder %s141, %s144
    %p153 = scmp.eq.s32.totalorder %s26, 1
    %p154 = por %p152, %p153
    %p155 = scmp.ne.s32.totalorder %s144, %s145
    %p156 = scmp.eq.s32.totalorder %s26, 0
    %p157 = por %p155, %p156
    %p158 = scmp.ne.s32.totalorder %s144, %s145
    %p159 = scmp.eq.s32.totalorder %s27, 1
    %p160 = por %p158, %p159
    %p162 = scmp.ne.s32.totalorder %s145, %s161
    %p163 = scmp.eq.s32.totalorder %s27, 0
    %p164 = por %p162, %p163
    %s165 = ssub.s32 %s21, %s28
    %p166 = scmp.eq.s32.totalorder %s165, 0
    %s168 = sadd.s32 %s167, 1
    %s169 = scalar_select %p166, %s167, %s168
    %p172 = pneg %p166
    %p173 = scmp.eq.s32.totalorder %s21, 1
    %p174 = por %p172, %p173
    %p175 = scmp.ne.s32.totalorder %s167, %s170
    %p176 = scmp.eq.s32.totalorder %s21, 0
    %p177 = por %p175, %p176
    %p178 = scmp.ne.s32.totalorder %s167, %s170
    %p179 = scmp.eq.s32.totalorder %s26, 1
    %p180 = por %p178, %p179
    %p181 = scmp.ne.s32.totalorder %s170, %s171
    %p182 = scmp.eq.s32.totalorder %s26, 0
    %p183 = por %p181, %p182
    %p184 = scmp.ne.s32.totalorder %s170, %s171
    %p185 = scmp.eq.s32.totalorder %s27, 1
    %p186 = por %p184, %p185
    %p188 = scmp.ne.s32.totalorder %s171, %s187
    %p189 = scmp.eq.s32.totalorder %s27, 0
    %p190 = por %p188, %p189
    %s191 = ssub.s32 %s21, %s28
    %p192 = scmp.eq.s32.totalorder %s191, 0
    %s194 = sadd.s32 %s193, 1
    %s195 = scalar_select %p192, %s193, %s194
    %p198 = pneg %p192
    %p199 = scmp.eq.s32.totalorder %s21, 1
    %p200 = por %p198, %p199
    %p201 = scmp.ne.s32.totalorder %s193, %s196
    %p202 = scmp.eq.s32.totalorder %s21, 0
    %p203 = por %p201, %p202
    %p204 = scmp.ne.s32.totalorder %s193, %s196
    %p205 = scmp.eq.s32.totalorder %s26, 1
    %p206 = por %p204, %p205
    %p207 = scmp.ne.s32.totalorder %s196, %s197
    %p208 = scmp.eq.s32.totalorder %s26, 0
    %p209 = por %p207, %p208
    %p210 = scmp.ne.s32.totalorder %s196, %s197
    %p211 = scmp.eq.s32.totalorder %s27, 1
    %p212 = por %p210, %p211
    %p214 = scmp.ne.s32.totalorder %s197, %s213
    %p215 = scmp.eq.s32.totalorder %s27, 0
    %p216 = por %p214, %p215
    %s217 = ssub.s32 %s21, %s28
    %p218 = scmp.eq.s32.totalorder %s217, 0
    %s220 = sadd.s32 %s219, 1
    %s221 = scalar_select %p218, %s219, %s220
    %p224 = pneg %p218
    %p225 = scmp.eq.s32.totalorder %s21, 1
    %p226 = por %p224, %p225
    %p227 = scmp.ne.s32.totalorder %s219, %s222
    %p228 = scmp.eq.s32.totalorder %s21, 0
    %p229 = por %p227, %p228
    %p230 = scmp.ne.s32.totalorder %s219, %s222
    %p231 = scmp.eq.s32.totalorder %s26, 1
    %p232 = por %p230, %p231
    %p233 = scmp.ne.s32.totalorder %s222, %s223
    %p234 = scmp.eq.s32.totalorder %s26, 0
    %p235 = por %p233, %p234
    %p236 = scmp.ne.s32.totalorder %s222, %s223
    %p237 = scmp.eq.s32.totalorder %s27, 1
    %p238 = por %p236, %p237
    %p240 = scmp.ne.s32.totalorder %s223, %s239
    %p241 = scmp.eq.s32.totalorder %s27, 0
    %p242 = por %p240, %p241
    %s243 = ssub.s32 %s21, %s28
    %p244 = scmp.eq.s32.totalorder %s243, 0
    %s246 = sadd.s32 %s245, 1
    %s247 = scalar_select %p244, %s245, %s246
    %p250 = pneg %p244
    %p251 = scmp.eq.s32.totalorder %s21, 1
    %p252 = por %p250, %p251
    %p253 = scmp.ne.s32.totalorder %s245, %s248
    %p254 = scmp.eq.s32.totalorder %s21, 0
    %p255 = por %p253, %p254
    %p256 = scmp.ne.s32.totalorder %s245, %s248
    %p257 = scmp.eq.s32.totalorder %s26, 1
    %p258 = por %p256, %p257
    %p259 = scmp.ne.s32.totalorder %s248, %s249
    %p260 = scmp.eq.s32.totalorder %s26, 0
    %p261 = por %p259, %p260
    %p262 = scmp.ne.s32.totalorder %s248, %s249
    %p263 = scmp.eq.s32.totalorder %s27, 1
    %p264 = por %p262, %p263
    %p266 = scmp.ne.s32.totalorder %s249, %s265
    %p267 = scmp.eq.s32.totalorder %s27, 0
    %p268 = por %p266, %p267
    %s269 = ssub.s32 %s21, %s28
    %p270 = scmp.eq.s32.totalorder %s269, 0
    %s272 = sadd.s32 %s271, 1
    %s273 = scalar_select %p270, %s271, %s272
    %p276 = pneg %p270
    %p277 = scmp.eq.s32.totalorder %s21, 1
    %p278 = por %p276, %p277
    %p279 = scmp.ne.s32.totalorder %s271, %s274
    %p280 = scmp.eq.s32.totalorder %s21, 0
    %p281 = por %p279, %p280
    %p282 = scmp.ne.s32.totalorder %s271, %s274
    %p283 = scmp.eq.s32.totalorder %s26, 1
    %p284 = por %p282, %p283
    %p285 = scmp.ne.s32.totalorder %s274, %s275
    %p286 = scmp.eq.s32.totalorder %s26, 0
    %p287 = por %p285, %p286
    %p288 = scmp.ne.s32.totalorder %s274, %s275
    %p289 = scmp.eq.s32.totalorder %s27, 1
    %p290 = por %p288, %p289
    %p292 = scmp.ne.s32.totalorder %s275, %s291
    %p293 = scmp.eq.s32.totalorder %s27, 0
    %p294 = por %p292, %p293
    %s295 = ssub.s32 %s21, %s28
    %p296 = scmp.eq.s32.totalorder %s295, 0
    %s298 = sadd.s32 %s297, 1
    %s299 = scalar_select %p296, %s297, %s298
    %p302 = pneg %p296
    %p303 = scmp.eq.s32.totalorder %s21, 1
    %p304 = por %p302, %p303
    %p305 = scmp.ne.s32.totalorder %s297, %s300
    %p306 = scmp.eq.s32.totalorder %s21, 0
    %p307 = por %p305, %p306
    %p308 = scmp.ne.s32.totalorder %s297, %s300
    %p309 = scmp.eq.s32.totalorder %s26, 1
    %p310 = por %p308, %p309
    %p311 = scmp.ne.s32.totalorder %s300, %s301
    %p312 = scmp.eq.s32.totalorder %s26, 0
    %p313 = por %p311, %p312
    %p314 = scmp.ne.s32.totalorder %s300, %s301
    %p315 = scmp.eq.s32.totalorder %s27, 1
    %p316 = por %p314, %p315
    %p318 = scmp.ne.s32.totalorder %s301, %s317
    %p319 = scmp.eq.s32.totalorder %s27, 0
    %p320 = por %p318, %p319
    %s322 = sadd.s32 %s321, 1
    %p325 = scmp.eq.s32.totalorder %s21, 1
    %p326 = scmp.ne.s32.totalorder %s321, %s323
    %p327 = scmp.eq.s32.totalorder %s21, 0
    %p328 = por %p326, %p327
    %p329 = scmp.ne.s32.totalorder %s321, %s323
    %p330 = scmp.eq.s32.totalorder %s26, 1
    %p331 = por %p329, %p330
    %p332 = scmp.ne.s32.totalorder %s323, %s324
    %p333 = scmp.eq.s32.totalorder %s26, 0
    %p334 = por %p332, %p333
    %p335 = scmp.ne.s32.totalorder %s323, %s324
    %p336 = scmp.eq.s32.totalorder %s27, 1
    %p337 = por %p335, %p336
    %p339 = scmp.ne.s32.totalorder %s324, %s338
    %p340 = scmp.eq.s32.totalorder %s27, 0
    %p341 = por %p339, %p340
    %s343 = sadd.s32 %s342, 1
    %p346 = scmp.eq.s32.totalorder %s21, 1
    %p347 = scmp.ne.s32.totalorder %s342, %s344
    %p348 = scmp.eq.s32.totalorder %s21, 0
    %p349 = por %p347, %p348
    %p350 = scmp.ne.s32.totalorder %s342, %s344
    %p351 = scmp.eq.s32.totalorder %s26, 1
    %p352 = por %p350, %p351
    %p353 = scmp.ne.s32.totalorder %s344, %s345
    %p354 = scmp.eq.s32.totalorder %s26, 0
    %p355 = por %p353, %p354
    %p356 = scmp.ne.s32.totalorder %s344, %s345
    %p357 = scmp.eq.s32.totalorder %s27, 1
    %p358 = por %p356, %p357
    %p360 = scmp.ne.s32.totalorder %s345, %s359
    %p361 = scmp.eq.s32.totalorder %s27, 0
    %p362 = por %p360, %p361
    %s364 = sadd.s32 %s363, 1
    %p367 = scmp.eq.s32.totalorder %s21, 1
    %p368 = scmp.ne.s32.totalorder %s363, %s365
    %p369 = scmp.eq.s32.totalorder %s21, 0
    %p370 = por %p368, %p369
    %p371 = scmp.ne.s32.totalorder %s363, %s365
    %p372 = scmp.eq.s32.totalorder %s26, 1
    %p373 = por %p371, %p372
    %p374 = scmp.ne.s32.totalorder %s365, %s366
    %p375 = scmp.eq.s32.totalorder %s26, 0
    %p376 = por %p374, %p375
    %p377 = scmp.ne.s32.totalorder %s365, %s366
    %p378 = scmp.eq.s32.totalorder %s27, 1
    %p379 = por %p377, %p378
    %p381 = scmp.ne.s32.totalorder %s366, %s380
    %p382 = scmp.eq.s32.totalorder %s27, 0
    %p383 = por %p381, %p382
    %s384 = ssub.s32 %s21, %s28
    %p385 = scmp.eq.s32.totalorder %s384, 0
    %s387 = sadd.s32 %s386, 1
    %s388 = scalar_select %p385, %s386, %s387
    %p391 = pneg %p385
    %p392 = scmp.eq.s32.totalorder %s21, 1
    %p393 = por %p391, %p392
    %p394 = scmp.ne.s32.totalorder %s386, %s389
    %p395 = scmp.eq.s32.totalorder %s21, 0
    %p396 = por %p394, %p395
    %p397 = scmp.ne.s32.totalorder %s386, %s389
    %p398 = scmp.eq.s32.totalorder %s26, 1
    %p399 = por %p397, %p398
    %p400 = scmp.ne.s32.totalorder %s389, %s390
    %p401 = scmp.eq.s32.totalorder %s26, 0
    %p402 = por %p400, %p401
    %p403 = scmp.ne.s32.totalorder %s389, %s390
    %p404 = scmp.eq.s32.totalorder %s27, 1
    %p405 = por %p403, %p404
    %p407 = scmp.ne.s32.totalorder %s390, %s406
    %p408 = scmp.eq.s32.totalorder %s27, 0
    %p409 = por %p407, %p408
    %p410 = scmp.le.s32.totalorder 1, %s21
    %p411 = scmp.lt.s32.totalorder %s21, 3
    %p412 = pnand %p410, %p411
    %p413 = pneg %p412
    // Predicated region
    $region9: #{forward.3} parent=5 // pred_check
      _
    $region10: #{forward.3} parent=5 // pred_check_branch
      %415 = sbr.rel (%p412) target = $region12
    $region11: #{forward.3} parent=5 // pred_region
      %s416 = ssub.s32 %s21, 1
      // Predicated region
      $region13: #{forward.3} parent=11 // pred_check
        %p417 = pneg %p42
      $region14: #{forward.3} parent=11 // pred_check_branch
        %419 = sbr.rel (%p417) target = $region16
      $region15: #{forward.3} parent=11 // pred_region
        _
      $region16: #{forward.3} parent=11 // pred_fallthru
        _
      // Predicated region
      $region17: #{forward.3} parent=11 // pred_check
        %p420 = pneg %p89
      $region18: #{forward.3} parent=11 // pred_check_branch
        %422 = sbr.rel (%p420) target = $region20
      $region19: #{forward.3} parent=11 // pred_region
        _
      $region20: #{forward.3} parent=11 // pred_fallthru
        _
      // Predicated region
      $region21: #{forward.3} parent=11 // pred_check
        %p423 = pneg %p110
      $region22: #{forward.3} parent=11 // pred_check_branch
        %425 = sbr.rel (%p423) target = $region24
      $region23: #{forward.3} parent=11 // pred_region
        _
      $region24: #{forward.3} parent=11 // pred_fallthru
        _
      // Predicated region
      $region25: #{forward.3} parent=11 // pred_check
        %p426 = pneg %p131
      $region26: #{forward.3} parent=11 // pred_check_branch
        %428 = sbr.rel (%p426) target = $region28
      $region27: #{forward.3} parent=11 // pred_region
        _
      $region28: #{forward.3} parent=11 // pred_fallthru
        _
      // Predicated region
      $region29: #{forward.3} parent=11 // pred_check
        %p429 = pneg %p334
      $region30: #{forward.3} parent=11 // pred_check_branch
        %431 = sbr.rel (%p429) target = $region32
      $region31: #{forward.3} parent=11 // pred_region
        _
      $region32: #{forward.3} parent=11 // pred_fallthru
        _
      // Predicated region
      $region33: #{forward.3} parent=11 // pred_check
        %p432 = pneg %p355
      $region34: #{forward.3} parent=11 // pred_check_branch
        %434 = sbr.rel (%p432) target = $region36
      $region35: #{forward.3} parent=11 // pred_region
        _
      $region36: #{forward.3} parent=11 // pred_fallthru
        _
      // Predicated region
      $region37: #{forward.3} parent=11 // pred_check
        %p435 = pneg %p376
      $region38: #{forward.3} parent=11 // pred_check_branch
        %437 = sbr.rel (%p435) target = $region40
      $region39: #{forward.3} parent=11 // pred_region
        _
      $region40: #{forward.3} parent=11 // pred_fallthru
        _
    $region12: #{forward.3} parent=5 // pred_fallthru
      _
    %p438 = scmp.lt.s32.totalorder %s21, 2
    // Predicated region
    $region41: #{forward.3} parent=5 // pred_check
      %p439 = pneg %p438
    $region42: #{forward.3} parent=5 // pred_check_branch
      %441 = sbr.rel (%p439) target = $region44
    $region43: #{forward.3} parent=5 // pred_region
      // Predicated region
      $region45: #{forward.3} parent=43 // pred_check
        %p442 = pneg %p62
      $region46: #{forward.3} parent=43 // pred_check_branch
        %444 = sbr.rel (%p442) target = $region48
      $region47: #{forward.3} parent=43 // pred_region
        %p445 = scmp.lt.s32.totalorder %s21, 1
        %s446 = scalar_select %p445, %s21, 1
        %s447 = smul.addr %s446, 3
        %s448 = smul.addr %s447, 8
        %s449 = scalar_lea.vmem %s1, %s448
      $region48: #{forward.3} parent=43 // pred_fallthru
        _
      // Predicated region
      $region49: #{forward.3} parent=43 // pred_check
        %p450 = pneg %p151
      $region50: #{forward.3} parent=43 // pred_check_branch
        %452 = sbr.rel (%p450) target = $region52
      $region51: #{forward.3} parent=43 // pred_region
        %p453 = scmp.lt.s32.totalorder %s21, 1
        %s454 = scalar_select %p453, %s21, 1
        %s455 = scalar_lea.vmem %s5, %s454
      $region52: #{forward.3} parent=43 // pred_fallthru
        _
      // Predicated region
      $region53: #{forward.3} parent=43 // pred_check
        %p456 = pneg %p177
      $region54: #{forward.3} parent=43 // pred_check_branch
        %458 = sbr.rel (%p456) target = $region56
      $region55: #{forward.3} parent=43 // pred_region
        %p459 = scmp.lt.s32.totalorder %s21, 1
        %s460 = scalar_select %p459, %s21, 1
        %s461 = scalar_lea.vmem %s6, %s460
      $region56: #{forward.3} parent=43 // pred_fallthru
        _
      // Predicated region
      $region57: #{forward.3} parent=43 // pred_check
        %p462 = pneg %p203
      $region58: #{forward.3} parent=43 // pred_check_branch
        %464 = sbr.rel (%p462) target = $region60
      $region59: #{forward.3} parent=43 // pred_region
        %p465 = scmp.lt.s32.totalorder %s21, 1
        %s466 = scalar_select %p465, %s21, 1
        %s467 = scalar_lea.vmem %s7, %s466
      $region60: #{forward.3} parent=43 // pred_fallthru
        _
      // Predicated region
      $region61: #{forward.3} parent=43 // pred_check
        %p468 = pneg %p229
      $region62: #{forward.3} parent=43 // pred_check_branch
        %470 = sbr.rel (%p468) target = $region64
      $region63: #{forward.3} parent=43 // pred_region
        %p471 = scmp.lt.s32.totalorder %s21, 1
        %s472 = scalar_select %p471, %s21, 1
        %s473 = smul.addr %s472, 2
        %s474 = scalar_lea.vmem %s8, %s473
      $region64: #{forward.3} parent=43 // pred_fallthru
        _
      // Predicated region
      $region65: #{forward.3} parent=43 // pred_check
        %p475 = pneg %p255
      $region66: #{forward.3} parent=43 // pred_check_branch
        %477 = sbr.rel (%p475) target = $region68
      $region67: #{forward.3} parent=43 // pred_region
        %p478 = scmp.lt.s32.totalorder %s21, 1
        %s479 = scalar_select %p478, %s21, 1
        %s480 = smul.addr %s479, 2
        %s481 = scalar_lea.vmem %s9, %s480
      $region68: #{forward.3} parent=43 // pred_fallthru
        _
      // Predicated region
      $region69: #{forward.3} parent=43 // pred_check
        %p482 = pneg %p281
      $region70: #{forward.3} parent=43 // pred_check_branch
        %484 = sbr.rel (%p482) target = $region72
      $region71: #{forward.3} parent=43 // pred_region
        %p485 = scmp.lt.s32.totalorder %s21, 1
        %s486 = scalar_select %p485, %s21, 1
        %s487 = smul.addr %s486, 8
        %s488 = scalar_lea.vmem %s10, %s487
      $region72: #{forward.3} parent=43 // pred_fallthru
        _
      // Predicated region
      $region73: #{forward.3} parent=43 // pred_check
        %p489 = pneg %p307
      $region74: #{forward.3} parent=43 // pred_check_branch
        %491 = sbr.rel (%p489) target = $region76
      $region75: #{forward.3} parent=43 // pred_region
        %p492 = scmp.lt.s32.totalorder %s21, 1
        %s493 = scalar_select %p492, %s21, 1
        %s494 = smul.addr %s493, 8
        %s495 = scalar_lea.vmem %s11, %s494
      $region76: #{forward.3} parent=43 // pred_fallthru
        _
    $region44: #{forward.3} parent=5 // pred_fallthru
      _
    %p496 = scmp.le.s32.totalorder 1, %s21
    %p497 = scmp.lt.s32.totalorder %s21, 3
    %p498 = pnand %p496, %p497
    %p499 = pneg %p498
    // Predicated region
    $region77: #{forward.3} parent=5 // pred_check
      _
    $region78: #{forward.3} parent=5 // pred_check_branch
      %501 = sbr.rel (%p498) target = $region80
    $region79: #{forward.3} parent=5 // pred_region
      %s502 = ssub.s32 %s21, 1
      %p503 = pneg %p42
      %p504 = pneg %p39
      %p505 = scmp.lt.s32.totalorder %s26, 1
      %s506 = scalar_select %p505, %s26, 1
      %s507 = smul.addr %s506, 3
      %s508 = smul.addr %s507, 8
      %s509 = scalar_lea.vmem %s1, %s508
      %p510 = pneg %p68
      %p511 = pneg %p65
      %p512 = pneg %p89
      %p513 = pneg %p86
      %p514 = pneg %p110
      %p515 = pneg %p107
      %p516 = pneg %p131
      %p517 = pneg %p128
      %p518 = scmp.lt.s32.totalorder %s26, 1
      %s519 = scalar_select %p518, %s26, 1
      %s520 = scalar_lea.vmem %s5, %s519
      %p521 = pneg %p157
      %p522 = pneg %p154
      %p523 = scmp.lt.s32.totalorder %s26, 1
      %s524 = scalar_select %p523, %s26, 1
      %s525 = scalar_lea.vmem %s6, %s524
      %p526 = pneg %p183
      %p527 = pneg %p180
      %p528 = scmp.lt.s32.totalorder %s26, 1
      %s529 = scalar_select %p528, %s26, 1
      %s530 = scalar_lea.vmem %s7, %s529
      %p531 = pneg %p209
      %p532 = pneg %p206
      %p533 = scmp.lt.s32.totalorder %s26, 1
      %s534 = scalar_select %p533, %s26, 1
      %s535 = smul.addr %s534, 2
      %s536 = scalar_lea.vmem %s8, %s535
      %p537 = pneg %p235
      %p538 = pneg %p232
      %p539 = scmp.lt.s32.totalorder %s26, 1
      %s540 = scalar_select %p539, %s26, 1
      %s541 = smul.addr %s540, 2
      %s542 = scalar_lea.vmem %s9, %s541
      %p543 = pneg %p261
      %p544 = pneg %p258
      %p545 = scmp.lt.s32.totalorder %s26, 1
      %s546 = scalar_select %p545, %s26, 1
      %s547 = smul.addr %s546, 8
      %s548 = scalar_lea.vmem %s10, %s547
      %p549 = pneg %p287
      %p550 = pneg %p284
      %p551 = scmp.lt.s32.totalorder %s26, 1
      %s552 = scalar_select %p551, %s26, 1
      %s553 = smul.addr %s552, 8
      %s554 = scalar_lea.vmem %s11, %s553
      %p555 = pneg %p313
      %p556 = pneg %p310
      %p557 = pneg %p334
      %p558 = pneg %p331
      %p559 = pneg %p355
      %p560 = pneg %p352
      %p561 = pneg %p376
      %p562 = pneg %p373
      %p563 = pneg %p402
      %p564 = pneg %p399
      %p565 = scmp.lt.s32.totalorder %s26, 1
      %s566 = scalar_select %p565, %s26, 1
      %s567 = smul.addr %s566, 8
      %s568 = smul.addr %s567, 8
      %s569 = scalar_lea.vmem %s15, %s568
      %p570 = scmp.lt.s32.totalorder %s26, 1
      %s571 = scalar_select %p570, %s26, 1
      %s572 = smul.addr %s571, 3
      %s573 = smul.addr %s572, 8
      %s574 = scalar_lea.vmem %s1, %s573
      %p575 = scmp.lt.s32.totalorder %s26, 1
      %s576 = scalar_select %p575, %s26, 1
      %s577 = scalar_lea.vmem %s5, %s576
      %p578 = scmp.lt.s32.totalorder %s26, 1
      %s579 = scalar_select %p578, %s26, 1
      %s580 = scalar_lea.vmem %s6, %s579
      %p581 = scmp.lt.s32.totalorder %s26, 1
      %s582 = scalar_select %p581, %s26, 1
      %s583 = scalar_lea.vmem %s7, %s582
      %p584 = scmp.lt.s32.totalorder %s26, 1
      %s585 = scalar_select %p584, %s26, 1
      %s586 = smul.addr %s585, 2
      %s587 = scalar_lea.vmem %s8, %s586
      %p588 = scmp.lt.s32.totalorder %s26, 1
      %s589 = scalar_select %p588, %s26, 1
      %s590 = smul.addr %s589, 2
      %s591 = scalar_lea.vmem %s9, %s590
      %p592 = scmp.lt.s32.totalorder %s26, 1
      %s593 = scalar_select %p592, %s26, 1
      %s594 = smul.addr %s593, 8
      %s595 = scalar_lea.vmem %s10, %s594
      %p596 = scmp.lt.s32.totalorder %s26, 1
      %s597 = scalar_select %p596, %s26, 1
      %s598 = smul.addr %s597, 8
      %s599 = scalar_lea.vmem %s11, %s598
      %p600 = scmp.lt.s32.totalorder %s26, 1
      %s601 = scalar_select %p600, %s26, 1
      %s602 = smul.addr %s601, 8
      %s603 = smul.addr %s602, 8
      %s604 = scalar_lea.vmem %s15, %s603
      %v606 = vld [vmem:[%s574] sm:$0xff]
      %v607 = vld [vmem:[%s574 + $0x8] sm:$0xff]
      %v608 = vld [vmem:[%s574 + $0x10] sm:$0xff]
      %609 = vxpose.xlu0.b32.start [1/16] %v606, 128
      %610 = vxpose.xlu0.b32.cont [2/16] %v607, 128
      %611 = vxpose.xlu0.b32.cont [3/16] %v608, 128
      %612 = vxpose.xlu0.b32.cont [4/16] 0.0, 128
      %613 = vxpose.xlu0.b32.cont [5/16] 0.0, 128
      %614 = vxpose.xlu0.b32.cont [6/16] 0.0, 128
      %615 = vxpose.xlu0.b32.cont [7/16] 0.0, 128
      %616 = vxpose.xlu0.b32.cont [8/16] 0.0, 128
      %617 = vxpose.xlu0.b32.cont [9/16] 0.0, 128
      %618 = vxpose.xlu0.b32.cont [10/16] 0.0, 128
      %619 = vxpose.xlu0.b32.cont [11/16] 0.0, 128
      %620 = vxpose.xlu0.b32.cont [12/16] 0.0, 128
      %621 = vxpose.xlu0.b32.cont [13/16] 0.0, 128
      %622 = vxpose.xlu0.b32.cont [14/16] 0.0, 128
      %623 = vxpose.xlu0.b32.cont [15/16] 0.0, 128
      %624 = vxpose.xlu0.b32.end [16/16] 0.0, 128
      %v625 = vpop.trf.xlu0
      %v626 = vpop.trf.xlu0
      %v627 = vpop.trf.xlu0
      %v628 = vpop.trf.xlu0
      %v629 = vpop.trf.xlu0
      %v630 = vpop.trf.xlu0
      %v631 = vpop.trf.xlu0
      %v632 = vpop.trf.xlu0
      %v633 = vpop.trf.xlu0
      %v634 = vpop.trf.xlu0
      %v635 = vpop.trf.xlu0
      %v636 = vpop.trf.xlu0
      %v637 = vpop.trf.xlu0
      %v638 = vpop.trf.xlu0
      %v639 = vpop.trf.xlu0
      %v640 = vpop.trf.xlu0
      %v641 = vld [vmem:[%s4] sm:$0xff]
      %v642 = vld [vmem:[%s4 + $0x8] sm:$0xff]
      %643 = vxpose.xlu0.b32.start [1/16] %v641, 128
      %644 = vxpose.xlu0.b32.cont [2/16] %v642, 128
      %645 = vxpose.xlu0.b32.cont [3/16] 0.0, 128
      %646 = vxpose.xlu0.b32.cont [4/16] 0.0, 128
      %647 = vxpose.xlu0.b32.cont [5/16] 0.0, 128
      %648 = vxpose.xlu0.b32.cont [6/16] 0.0, 128
      %649 = vxpose.xlu0.b32.cont [7/16] 0.0, 128
      %650 = vxpose.xlu0.b32.cont [8/16] 0.0, 128
      %651 = vxpose.xlu0.b32.cont [9/16] 0.0, 128
      %652 = vxpose.xlu0.b32.cont [10/16] 0.0, 128
      %653 = vxpose.xlu0.b32.cont [11/16] 0.0, 128
      %654 = vxpose.xlu0.b32.cont [12/16] 0.0, 128
      %655 = vxpose.xlu0.b32.cont [13/16] 0.0, 128
      %656 = vxpose.xlu0.b32.cont [14/16] 0.0, 128
      %657 = vxpose.xlu0.b32.cont [15/16] 0.0, 128
      %658 = vxpose.xlu0.b32.end [16/16] 0.0, 128
      %v659 = vpop.trf.xlu0
      %v660 = vpop.trf.xlu0
      %v661 = vpop.trf.xlu0
      %v662 = vpop.trf.xlu0
      %v663 = vpop.trf.xlu0
      %v664 = vpop.trf.xlu0
      %v665 = vpop.trf.xlu0
      %v666 = vpop.trf.xlu0
      %v667 = vpop.trf.xlu0
      %v668 = vpop.trf.xlu0
      %v669 = vpop.trf.xlu0
      %v670 = vpop.trf.xlu0
      %v671 = vpop.trf.xlu0
      %v672 = vpop.trf.xlu0
      %v673 = vpop.trf.xlu0
      %v674 = vpop.trf.xlu0
      %v675 = vld [vmem:[%s0] sm:$0xff]
      %v676 = vld [vmem:[%s0 + $0x8] sm:$0xff]
      %v677 = vld [vmem:[%s0 + $0x10] sm:$0xff]
      %v678 = vld [vmem:[%s0 + $0x18] sm:$0xff]
      %v679 = vld [vmem:[%s0 + $0x20] sm:$0xff]
      %v680 = vld [vmem:[%s0 + $0x28] sm:$0xff]
      %v681 = vld [vmem:[%s0 + $0x30] sm:$0xff]
      %v682 = vld [vmem:[%s0 + $0x38] sm:$0xff]
      %v683 = vld [vmem:[%s0 + $0x40] sm:$0xff]
      %v684 = vld [vmem:[%s0 + $0x48] sm:$0xff]
      %v685 = vld [vmem:[%s0 + $0x50] sm:$0xff]
      %v686 = vld [vmem:[%s0 + $0x58] sm:$0xff]
      %v687 = vld [vmem:[%s0 + $0x60] sm:$0xff]
      %v688 = vld [vmem:[%s0 + $0x68] sm:$0xff]
      %v689 = vld [vmem:[%s0 + $0x70] sm:$0xff]
      %v690 = vld [vmem:[%s0 + $0x78] sm:$0xff]
      %692 = vset.pattern.permute.xlu0 0
      %693 = vperm.xlu0 %692, %v625
      %v694 = vpop.permute.xlu0 %693
      %697 = vset.pattern.permute.xlu0 0
      %698 = vperm.xlu0 %697, %v626
      %v699 = vpop.permute.xlu0 %698
      %702 = vset.pattern.permute.xlu0 0
      %703 = vperm.xlu0 %702, %v627
      %v704 = vpop.permute.xlu0 %703
      %707 = vset.pattern.permute.xlu0 0
      %708 = vperm.xlu0 %707, %v628
      %v709 = vpop.permute.xlu0 %708
      %712 = vset.pattern.permute.xlu0 0
      %713 = vperm.xlu0 %712, %v629
      %v714 = vpop.permute.xlu0 %713
      %717 = vset.pattern.permute.xlu0 0
      %718 = vperm.xlu0 %717, %v630
      %v719 = vpop.permute.xlu0 %718
      %722 = vset.pattern.permute.xlu0 0
      %723 = vperm.xlu0 %722, %v631
      %v724 = vpop.permute.xlu0 %723
      %727 = vset.pattern.permute.xlu0 0
      %728 = vperm.xlu0 %727, %v632
      %v729 = vpop.permute.xlu0 %728
      %732 = vset.pattern.permute.xlu0 0
      %733 = vperm.xlu0 %732, %v633
      %v734 = vpop.permute.xlu0 %733
      %737 = vset.pattern.permute.xlu0 0
      %738 = vperm.xlu0 %737, %v634
      %v739 = vpop.permute.xlu0 %738
      %742 = vset.pattern.permute.xlu0 0
      %743 = vperm.xlu0 %742, %v635
      %v744 = vpop.permute.xlu0 %743
      %747 = vset.pattern.permute.xlu0 0
      %748 = vperm.xlu0 %747, %v636
      %v749 = vpop.permute.xlu0 %748
      %752 = vset.pattern.permute.xlu0 0
      %753 = vperm.xlu0 %752, %v637
      %v754 = vpop.permute.xlu0 %753
      %757 = vset.pattern.permute.xlu0 0
      %758 = vperm.xlu0 %757, %v638
      %v759 = vpop.permute.xlu0 %758
      %762 = vset.pattern.permute.xlu0 0
      %763 = vperm.xlu0 %762, %v639
      %v764 = vpop.permute.xlu0 %763
      %767 = vset.pattern.permute.xlu0 0
      %768 = vperm.xlu0 %767, %v640
      %v769 = vpop.permute.xlu0 %768
      %v771 = vmul.f32 %v675, %v694
      %v772 = vmul.f32 %v676, %v699
      %v773 = vmul.f32 %v677, %v704
      %v774 = vmul.f32 %v678, %v709
      %v775 = vmul.f32 %v679, %v714
      %v776 = vmul.f32 %v680, %v719
      %v777 = vmul.f32 %v681, %v724
      %v778 = vmul.f32 %v682, %v729
      %v779 = vmul.f32 %v683, %v734
      %v780 = vmul.f32 %v684, %v739
      %v781 = vmul.f32 %v685, %v744
      %v782 = vmul.f32 %v686, %v749
      %v783 = vmul.f32 %v687, %v754
      %v784 = vmul.f32 %v688, %v759
      %v785 = vmul.f32 %v689, %v764
      %v786 = vmul.f32 %v690, %v769
      %v787 = vpack.c.bf16 %v772, %v771
      %v788 = vpack.c.bf16 %v774, %v773
      %v789 = vpack.c.bf16 %v776, %v775
      %v790 = vpack.c.bf16 %v778, %v777
      %v791 = vpack.c.bf16 %v780, %v779
      %v792 = vpack.c.bf16 %v782, %v781
      %v793 = vpack.c.bf16 %v784, %v783
      %v794 = vpack.c.bf16 %v786, %v785
      %v795 = vld [vmem:[%s2] sm:$0xf]
      %v796 = vld [vmem:[%s2 + $0x4] sm:$0xf]
      %v797 = vld [vmem:[%s2 + $0x8] sm:$0xf]
      %v798 = vld [vmem:[%s2 + $0xc] sm:$0xf]
      %v799 = vld [vmem:[%s2 + $0x10] sm:$0xf]
      %v800 = vld [vmem:[%s2 + $0x14] sm:$0xf]
      %v801 = vld [vmem:[%s2 + $0x18] sm:$0xf]
      %v802 = vld [vmem:[%s2 + $0x1c] sm:$0xf]
      %v803 = vld [vmem:[%s2 + $0x20] sm:$0xf]
      %v804 = vld [vmem:[%s2 + $0x24] sm:$0xf]
      %v805 = vld [vmem:[%s2 + $0x28] sm:$0xf]
      %v806 = vld [vmem:[%s2 + $0x2c] sm:$0xf]
      %v807 = vld [vmem:[%s2 + $0x30] sm:$0xf]
      %v808 = vld [vmem:[%s2 + $0x34] sm:$0xf]
      %v809 = vld [vmem:[%s2 + $0x38] sm:$0xf]
      %v810 = vld [vmem:[%s2 + $0x3c] sm:$0xf]
      %v827 = vunpack.c.l.b16 %v795
      %v828 = vunpack.c.l.b16 %v796
      %v829 = vunpack.c.l.b16 %v797
      %v830 = vunpack.c.l.b16 %v798
      %v831 = vunpack.c.l.b16 %v799
      %v832 = vunpack.c.l.b16 %v800
      %v833 = vunpack.c.l.b16 %v801
      %v834 = vunpack.c.l.b16 %v802
      %v835 = vunpack.c.l.b16 %v803
      %v836 = vunpack.c.l.b16 %v804
      %v837 = vunpack.c.l.b16 %v805
      %v838 = vunpack.c.l.b16 %v806
      %v839 = vunpack.c.l.b16 %v807
      %v840 = vunpack.c.l.b16 %v808
      %v841 = vunpack.c.l.b16 %v809
      %v842 = vunpack.c.l.b16 %v810
      %v843 = vpack.c.b16 %v828, %v827
      %v844 = vpack.c.b16 %v830, %v829
      %v845 = vpack.c.b16 %v832, %v831
      %v846 = vpack.c.b16 %v834, %v833
      %v847 = vpack.c.b16 %v836, %v835
      %v848 = vpack.c.b16 %v838, %v837
      %v849 = vpack.c.b16 %v840, %v839
      %v850 = vpack.c.b16 %v842, %v841
      %859 = vmatprep.subr.bf16.mxu0 0
      %860 = vmatpush1.bf16.msra.mxu0 %v794
      %861 = vmatprep.subr.bf16.mxu0 0
      %862 = vmatpush1.bf16.msra.mxu0 %v793
      %863 = vmatprep.subr.bf16.mxu0 0
      %864 = vmatpush1.bf16.msra.mxu0 %v792
      %865 = vmatprep.subr.bf16.mxu0 0
      %866 = vmatpush1.bf16.msra.mxu0 %v791
      %867 = vmatprep.subr.bf16.mxu0 0
      %868 = vmatpush1.bf16.msra.mxu0 %v790
      %869 = vmatprep.subr.bf16.mxu0 0
      %870 = vmatpush1.bf16.msra.mxu0 %v789
      %871 = vmatprep.subr.bf16.mxu0 0
      %872 = vmatpush1.bf16.msra.mxu0 %v788
      %873 = vmatprep.subr.bf16.mxu0 0
      %874 = vmatpush1.bf16.msra.mxu0 %v787
      %875 = vmatprep.subr.bf16.mxu0 0
      %876 = vmatpush2.bf16.msra.mxu0 0
      %877 = vmatprep.subr.bf16.mxu0 0
      %878 = vmatpush2.bf16.msra.mxu0 0
      %879 = vmatprep.subr.bf16.mxu0 0
      %880 = vmatpush2.bf16.msra.mxu0 0
      %881 = vmatprep.subr.bf16.mxu0 0
      %882 = vmatpush2.bf16.msra.mxu0 0
      %883 = vmatprep.subr.bf16.mxu0 0
      %884 = vmatpush2.bf16.msra.mxu0 0
      %885 = vmatprep.subr.bf16.mxu0 0
      %886 = vmatpush2.bf16.msra.mxu0 0
      %887 = vmatprep.subr.bf16.mxu0 0
      %888 = vmatpush2.bf16.msra.mxu0 0
      %889 = vmatprep.subr.bf16.mxu0 0
      %890 = vmatpush2.bf16.msra.mxu0 0
      %891 = vmatprep.mubr.bf16.mxu0 0
      %892 = vmatmul.mubr.bf16.gmra.mxu0 %v843
      %v893 = vpop.f32.mrf.mxu0
      %v894 = vadd.f32 0.0, %v893
      %v895 = vpop.f32.mrf.mxu0
      %v896 = vpop.f32.mrf.mxu0
      %v897 = vadd.f32 0.0, %v896
      %v898 = vpop.f32.mrf.mxu0
      %899 = vmatprep.mubr.bf16.mxu0 0
      %900 = vmatmul.mubr.bf16.gmra.mxu0 %v844
      %v901 = vpop.f32.mrf.mxu0
      %v902 = vadd.f32 0.0, %v901
      %v903 = vpop.f32.mrf.mxu0
      %v904 = vpop.f32.mrf.mxu0
      %v905 = vadd.f32 0.0, %v904
      %v906 = vpop.f32.mrf.mxu0
      %907 = vmatprep.mubr.bf16.mxu0 0
      %908 = vmatmul.mubr.bf16.gmra.mxu0 %v845
      %v909 = vpop.f32.mrf.mxu0
      %v910 = vadd.f32 0.0, %v909
      %v911 = vpop.f32.mrf.mxu0
      %v912 = vpop.f32.mrf.mxu0
      %v913 = vadd.f32 0.0, %v912
      %v914 = vpop.f32.mrf.mxu0
      %915 = vmatprep.mubr.bf16.mxu0 0
      %916 = vmatmul.mubr.bf16.gmra.mxu0 %v846
      %v917 = vpop.f32.mrf.mxu0
      %v918 = vadd.f32 0.0, %v917
      %v919 = vpop.f32.mrf.mxu0
      %v920 = vpop.f32.mrf.mxu0
      %v921 = vadd.f32 0.0, %v920
      %v922 = vpop.f32.mrf.mxu0
      %923 = vmatprep.mubr.bf16.mxu0 0
      %924 = vmatmul.mubr.bf16.gmra.mxu0 %v847
      %v925 = vpop.f32.mrf.mxu0
      %v926 = vadd.f32 0.0, %v925
      %v927 = vpop.f32.mrf.mxu0
      %v928 = vpop.f32.mrf.mxu0
      %v929 = vadd.f32 0.0, %v928
      %v930 = vpop.f32.mrf.mxu0
      %931 = vmatprep.mubr.bf16.mxu0 0
      %932 = vmatmul.mubr.bf16.gmra.mxu0 %v848
      %v933 = vpop.f32.mrf.mxu0
      %v934 = vadd.f32 0.0, %v933
      %v935 = vpop.f32.mrf.mxu0
      %v936 = vpop.f32.mrf.mxu0
      %v937 = vadd.f32 0.0, %v936
      %v938 = vpop.f32.mrf.mxu0
      %939 = vmatprep.mubr.bf16.mxu0 0
      %940 = vmatmul.mubr.bf16.gmra.mxu0 %v849
      %v941 = vpop.f32.mrf.mxu0
      %v942 = vadd.f32 0.0, %v941
      %v943 = vpop.f32.mrf.mxu0
      %v944 = vpop.f32.mrf.mxu0
      %v945 = vadd.f32 0.0, %v944
      %v946 = vpop.f32.mrf.mxu0
      %947 = vmatprep.mubr.bf16.mxu0 0
      %948 = vmatmul.mubr.bf16.gmra.mxu0 %v850
      %v949 = vpop.f32.mrf.mxu0
      %v950 = vadd.f32 0.0, %v949
      %v951 = vpop.f32.mrf.mxu0
      %v952 = vpop.f32.mrf.mxu0
      %v953 = vadd.f32 0.0, %v952
      %v954 = vpop.f32.mrf.mxu0
      %955 = vdwg.mxu0
      %956 = vset.pattern.permute.xlu0 7
      %957 = vperm.xlu0 %956, %v625
      %v958 = vpop.permute.xlu0 %957
      %960 = vset.pattern.permute.xlu0 7
      %961 = vperm.xlu0 %960, %v626
      %v962 = vpop.permute.xlu0 %961
      %964 = vset.pattern.permute.xlu0 7
      %965 = vperm.xlu0 %964, %v627
      %v966 = vpop.permute.xlu0 %965
      %968 = vset.pattern.permute.xlu0 7
      %969 = vperm.xlu0 %968, %v628
      %v970 = vpop.permute.xlu0 %969
      %972 = vset.pattern.permute.xlu0 7
      %973 = vperm.xlu0 %972, %v629
      %v974 = vpop.permute.xlu0 %973
      %976 = vset.pattern.permute.xlu0 7
      %977 = vperm.xlu0 %976, %v630
      %v978 = vpop.permute.xlu0 %977
      %980 = vset.pattern.permute.xlu0 7
      %981 = vperm.xlu0 %980, %v631
      %v982 = vpop.permute.xlu0 %981
      %984 = vset.pattern.permute.xlu0 7
      %985 = vperm.xlu0 %984, %v632
      %v986 = vpop.permute.xlu0 %985
      %988 = vset.pattern.permute.xlu0 7
      %989 = vperm.xlu0 %988, %v633
      %v990 = vpop.permute.xlu0 %989
      %992 = vset.pattern.permute.xlu0 7
      %993 = vperm.xlu0 %992, %v634
      %v994 = vpop.permute.xlu0 %993
      %996 = vset.pattern.permute.xlu0 7
      %997 = vperm.xlu0 %996, %v635
      %v998 = vpop.permute.xlu0 %997
      %1000 = vset.pattern.permute.xlu0 7
      %1001 = vperm.xlu0 %1000, %v636
      %v1002 = vpop.permute.xlu0 %1001
      %1004 = vset.pattern.permute.xlu0 7
      %1005 = vperm.xlu0 %1004, %v637
      %v1006 = vpop.permute.xlu0 %1005
      %1008 = vset.pattern.permute.xlu0 7
      %1009 = vperm.xlu0 %1008, %v638
      %v1010 = vpop.permute.xlu0 %1009
      %1012 = vset.pattern.permute.xlu0 7
      %1013 = vperm.xlu0 %1012, %v639
      %v1014 = vpop.permute.xlu0 %1013
      %1016 = vset.pattern.permute.xlu0 7
      %1017 = vperm.xlu0 %1016, %v640
      %v1018 = vpop.permute.xlu0 %1017
      %v1020 = vmul.f32 %v894, %v958
      %v1021 = vmul.f32 %v897, %v962
      %v1022 = vmul.f32 %v902, %v966
      %v1023 = vmul.f32 %v905, %v970
      %v1024 = vmul.f32 %v910, %v974
      %v1025 = vmul.f32 %v913, %v978
      %v1026 = vmul.f32 %v918, %v982
      %v1027 = vmul.f32 %v921, %v986
      %v1028 = vmul.f32 %v926, %v990
      %v1029 = vmul.f32 %v929, %v994
      %v1030 = vmul.f32 %v934, %v998
      %v1031 = vmul.f32 %v937, %v1002
      %v1032 = vmul.f32 %v942, %v1006
      %v1033 = vmul.f32 %v945, %v1010
      %v1034 = vmul.f32 %v950, %v1014
      %v1035 = vmul.f32 %v953, %v1018
      %v1036 = vld [vmem:[%s577] sm:$0x1]
      %v1038 = vlaneseq
      %v1039 = vshrl.u32 %v1038, 7
      %v1040 = vsub.s32 0, %v1039
      %v1041 = vrot.slane %v1036, %v1040
      %v1043 = vadd.f32 %v1020, %v1041
      %v1044 = vadd.f32 %v1021, %v1041
      %v1045 = vadd.f32 %v1022, %v1041
      %v1046 = vadd.f32 %v1023, %v1041
      %v1047 = vadd.f32 %v1024, %v1041
      %v1048 = vadd.f32 %v1025, %v1041
      %v1049 = vadd.f32 %v1026, %v1041
      %v1050 = vadd.f32 %v1027, %v1041
      %v1051 = vadd.f32 %v1028, %v1041
      %v1052 = vadd.f32 %v1029, %v1041
      %v1053 = vadd.f32 %v1030, %v1041
      %v1054 = vadd.f32 %v1031, %v1041
      %v1055 = vadd.f32 %v1032, %v1041
      %v1056 = vadd.f32 %v1033, %v1041
      %v1057 = vadd.f32 %v1034, %v1041
      %v1058 = vadd.f32 %v1035, %v1041
      %1060 = vset.pattern.permute.xlu0 0
      %1061 = vperm.xlu0 %1060, %v659
      %v1062 = vpop.permute.xlu0 %1061
      %1065 = vset.pattern.permute.xlu0 0
      %1066 = vperm.xlu0 %1065, %v660
      %v1067 = vpop.permute.xlu0 %1066
      %1070 = vset.pattern.permute.xlu0 0
      %1071 = vperm.xlu0 %1070, %v661
      %v1072 = vpop.permute.xlu0 %1071
      %1075 = vset.pattern.permute.xlu0 0
      %1076 = vperm.xlu0 %1075, %v662
      %v1077 = vpop.permute.xlu0 %1076
      %1080 = vset.pattern.permute.xlu0 0
      %1081 = vperm.xlu0 %1080, %v663
      %v1082 = vpop.permute.xlu0 %1081
      %1085 = vset.pattern.permute.xlu0 0
      %1086 = vperm.xlu0 %1085, %v664
      %v1087 = vpop.permute.xlu0 %1086
      %1090 = vset.pattern.permute.xlu0 0
      %1091 = vperm.xlu0 %1090, %v665
      %v1092 = vpop.permute.xlu0 %1091
      %1095 = vset.pattern.permute.xlu0 0
      %1096 = vperm.xlu0 %1095, %v666
      %v1097 = vpop.permute.xlu0 %1096
      %1100 = vset.pattern.permute.xlu0 0
      %1101 = vperm.xlu0 %1100, %v667
      %v1102 = vpop.permute.xlu0 %1101
      %1105 = vset.pattern.permute.xlu0 0
      %1106 = vperm.xlu0 %1105, %v668
      %v1107 = vpop.permute.xlu0 %1106
      %1110 = vset.pattern.permute.xlu0 0
      %1111 = vperm.xlu0 %1110, %v669
      %v1112 = vpop.permute.xlu0 %1111
      %1115 = vset.pattern.permute.xlu0 0
      %1116 = vperm.xlu0 %1115, %v670
      %v1117 = vpop.permute.xlu0 %1116
      %1120 = vset.pattern.permute.xlu0 0
      %1121 = vperm.xlu0 %1120, %v671
      %v1122 = vpop.permute.xlu0 %1121
      %1125 = vset.pattern.permute.xlu0 0
      %1126 = vperm.xlu0 %1125, %v672
      %v1127 = vpop.permute.xlu0 %1126
      %1130 = vset.pattern.permute.xlu0 0
      %1131 = vperm.xlu0 %1130, %v673
      %v1132 = vpop.permute.xlu0 %1131
      %1135 = vset.pattern.permute.xlu0 0
      %1136 = vperm.xlu0 %1135, %v674
      %v1137 = vpop.permute.xlu0 %1136
      %v1139 = vadd.f32 %v1043, %v1062
      %v1140 = vadd.f32 %v1044, %v1067
      %v1141 = vadd.f32 %v1045, %v1072
      %v1142 = vadd.f32 %v1046, %v1077
      %v1143 = vadd.f32 %v1047, %v1082
      %v1144 = vadd.f32 %v1048, %v1087
      %v1145 = vadd.f32 %v1049, %v1092
      %v1146 = vadd.f32 %v1050, %v1097
      %v1147 = vadd.f32 %v1051, %v1102
      %v1148 = vadd.f32 %v1052, %v1107
      %v1149 = vadd.f32 %v1053, %v1112
      %v1150 = vadd.f32 %v1054, %v1117
      %v1151 = vadd.f32 %v1055, %v1122
      %v1152 = vadd.f32 %v1056, %v1127
      %v1153 = vadd.f32 %v1057, %v1132
      %v1154 = vadd.f32 %v1058, %v1137
      %vm1155 = vcmp.ge.f32.partialorder %v1139, 0.0
      %vm1156 = vcmp.ge.f32.partialorder %v1140, 0.0
      %vm1157 = vcmp.ge.f32.partialorder %v1141, 0.0
      %vm1158 = vcmp.ge.f32.partialorder %v1142, 0.0
      %vm1159 = vcmp.ge.f32.partialorder %v1143, 0.0
      %vm1160 = vcmp.ge.f32.partialorder %v1144, 0.0
      %vm1161 = vcmp.ge.f32.partialorder %v1145, 0.0
      %vm1162 = vcmp.ge.f32.partialorder %v1146, 0.0
      %vm1163 = vcmp.ge.f32.partialorder %v1147, 0.0
      %vm1164 = vcmp.ge.f32.partialorder %v1148, 0.0
      %vm1165 = vcmp.ge.f32.partialorder %v1149, 0.0
      %vm1166 = vcmp.ge.f32.partialorder %v1150, 0.0
      %vm1167 = vcmp.ge.f32.partialorder %v1151, 0.0
      %vm1168 = vcmp.ge.f32.partialorder %v1152, 0.0
      %vm1169 = vcmp.ge.f32.partialorder %v1153, 0.0
      %vm1170 = vcmp.ge.f32.partialorder %v1154, 0.0
      %v1171 = vmul.f32 %v1139, 0.2
      %v1172 = vmul.f32 %v1140, 0.2
      %v1173 = vmul.f32 %v1141, 0.2
      %v1174 = vmul.f32 %v1142, 0.2
      %v1175 = vmul.f32 %v1143, 0.2
      %v1176 = vmul.f32 %v1144, 0.2
      %v1177 = vmul.f32 %v1145, 0.2
      %v1178 = vmul.f32 %v1146, 0.2
      %v1179 = vmul.f32 %v1147, 0.2
      %v1180 = vmul.f32 %v1148, 0.2
      %v1181 = vmul.f32 %v1149, 0.2
      %v1182 = vmul.f32 %v1150, 0.2
      %v1183 = vmul.f32 %v1151, 0.2
      %v1184 = vmul.f32 %v1152, 0.2
      %v1185 = vmul.f32 %v1153, 0.2
      %v1186 = vmul.f32 %v1154, 0.2
      %v1187 = vsel %vm1155, %v1139, %v1171
      %v1188 = vsel %vm1156, %v1140, %v1172
      %v1189 = vsel %vm1157, %v1141, %v1173
      %v1190 = vsel %vm1158, %v1142, %v1174
      %v1191 = vsel %vm1159, %v1143, %v1175
      %v1192 = vsel %vm1160, %v1144, %v1176
      %v1193 = vsel %vm1161, %v1145, %v1177
      %v1194 = vsel %vm1162, %v1146, %v1178
      %v1195 = vsel %vm1163, %v1147, %v1179
      %v1196 = vsel %vm1164, %v1148, %v1180
      %v1197 = vsel %vm1165, %v1149, %v1181
      %v1198 = vsel %vm1166, %v1150, %v1182
      %v1199 = vsel %vm1167, %v1151, %v1183
      %v1200 = vsel %vm1168, %v1152, %v1184
      %v1201 = vsel %vm1169, %v1153, %v1185
      %v1202 = vsel %vm1170, %v1154, %v1186
      %v1203 = vpack.c.bf16 %v1188, %v1187
      %v1204 = vpack.c.bf16 %v1190, %v1189
      %v1205 = vpack.c.bf16 %v1192, %v1191
      %v1206 = vpack.c.bf16 %v1194, %v1193
      %v1207 = vpack.c.bf16 %v1196, %v1195
      %v1208 = vpack.c.bf16 %v1198, %v1197
      %v1209 = vpack.c.bf16 %v1200, %v1199
      %v1210 = vpack.c.bf16 %v1202, %v1201
      %v1211 = vunpack.c.l.bf16 %v1203
      %v1212 = vunpack.c.h.bf16 %v1203
      %v1213 = vunpack.c.l.bf16 %v1204
      %v1214 = vunpack.c.h.bf16 %v1204
      %v1215 = vunpack.c.l.bf16 %v1205
      %v1216 = vunpack.c.h.bf16 %v1205
      %v1217 = vunpack.c.l.bf16 %v1206
      %v1218 = vunpack.c.h.bf16 %v1206
      %v1219 = vunpack.c.l.bf16 %v1207
      %v1220 = vunpack.c.h.bf16 %v1207
      %v1221 = vunpack.c.l.bf16 %v1208
      %v1222 = vunpack.c.h.bf16 %v1208
      %v1223 = vunpack.c.l.bf16 %v1209
      %v1224 = vunpack.c.h.bf16 %v1209
      %v1225 = vunpack.c.l.bf16 %v1210
      %v1226 = vunpack.c.h.bf16 %v1210
      %1227 = vset.pattern.permute.xlu0 14
      %1228 = vperm.xlu0 %1227, %v625
      %v1229 = vpop.permute.xlu0 %1228
      %1231 = vset.pattern.permute.xlu0 14
      %1232 = vperm.xlu0 %1231, %v626
      %v1233 = vpop.permute.xlu0 %1232
      %1235 = vset.pattern.permute.xlu0 14
      %1236 = vperm.xlu0 %1235, %v627
      %v1237 = vpop.permute.xlu0 %1236
      %1239 = vset.pattern.permute.xlu0 14
      %1240 = vperm.xlu0 %1239, %v628
      %v1241 = vpop.permute.xlu0 %1240
      %1243 = vset.pattern.permute.xlu0 14
      %1244 = vperm.xlu0 %1243, %v629
      %v1245 = vpop.permute.xlu0 %1244
      %1247 = vset.pattern.permute.xlu0 14
      %1248 = vperm.xlu0 %1247, %v630
      %v1249 = vpop.permute.xlu0 %1248
      %1251 = vset.pattern.permute.xlu0 14
      %1252 = vperm.xlu0 %1251, %v631
      %v1253 = vpop.permute.xlu0 %1252
      %1255 = vset.pattern.permute.xlu0 14
      %1256 = vperm.xlu0 %1255, %v632
      %v1257 = vpop.permute.xlu0 %1256
      %1259 = vset.pattern.permute.xlu0 14
      %1260 = vperm.xlu0 %1259, %v633
      %v1261 = vpop.permute.xlu0 %1260
      %1263 = vset.pattern.permute.xlu0 14
      %1264 = vperm.xlu0 %1263, %v634
      %v1265 = vpop.permute.xlu0 %1264
      %1267 = vset.pattern.permute.xlu0 14
      %1268 = vperm.xlu0 %1267, %v635
      %v1269 = vpop.permute.xlu0 %1268
      %1271 = vset.pattern.permute.xlu0 14
      %1272 = vperm.xlu0 %1271, %v636
      %v1273 = vpop.permute.xlu0 %1272
      %1275 = vset.pattern.permute.xlu0 14
      %1276 = vperm.xlu0 %1275, %v637
      %v1277 = vpop.permute.xlu0 %1276
      %1279 = vset.pattern.permute.xlu0 14
      %1280 = vperm.xlu0 %1279, %v638
      %v1281 = vpop.permute.xlu0 %1280
      %1283 = vset.pattern.permute.xlu0 14
      %1284 = vperm.xlu0 %1283, %v639
      %v1285 = vpop.permute.xlu0 %1284
      %1287 = vset.pattern.permute.xlu0 14
      %1288 = vperm.xlu0 %1287, %v640
      %v1289 = vpop.permute.xlu0 %1288
      %v1291 = vmul.f32 %v1211, %v1229
      %v1292 = vmul.f32 %v1212, %v1233
      %v1293 = vmul.f32 %v1213, %v1237
      %v1294 = vmul.f32 %v1214, %v1241
      %v1295 = vmul.f32 %v1215, %v1245
      %v1296 = vmul.f32 %v1216, %v1249
      %v1297 = vmul.f32 %v1217, %v1253
      %v1298 = vmul.f32 %v1218, %v1257
      %v1299 = vmul.f32 %v1219, %v1261
      %v1300 = vmul.f32 %v1220, %v1265
      %v1301 = vmul.f32 %v1221, %v1269
      %v1302 = vmul.f32 %v1222, %v1273
      %v1303 = vmul.f32 %v1223, %v1277
      %v1304 = vmul.f32 %v1224, %v1281
      %v1305 = vmul.f32 %v1225, %v1285
      %v1306 = vmul.f32 %v1226, %v1289
      %v1307 = vpack.c.bf16 %v1292, %v1291
      %v1308 = vpack.c.bf16 %v1294, %v1293
      %v1309 = vpack.c.bf16 %v1296, %v1295
      %v1310 = vpack.c.bf16 %v1298, %v1297
      %v1311 = vpack.c.bf16 %v1300, %v1299
      %v1312 = vpack.c.bf16 %v1302, %v1301
      %v1313 = vpack.c.bf16 %v1304, %v1303
      %v1314 = vpack.c.bf16 %v1306, %v1305
      %v1315 = vld [vmem:[%s3] sm:$0xf]
      %1316 = vset.pattern.permute.xlu0 7
      %1317 = vperm.xlu0 %1316, %v659
      %v1318 = vpop.permute.xlu0 %1317
      %1320 = vmatprep.subr.bf16.mxu0 0
      %1321 = vmatpush1.bf16.msra.mxu0 %v1314
      %1322 = vmatprep.subr.bf16.mxu0 0
      %1323 = vmatpush1.bf16.msra.mxu0 %v1313
      %1324 = vmatprep.subr.bf16.mxu0 0
      %1325 = vmatpush1.bf16.msra.mxu0 %v1312
      %1326 = vmatprep.subr.bf16.mxu0 0
      %1327 = vmatpush1.bf16.msra.mxu0 %v1311
      %1328 = vmatprep.subr.bf16.mxu0 0
      %1329 = vmatpush1.bf16.msra.mxu0 %v1310
      %1330 = vmatprep.subr.bf16.mxu0 0
      %1331 = vmatpush1.bf16.msra.mxu0 %v1309
      %1332 = vmatprep.subr.bf16.mxu0 0
      %1333 = vmatpush1.bf16.msra.mxu0 %v1308
      %1334 = vmatprep.subr.bf16.mxu0 0
      %1335 = vmatpush1.bf16.msra.mxu0 %v1307
      %1336 = vmatprep.subr.bf16.mxu0 0
      %1337 = vmatpush2.bf16.msra.mxu0 0
      %1338 = vmatprep.subr.bf16.mxu0 0
      %1339 = vmatpush2.bf16.msra.mxu0 0
      %1340 = vmatprep.subr.bf16.mxu0 0
      %1341 = vmatpush2.bf16.msra.mxu0 0
      %1342 = vmatprep.subr.bf16.mxu0 0
      %1343 = vmatpush2.bf16.msra.mxu0 0
      %1344 = vmatprep.subr.bf16.mxu0 0
      %1345 = vmatpush2.bf16.msra.mxu0 0
      %1346 = vmatprep.subr.bf16.mxu0 0
      %1347 = vmatpush2.bf16.msra.mxu0 0
      %1348 = vmatprep.subr.bf16.mxu0 0
      %1349 = vmatpush2.bf16.msra.mxu0 0
      %1350 = vmatprep.subr.bf16.mxu0 0
      %1351 = vmatpush2.bf16.msra.mxu0 0
      %1352 = vmatprep.mubr.bf16.mxu0 0
      %1353 = vmatmul.mubr.bf16.gmra.mxu0 %v1315
      %v1354 = vpop.f32.mrf.mxu0
      %v1355 = vadd.f32 %v1318, %v1354
      %v1356 = vpop.f32.mrf.mxu0
      %v1357 = vpop.f32.mrf.mxu0
      %v1358 = vpop.f32.mrf.mxu0
      %1359 = vdwg.mxu0
      %v1360 = vld [vmem:[%s12] sm:$0xf]
      %v1361 = vld [vmem:[%s12 + $0x4] sm:$0xf]
      %1362 = vset.pattern.permute.xlu0 1
      %1363 = vperm.xlu0 %1362, %v625
      %v1364 = vpop.permute.xlu0 %1363
      %1366 = vset.pattern.permute.xlu0 1
      %1367 = vperm.xlu0 %1366, %v626
      %v1368 = vpop.permute.xlu0 %1367
      %1370 = vset.pattern.permute.xlu0 1
      %1371 = vperm.xlu0 %1370, %v627
      %v1372 = vpop.permute.xlu0 %1371
      %1374 = vset.pattern.permute.xlu0 1
      %1375 = vperm.xlu0 %1374, %v628
      %v1376 = vpop.permute.xlu0 %1375
      %1378 = vset.pattern.permute.xlu0 1
      %1379 = vperm.xlu0 %1378, %v629
      %v1380 = vpop.permute.xlu0 %1379
      %1382 = vset.pattern.permute.xlu0 1
      %1383 = vperm.xlu0 %1382, %v630
      %v1384 = vpop.permute.xlu0 %1383
      %1386 = vset.pattern.permute.xlu0 1
      %1387 = vperm.xlu0 %1386, %v631
      %v1388 = vpop.permute.xlu0 %1387
      %1390 = vset.pattern.permute.xlu0 1
      %1391 = vperm.xlu0 %1390, %v632
      %v1392 = vpop.permute.xlu0 %1391
      %1394 = vset.pattern.permute.xlu0 1
      %1395 = vperm.xlu0 %1394, %v633
      %v1396 = vpop.permute.xlu0 %1395
      %1398 = vset.pattern.permute.xlu0 1
      %1399 = vperm.xlu0 %1398, %v634
      %v1400 = vpop.permute.xlu0 %1399
      %1402 = vset.pattern.permute.xlu0 1
      %1403 = vperm.xlu0 %1402, %v635
      %v1404 = vpop.permute.xlu0 %1403
      %1406 = vset.pattern.permute.xlu0 1
      %1407 = vperm.xlu0 %1406, %v636
      %v1408 = vpop.permute.xlu0 %1407
      %1410 = vset.pattern.permute.xlu0 1
      %1411 = vperm.xlu0 %1410, %v637
      %v1412 = vpop.permute.xlu0 %1411
      %1414 = vset.pattern.permute.xlu0 1
      %1415 = vperm.xlu0 %1414, %v638
      %v1416 = vpop.permute.xlu0 %1415
      %1418 = vset.pattern.permute.xlu0 1
      %1419 = vperm.xlu0 %1418, %v639
      %v1420 = vpop.permute.xlu0 %1419
      %1422 = vset.pattern.permute.xlu0 1
      %1423 = vperm.xlu0 %1422, %v640
      %v1424 = vpop.permute.xlu0 %1423
      %v1426 = vmul.f32 %v1211, %v1364
      %v1427 = vmul.f32 %v1212, %v1368
      %v1428 = vmul.f32 %v1213, %v1372
      %v1429 = vmul.f32 %v1214, %v1376
      %v1430 = vmul.f32 %v1215, %v1380
      %v1431 = vmul.f32 %v1216, %v1384
      %v1432 = vmul.f32 %v1217, %v1388
      %v1433 = vmul.f32 %v1218, %v1392
      %v1434 = vmul.f32 %v1219, %v1396
      %v1435 = vmul.f32 %v1220, %v1400
      %v1436 = vmul.f32 %v1221, %v1404
      %v1437 = vmul.f32 %v1222, %v1408
      %v1438 = vmul.f32 %v1223, %v1412
      %v1439 = vmul.f32 %v1224, %v1416
      %v1440 = vmul.f32 %v1225, %v1420
      %v1441 = vmul.f32 %v1226, %v1424
      %v1442 = vpack.c.bf16 %v1427, %v1426
      %v1443 = vpack.c.bf16 %v1429, %v1428
      %v1444 = vpack.c.bf16 %v1431, %v1430
      %v1445 = vpack.c.bf16 %v1433, %v1432
      %v1446 = vpack.c.bf16 %v1435, %v1434
      %v1447 = vpack.c.bf16 %v1437, %v1436
      %v1448 = vpack.c.bf16 %v1439, %v1438
      %v1449 = vpack.c.bf16 %v1441, %v1440
      %s1450 = scalar_lea.vmem %s2, 64
      %v1451 = vld [vmem:[%s1450] sm:$0xf]
      %v1452 = vld [vmem:[%s1450 + $0x4] sm:$0xf]
      %v1453 = vld [vmem:[%s1450 + $0x8] sm:$0xf]
      %v1454 = vld [vmem:[%s1450 + $0xc] sm:$0xf]
      %v1455 = vld [vmem:[%s1450 + $0x10] sm:$0xf]
      %v1456 = vld [vmem:[%s1450 + $0x14] sm:$0xf]
      %v1457 = vld [vmem:[%s1450 + $0x18] sm:$0xf]
      %v1458 = vld [vmem:[%s1450 + $0x1c] sm:$0xf]
      %v1459 = vld [vmem:[%s1450 + $0x20] sm:$0xf]
      %v1460 = vld [vmem:[%s1450 + $0x24] sm:$0xf]
      %v1461 = vld [vmem:[%s1450 + $0x28] sm:$0xf]
      %v1462 = vld [vmem:[%s1450 + $0x2c] sm:$0xf]
      %v1463 = vld [vmem:[%s1450 + $0x30] sm:$0xf]
      %v1464 = vld [vmem:[%s1450 + $0x34] sm:$0xf]
      %v1465 = vld [vmem:[%s1450 + $0x38] sm:$0xf]
      %v1466 = vld [vmem:[%s1450 + $0x3c] sm:$0xf]
      %v1483 = vunpack.c.l.b16 %v1451
      %v1484 = vunpack.c.l.b16 %v1452
      %v1485 = vunpack.c.l.b16 %v1453
      %v1486 = vunpack.c.l.b16 %v1454
      %v1487 = vunpack.c.l.b16 %v1455
      %v1488 = vunpack.c.l.b16 %v1456
      %v1489 = vunpack.c.l.b16 %v1457
      %v1490 = vunpack.c.l.b16 %v1458
      %v1491 = vunpack.c.l.b16 %v1459
      %v1492 = vunpack.c.l.b16 %v1460
      %v1493 = vunpack.c.l.b16 %v1461
      %v1494 = vunpack.c.l.b16 %v1462
      %v1495 = vunpack.c.l.b16 %v1463
      %v1496 = vunpack.c.l.b16 %v1464
      %v1497 = vunpack.c.l.b16 %v1465
      %v1498 = vunpack.c.l.b16 %v1466
      %v1499 = vpack.c.b16 %v1484, %v1483
      %v1500 = vpack.c.b16 %v1486, %v1485
      %v1501 = vpack.c.b16 %v1488, %v1487
      %v1502 = vpack.c.b16 %v1490, %v1489
      %v1503 = vpack.c.b16 %v1492, %v1491
      %v1504 = vpack.c.b16 %v1494, %v1493
      %v1505 = vpack.c.b16 %v1496, %v1495
      %v1506 = vpack.c.b16 %v1498, %v1497
      %1515 = vmatprep.subr.bf16.mxu0 0
      %1516 = vmatpush1.bf16.msra.mxu0 %v1449
      %1517 = vmatprep.subr.bf16.mxu0 0
      %1518 = vmatpush1.bf16.msra.mxu0 %v1448
      %1519 = vmatprep.subr.bf16.mxu0 0
      %1520 = vmatpush1.bf16.msra.mxu0 %v1447
      %1521 = vmatprep.subr.bf16.mxu0 0
      %1522 = vmatpush1.bf16.msra.mxu0 %v1446
      %1523 = vmatprep.subr.bf16.mxu0 0
      %1524 = vmatpush1.bf16.msra.mxu0 %v1445
      %1525 = vmatprep.subr.bf16.mxu0 0
      %1526 = vmatpush1.bf16.msra.mxu0 %v1444
      %1527 = vmatprep.subr.bf16.mxu0 0
      %1528 = vmatpush1.bf16.msra.mxu0 %v1443
      %1529 = vmatprep.subr.bf16.mxu0 0
      %1530 = vmatpush1.bf16.msra.mxu0 %v1442
      %1531 = vmatprep.subr.bf16.mxu0 0
      %1532 = vmatpush2.bf16.msra.mxu0 0
      %1533 = vmatprep.subr.bf16.mxu0 0
      %1534 = vmatpush2.bf16.msra.mxu0 0
      %1535 = vmatprep.subr.bf16.mxu0 0
      %1536 = vmatpush2.bf16.msra.mxu0 0
      %1537 = vmatprep.subr.bf16.mxu0 0
      %1538 = vmatpush2.bf16.msra.mxu0 0
      %1539 = vmatprep.subr.bf16.mxu0 0
      %1540 = vmatpush2.bf16.msra.mxu0 0
      %1541 = vmatprep.subr.bf16.mxu0 0
      %1542 = vmatpush2.bf16.msra.mxu0 0
      %1543 = vmatprep.subr.bf16.mxu0 0
      %1544 = vmatpush2.bf16.msra.mxu0 0
      %1545 = vmatprep.subr.bf16.mxu0 0
      %1546 = vmatpush2.bf16.msra.mxu0 0
      %1547 = vmatprep.mubr.bf16.mxu0 0
      %1548 = vmatmul.mubr.bf16.gmra.mxu0 %v1499
      %v1549 = vpop.f32.mrf.mxu0
      %v1550 = vadd.f32 0.0, %v1549
      %v1551 = vpop.f32.mrf.mxu0
      %v1552 = vpop.f32.mrf.mxu0
      %v1553 = vadd.f32 0.0, %v1552
      %v1554 = vpop.f32.mrf.mxu0
      %1555 = vmatprep.mubr.bf16.mxu0 0
      %1556 = vmatmul.mubr.bf16.gmra.mxu0 %v1500
      %v1557 = vpop.f32.mrf.mxu0
      %v1558 = vadd.f32 0.0, %v1557
      %v1559 = vpop.f32.mrf.mxu0
      %v1560 = vpop.f32.mrf.mxu0
      %v1561 = vadd.f32 0.0, %v1560
      %v1562 = vpop.f32.mrf.mxu0
      %1563 = vmatprep.mubr.bf16.mxu0 0
      %1564 = vmatmul.mubr.bf16.gmra.mxu0 %v1501
      %v1565 = vpop.f32.mrf.mxu0
      %v1566 = vadd.f32 0.0, %v1565
      %v1567 = vpop.f32.mrf.mxu0
      %v1568 = vpop.f32.mrf.mxu0
      %v1569 = vadd.f32 0.0, %v1568
      %v1570 = vpop.f32.mrf.mxu0
      %1571 = vmatprep.mubr.bf16.mxu0 0
      %1572 = vmatmul.mubr.bf16.gmra.mxu0 %v1502
      %v1573 = vpop.f32.mrf.mxu0
      %v1574 = vadd.f32 0.0, %v1573
      %v1575 = vpop.f32.mrf.mxu0
      %v1576 = vpop.f32.mrf.mxu0
      %v1577 = vadd.f32 0.0, %v1576
      %v1578 = vpop.f32.mrf.mxu0
      %1579 = vmatprep.mubr.bf16.mxu0 0
      %1580 = vmatmul.mubr.bf16.gmra.mxu0 %v1503
      %v1581 = vpop.f32.mrf.mxu0
      %v1582 = vadd.f32 0.0, %v1581
      %v1583 = vpop.f32.mrf.mxu0
      %v1584 = vpop.f32.mrf.mxu0
      %v1585 = vadd.f32 0.0, %v1584
      %v1586 = vpop.f32.mrf.mxu0
      %1587 = vmatprep.mubr.bf16.mxu0 0
      %1588 = vmatmul.mubr.bf16.gmra.mxu0 %v1504
      %v1589 = vpop.f32.mrf.mxu0
      %v1590 = vadd.f32 0.0, %v1589
      %v1591 = vpop.f32.mrf.mxu0
      %v1592 = vpop.f32.mrf.mxu0
      %v1593 = vadd.f32 0.0, %v1592
      %v1594 = vpop.f32.mrf.mxu0
      %1595 = vmatprep.mubr.bf16.mxu0 0
      %1596 = vmatmul.mubr.bf16.gmra.mxu0 %v1505
      %v1597 = vpop.f32.mrf.mxu0
      %v1598 = vadd.f32 0.0, %v1597
      %v1599 = vpop.f32.mrf.mxu0
      %v1600 = vpop.f32.mrf.mxu0
      %v1601 = vadd.f32 0.0, %v1600
      %v1602 = vpop.f32.mrf.mxu0
      %1603 = vmatprep.mubr.bf16.mxu0 0
      %1604 = vmatmul.mubr.bf16.gmra.mxu0 %v1506
      %v1605 = vpop.f32.mrf.mxu0
      %v1606 = vadd.f32 0.0, %v1605
      %v1607 = vpop.f32.mrf.mxu0
      %v1608 = vpop.f32.mrf.mxu0
      %v1609 = vadd.f32 0.0, %v1608
      %v1610 = vpop.f32.mrf.mxu0
      %1611 = vdwg.mxu0
      %1612 = vset.pattern.permute.xlu0 8
      %1613 = vperm.xlu0 %1612, %v625
      %v1614 = vpop.permute.xlu0 %1613
      %1616 = vset.pattern.permute.xlu0 8
      %1617 = vperm.xlu0 %1616, %v626
      %v1618 = vpop.permute.xlu0 %1617
      %1620 = vset.pattern.permute.xlu0 8
      %1621 = vperm.xlu0 %1620, %v627
      %v1622 = vpop.permute.xlu0 %1621
      %1624 = vset.pattern.permute.xlu0 8
      %1625 = vperm.xlu0 %1624, %v628
      %v1626 = vpop.permute.xlu0 %1625
      %1628 = vset.pattern.permute.xlu0 8
      %1629 = vperm.xlu0 %1628, %v629
      %v1630 = vpop.permute.xlu0 %1629
      %1632 = vset.pattern.permute.xlu0 8
      %1633 = vperm.xlu0 %1632, %v630
      %v1634 = vpop.permute.xlu0 %1633
      %1636 = vset.pattern.permute.xlu0 8
      %1637 = vperm.xlu0 %1636, %v631
      %v1638 = vpop.permute.xlu0 %1637
      %1640 = vset.pattern.permute.xlu0 8
      %1641 = vperm.xlu0 %1640, %v632
      %v1642 = vpop.permute.xlu0 %1641
      %1644 = vset.pattern.permute.xlu0 8
      %1645 = vperm.xlu0 %1644, %v633
      %v1646 = vpop.permute.xlu0 %1645
      %1648 = vset.pattern.permute.xlu0 8
      %1649 = vperm.xlu0 %1648, %v634
      %v1650 = vpop.permute.xlu0 %1649
      %1652 = vset.pattern.permute.xlu0 8
      %1653 = vperm.xlu0 %1652, %v635
      %v1654 = vpop.permute.xlu0 %1653
      %1656 = vset.pattern.permute.xlu0 8
      %1657 = vperm.xlu0 %1656, %v636
      %v1658 = vpop.permute.xlu0 %1657
      %1660 = vset.pattern.permute.xlu0 8
      %1661 = vperm.xlu0 %1660, %v637
      %v1662 = vpop.permute.xlu0 %1661
      %1664 = vset.pattern.permute.xlu0 8
      %1665 = vperm.xlu0 %1664, %v638
      %v1666 = vpop.permute.xlu0 %1665
      %1668 = vset.pattern.permute.xlu0 8
      %1669 = vperm.xlu0 %1668, %v639
      %v1670 = vpop.permute.xlu0 %1669
      %1672 = vset.pattern.permute.xlu0 8
      %1673 = vperm.xlu0 %1672, %v640
      %v1674 = vpop.permute.xlu0 %1673
      %v1676 = vmul.f32 %v1550, %v1614
      %v1677 = vmul.f32 %v1553, %v1618
      %v1678 = vmul.f32 %v1558, %v1622
      %v1679 = vmul.f32 %v1561, %v1626
      %v1680 = vmul.f32 %v1566, %v1630
      %v1681 = vmul.f32 %v1569, %v1634
      %v1682 = vmul.f32 %v1574, %v1638
      %v1683 = vmul.f32 %v1577, %v1642
      %v1684 = vmul.f32 %v1582, %v1646
      %v1685 = vmul.f32 %v1585, %v1650
      %v1686 = vmul.f32 %v1590, %v1654
      %v1687 = vmul.f32 %v1593, %v1658
      %v1688 = vmul.f32 %v1598, %v1662
      %v1689 = vmul.f32 %v1601, %v1666
      %v1690 = vmul.f32 %v1606, %v1670
      %v1691 = vmul.f32 %v1609, %v1674
      %v1692 = vpack.c.bf16 %v1677, %v1676
      %v1693 = vpack.c.bf16 %v1679, %v1678
      %v1694 = vpack.c.bf16 %v1681, %v1680
      %v1695 = vpack.c.bf16 %v1683, %v1682
      %v1696 = vpack.c.bf16 %v1685, %v1684
      %v1697 = vpack.c.bf16 %v1687, %v1686
      %v1698 = vpack.c.bf16 %v1689, %v1688
      %v1699 = vpack.c.bf16 %v1691, %v1690
      %v1700 = vld [vmem:[%s580] sm:$0x1]
      %v1702 = vlaneseq
      %v1703 = vshrl.u32 %v1702, 7
      %v1704 = vsub.s32 0, %v1703
      %v1705 = vrot.slane %v1700, %v1704
      %v1709 = vunpack.c.l.b16 %v1360
      %v1710 = vunpack.c.l.b16 %v1361
      %v1711 = vpack.c.b16 %v1710, %v1709
      %vm1713 = vcmask 130048
      %v1715 = vsel %vm1713, %v1692, 0
      %v1718 = vsel %vm1713, %v1693, 0
      %v1721 = vsel %vm1713, %v1694, 0
      %v1724 = vsel %vm1713, %v1695, 0
      %v1727 = vsel %vm1713, %v1696, 0
      %v1730 = vsel %vm1713, %v1697, 0
      %v1733 = vsel %vm1713, %v1698, 0
      %v1736 = vsel %vm1713, %v1699, 0
      %1738 = vmatprep.subr.bf16.mxu0 0
      %1739 = vmatpush1.bf16.msra.mxu0 0
      %1740 = vmatprep.subr.bf16.mxu0 0
      %1741 = vmatpush1.bf16.msra.mxu0 0
      %1742 = vmatprep.subr.bf16.mxu0 0
      %1743 = vmatpush1.bf16.msra.mxu0 0
      %1744 = vmatprep.subr.bf16.mxu0 0
      %1745 = vmatpush1.bf16.msra.mxu0 0
      %1746 = vmatprep.subr.bf16.mxu0 0
      %1747 = vmatpush1.bf16.msra.mxu0 0
      %1748 = vmatprep.subr.bf16.mxu0 0
      %1749 = vmatpush1.bf16.msra.mxu0 0
      %1750 = vmatprep.subr.bf16.mxu0 0
      %1751 = vmatpush1.bf16.msra.mxu0 0
      %1752 = vmatprep.subr.bf16.mxu0 0
      %1753 = vmatpush1.bf16.msra.mxu0 %v1711
      %1754 = vmatprep.subr.bf16.mxu0 0
      %1755 = vmatpush2.bf16.msra.mxu0 0
      %1756 = vmatprep.subr.bf16.mxu0 0
      %1757 = vmatpush2.bf16.msra.mxu0 0
      %1758 = vmatprep.subr.bf16.mxu0 0
      %1759 = vmatpush2.bf16.msra.mxu0 0
      %1760 = vmatprep.subr.bf16.mxu0 0
      %1761 = vmatpush2.bf16.msra.mxu0 0
      %1762 = vmatprep.subr.bf16.mxu0 0
      %1763 = vmatpush2.bf16.msra.mxu0 0
      %1764 = vmatprep.subr.bf16.mxu0 0
      %1765 = vmatpush2.bf16.msra.mxu0 0
      %1766 = vmatprep.subr.bf16.mxu0 0
      %1767 = vmatpush2.bf16.msra.mxu0 0
      %1768 = vmatprep.subr.bf16.mxu0 0
      %1769 = vmatpush2.bf16.msra.mxu0 0
      %1770 = vmatprep.mubr.bf16.mxu0 0
      %1771 = vmatmul.mubr.bf16.gmra.mxu0 %v1715
      %v1772 = vpop.f32.mrf.mxu0
      %v1773 = vadd.f32 %v1705, %v1772
      %v1774 = vpop.f32.mrf.mxu0
      %v1775 = vpop.f32.mrf.mxu0
      %v1776 = vadd.f32 %v1705, %v1775
      %v1777 = vpop.f32.mrf.mxu0
      %1778 = vmatprep.mubr.bf16.mxu0 0
      %1779 = vmatmul.mubr.bf16.gmra.mxu0 %v1718
      %v1780 = vpop.f32.mrf.mxu0
      %v1781 = vadd.f32 %v1705, %v1780
      %v1782 = vpop.f32.mrf.mxu0
      %v1783 = vpop.f32.mrf.mxu0
      %v1784 = vadd.f32 %v1705, %v1783
      %v1785 = vpop.f32.mrf.mxu0
      %1786 = vmatprep.mubr.bf16.mxu0 0
      %1787 = vmatmul.mubr.bf16.gmra.mxu0 %v1721
      %v1788 = vpop.f32.mrf.mxu0
      %v1789 = vadd.f32 %v1705, %v1788
      %v1790 = vpop.f32.mrf.mxu0
      %v1791 = vpop.f32.mrf.mxu0
      %v1792 = vadd.f32 %v1705, %v1791
      %v1793 = vpop.f32.mrf.mxu0
      %1794 = vmatprep.mubr.bf16.mxu0 0
      %1795 = vmatmul.mubr.bf16.gmra.mxu0 %v1724
      %v1796 = vpop.f32.mrf.mxu0
      %v1797 = vadd.f32 %v1705, %v1796
      %v1798 = vpop.f32.mrf.mxu0
      %v1799 = vpop.f32.mrf.mxu0
      %v1800 = vadd.f32 %v1705, %v1799
      %v1801 = vpop.f32.mrf.mxu0
      %1802 = vmatprep.mubr.bf16.mxu0 0
      %1803 = vmatmul.mubr.bf16.gmra.mxu0 %v1727
      %v1804 = vpop.f32.mrf.mxu0
      %v1805 = vadd.f32 %v1705, %v1804
      %v1806 = vpop.f32.mrf.mxu0
      %v1807 = vpop.f32.mrf.mxu0
      %v1808 = vadd.f32 %v1705, %v1807
      %v1809 = vpop.f32.mrf.mxu0
      %1810 = vmatprep.mubr.bf16.mxu0 0
      %1811 = vmatmul.mubr.bf16.gmra.mxu0 %v1730
      %v1812 = vpop.f32.mrf.mxu0
      %v1813 = vadd.f32 %v1705, %v1812
      %v1814 = vpop.f32.mrf.mxu0
      %v1815 = vpop.f32.mrf.mxu0
      %v1816 = vadd.f32 %v1705, %v1815
      %v1817 = vpop.f32.mrf.mxu0
      %1818 = vmatprep.mubr.bf16.mxu0 0
      %1819 = vmatmul.mubr.bf16.gmra.mxu0 %v1733
      %v1820 = vpop.f32.mrf.mxu0
      %v1821 = vadd.f32 %v1705, %v1820
      %v1822 = vpop.f32.mrf.mxu0
      %v1823 = vpop.f32.mrf.mxu0
      %v1824 = vadd.f32 %v1705, %v1823
      %v1825 = vpop.f32.mrf.mxu0
      %1826 = vmatprep.mubr.bf16.mxu0 0
      %1827 = vmatmul.mubr.bf16.gmra.mxu0 %v1736
      %v1828 = vpop.f32.mrf.mxu0
      %v1829 = vadd.f32 %v1705, %v1828
      %v1830 = vpop.f32.mrf.mxu0
      %v1831 = vpop.f32.mrf.mxu0
      %v1832 = vadd.f32 %v1705, %v1831
      %v1833 = vpop.f32.mrf.mxu0
      %1834 = vdwg.mxu0
      %1835 = vset.pattern.permute.xlu0 1
      %1836 = vperm.xlu0 %1835, %v659
      %v1837 = vpop.permute.xlu0 %1836
      %1839 = vset.pattern.permute.xlu0 1
      %1840 = vperm.xlu0 %1839, %v660
      %v1841 = vpop.permute.xlu0 %1840
      %1843 = vset.pattern.permute.xlu0 1
      %1844 = vperm.xlu0 %1843, %v661
      %v1845 = vpop.permute.xlu0 %1844
      %1847 = vset.pattern.permute.xlu0 1
      %1848 = vperm.xlu0 %1847, %v662
      %v1849 = vpop.permute.xlu0 %1848
      %1851 = vset.pattern.permute.xlu0 1
      %1852 = vperm.xlu0 %1851, %v663
      %v1853 = vpop.permute.xlu0 %1852
      %1855 = vset.pattern.permute.xlu0 1
      %1856 = vperm.xlu0 %1855, %v664
      %v1857 = vpop.permute.xlu0 %1856
      %1859 = vset.pattern.permute.xlu0 1
      %1860 = vperm.xlu0 %1859, %v665
      %v1861 = vpop.permute.xlu0 %1860
      %1863 = vset.pattern.permute.xlu0 1
      %1864 = vperm.xlu0 %1863, %v666
      %v1865 = vpop.permute.xlu0 %1864
      %1867 = vset.pattern.permute.xlu0 1
      %1868 = vperm.xlu0 %1867, %v667
      %v1869 = vpop.permute.xlu0 %1868
      %1871 = vset.pattern.permute.xlu0 1
      %1872 = vperm.xlu0 %1871, %v668
      %v1873 = vpop.permute.xlu0 %1872
      %1875 = vset.pattern.permute.xlu0 1
      %1876 = vperm.xlu0 %1875, %v669
      %v1877 = vpop.permute.xlu0 %1876
      %1879 = vset.pattern.permute.xlu0 1
      %1880 = vperm.xlu0 %1879, %v670
      %v1881 = vpop.permute.xlu0 %1880
      %1883 = vset.pattern.permute.xlu0 1
      %1884 = vperm.xlu0 %1883, %v671
      %v1885 = vpop.permute.xlu0 %1884
      %1887 = vset.pattern.permute.xlu0 1
      %1888 = vperm.xlu0 %1887, %v672
      %v1889 = vpop.permute.xlu0 %1888
      %1891 = vset.pattern.permute.xlu0 1
      %1892 = vperm.xlu0 %1891, %v673
      %v1893 = vpop.permute.xlu0 %1892
      %1895 = vset.pattern.permute.xlu0 1
      %1896 = vperm.xlu0 %1895, %v674
      %v1897 = vpop.permute.xlu0 %1896
      %v1899 = vadd.f32 %v1773, %v1837
      %v1900 = vadd.f32 %v1776, %v1841
      %v1901 = vadd.f32 %v1781, %v1845
      %v1902 = vadd.f32 %v1784, %v1849
      %v1903 = vadd.f32 %v1789, %v1853
      %v1904 = vadd.f32 %v1792, %v1857
      %v1905 = vadd.f32 %v1797, %v1861
      %v1906 = vadd.f32 %v1800, %v1865
      %v1907 = vadd.f32 %v1805, %v1869
      %v1908 = vadd.f32 %v1808, %v1873
      %v1909 = vadd.f32 %v1813, %v1877
      %v1910 = vadd.f32 %v1816, %v1881
      %v1911 = vadd.f32 %v1821, %v1885
      %v1912 = vadd.f32 %v1824, %v1889
      %v1913 = vadd.f32 %v1829, %v1893
      %v1914 = vadd.f32 %v1832, %v1897
      %vm1915 = vcmp.ge.f32.partialorder %v1899, 0.0
      %vm1916 = vcmp.ge.f32.partialorder %v1900, 0.0
      %vm1917 = vcmp.ge.f32.partialorder %v1901, 0.0
      %vm1918 = vcmp.ge.f32.partialorder %v1902, 0.0
      %vm1919 = vcmp.ge.f32.partialorder %v1903, 0.0
      %vm1920 = vcmp.ge.f32.partialorder %v1904, 0.0
      %vm1921 = vcmp.ge.f32.partialorder %v1905, 0.0
      %vm1922 = vcmp.ge.f32.partialorder %v1906, 0.0
      %vm1923 = vcmp.ge.f32.partialorder %v1907, 0.0
      %vm1924 = vcmp.ge.f32.partialorder %v1908, 0.0
      %vm1925 = vcmp.ge.f32.partialorder %v1909, 0.0
      %vm1926 = vcmp.ge.f32.partialorder %v1910, 0.0
      %vm1927 = vcmp.ge.f32.partialorder %v1911, 0.0
      %vm1928 = vcmp.ge.f32.partialorder %v1912, 0.0
      %vm1929 = vcmp.ge.f32.partialorder %v1913, 0.0
      %vm1930 = vcmp.ge.f32.partialorder %v1914, 0.0
      %v1931 = vmul.f32 %v1899, 0.2
      %v1932 = vmul.f32 %v1900, 0.2
      %v1933 = vmul.f32 %v1901, 0.2
      %v1934 = vmul.f32 %v1902, 0.2
      %v1935 = vmul.f32 %v1903, 0.2
      %v1936 = vmul.f32 %v1904, 0.2
      %v1937 = vmul.f32 %v1905, 0.2
      %v1938 = vmul.f32 %v1906, 0.2
      %v1939 = vmul.f32 %v1907, 0.2
      %v1940 = vmul.f32 %v1908, 0.2
      %v1941 = vmul.f32 %v1909, 0.2
      %v1942 = vmul.f32 %v1910, 0.2
      %v1943 = vmul.f32 %v1911, 0.2
      %v1944 = vmul.f32 %v1912, 0.2
      %v1945 = vmul.f32 %v1913, 0.2
      %v1946 = vmul.f32 %v1914, 0.2
      %v1947 = vsel %vm1915, %v1899, %v1931
      %v1948 = vsel %vm1916, %v1900, %v1932
      %v1949 = vsel %vm1917, %v1901, %v1933
      %v1950 = vsel %vm1918, %v1902, %v1934
      %v1951 = vsel %vm1919, %v1903, %v1935
      %v1952 = vsel %vm1920, %v1904, %v1936
      %v1953 = vsel %vm1921, %v1905, %v1937
      %v1954 = vsel %vm1922, %v1906, %v1938
      %v1955 = vsel %vm1923, %v1907, %v1939
      %v1956 = vsel %vm1924, %v1908, %v1940
      %v1957 = vsel %vm1925, %v1909, %v1941
      %v1958 = vsel %vm1926, %v1910, %v1942
      %v1959 = vsel %vm1927, %v1911, %v1943
      %v1960 = vsel %vm1928, %v1912, %v1944
      %v1961 = vsel %vm1929, %v1913, %v1945
      %v1962 = vsel %vm1930, %v1914, %v1946
      %v1963 = vpack.c.bf16 %v1948, %v1947
      %v1964 = vpack.c.bf16 %v1950, %v1949
      %v1965 = vpack.c.bf16 %v1952, %v1951
      %v1966 = vpack.c.bf16 %v1954, %v1953
      %v1967 = vpack.c.bf16 %v1956, %v1955
      %v1968 = vpack.c.bf16 %v1958, %v1957
      %v1969 = vpack.c.bf16 %v1960, %v1959
      %v1970 = vpack.c.bf16 %v1962, %v1961
      %v1971 = vunpack.c.l.bf16 %v1963
      %v1972 = vunpack.c.h.bf16 %v1963
      %v1973 = vunpack.c.l.bf16 %v1964
      %v1974 = vunpack.c.h.bf16 %v1964
      %v1975 = vunpack.c.l.bf16 %v1965
      %v1976 = vunpack.c.h.bf16 %v1965
      %v1977 = vunpack.c.l.bf16 %v1966
      %v1978 = vunpack.c.h.bf16 %v1966
      %v1979 = vunpack.c.l.bf16 %v1967
      %v1980 = vunpack.c.h.bf16 %v1967
      %v1981 = vunpack.c.l.bf16 %v1968
      %v1982 = vunpack.c.h.bf16 %v1968
      %v1983 = vunpack.c.l.bf16 %v1969
      %v1984 = vunpack.c.h.bf16 %v1969
      %v1985 = vunpack.c.l.bf16 %v1970
      %v1986 = vunpack.c.h.bf16 %v1970
      %1987 = vset.pattern.permute.xlu0 2
      %1988 = vperm.xlu0 %1987, %v625
      %v1989 = vpop.permute.xlu0 %1988
      %1991 = vset.pattern.permute.xlu0 2
      %1992 = vperm.xlu0 %1991, %v626
      %v1993 = vpop.permute.xlu0 %1992
      %1995 = vset.pattern.permute.xlu0 2
      %1996 = vperm.xlu0 %1995, %v627
      %v1997 = vpop.permute.xlu0 %1996
      %1999 = vset.pattern.permute.xlu0 2
      %2000 = vperm.xlu0 %1999, %v628
      %v2001 = vpop.permute.xlu0 %2000
      %2003 = vset.pattern.permute.xlu0 2
      %2004 = vperm.xlu0 %2003, %v629
      %v2005 = vpop.permute.xlu0 %2004
      %2007 = vset.pattern.permute.xlu0 2
      %2008 = vperm.xlu0 %2007, %v630
      %v2009 = vpop.permute.xlu0 %2008
      %2011 = vset.pattern.permute.xlu0 2
      %2012 = vperm.xlu0 %2011, %v631
      %v2013 = vpop.permute.xlu0 %2012
      %2015 = vset.pattern.permute.xlu0 2
      %2016 = vperm.xlu0 %2015, %v632
      %v2017 = vpop.permute.xlu0 %2016
      %2019 = vset.pattern.permute.xlu0 2
      %2020 = vperm.xlu0 %2019, %v633
      %v2021 = vpop.permute.xlu0 %2020
      %2023 = vset.pattern.permute.xlu0 2
      %2024 = vperm.xlu0 %2023, %v634
      %v2025 = vpop.permute.xlu0 %2024
      %2027 = vset.pattern.permute.xlu0 2
      %2028 = vperm.xlu0 %2027, %v635
      %v2029 = vpop.permute.xlu0 %2028
      %2031 = vset.pattern.permute.xlu0 2
      %2032 = vperm.xlu0 %2031, %v636
      %v2033 = vpop.permute.xlu0 %2032
      %2035 = vset.pattern.permute.xlu0 2
      %2036 = vperm.xlu0 %2035, %v637
      %v2037 = vpop.permute.xlu0 %2036
      %2039 = vset.pattern.permute.xlu0 2
      %2040 = vperm.xlu0 %2039, %v638
      %v2041 = vpop.permute.xlu0 %2040
      %2043 = vset.pattern.permute.xlu0 2
      %2044 = vperm.xlu0 %2043, %v639
      %v2045 = vpop.permute.xlu0 %2044
      %2047 = vset.pattern.permute.xlu0 2
      %2048 = vperm.xlu0 %2047, %v640
      %v2049 = vpop.permute.xlu0 %2048
      %v2051 = vmul.f32 %v1971, %v1989
      %v2052 = vmul.f32 %v1972, %v1993
      %v2053 = vmul.f32 %v1973, %v1997
      %v2054 = vmul.f32 %v1974, %v2001
      %v2055 = vmul.f32 %v1975, %v2005
      %v2056 = vmul.f32 %v1976, %v2009
      %v2057 = vmul.f32 %v1977, %v2013
      %v2058 = vmul.f32 %v1978, %v2017
      %v2059 = vmul.f32 %v1979, %v2021
      %v2060 = vmul.f32 %v1980, %v2025
      %v2061 = vmul.f32 %v1981, %v2029
      %v2062 = vmul.f32 %v1982, %v2033
      %v2063 = vmul.f32 %v1983, %v2037
      %v2064 = vmul.f32 %v1984, %v2041
      %v2065 = vmul.f32 %v1985, %v2045
      %v2066 = vmul.f32 %v1986, %v2049
      %v2067 = vpack.c.bf16 %v2052, %v2051
      %v2068 = vpack.c.bf16 %v2054, %v2053
      %v2069 = vpack.c.bf16 %v2056, %v2055
      %v2070 = vpack.c.bf16 %v2058, %v2057
      %v2071 = vpack.c.bf16 %v2060, %v2059
      %v2072 = vpack.c.bf16 %v2062, %v2061
      %v2073 = vpack.c.bf16 %v2064, %v2063
      %v2074 = vpack.c.bf16 %v2066, %v2065
      %s2075 = scalar_lea.vmem %s2, 128
      %v2076 = vld [vmem:[%s2075] sm:$0xf]
      %v2077 = vld [vmem:[%s2075 + $0x4] sm:$0xf]
      %v2078 = vld [vmem:[%s2075 + $0x8] sm:$0xf]
      %v2079 = vld [vmem:[%s2075 + $0xc] sm:$0xf]
      %v2080 = vld [vmem:[%s2075 + $0x10] sm:$0xf]
      %v2081 = vld [vmem:[%s2075 + $0x14] sm:$0xf]
      %v2082 = vld [vmem:[%s2075 + $0x18] sm:$0xf]
      %v2083 = vld [vmem:[%s2075 + $0x1c] sm:$0xf]
      %v2084 = vld [vmem:[%s2075 + $0x20] sm:$0xf]
      %v2085 = vld [vmem:[%s2075 + $0x24] sm:$0xf]
      %v2086 = vld [vmem:[%s2075 + $0x28] sm:$0xf]
      %v2087 = vld [vmem:[%s2075 + $0x2c] sm:$0xf]
      %v2088 = vld [vmem:[%s2075 + $0x30] sm:$0xf]
      %v2089 = vld [vmem:[%s2075 + $0x34] sm:$0xf]
      %v2090 = vld [vmem:[%s2075 + $0x38] sm:$0xf]
      %v2091 = vld [vmem:[%s2075 + $0x3c] sm:$0xf]
      %v2108 = vunpack.c.l.b16 %v2076
      %v2109 = vunpack.c.l.b16 %v2077
      %v2110 = vunpack.c.l.b16 %v2078
      %v2111 = vunpack.c.l.b16 %v2079
      %v2112 = vunpack.c.l.b16 %v2080
      %v2113 = vunpack.c.l.b16 %v2081
      %v2114 = vunpack.c.l.b16 %v2082
      %v2115 = vunpack.c.l.b16 %v2083
      %v2116 = vunpack.c.l.b16 %v2084
      %v2117 = vunpack.c.l.b16 %v2085
      %v2118 = vunpack.c.l.b16 %v2086
      %v2119 = vunpack.c.l.b16 %v2087
      %v2120 = vunpack.c.l.b16 %v2088
      %v2121 = vunpack.c.l.b16 %v2089
      %v2122 = vunpack.c.l.b16 %v2090
      %v2123 = vunpack.c.l.b16 %v2091
      %v2124 = vpack.c.b16 %v2109, %v2108
      %v2125 = vpack.c.b16 %v2111, %v2110
      %v2126 = vpack.c.b16 %v2113, %v2112
      %v2127 = vpack.c.b16 %v2115, %v2114
      %v2128 = vpack.c.b16 %v2117, %v2116
      %v2129 = vpack.c.b16 %v2119, %v2118
      %v2130 = vpack.c.b16 %v2121, %v2120
      %v2131 = vpack.c.b16 %v2123, %v2122
      %2140 = vmatprep.subr.bf16.mxu0 0
      %2141 = vmatpush1.bf16.msra.mxu0 %v2074
      %2142 = vmatprep.subr.bf16.mxu0 0
      %2143 = vmatpush1.bf16.msra.mxu0 %v2073
      %2144 = vmatprep.subr.bf16.mxu0 0
      %2145 = vmatpush1.bf16.msra.mxu0 %v2072
      %2146 = vmatprep.subr.bf16.mxu0 0
      %2147 = vmatpush1.bf16.msra.mxu0 %v2071
      %2148 = vmatprep.subr.bf16.mxu0 0
      %2149 = vmatpush1.bf16.msra.mxu0 %v2070
      %2150 = vmatprep.subr.bf16.mxu0 0
      %2151 = vmatpush1.bf16.msra.mxu0 %v2069
      %2152 = vmatprep.subr.bf16.mxu0 0
      %2153 = vmatpush1.bf16.msra.mxu0 %v2068
      %2154 = vmatprep.subr.bf16.mxu0 0
      %2155 = vmatpush1.bf16.msra.mxu0 %v2067
      %2156 = vmatprep.subr.bf16.mxu0 0
      %2157 = vmatpush2.bf16.msra.mxu0 0
      %2158 = vmatprep.subr.bf16.mxu0 0
      %2159 = vmatpush2.bf16.msra.mxu0 0
      %2160 = vmatprep.subr.bf16.mxu0 0
      %2161 = vmatpush2.bf16.msra.mxu0 0
      %2162 = vmatprep.subr.bf16.mxu0 0
      %2163 = vmatpush2.bf16.msra.mxu0 0
      %2164 = vmatprep.subr.bf16.mxu0 0
      %2165 = vmatpush2.bf16.msra.mxu0 0
      %2166 = vmatprep.subr.bf16.mxu0 0
      %2167 = vmatpush2.bf16.msra.mxu0 0
      %2168 = vmatprep.subr.bf16.mxu0 0
      %2169 = vmatpush2.bf16.msra.mxu0 0
      %2170 = vmatprep.subr.bf16.mxu0 0
      %2171 = vmatpush2.bf16.msra.mxu0 0
      %2172 = vmatprep.mubr.bf16.mxu0 0
      %2173 = vmatmul.mubr.bf16.gmra.mxu0 %v2124
      %v2174 = vpop.f32.mrf.mxu0
      %v2175 = vadd.f32 0.0, %v2174
      %v2176 = vpop.f32.mrf.mxu0
      %v2177 = vpop.f32.mrf.mxu0
      %v2178 = vadd.f32 0.0, %v2177
      %v2179 = vpop.f32.mrf.mxu0
      %2180 = vmatprep.mubr.bf16.mxu0 0
      %2181 = vmatmul.mubr.bf16.gmra.mxu0 %v2125
      %v2182 = vpop.f32.mrf.mxu0
      %v2183 = vadd.f32 0.0, %v2182
      %v2184 = vpop.f32.mrf.mxu0
      %v2185 = vpop.f32.mrf.mxu0
      %v2186 = vadd.f32 0.0, %v2185
      %v2187 = vpop.f32.mrf.mxu0
      %2188 = vmatprep.mubr.bf16.mxu0 0
      %2189 = vmatmul.mubr.bf16.gmra.mxu0 %v2126
      %v2190 = vpop.f32.mrf.mxu0
      %v2191 = vadd.f32 0.0, %v2190
      %v2192 = vpop.f32.mrf.mxu0
      %v2193 = vpop.f32.mrf.mxu0
      %v2194 = vadd.f32 0.0, %v2193
      %v2195 = vpop.f32.mrf.mxu0
      %2196 = vmatprep.mubr.bf16.mxu0 0
      %2197 = vmatmul.mubr.bf16.gmra.mxu0 %v2127
      %v2198 = vpop.f32.mrf.mxu0
      %v2199 = vadd.f32 0.0, %v2198
      %v2200 = vpop.f32.mrf.mxu0
      %v2201 = vpop.f32.mrf.mxu0
      %v2202 = vadd.f32 0.0, %v2201
      %v2203 = vpop.f32.mrf.mxu0
      %2204 = vmatprep.mubr.bf16.mxu0 0
      %2205 = vmatmul.mubr.bf16.gmra.mxu0 %v2128
      %v2206 = vpop.f32.mrf.mxu0
      %v2207 = vadd.f32 0.0, %v2206
      %v2208 = vpop.f32.mrf.mxu0
      %v2209 = vpop.f32.mrf.mxu0
      %v2210 = vadd.f32 0.0, %v2209
      %v2211 = vpop.f32.mrf.mxu0
      %2212 = vmatprep.mubr.bf16.mxu0 0
      %2213 = vmatmul.mubr.bf16.gmra.mxu0 %v2129
      %v2214 = vpop.f32.mrf.mxu0
      %v2215 = vadd.f32 0.0, %v2214
      %v2216 = vpop.f32.mrf.mxu0
      %v2217 = vpop.f32.mrf.mxu0
      %v2218 = vadd.f32 0.0, %v2217
      %v2219 = vpop.f32.mrf.mxu0
      %2220 = vmatprep.mubr.bf16.mxu0 0
      %2221 = vmatmul.mubr.bf16.gmra.mxu0 %v2130
      %v2222 = vpop.f32.mrf.mxu0
      %v2223 = vadd.f32 0.0, %v2222
      %v2224 = vpop.f32.mrf.mxu0
      %v2225 = vpop.f32.mrf.mxu0
      %v2226 = vadd.f32 0.0, %v2225
      %v2227 = vpop.f32.mrf.mxu0
      %2228 = vmatprep.mubr.bf16.mxu0 0
      %2229 = vmatmul.mubr.bf16.gmra.mxu0 %v2131
      %v2230 = vpop.f32.mrf.mxu0
      %v2231 = vadd.f32 0.0, %v2230
      %v2232 = vpop.f32.mrf.mxu0
      %v2233 = vpop.f32.mrf.mxu0
      %v2234 = vadd.f32 0.0, %v2233
      %v2235 = vpop.f32.mrf.mxu0
      %2236 = vdwg.mxu0
      %2237 = vset.pattern.permute.xlu0 9
      %2238 = vperm.xlu0 %2237, %v625
      %v2239 = vpop.permute.xlu0 %2238
      %2241 = vset.pattern.permute.xlu0 9
      %2242 = vperm.xlu0 %2241, %v626
      %v2243 = vpop.permute.xlu0 %2242
      %2245 = vset.pattern.permute.xlu0 9
      %2246 = vperm.xlu0 %2245, %v627
      %v2247 = vpop.permute.xlu0 %2246
      %2249 = vset.pattern.permute.xlu0 9
      %2250 = vperm.xlu0 %2249, %v628
      %v2251 = vpop.permute.xlu0 %2250
      %2253 = vset.pattern.permute.xlu0 9
      %2254 = vperm.xlu0 %2253, %v629
      %v2255 = vpop.permute.xlu0 %2254
      %2257 = vset.pattern.permute.xlu0 9
      %2258 = vperm.xlu0 %2257, %v630
      %v2259 = vpop.permute.xlu0 %2258
      %2261 = vset.pattern.permute.xlu0 9
      %2262 = vperm.xlu0 %2261, %v631
      %v2263 = vpop.permute.xlu0 %2262
      %2265 = vset.pattern.permute.xlu0 9
      %2266 = vperm.xlu0 %2265, %v632
      %v2267 = vpop.permute.xlu0 %2266
      %2269 = vset.pattern.permute.xlu0 9
      %2270 = vperm.xlu0 %2269, %v633
      %v2271 = vpop.permute.xlu0 %2270
      %2273 = vset.pattern.permute.xlu0 9
      %2274 = vperm.xlu0 %2273, %v634
      %v2275 = vpop.permute.xlu0 %2274
      %2277 = vset.pattern.permute.xlu0 9
      %2278 = vperm.xlu0 %2277, %v635
      %v2279 = vpop.permute.xlu0 %2278
      %2281 = vset.pattern.permute.xlu0 9
      %2282 = vperm.xlu0 %2281, %v636
      %v2283 = vpop.permute.xlu0 %2282
      %2285 = vset.pattern.permute.xlu0 9
      %2286 = vperm.xlu0 %2285, %v637
      %v2287 = vpop.permute.xlu0 %2286
      %2289 = vset.pattern.permute.xlu0 9
      %2290 = vperm.xlu0 %2289, %v638
      %v2291 = vpop.permute.xlu0 %2290
      %2293 = vset.pattern.permute.xlu0 9
      %2294 = vperm.xlu0 %2293, %v639
      %v2295 = vpop.permute.xlu0 %2294
      %2297 = vset.pattern.permute.xlu0 9
      %2298 = vperm.xlu0 %2297, %v640
      %v2299 = vpop.permute.xlu0 %2298
      %v2301 = vmul.f32 %v2175, %v2239
      %v2302 = vmul.f32 %v2178, %v2243
      %v2303 = vmul.f32 %v2183, %v2247
      %v2304 = vmul.f32 %v2186, %v2251
      %v2305 = vmul.f32 %v2191, %v2255
      %v2306 = vmul.f32 %v2194, %v2259
      %v2307 = vmul.f32 %v2199, %v2263
      %v2308 = vmul.f32 %v2202, %v2267
      %v2309 = vmul.f32 %v2207, %v2271
      %v2310 = vmul.f32 %v2210, %v2275
      %v2311 = vmul.f32 %v2215, %v2279
      %v2312 = vmul.f32 %v2218, %v2283
      %v2313 = vmul.f32 %v2223, %v2287
      %v2314 = vmul.f32 %v2226, %v2291
      %v2315 = vmul.f32 %v2231, %v2295
      %v2316 = vmul.f32 %v2234, %v2299
      %v2317 = vld [vmem:[%s583] sm:$0x1]
      %v2319 = vlaneseq
      %v2320 = vshrl.u32 %v2319, 7
      %v2321 = vsub.s32 0, %v2320
      %v2322 = vrot.slane %v2317, %v2321
      %v2324 = vadd.f32 %v2301, %v2322
      %v2325 = vadd.f32 %v2302, %v2322
      %v2326 = vadd.f32 %v2303, %v2322
      %v2327 = vadd.f32 %v2304, %v2322
      %v2328 = vadd.f32 %v2305, %v2322
      %v2329 = vadd.f32 %v2306, %v2322
      %v2330 = vadd.f32 %v2307, %v2322
      %v2331 = vadd.f32 %v2308, %v2322
      %v2332 = vadd.f32 %v2309, %v2322
      %v2333 = vadd.f32 %v2310, %v2322
      %v2334 = vadd.f32 %v2311, %v2322
      %v2335 = vadd.f32 %v2312, %v2322
      %v2336 = vadd.f32 %v2313, %v2322
      %v2337 = vadd.f32 %v2314, %v2322
      %v2338 = vadd.f32 %v2315, %v2322
      %v2339 = vadd.f32 %v2316, %v2322
      %2340 = vset.pattern.permute.xlu0 2
      %2341 = vperm.xlu0 %2340, %v659
      %v2342 = vpop.permute.xlu0 %2341
      %2344 = vset.pattern.permute.xlu0 2
      %2345 = vperm.xlu0 %2344, %v660
      %v2346 = vpop.permute.xlu0 %2345
      %2348 = vset.pattern.permute.xlu0 2
      %2349 = vperm.xlu0 %2348, %v661
      %v2350 = vpop.permute.xlu0 %2349
      %2352 = vset.pattern.permute.xlu0 2
      %2353 = vperm.xlu0 %2352, %v662
      %v2354 = vpop.permute.xlu0 %2353
      %2356 = vset.pattern.permute.xlu0 2
      %2357 = vperm.xlu0 %2356, %v663
      %v2358 = vpop.permute.xlu0 %2357
      %2360 = vset.pattern.permute.xlu0 2
      %2361 = vperm.xlu0 %2360, %v664
      %v2362 = vpop.permute.xlu0 %2361
      %2364 = vset.pattern.permute.xlu0 2
      %2365 = vperm.xlu0 %2364, %v665
      %v2366 = vpop.permute.xlu0 %2365
      %2368 = vset.pattern.permute.xlu0 2
      %2369 = vperm.xlu0 %2368, %v666
      %v2370 = vpop.permute.xlu0 %2369
      %2372 = vset.pattern.permute.xlu0 2
      %2373 = vperm.xlu0 %2372, %v667
      %v2374 = vpop.permute.xlu0 %2373
      %2376 = vset.pattern.permute.xlu0 2
      %2377 = vperm.xlu0 %2376, %v668
      %v2378 = vpop.permute.xlu0 %2377
      %2380 = vset.pattern.permute.xlu0 2
      %2381 = vperm.xlu0 %2380, %v669
      %v2382 = vpop.permute.xlu0 %2381
      %2384 = vset.pattern.permute.xlu0 2
      %2385 = vperm.xlu0 %2384, %v670
      %v2386 = vpop.permute.xlu0 %2385
      %2388 = vset.pattern.permute.xlu0 2
      %2389 = vperm.xlu0 %2388, %v671
      %v2390 = vpop.permute.xlu0 %2389
      %2392 = vset.pattern.permute.xlu0 2
      %2393 = vperm.xlu0 %2392, %v672
      %v2394 = vpop.permute.xlu0 %2393
      %2396 = vset.pattern.permute.xlu0 2
      %2397 = vperm.xlu0 %2396, %v673
      %v2398 = vpop.permute.xlu0 %2397
      %2400 = vset.pattern.permute.xlu0 2
      %2401 = vperm.xlu0 %2400, %v674
      %v2402 = vpop.permute.xlu0 %2401
      %v2404 = vadd.f32 %v2324, %v2342
      %v2405 = vadd.f32 %v2325, %v2346
      %v2406 = vadd.f32 %v2326, %v2350
      %v2407 = vadd.f32 %v2327, %v2354
      %v2408 = vadd.f32 %v2328, %v2358
      %v2409 = vadd.f32 %v2329, %v2362
      %v2410 = vadd.f32 %v2330, %v2366
      %v2411 = vadd.f32 %v2331, %v2370
      %v2412 = vadd.f32 %v2332, %v2374
      %v2413 = vadd.f32 %v2333, %v2378
      %v2414 = vadd.f32 %v2334, %v2382
      %v2415 = vadd.f32 %v2335, %v2386
      %v2416 = vadd.f32 %v2336, %v2390
      %v2417 = vadd.f32 %v2337, %v2394
      %v2418 = vadd.f32 %v2338, %v2398
      %v2419 = vadd.f32 %v2339, %v2402
      %vm2420 = vcmp.ge.f32.partialorder %v2404, 0.0
      %vm2421 = vcmp.ge.f32.partialorder %v2405, 0.0
      %vm2422 = vcmp.ge.f32.partialorder %v2406, 0.0
      %vm2423 = vcmp.ge.f32.partialorder %v2407, 0.0
      %vm2424 = vcmp.ge.f32.partialorder %v2408, 0.0
      %vm2425 = vcmp.ge.f32.partialorder %v2409, 0.0
      %vm2426 = vcmp.ge.f32.partialorder %v2410, 0.0
      %vm2427 = vcmp.ge.f32.partialorder %v2411, 0.0
      %vm2428 = vcmp.ge.f32.partialorder %v2412, 0.0
      %vm2429 = vcmp.ge.f32.partialorder %v2413, 0.0
      %vm2430 = vcmp.ge.f32.partialorder %v2414, 0.0
      %vm2431 = vcmp.ge.f32.partialorder %v2415, 0.0
      %vm2432 = vcmp.ge.f32.partialorder %v2416, 0.0
      %vm2433 = vcmp.ge.f32.partialorder %v2417, 0.0
      %vm2434 = vcmp.ge.f32.partialorder %v2418, 0.0
      %vm2435 = vcmp.ge.f32.partialorder %v2419, 0.0
      %v2436 = vmul.f32 %v2404, 0.2
      %v2437 = vmul.f32 %v2405, 0.2
      %v2438 = vmul.f32 %v2406, 0.2
      %v2439 = vmul.f32 %v2407, 0.2
      %v2440 = vmul.f32 %v2408, 0.2
      %v2441 = vmul.f32 %v2409, 0.2
      %v2442 = vmul.f32 %v2410, 0.2
      %v2443 = vmul.f32 %v2411, 0.2
      %v2444 = vmul.f32 %v2412, 0.2
      %v2445 = vmul.f32 %v2413, 0.2
      %v2446 = vmul.f32 %v2414, 0.2
      %v2447 = vmul.f32 %v2415, 0.2
      %v2448 = vmul.f32 %v2416, 0.2
      %v2449 = vmul.f32 %v2417, 0.2
      %v2450 = vmul.f32 %v2418, 0.2
      %v2451 = vmul.f32 %v2419, 0.2
      %v2452 = vsel %vm2420, %v2404, %v2436
      %v2453 = vsel %vm2421, %v2405, %v2437
      %v2454 = vsel %vm2422, %v2406, %v2438
      %v2455 = vsel %vm2423, %v2407, %v2439
      %v2456 = vsel %vm2424, %v2408, %v2440
      %v2457 = vsel %vm2425, %v2409, %v2441
      %v2458 = vsel %vm2426, %v2410, %v2442
      %v2459 = vsel %vm2427, %v2411, %v2443
      %v2460 = vsel %vm2428, %v2412, %v2444
      %v2461 = vsel %vm2429, %v2413, %v2445
      %v2462 = vsel %vm2430, %v2414, %v2446
      %v2463 = vsel %vm2431, %v2415, %v2447
      %v2464 = vsel %vm2432, %v2416, %v2448
      %v2465 = vsel %vm2433, %v2417, %v2449
      %v2466 = vsel %vm2434, %v2418, %v2450
      %v2467 = vsel %vm2435, %v2419, %v2451
      %v2468 = vpack.c.bf16 %v2453, %v2452
      %v2469 = vpack.c.bf16 %v2455, %v2454
      %v2470 = vpack.c.bf16 %v2457, %v2456
      %v2471 = vpack.c.bf16 %v2459, %v2458
      %v2472 = vpack.c.bf16 %v2461, %v2460
      %v2473 = vpack.c.bf16 %v2463, %v2462
      %v2474 = vpack.c.bf16 %v2465, %v2464
      %v2475 = vpack.c.bf16 %v2467, %v2466
      %v2476 = vpack.c.bf16 %v1355, %v1355
      %v2478 = vsel %vm1713, %v2476, 0
      %2480 = vmatprep.subr.bf16.mxu0 0
      %2481 = vmatpush1.bf16.msra.mxu0 0
      %2482 = vmatprep.subr.bf16.mxu0 0
      %2483 = vmatpush1.bf16.msra.mxu0 0
      %2484 = vmatprep.subr.bf16.mxu0 0
      %2485 = vmatpush1.bf16.msra.mxu0 0
      %2486 = vmatprep.subr.bf16.mxu0 0
      %2487 = vmatpush1.bf16.msra.mxu0 0
      %2488 = vmatprep.subr.bf16.mxu0 0
      %2489 = vmatpush1.bf16.msra.mxu0 0
      %2490 = vmatprep.subr.bf16.mxu0 0
      %2491 = vmatpush1.bf16.msra.mxu0 0
      %2492 = vmatprep.subr.bf16.mxu0 0
      %2493 = vmatpush1.bf16.msra.mxu0 0
      %2494 = vmatprep.subr.bf16.mxu0 0
      %2495 = vmatpush1.bf16.msra.mxu0 %v1711
      %2496 = vmatprep.subr.bf16.mxu0 0
      %2497 = vmatpush2.bf16.msra.mxu0 0
      %2498 = vmatprep.subr.bf16.mxu0 0
      %2499 = vmatpush2.bf16.msra.mxu0 0
      %2500 = vmatprep.subr.bf16.mxu0 0
      %2501 = vmatpush2.bf16.msra.mxu0 0
      %2502 = vmatprep.subr.bf16.mxu0 0
      %2503 = vmatpush2.bf16.msra.mxu0 0
      %2504 = vmatprep.subr.bf16.mxu0 0
      %2505 = vmatpush2.bf16.msra.mxu0 0
      %2506 = vmatprep.subr.bf16.mxu0 0
      %2507 = vmatpush2.bf16.msra.mxu0 0
      %2508 = vmatprep.subr.bf16.mxu0 0
      %2509 = vmatpush2.bf16.msra.mxu0 0
      %2510 = vmatprep.subr.bf16.mxu0 0
      %2511 = vmatpush2.bf16.msra.mxu0 0
      %2512 = vmatprep.mubr.bf16.mxu0 0
      %2513 = vmatmul.mubr.bf16.gmra.mxu0 %v2478
      %v2514 = vpop.f32.mrf.mxu0
      %v2515 = vadd.f32 0.0, %v2514
      %v2516 = vpop.f32.mrf.mxu0
      %v2517 = vpop.f32.mrf.mxu0
      %v2518 = vpop.f32.mrf.mxu0
      %2519 = vdwg.mxu0
      %v2520 = vunpack.c.l.bf16 %v2468
      %v2521 = vunpack.c.h.bf16 %v2468
      %v2522 = vunpack.c.l.bf16 %v2469
      %v2523 = vunpack.c.h.bf16 %v2469
      %v2524 = vunpack.c.l.bf16 %v2470
      %v2525 = vunpack.c.h.bf16 %v2470
      %v2526 = vunpack.c.l.bf16 %v2471
      %v2527 = vunpack.c.h.bf16 %v2471
      %v2528 = vunpack.c.l.bf16 %v2472
      %v2529 = vunpack.c.h.bf16 %v2472
      %v2530 = vunpack.c.l.bf16 %v2473
      %v2531 = vunpack.c.h.bf16 %v2473
      %v2532 = vunpack.c.l.bf16 %v2474
      %v2533 = vunpack.c.h.bf16 %v2474
      %v2534 = vunpack.c.l.bf16 %v2475
      %v2535 = vunpack.c.h.bf16 %v2475
      %2536 = vset.pattern.permute.xlu0 15
      %2537 = vperm.xlu0 %2536, %v625
      %v2538 = vpop.permute.xlu0 %2537
      %2540 = vset.pattern.permute.xlu0 15
      %2541 = vperm.xlu0 %2540, %v626
      %v2542 = vpop.permute.xlu0 %2541
      %2544 = vset.pattern.permute.xlu0 15
      %2545 = vperm.xlu0 %2544, %v627
      %v2546 = vpop.permute.xlu0 %2545
      %2548 = vset.pattern.permute.xlu0 15
      %2549 = vperm.xlu0 %2548, %v628
      %v2550 = vpop.permute.xlu0 %2549
      %2552 = vset.pattern.permute.xlu0 15
      %2553 = vperm.xlu0 %2552, %v629
      %v2554 = vpop.permute.xlu0 %2553
      %2556 = vset.pattern.permute.xlu0 15
      %2557 = vperm.xlu0 %2556, %v630
      %v2558 = vpop.permute.xlu0 %2557
      %2560 = vset.pattern.permute.xlu0 15
      %2561 = vperm.xlu0 %2560, %v631
      %v2562 = vpop.permute.xlu0 %2561
      %2564 = vset.pattern.permute.xlu0 15
      %2565 = vperm.xlu0 %2564, %v632
      %v2566 = vpop.permute.xlu0 %2565
      %2568 = vset.pattern.permute.xlu0 15
      %2569 = vperm.xlu0 %2568, %v633
      %v2570 = vpop.permute.xlu0 %2569
      %2572 = vset.pattern.permute.xlu0 15
      %2573 = vperm.xlu0 %2572, %v634
      %v2574 = vpop.permute.xlu0 %2573
      %2576 = vset.pattern.permute.xlu0 15
      %2577 = vperm.xlu0 %2576, %v635
      %v2578 = vpop.permute.xlu0 %2577
      %2580 = vset.pattern.permute.xlu0 15
      %2581 = vperm.xlu0 %2580, %v636
      %v2582 = vpop.permute.xlu0 %2581
      %2584 = vset.pattern.permute.xlu0 15
      %2585 = vperm.xlu0 %2584, %v637
      %v2586 = vpop.permute.xlu0 %2585
      %2588 = vset.pattern.permute.xlu0 15
      %2589 = vperm.xlu0 %2588, %v638
      %v2590 = vpop.permute.xlu0 %2589
      %2592 = vset.pattern.permute.xlu0 15
      %2593 = vperm.xlu0 %2592, %v639
      %v2594 = vpop.permute.xlu0 %2593
      %2596 = vset.pattern.permute.xlu0 15
      %2597 = vperm.xlu0 %2596, %v640
      %v2598 = vpop.permute.xlu0 %2597
      %v2600 = vmul.f32 %v2520, %v2538
      %v2601 = vmul.f32 %v2521, %v2542
      %v2602 = vmul.f32 %v2522, %v2546
      %v2603 = vmul.f32 %v2523, %v2550
      %v2604 = vmul.f32 %v2524, %v2554
      %v2605 = vmul.f32 %v2525, %v2558
      %v2606 = vmul.f32 %v2526, %v2562
      %v2607 = vmul.f32 %v2527, %v2566
      %v2608 = vmul.f32 %v2528, %v2570
      %v2609 = vmul.f32 %v2529, %v2574
      %v2610 = vmul.f32 %v2530, %v2578
      %v2611 = vmul.f32 %v2531, %v2582
      %v2612 = vmul.f32 %v2532, %v2586
      %v2613 = vmul.f32 %v2533, %v2590
      %v2614 = vmul.f32 %v2534, %v2594
      %v2615 = vmul.f32 %v2535, %v2598
      %v2616 = vpack.c.bf16 %v2601, %v2600
      %v2617 = vpack.c.bf16 %v2603, %v2602
      %v2618 = vpack.c.bf16 %v2605, %v2604
      %v2619 = vpack.c.bf16 %v2607, %v2606
      %v2620 = vpack.c.bf16 %v2609, %v2608
      %v2621 = vpack.c.bf16 %v2611, %v2610
      %v2622 = vpack.c.bf16 %v2613, %v2612
      %v2623 = vpack.c.bf16 %v2615, %v2614
      %s2624 = scalar_lea.vmem %s3, 4
      %v2625 = vld [vmem:[%s2624] sm:$0xf]
      %2626 = vset.pattern.permute.xlu0 8
      %2627 = vperm.xlu0 %2626, %v659
      %v2628 = vpop.permute.xlu0 %2627
      %2630 = vmatprep.subr.bf16.mxu0 0
      %2631 = vmatpush1.bf16.msra.mxu0 %v2623
      %2632 = vmatprep.subr.bf16.mxu0 0
      %2633 = vmatpush1.bf16.msra.mxu0 %v2622
      %2634 = vmatprep.subr.bf16.mxu0 0
      %2635 = vmatpush1.bf16.msra.mxu0 %v2621
      %2636 = vmatprep.subr.bf16.mxu0 0
      %2637 = vmatpush1.bf16.msra.mxu0 %v2620
      %2638 = vmatprep.subr.bf16.mxu0 0
      %2639 = vmatpush1.bf16.msra.mxu0 %v2619
      %2640 = vmatprep.subr.bf16.mxu0 0
      %2641 = vmatpush1.bf16.msra.mxu0 %v2618
      %2642 = vmatprep.subr.bf16.mxu0 0
      %2643 = vmatpush1.bf16.msra.mxu0 %v2617
      %2644 = vmatprep.subr.bf16.mxu0 0
      %2645 = vmatpush1.bf16.msra.mxu0 %v2616
      %2646 = vmatprep.subr.bf16.mxu0 0
      %2647 = vmatpush2.bf16.msra.mxu0 0
      %2648 = vmatprep.subr.bf16.mxu0 0
      %2649 = vmatpush2.bf16.msra.mxu0 0
      %2650 = vmatprep.subr.bf16.mxu0 0
      %2651 = vmatpush2.bf16.msra.mxu0 0
      %2652 = vmatprep.subr.bf16.mxu0 0
      %2653 = vmatpush2.bf16.msra.mxu0 0
      %2654 = vmatprep.subr.bf16.mxu0 0
      %2655 = vmatpush2.bf16.msra.mxu0 0
      %2656 = vmatprep.subr.bf16.mxu0 0
      %2657 = vmatpush2.bf16.msra.mxu0 0
      %2658 = vmatprep.subr.bf16.mxu0 0
      %2659 = vmatpush2.bf16.msra.mxu0 0
      %2660 = vmatprep.subr.bf16.mxu0 0
      %2661 = vmatpush2.bf16.msra.mxu0 0
      %2662 = vmatprep.mubr.bf16.mxu0 0
      %2663 = vmatmul.mubr.bf16.gmra.mxu0 %v2625
      %v2664 = vpop.f32.mrf.mxu0
      %v2665 = vadd.f32 %v2628, %v2664
      %v2666 = vpop.f32.mrf.mxu0
      %v2667 = vpop.f32.mrf.mxu0
      %v2668 = vpop.f32.mrf.mxu0
      %2669 = vdwg.mxu0
      %v2670 = vadd.f32 %v2665, %v2515
      %v2671 = vld [vmem:[%s13] sm:$0xff]
      %v2672 = vld [vmem:[%s13 + $0x8] sm:$0xff]
      %v2673 = vld [vmem:[%s13 + $0x10] sm:$0xff]
      %v2674 = vld [vmem:[%s13 + $0x18] sm:$0xff]
      %v2675 = vld [vmem:[%s13 + $0x20] sm:$0xff]
      %v2676 = vld [vmem:[%s13 + $0x28] sm:$0xff]
      %v2677 = vld [vmem:[%s13 + $0x30] sm:$0xff]
      %v2678 = vld [vmem:[%s13 + $0x38] sm:$0xff]
      %2679 = vset.pattern.permute.xlu0 3
      %2680 = vperm.xlu0 %2679, %v625
      %v2681 = vpop.permute.xlu0 %2680
      %2683 = vset.pattern.permute.xlu0 3
      %2684 = vperm.xlu0 %2683, %v626
      %v2685 = vpop.permute.xlu0 %2684
      %2687 = vset.pattern.permute.xlu0 3
      %2688 = vperm.xlu0 %2687, %v627
      %v2689 = vpop.permute.xlu0 %2688
      %2691 = vset.pattern.permute.xlu0 3
      %2692 = vperm.xlu0 %2691, %v628
      %v2693 = vpop.permute.xlu0 %2692
      %2695 = vset.pattern.permute.xlu0 3
      %2696 = vperm.xlu0 %2695, %v629
      %v2697 = vpop.permute.xlu0 %2696
      %2699 = vset.pattern.permute.xlu0 3
      %2700 = vperm.xlu0 %2699, %v630
      %v2701 = vpop.permute.xlu0 %2700
      %2703 = vset.pattern.permute.xlu0 3
      %2704 = vperm.xlu0 %2703, %v631
      %v2705 = vpop.permute.xlu0 %2704
      %2707 = vset.pattern.permute.xlu0 3
      %2708 = vperm.xlu0 %2707, %v632
      %v2709 = vpop.permute.xlu0 %2708
      %2711 = vset.pattern.permute.xlu0 3
      %2712 = vperm.xlu0 %2711, %v633
      %v2713 = vpop.permute.xlu0 %2712
      %2715 = vset.pattern.permute.xlu0 3
      %2716 = vperm.xlu0 %2715, %v634
      %v2717 = vpop.permute.xlu0 %2716
      %2719 = vset.pattern.permute.xlu0 3
      %2720 = vperm.xlu0 %2719, %v635
      %v2721 = vpop.permute.xlu0 %2720
      %2723 = vset.pattern.permute.xlu0 3
      %2724 = vperm.xlu0 %2723, %v636
      %v2725 = vpop.permute.xlu0 %2724
      %2727 = vset.pattern.permute.xlu0 3
      %2728 = vperm.xlu0 %2727, %v637
      %v2729 = vpop.permute.xlu0 %2728
      %2731 = vset.pattern.permute.xlu0 3
      %2732 = vperm.xlu0 %2731, %v638
      %v2733 = vpop.permute.xlu0 %2732
      %2735 = vset.pattern.permute.xlu0 3
      %2736 = vperm.xlu0 %2735, %v639
      %v2737 = vpop.permute.xlu0 %2736
      %2739 = vset.pattern.permute.xlu0 3
      %2740 = vperm.xlu0 %2739, %v640
      %v2741 = vpop.permute.xlu0 %2740
      %v2743 = vmul.f32 %v2520, %v2681
      %v2744 = vmul.f32 %v2521, %v2685
      %v2745 = vmul.f32 %v2522, %v2689
      %v2746 = vmul.f32 %v2523, %v2693
      %v2747 = vmul.f32 %v2524, %v2697
      %v2748 = vmul.f32 %v2525, %v2701
      %v2749 = vmul.f32 %v2526, %v2705
      %v2750 = vmul.f32 %v2527, %v2709
      %v2751 = vmul.f32 %v2528, %v2713
      %v2752 = vmul.f32 %v2529, %v2717
      %v2753 = vmul.f32 %v2530, %v2721
      %v2754 = vmul.f32 %v2531, %v2725
      %v2755 = vmul.f32 %v2532, %v2729
      %v2756 = vmul.f32 %v2533, %v2733
      %v2757 = vmul.f32 %v2534, %v2737
      %v2758 = vmul.f32 %v2535, %v2741
      %v2759 = vpack.c.bf16 %v2744, %v2743
      %v2760 = vpack.c.bf16 %v2746, %v2745
      %v2761 = vpack.c.bf16 %v2748, %v2747
      %v2762 = vpack.c.bf16 %v2750, %v2749
      %v2763 = vpack.c.bf16 %v2752, %v2751
      %v2764 = vpack.c.bf16 %v2754, %v2753
      %v2765 = vpack.c.bf16 %v2756, %v2755
      %v2766 = vpack.c.bf16 %v2758, %v2757
      %s2767 = scalar_lea.vmem %s2, 192
      %v2768 = vld [vmem:[%s2767] sm:$0xf]
      %v2769 = vld [vmem:[%s2767 + $0x4] sm:$0xf]
      %v2770 = vld [vmem:[%s2767 + $0x8] sm:$0xf]
      %v2771 = vld [vmem:[%s2767 + $0xc] sm:$0xf]
      %v2772 = vld [vmem:[%s2767 + $0x10] sm:$0xf]
      %v2773 = vld [vmem:[%s2767 + $0x14] sm:$0xf]
      %v2774 = vld [vmem:[%s2767 + $0x18] sm:$0xf]
      %v2775 = vld [vmem:[%s2767 + $0x1c] sm:$0xf]
      %v2776 = vld [vmem:[%s2767 + $0x20] sm:$0xf]
      %v2777 = vld [vmem:[%s2767 + $0x24] sm:$0xf]
      %v2778 = vld [vmem:[%s2767 + $0x28] sm:$0xf]
      %v2779 = vld [vmem:[%s2767 + $0x2c] sm:$0xf]
      %v2780 = vld [vmem:[%s2767 + $0x30] sm:$0xf]
      %v2781 = vld [vmem:[%s2767 + $0x34] sm:$0xf]
      %v2782 = vld [vmem:[%s2767 + $0x38] sm:$0xf]
      %v2783 = vld [vmem:[%s2767 + $0x3c] sm:$0xf]
      %v2800 = vunpack.c.l.b16 %v2768
      %v2801 = vunpack.c.l.b16 %v2769
      %v2802 = vunpack.c.l.b16 %v2770
      %v2803 = vunpack.c.l.b16 %v2771
      %v2804 = vunpack.c.l.b16 %v2772
      %v2805 = vunpack.c.l.b16 %v2773
      %v2806 = vunpack.c.l.b16 %v2774
      %v2807 = vunpack.c.l.b16 %v2775
      %v2808 = vunpack.c.l.b16 %v2776
      %v2809 = vunpack.c.l.b16 %v2777
      %v2810 = vunpack.c.l.b16 %v2778
      %v2811 = vunpack.c.l.b16 %v2779
      %v2812 = vunpack.c.l.b16 %v2780
      %v2813 = vunpack.c.l.b16 %v2781
      %v2814 = vunpack.c.l.b16 %v2782
      %v2815 = vunpack.c.l.b16 %v2783
      %v2816 = vpack.c.b16 %v2801, %v2800
      %v2817 = vpack.c.b16 %v2803, %v2802
      %v2818 = vpack.c.b16 %v2805, %v2804
      %v2819 = vpack.c.b16 %v2807, %v2806
      %v2820 = vpack.c.b16 %v2809, %v2808
      %v2821 = vpack.c.b16 %v2811, %v2810
      %v2822 = vpack.c.b16 %v2813, %v2812
      %v2823 = vpack.c.b16 %v2815, %v2814
      %2832 = vmatprep.subr.bf16.mxu0 0
      %2833 = vmatpush1.bf16.msra.mxu0 %v2766
      %2834 = vmatprep.subr.bf16.mxu0 0
      %2835 = vmatpush1.bf16.msra.mxu0 %v2765
      %2836 = vmatprep.subr.bf16.mxu0 0
      %2837 = vmatpush1.bf16.msra.mxu0 %v2764
      %2838 = vmatprep.subr.bf16.mxu0 0
      %2839 = vmatpush1.bf16.msra.mxu0 %v2763
      %2840 = vmatprep.subr.bf16.mxu0 0
      %2841 = vmatpush1.bf16.msra.mxu0 %v2762
      %2842 = vmatprep.subr.bf16.mxu0 0
      %2843 = vmatpush1.bf16.msra.mxu0 %v2761
      %2844 = vmatprep.subr.bf16.mxu0 0
      %2845 = vmatpush1.bf16.msra.mxu0 %v2760
      %2846 = vmatprep.subr.bf16.mxu0 0
      %2847 = vmatpush1.bf16.msra.mxu0 %v2759
      %2848 = vmatprep.subr.bf16.mxu0 0
      %2849 = vmatpush2.bf16.msra.mxu0 0
      %2850 = vmatprep.subr.bf16.mxu0 0
      %2851 = vmatpush2.bf16.msra.mxu0 0
      %2852 = vmatprep.subr.bf16.mxu0 0
      %2853 = vmatpush2.bf16.msra.mxu0 0
      %2854 = vmatprep.subr.bf16.mxu0 0
      %2855 = vmatpush2.bf16.msra.mxu0 0
      %2856 = vmatprep.subr.bf16.mxu0 0
      %2857 = vmatpush2.bf16.msra.mxu0 0
      %2858 = vmatprep.subr.bf16.mxu0 0
      %2859 = vmatpush2.bf16.msra.mxu0 0
      %2860 = vmatprep.subr.bf16.mxu0 0
      %2861 = vmatpush2.bf16.msra.mxu0 0
      %2862 = vmatprep.subr.bf16.mxu0 0
      %2863 = vmatpush2.bf16.msra.mxu0 0
      %2864 = vmatprep.mubr.bf16.mxu0 0
      %2865 = vmatmul.mubr.bf16.gmra.mxu0 %v2816
      %v2866 = vpop.f32.mrf.mxu0
      %v2867 = vadd.f32 0.0, %v2866
      %v2868 = vpop.f32.mrf.mxu0
      %v2869 = vpop.f32.mrf.mxu0
      %v2870 = vadd.f32 0.0, %v2869
      %v2871 = vpop.f32.mrf.mxu0
      %2872 = vmatprep.mubr.bf16.mxu0 0
      %2873 = vmatmul.mubr.bf16.gmra.mxu0 %v2817
      %v2874 = vpop.f32.mrf.mxu0
      %v2875 = vadd.f32 0.0, %v2874
      %v2876 = vpop.f32.mrf.mxu0
      %v2877 = vpop.f32.mrf.mxu0
      %v2878 = vadd.f32 0.0, %v2877
      %v2879 = vpop.f32.mrf.mxu0
      %2880 = vmatprep.mubr.bf16.mxu0 0
      %2881 = vmatmul.mubr.bf16.gmra.mxu0 %v2818
      %v2882 = vpop.f32.mrf.mxu0
      %v2883 = vadd.f32 0.0, %v2882
      %v2884 = vpop.f32.mrf.mxu0
      %v2885 = vpop.f32.mrf.mxu0
      %v2886 = vadd.f32 0.0, %v2885
      %v2887 = vpop.f32.mrf.mxu0
      %2888 = vmatprep.mubr.bf16.mxu0 0
      %2889 = vmatmul.mubr.bf16.gmra.mxu0 %v2819
      %v2890 = vpop.f32.mrf.mxu0
      %v2891 = vadd.f32 0.0, %v2890
      %v2892 = vpop.f32.mrf.mxu0
      %v2893 = vpop.f32.mrf.mxu0
      %v2894 = vadd.f32 0.0, %v2893
      %v2895 = vpop.f32.mrf.mxu0
      %2896 = vmatprep.mubr.bf16.mxu0 0
      %2897 = vmatmul.mubr.bf16.gmra.mxu0 %v2820
      %v2898 = vpop.f32.mrf.mxu0
      %v2899 = vadd.f32 0.0, %v2898
      %v2900 = vpop.f32.mrf.mxu0
      %v2901 = vpop.f32.mrf.mxu0
      %v2902 = vadd.f32 0.0, %v2901
      %v2903 = vpop.f32.mrf.mxu0
      %2904 = vmatprep.mubr.bf16.mxu0 0
      %2905 = vmatmul.mubr.bf16.gmra.mxu0 %v2821
      %v2906 = vpop.f32.mrf.mxu0
      %v2907 = vadd.f32 0.0, %v2906
      %v2908 = vpop.f32.mrf.mxu0
      %v2909 = vpop.f32.mrf.mxu0
      %v2910 = vadd.f32 0.0, %v2909
      %v2911 = vpop.f32.mrf.mxu0
      %2912 = vmatprep.mubr.bf16.mxu0 0
      %2913 = vmatmul.mubr.bf16.gmra.mxu0 %v2822
      %v2914 = vpop.f32.mrf.mxu0
      %v2915 = vadd.f32 0.0, %v2914
      %v2916 = vpop.f32.mrf.mxu0
      %v2917 = vpop.f32.mrf.mxu0
      %v2918 = vadd.f32 0.0, %v2917
      %v2919 = vpop.f32.mrf.mxu0
      %2920 = vmatprep.mubr.bf16.mxu0 0
      %2921 = vmatmul.mubr.bf16.gmra.mxu0 %v2823
      %v2922 = vpop.f32.mrf.mxu0
      %v2923 = vadd.f32 0.0, %v2922
      %v2924 = vpop.f32.mrf.mxu0
      %v2925 = vpop.f32.mrf.mxu0
      %v2926 = vadd.f32 0.0, %v2925
      %v2927 = vpop.f32.mrf.mxu0
      %2928 = vdwg.mxu0
      %2929 = vset.pattern.permute.xlu0 10
      %2930 = vperm.xlu0 %2929, %v625
      %v2931 = vpop.permute.xlu0 %2930
      %2933 = vset.pattern.permute.xlu0 10
      %2934 = vperm.xlu0 %2933, %v626
      %v2935 = vpop.permute.xlu0 %2934
      %2937 = vset.pattern.permute.xlu0 10
      %2938 = vperm.xlu0 %2937, %v627
      %v2939 = vpop.permute.xlu0 %2938
      %2941 = vset.pattern.permute.xlu0 10
      %2942 = vperm.xlu0 %2941, %v628
      %v2943 = vpop.permute.xlu0 %2942
      %2945 = vset.pattern.permute.xlu0 10
      %2946 = vperm.xlu0 %2945, %v629
      %v2947 = vpop.permute.xlu0 %2946
      %2949 = vset.pattern.permute.xlu0 10
      %2950 = vperm.xlu0 %2949, %v630
      %v2951 = vpop.permute.xlu0 %2950
      %2953 = vset.pattern.permute.xlu0 10
      %2954 = vperm.xlu0 %2953, %v631
      %v2955 = vpop.permute.xlu0 %2954
      %2957 = vset.pattern.permute.xlu0 10
      %2958 = vperm.xlu0 %2957, %v632
      %v2959 = vpop.permute.xlu0 %2958
      %2961 = vset.pattern.permute.xlu0 10
      %2962 = vperm.xlu0 %2961, %v633
      %v2963 = vpop.permute.xlu0 %2962
      %2965 = vset.pattern.permute.xlu0 10
      %2966 = vperm.xlu0 %2965, %v634
      %v2967 = vpop.permute.xlu0 %2966
      %2969 = vset.pattern.permute.xlu0 10
      %2970 = vperm.xlu0 %2969, %v635
      %v2971 = vpop.permute.xlu0 %2970
      %2973 = vset.pattern.permute.xlu0 10
      %2974 = vperm.xlu0 %2973, %v636
      %v2975 = vpop.permute.xlu0 %2974
      %2977 = vset.pattern.permute.xlu0 10
      %2978 = vperm.xlu0 %2977, %v637
      %v2979 = vpop.permute.xlu0 %2978
      %2981 = vset.pattern.permute.xlu0 10
      %2982 = vperm.xlu0 %2981, %v638
      %v2983 = vpop.permute.xlu0 %2982
      %2985 = vset.pattern.permute.xlu0 10
      %2986 = vperm.xlu0 %2985, %v639
      %v2987 = vpop.permute.xlu0 %2986
      %2989 = vset.pattern.permute.xlu0 10
      %2990 = vperm.xlu0 %2989, %v640
      %v2991 = vpop.permute.xlu0 %2990
      %v2993 = vmul.f32 %v2867, %v2931
      %v2994 = vmul.f32 %v2870, %v2935
      %v2995 = vmul.f32 %v2875, %v2939
      %v2996 = vmul.f32 %v2878, %v2943
      %v2997 = vmul.f32 %v2883, %v2947
      %v2998 = vmul.f32 %v2886, %v2951
      %v2999 = vmul.f32 %v2891, %v2955
      %v3000 = vmul.f32 %v2894, %v2959
      %v3001 = vmul.f32 %v2899, %v2963
      %v3002 = vmul.f32 %v2902, %v2967
      %v3003 = vmul.f32 %v2907, %v2971
      %v3004 = vmul.f32 %v2910, %v2975
      %v3005 = vmul.f32 %v2915, %v2979
      %v3006 = vmul.f32 %v2918, %v2983
      %v3007 = vmul.f32 %v2923, %v2987
      %v3008 = vmul.f32 %v2926, %v2991
      %v3009 = vpack.c.bf16 %v2994, %v2993
      %v3010 = vpack.c.bf16 %v2996, %v2995
      %v3011 = vpack.c.bf16 %v2998, %v2997
      %v3012 = vpack.c.bf16 %v3000, %v2999
      %v3013 = vpack.c.bf16 %v3002, %v3001
      %v3014 = vpack.c.bf16 %v3004, %v3003
      %v3015 = vpack.c.bf16 %v3006, %v3005
      %v3016 = vpack.c.bf16 %v3008, %v3007
      %v3017 = vld [vmem:[%s587] sm:$0x3]
      %v3019 = vlaneseq
      %v3020 = vshrl.u32 %v3019, 7
      %v3021 = vsub.s32 0, %v3020
      %v3022 = vrot.slane %v3017, %v3021
      %v3023 = vlaneseq
      %v3024 = vshrl.u32 %v3023, 7
      %v3025 = vsub.s32 1, %v3024
      %v3026 = vrot.slane %v3017, %v3025
      %v3037 = vunpack.c.l.b16 %v2671
      %v3038 = vunpack.c.h.b16 %v2671
      %v3039 = vunpack.c.l.b16 %v2672
      %v3040 = vunpack.c.h.b16 %v2672
      %v3041 = vunpack.c.l.b16 %v2673
      %v3042 = vunpack.c.h.b16 %v2673
      %v3043 = vunpack.c.l.b16 %v2674
      %v3044 = vunpack.c.h.b16 %v2674
      %v3045 = vunpack.c.l.b16 %v2675
      %v3046 = vunpack.c.h.b16 %v2675
      %v3047 = vunpack.c.l.b16 %v2676
      %v3048 = vunpack.c.h.b16 %v2676
      %v3049 = vunpack.c.l.b16 %v2677
      %v3050 = vunpack.c.h.b16 %v2677
      %v3051 = vunpack.c.l.b16 %v2678
      %v3052 = vunpack.c.h.b16 %v2678
      %v3053 = vpack.c.b16 %v3039, %v3037
      %v3054 = vpack.c.b16 %v3040, %v3038
      %v3055 = vpack.c.b16 %v3043, %v3041
      %v3056 = vpack.c.b16 %v3044, %v3042
      %v3057 = vpack.c.b16 %v3047, %v3045
      %v3058 = vpack.c.b16 %v3048, %v3046
      %v3059 = vpack.c.b16 %v3051, %v3049
      %v3060 = vpack.c.b16 %v3052, %v3050
      %vm3069 = vcmask 523264
      %v3071 = vsel %vm3069, %v3009, 0
      %v3074 = vsel %vm3069, %v3010, 0
      %v3077 = vsel %vm3069, %v3011, 0
      %v3080 = vsel %vm3069, %v3012, 0
      %v3083 = vsel %vm3069, %v3013, 0
      %v3086 = vsel %vm3069, %v3014, 0
      %v3089 = vsel %vm3069, %v3015, 0
      %v3092 = vsel %vm3069, %v3016, 0
      %3094 = vmatprep.subr.bf16.mxu0 0
      %3095 = vmatpush1.bf16.msra.mxu0 0
      %3096 = vmatprep.subr.bf16.mxu0 0
      %3097 = vmatpush1.bf16.msra.mxu0 0
      %3098 = vmatprep.subr.bf16.mxu0 0
      %3099 = vmatpush1.bf16.msra.mxu0 0
      %3100 = vmatprep.subr.bf16.mxu0 0
      %3101 = vmatpush1.bf16.msra.mxu0 0
      %3102 = vmatprep.subr.bf16.mxu0 %v3060
      %3103 = vmatpush1.bf16.msra.mxu0 %v3059
      %3104 = vmatprep.subr.bf16.mxu0 %v3058
      %3105 = vmatpush1.bf16.msra.mxu0 %v3057
      %3106 = vmatprep.subr.bf16.mxu0 %v3056
      %3107 = vmatpush1.bf16.msra.mxu0 %v3055
      %3108 = vmatprep.subr.bf16.mxu0 %v3054
      %3109 = vmatpush1.bf16.msra.mxu0 %v3053
      %3110 = vmatprep.subr.bf16.mxu0 0
      %3111 = vmatpush2.bf16.msra.mxu0 0
      %3112 = vmatprep.subr.bf16.mxu0 0
      %3113 = vmatpush2.bf16.msra.mxu0 0
      %3114 = vmatprep.subr.bf16.mxu0 0
      %3115 = vmatpush2.bf16.msra.mxu0 0
      %3116 = vmatprep.subr.bf16.mxu0 0
      %3117 = vmatpush2.bf16.msra.mxu0 0
      %3118 = vmatprep.subr.bf16.mxu0 0
      %3119 = vmatpush2.bf16.msra.mxu0 0
      %3120 = vmatprep.subr.bf16.mxu0 0
      %3121 = vmatpush2.bf16.msra.mxu0 0
      %3122 = vmatprep.subr.bf16.mxu0 0
      %3123 = vmatpush2.bf16.msra.mxu0 0
      %3124 = vmatprep.subr.bf16.mxu0 0
      %3125 = vmatpush2.bf16.msra.mxu0 0
      %3126 = vmatprep.mubr.bf16.mxu0 0
      %3127 = vmatmul.mubr.bf16.gmra.mxu0 %v3071
      %v3128 = vpop.f32.mrf.mxu0
      %v3129 = vadd.f32 %v3022, %v3128
      %v3130 = vpop.f32.mrf.mxu0
      %v3131 = vadd.f32 %v3026, %v3130
      %v3132 = vpop.f32.mrf.mxu0
      %v3133 = vadd.f32 %v3022, %v3132
      %v3134 = vpop.f32.mrf.mxu0
      %v3135 = vadd.f32 %v3026, %v3134
      %3136 = vmatprep.mubr.bf16.mxu0 0
      %3137 = vmatmul.mubr.bf16.gmra.mxu0 %v3074
      %v3138 = vpop.f32.mrf.mxu0
      %v3139 = vadd.f32 %v3022, %v3138
      %v3140 = vpop.f32.mrf.mxu0
      %v3141 = vadd.f32 %v3026, %v3140
      %v3142 = vpop.f32.mrf.mxu0
      %v3143 = vadd.f32 %v3022, %v3142
      %v3144 = vpop.f32.mrf.mxu0
      %v3145 = vadd.f32 %v3026, %v3144
      %3146 = vmatprep.mubr.bf16.mxu0 0
      %3147 = vmatmul.mubr.bf16.gmra.mxu0 %v3077
      %v3148 = vpop.f32.mrf.mxu0
      %v3149 = vadd.f32 %v3022, %v3148
      %v3150 = vpop.f32.mrf.mxu0
      %v3151 = vadd.f32 %v3026, %v3150
      %v3152 = vpop.f32.mrf.mxu0
      %v3153 = vadd.f32 %v3022, %v3152
      %v3154 = vpop.f32.mrf.mxu0
      %v3155 = vadd.f32 %v3026, %v3154
      %3156 = vmatprep.mubr.bf16.mxu0 0
      %3157 = vmatmul.mubr.bf16.gmra.mxu0 %v3080
      %v3158 = vpop.f32.mrf.mxu0
      %v3159 = vadd.f32 %v3022, %v3158
      %v3160 = vpop.f32.mrf.mxu0
      %v3161 = vadd.f32 %v3026, %v3160
      %v3162 = vpop.f32.mrf.mxu0
      %v3163 = vadd.f32 %v3022, %v3162
      %v3164 = vpop.f32.mrf.mxu0
      %v3165 = vadd.f32 %v3026, %v3164
      %3166 = vmatprep.mubr.bf16.mxu0 0
      %3167 = vmatmul.mubr.bf16.gmra.mxu0 %v3083
      %v3168 = vpop.f32.mrf.mxu0
      %v3169 = vadd.f32 %v3022, %v3168
      %v3170 = vpop.f32.mrf.mxu0
      %v3171 = vadd.f32 %v3026, %v3170
      %v3172 = vpop.f32.mrf.mxu0
      %v3173 = vadd.f32 %v3022, %v3172
      %v3174 = vpop.f32.mrf.mxu0
      %v3175 = vadd.f32 %v3026, %v3174
      %3176 = vmatprep.mubr.bf16.mxu0 0
      %3177 = vmatmul.mubr.bf16.gmra.mxu0 %v3086
      %v3178 = vpop.f32.mrf.mxu0
      %v3179 = vadd.f32 %v3022, %v3178
      %v3180 = vpop.f32.mrf.mxu0
      %v3181 = vadd.f32 %v3026, %v3180
      %v3182 = vpop.f32.mrf.mxu0
      %v3183 = vadd.f32 %v3022, %v3182
      %v3184 = vpop.f32.mrf.mxu0
      %v3185 = vadd.f32 %v3026, %v3184
      %3186 = vmatprep.mubr.bf16.mxu0 0
      %3187 = vmatmul.mubr.bf16.gmra.mxu0 %v3089
      %v3188 = vpop.f32.mrf.mxu0
      %v3189 = vadd.f32 %v3022, %v3188
      %v3190 = vpop.f32.mrf.mxu0
      %v3191 = vadd.f32 %v3026, %v3190
      %v3192 = vpop.f32.mrf.mxu0
      %v3193 = vadd.f32 %v3022, %v3192
      %v3194 = vpop.f32.mrf.mxu0
      %v3195 = vadd.f32 %v3026, %v3194
      %3196 = vmatprep.mubr.bf16.mxu0 0
      %3197 = vmatmul.mubr.bf16.gmra.mxu0 %v3092
      %v3198 = vpop.f32.mrf.mxu0
      %v3199 = vadd.f32 %v3022, %v3198
      %v3200 = vpop.f32.mrf.mxu0
      %v3201 = vadd.f32 %v3026, %v3200
      %v3202 = vpop.f32.mrf.mxu0
      %v3203 = vadd.f32 %v3022, %v3202
      %v3204 = vpop.f32.mrf.mxu0
      %v3205 = vadd.f32 %v3026, %v3204
      %3206 = vdwg.mxu0
      %3207 = vset.pattern.permute.xlu0 3
      %3208 = vperm.xlu0 %3207, %v659
      %v3209 = vpop.permute.xlu0 %3208
      %3211 = vset.pattern.permute.xlu0 3
      %3212 = vperm.xlu0 %3211, %v660
      %v3213 = vpop.permute.xlu0 %3212
      %3215 = vset.pattern.permute.xlu0 3
      %3216 = vperm.xlu0 %3215, %v661
      %v3217 = vpop.permute.xlu0 %3216
      %3219 = vset.pattern.permute.xlu0 3
      %3220 = vperm.xlu0 %3219, %v662
      %v3221 = vpop.permute.xlu0 %3220
      %3223 = vset.pattern.permute.xlu0 3
      %3224 = vperm.xlu0 %3223, %v663
      %v3225 = vpop.permute.xlu0 %3224
      %3227 = vset.pattern.permute.xlu0 3
      %3228 = vperm.xlu0 %3227, %v664
      %v3229 = vpop.permute.xlu0 %3228
      %3231 = vset.pattern.permute.xlu0 3
      %3232 = vperm.xlu0 %3231, %v665
      %v3233 = vpop.permute.xlu0 %3232
      %3235 = vset.pattern.permute.xlu0 3
      %3236 = vperm.xlu0 %3235, %v666
      %v3237 = vpop.permute.xlu0 %3236
      %3239 = vset.pattern.permute.xlu0 3
      %3240 = vperm.xlu0 %3239, %v667
      %v3241 = vpop.permute.xlu0 %3240
      %3243 = vset.pattern.permute.xlu0 3
      %3244 = vperm.xlu0 %3243, %v668
      %v3245 = vpop.permute.xlu0 %3244
      %3247 = vset.pattern.permute.xlu0 3
      %3248 = vperm.xlu0 %3247, %v669
      %v3249 = vpop.permute.xlu0 %3248
      %3251 = vset.pattern.permute.xlu0 3
      %3252 = vperm.xlu0 %3251, %v670
      %v3253 = vpop.permute.xlu0 %3252
      %3255 = vset.pattern.permute.xlu0 3
      %3256 = vperm.xlu0 %3255, %v671
      %v3257 = vpop.permute.xlu0 %3256
      %3259 = vset.pattern.permute.xlu0 3
      %3260 = vperm.xlu0 %3259, %v672
      %v3261 = vpop.permute.xlu0 %3260
      %3263 = vset.pattern.permute.xlu0 3
      %3264 = vperm.xlu0 %3263, %v673
      %v3265 = vpop.permute.xlu0 %3264
      %3267 = vset.pattern.permute.xlu0 3
      %3268 = vperm.xlu0 %3267, %v674
      %v3269 = vpop.permute.xlu0 %3268
      %v3271 = vadd.f32 %v3129, %v3209
      %v3272 = vadd.f32 %v3131, %v3209
      %v3273 = vadd.f32 %v3133, %v3213
      %v3274 = vadd.f32 %v3135, %v3213
      %v3275 = vadd.f32 %v3139, %v3217
      %v3276 = vadd.f32 %v3141, %v3217
      %v3277 = vadd.f32 %v3143, %v3221
      %v3278 = vadd.f32 %v3145, %v3221
      %v3279 = vadd.f32 %v3149, %v3225
      %v3280 = vadd.f32 %v3151, %v3225
      %v3281 = vadd.f32 %v3153, %v3229
      %v3282 = vadd.f32 %v3155, %v3229
      %v3283 = vadd.f32 %v3159, %v3233
      %v3284 = vadd.f32 %v3161, %v3233
      %v3285 = vadd.f32 %v3163, %v3237
      %v3286 = vadd.f32 %v3165, %v3237
      %v3287 = vadd.f32 %v3169, %v3241
      %v3288 = vadd.f32 %v3171, %v3241
      %v3289 = vadd.f32 %v3173, %v3245
      %v3290 = vadd.f32 %v3175, %v3245
      %v3291 = vadd.f32 %v3179, %v3249
      %v3292 = vadd.f32 %v3181, %v3249
      %v3293 = vadd.f32 %v3183, %v3253
      %v3294 = vadd.f32 %v3185, %v3253
      %v3295 = vadd.f32 %v3189, %v3257
      %v3296 = vadd.f32 %v3191, %v3257
      %v3297 = vadd.f32 %v3193, %v3261
      %v3298 = vadd.f32 %v3195, %v3261
      %v3299 = vadd.f32 %v3199, %v3265
      %v3300 = vadd.f32 %v3201, %v3265
      %v3301 = vadd.f32 %v3203, %v3269
      %v3302 = vadd.f32 %v3205, %v3269
      %vm3303 = vcmp.ge.f32.partialorder %v3271, 0.0
      %vm3304 = vcmp.ge.f32.partialorder %v3272, 0.0
      %vm3305 = vcmp.ge.f32.partialorder %v3273, 0.0
      %vm3306 = vcmp.ge.f32.partialorder %v3274, 0.0
      %vm3307 = vcmp.ge.f32.partialorder %v3275, 0.0
      %vm3308 = vcmp.ge.f32.partialorder %v3276, 0.0
      %vm3309 = vcmp.ge.f32.partialorder %v3277, 0.0
      %vm3310 = vcmp.ge.f32.partialorder %v3278, 0.0
      %vm3311 = vcmp.ge.f32.partialorder %v3279, 0.0
      %vm3312 = vcmp.ge.f32.partialorder %v3280, 0.0
      %vm3313 = vcmp.ge.f32.partialorder %v3281, 0.0
      %vm3314 = vcmp.ge.f32.partialorder %v3282, 0.0
      %vm3315 = vcmp.ge.f32.partialorder %v3283, 0.0
      %vm3316 = vcmp.ge.f32.partialorder %v3284, 0.0
      %vm3317 = vcmp.ge.f32.partialorder %v3285, 0.0
      %vm3318 = vcmp.ge.f32.partialorder %v3286, 0.0
      %vm3319 = vcmp.ge.f32.partialorder %v3287, 0.0
      %vm3320 = vcmp.ge.f32.partialorder %v3288, 0.0
      %vm3321 = vcmp.ge.f32.partialorder %v3289, 0.0
      %vm3322 = vcmp.ge.f32.partialorder %v3290, 0.0
      %vm3323 = vcmp.ge.f32.partialorder %v3291, 0.0
      %vm3324 = vcmp.ge.f32.partialorder %v3292, 0.0
      %vm3325 = vcmp.ge.f32.partialorder %v3293, 0.0
      %vm3326 = vcmp.ge.f32.partialorder %v3294, 0.0
      %vm3327 = vcmp.ge.f32.partialorder %v3295, 0.0
      %vm3328 = vcmp.ge.f32.partialorder %v3296, 0.0
      %vm3329 = vcmp.ge.f32.partialorder %v3297, 0.0
      %vm3330 = vcmp.ge.f32.partialorder %v3298, 0.0
      %vm3331 = vcmp.ge.f32.partialorder %v3299, 0.0
      %vm3332 = vcmp.ge.f32.partialorder %v3300, 0.0
      %vm3333 = vcmp.ge.f32.partialorder %v3301, 0.0
      %vm3334 = vcmp.ge.f32.partialorder %v3302, 0.0
      %v3335 = vmul.f32 %v3271, 0.2
      %v3336 = vmul.f32 %v3272, 0.2
      %v3337 = vmul.f32 %v3273, 0.2
      %v3338 = vmul.f32 %v3274, 0.2
      %v3339 = vmul.f32 %v3275, 0.2
      %v3340 = vmul.f32 %v3276, 0.2
      %v3341 = vmul.f32 %v3277, 0.2
      %v3342 = vmul.f32 %v3278, 0.2
      %v3343 = vmul.f32 %v3279, 0.2
      %v3344 = vmul.f32 %v3280, 0.2
      %v3345 = vmul.f32 %v3281, 0.2
      %v3346 = vmul.f32 %v3282, 0.2
      %v3347 = vmul.f32 %v3283, 0.2
      %v3348 = vmul.f32 %v3284, 0.2
      %v3349 = vmul.f32 %v3285, 0.2
      %v3350 = vmul.f32 %v3286, 0.2
      %v3351 = vmul.f32 %v3287, 0.2
      %v3352 = vmul.f32 %v3288, 0.2
      %v3353 = vmul.f32 %v3289, 0.2
      %v3354 = vmul.f32 %v3290, 0.2
      %v3355 = vmul.f32 %v3291, 0.2
      %v3356 = vmul.f32 %v3292, 0.2
      %v3357 = vmul.f32 %v3293, 0.2
      %v3358 = vmul.f32 %v3294, 0.2
      %v3359 = vmul.f32 %v3295, 0.2
      %v3360 = vmul.f32 %v3296, 0.2
      %v3361 = vmul.f32 %v3297, 0.2
      %v3362 = vmul.f32 %v3298, 0.2
      %v3363 = vmul.f32 %v3299, 0.2
      %v3364 = vmul.f32 %v3300, 0.2
      %v3365 = vmul.f32 %v3301, 0.2
      %v3366 = vmul.f32 %v3302, 0.2
      %v3367 = vsel %vm3303, %v3271, %v3335
      %v3368 = vsel %vm3304, %v3272, %v3336
      %v3369 = vsel %vm3305, %v3273, %v3337
      %v3370 = vsel %vm3306, %v3274, %v3338
      %v3371 = vsel %vm3307, %v3275, %v3339
      %v3372 = vsel %vm3308, %v3276, %v3340
      %v3373 = vsel %vm3309, %v3277, %v3341
      %v3374 = vsel %vm3310, %v3278, %v3342
      %v3375 = vsel %vm3311, %v3279, %v3343
      %v3376 = vsel %vm3312, %v3280, %v3344
      %v3377 = vsel %vm3313, %v3281, %v3345
      %v3378 = vsel %vm3314, %v3282, %v3346
      %v3379 = vsel %vm3315, %v3283, %v3347
      %v3380 = vsel %vm3316, %v3284, %v3348
      %v3381 = vsel %vm3317, %v3285, %v3349
      %v3382 = vsel %vm3318, %v3286, %v3350
      %v3383 = vsel %vm3319, %v3287, %v3351
      %v3384 = vsel %vm3320, %v3288, %v3352
      %v3385 = vsel %vm3321, %v3289, %v3353
      %v3386 = vsel %vm3322, %v3290, %v3354
      %v3387 = vsel %vm3323, %v3291, %v3355
      %v3388 = vsel %vm3324, %v3292, %v3356
      %v3389 = vsel %vm3325, %v3293, %v3357
      %v3390 = vsel %vm3326, %v3294, %v3358
      %v3391 = vsel %vm3327, %v3295, %v3359
      %v3392 = vsel %vm3328, %v3296, %v3360
      %v3393 = vsel %vm3329, %v3297, %v3361
      %v3394 = vsel %vm3330, %v3298, %v3362
      %v3395 = vsel %vm3331, %v3299, %v3363
      %v3396 = vsel %vm3332, %v3300, %v3364
      %v3397 = vsel %vm3333, %v3301, %v3365
      %v3398 = vsel %vm3334, %v3302, %v3366
      %v3399 = vpack.c.bf16 %v3369, %v3367
      %v3400 = vpack.c.bf16 %v3370, %v3368
      %v3401 = vpack.c.bf16 %v3373, %v3371
      %v3402 = vpack.c.bf16 %v3374, %v3372
      %v3403 = vpack.c.bf16 %v3377, %v3375
      %v3404 = vpack.c.bf16 %v3378, %v3376
      %v3405 = vpack.c.bf16 %v3381, %v3379
      %v3406 = vpack.c.bf16 %v3382, %v3380
      %v3407 = vpack.c.bf16 %v3385, %v3383
      %v3408 = vpack.c.bf16 %v3386, %v3384
      %v3409 = vpack.c.bf16 %v3389, %v3387
      %v3410 = vpack.c.bf16 %v3390, %v3388
      %v3411 = vpack.c.bf16 %v3393, %v3391
      %v3412 = vpack.c.bf16 %v3394, %v3392
      %v3413 = vpack.c.bf16 %v3397, %v3395
      %v3414 = vpack.c.bf16 %v3398, %v3396
      %v3415 = vunpack.c.l.bf16 %v3399
      %v3416 = vunpack.c.l.bf16 %v3400
      %v3417 = vunpack.c.h.bf16 %v3399
      %v3418 = vunpack.c.h.bf16 %v3400
      %v3419 = vunpack.c.l.bf16 %v3401
      %v3420 = vunpack.c.l.bf16 %v3402
      %v3421 = vunpack.c.h.bf16 %v3401
      %v3422 = vunpack.c.h.bf16 %v3402
      %v3423 = vunpack.c.l.bf16 %v3403
      %v3424 = vunpack.c.l.bf16 %v3404
      %v3425 = vunpack.c.h.bf16 %v3403
      %v3426 = vunpack.c.h.bf16 %v3404
      %v3427 = vunpack.c.l.bf16 %v3405
      %v3428 = vunpack.c.l.bf16 %v3406
      %v3429 = vunpack.c.h.bf16 %v3405
      %v3430 = vunpack.c.h.bf16 %v3406
      %v3431 = vunpack.c.l.bf16 %v3407
      %v3432 = vunpack.c.l.bf16 %v3408
      %v3433 = vunpack.c.h.bf16 %v3407
      %v3434 = vunpack.c.h.bf16 %v3408
      %v3435 = vunpack.c.l.bf16 %v3409
      %v3436 = vunpack.c.l.bf16 %v3410
      %v3437 = vunpack.c.h.bf16 %v3409
      %v3438 = vunpack.c.h.bf16 %v3410
      %v3439 = vunpack.c.l.bf16 %v3411
      %v3440 = vunpack.c.l.bf16 %v3412
      %v3441 = vunpack.c.h.bf16 %v3411
      %v3442 = vunpack.c.h.bf16 %v3412
      %v3443 = vunpack.c.l.bf16 %v3413
      %v3444 = vunpack.c.l.bf16 %v3414
      %v3445 = vunpack.c.h.bf16 %v3413
      %v3446 = vunpack.c.h.bf16 %v3414
      %3447 = vset.pattern.permute.xlu0 4
      %3448 = vperm.xlu0 %3447, %v625
      %v3449 = vpop.permute.xlu0 %3448
      %3451 = vset.pattern.permute.xlu0 4
      %3452 = vperm.xlu0 %3451, %v626
      %v3453 = vpop.permute.xlu0 %3452
      %3455 = vset.pattern.permute.xlu0 4
      %3456 = vperm.xlu0 %3455, %v627
      %v3457 = vpop.permute.xlu0 %3456
      %3459 = vset.pattern.permute.xlu0 4
      %3460 = vperm.xlu0 %3459, %v628
      %v3461 = vpop.permute.xlu0 %3460
      %3463 = vset.pattern.permute.xlu0 4
      %3464 = vperm.xlu0 %3463, %v629
      %v3465 = vpop.permute.xlu0 %3464
      %3467 = vset.pattern.permute.xlu0 4
      %3468 = vperm.xlu0 %3467, %v630
      %v3469 = vpop.permute.xlu0 %3468
      %3471 = vset.pattern.permute.xlu0 4
      %3472 = vperm.xlu0 %3471, %v631
      %v3473 = vpop.permute.xlu0 %3472
      %3475 = vset.pattern.permute.xlu0 4
      %3476 = vperm.xlu0 %3475, %v632
      %v3477 = vpop.permute.xlu0 %3476
      %3479 = vset.pattern.permute.xlu0 4
      %3480 = vperm.xlu0 %3479, %v633
      %v3481 = vpop.permute.xlu0 %3480
      %3483 = vset.pattern.permute.xlu0 4
      %3484 = vperm.xlu0 %3483, %v634
      %v3485 = vpop.permute.xlu0 %3484
      %3487 = vset.pattern.permute.xlu0 4
      %3488 = vperm.xlu0 %3487, %v635
      %v3489 = vpop.permute.xlu0 %3488
      %3491 = vset.pattern.permute.xlu0 4
      %3492 = vperm.xlu0 %3491, %v636
      %v3493 = vpop.permute.xlu0 %3492
      %3495 = vset.pattern.permute.xlu0 4
      %3496 = vperm.xlu0 %3495, %v637
      %v3497 = vpop.permute.xlu0 %3496
      %3499 = vset.pattern.permute.xlu0 4
      %3500 = vperm.xlu0 %3499, %v638
      %v3501 = vpop.permute.xlu0 %3500
      %3503 = vset.pattern.permute.xlu0 4
      %3504 = vperm.xlu0 %3503, %v639
      %v3505 = vpop.permute.xlu0 %3504
      %3507 = vset.pattern.permute.xlu0 4
      %3508 = vperm.xlu0 %3507, %v640
      %v3509 = vpop.permute.xlu0 %3508
      %v3511 = vmul.f32 %v3415, %v3449
      %v3512 = vmul.f32 %v3416, %v3449
      %v3513 = vmul.f32 %v3417, %v3453
      %v3514 = vmul.f32 %v3418, %v3453
      %v3515 = vmul.f32 %v3419, %v3457
      %v3516 = vmul.f32 %v3420, %v3457
      %v3517 = vmul.f32 %v3421, %v3461
      %v3518 = vmul.f32 %v3422, %v3461
      %v3519 = vmul.f32 %v3423, %v3465
      %v3520 = vmul.f32 %v3424, %v3465
      %v3521 = vmul.f32 %v3425, %v3469
      %v3522 = vmul.f32 %v3426, %v3469
      %v3523 = vmul.f32 %v3427, %v3473
      %v3524 = vmul.f32 %v3428, %v3473
      %v3525 = vmul.f32 %v3429, %v3477
      %v3526 = vmul.f32 %v3430, %v3477
      %v3527 = vmul.f32 %v3431, %v3481
      %v3528 = vmul.f32 %v3432, %v3481
      %v3529 = vmul.f32 %v3433, %v3485
      %v3530 = vmul.f32 %v3434, %v3485
      %v3531 = vmul.f32 %v3435, %v3489
      %v3532 = vmul.f32 %v3436, %v3489
      %v3533 = vmul.f32 %v3437, %v3493
      %v3534 = vmul.f32 %v3438, %v3493
      %v3535 = vmul.f32 %v3439, %v3497
      %v3536 = vmul.f32 %v3440, %v3497
      %v3537 = vmul.f32 %v3441, %v3501
      %v3538 = vmul.f32 %v3442, %v3501
      %v3539 = vmul.f32 %v3443, %v3505
      %v3540 = vmul.f32 %v3444, %v3505
      %v3541 = vmul.f32 %v3445, %v3509
      %v3542 = vmul.f32 %v3446, %v3509
      %v3543 = vpack.c.bf16 %v3513, %v3511
      %v3544 = vpack.c.bf16 %v3514, %v3512
      %v3545 = vpack.c.bf16 %v3517, %v3515
      %v3546 = vpack.c.bf16 %v3518, %v3516
      %v3547 = vpack.c.bf16 %v3521, %v3519
      %v3548 = vpack.c.bf16 %v3522, %v3520
      %v3549 = vpack.c.bf16 %v3525, %v3523
      %v3550 = vpack.c.bf16 %v3526, %v3524
      %v3551 = vpack.c.bf16 %v3529, %v3527
      %v3552 = vpack.c.bf16 %v3530, %v3528
      %v3553 = vpack.c.bf16 %v3533, %v3531
      %v3554 = vpack.c.bf16 %v3534, %v3532
      %v3555 = vpack.c.bf16 %v3537, %v3535
      %v3556 = vpack.c.bf16 %v3538, %v3536
      %v3557 = vpack.c.bf16 %v3541, %v3539
      %v3558 = vpack.c.bf16 %v3542, %v3540
      %s3559 = scalar_lea.vmem %s2, 256
      %v3560 = vld [vmem:[%s3559] sm:$0xf]
      %v3561 = vld [vmem:[%s3559 + $0x4] sm:$0xf]
      %v3562 = vld [vmem:[%s3559 + $0x8] sm:$0xf]
      %v3563 = vld [vmem:[%s3559 + $0xc] sm:$0xf]
      %v3564 = vld [vmem:[%s3559 + $0x10] sm:$0xf]
      %v3565 = vld [vmem:[%s3559 + $0x14] sm:$0xf]
      %v3566 = vld [vmem:[%s3559 + $0x18] sm:$0xf]
      %v3567 = vld [vmem:[%s3559 + $0x1c] sm:$0xf]
      %v3568 = vld [vmem:[%s3559 + $0x20] sm:$0xf]
      %v3569 = vld [vmem:[%s3559 + $0x24] sm:$0xf]
      %v3570 = vld [vmem:[%s3559 + $0x28] sm:$0xf]
      %v3571 = vld [vmem:[%s3559 + $0x2c] sm:$0xf]
      %v3572 = vld [vmem:[%s3559 + $0x30] sm:$0xf]
      %v3573 = vld [vmem:[%s3559 + $0x34] sm:$0xf]
      %v3574 = vld [vmem:[%s3559 + $0x38] sm:$0xf]
      %v3575 = vld [vmem:[%s3559 + $0x3c] sm:$0xf]
      %v3592 = vunpack.c.l.b16 %v3560
      %v3593 = vunpack.c.l.b16 %v3561
      %v3594 = vunpack.c.l.b16 %v3562
      %v3595 = vunpack.c.l.b16 %v3563
      %v3596 = vunpack.c.l.b16 %v3564
      %v3597 = vunpack.c.l.b16 %v3565
      %v3598 = vunpack.c.l.b16 %v3566
      %v3599 = vunpack.c.l.b16 %v3567
      %v3600 = vunpack.c.l.b16 %v3568
      %v3601 = vunpack.c.l.b16 %v3569
      %v3602 = vunpack.c.l.b16 %v3570
      %v3603 = vunpack.c.l.b16 %v3571
      %v3604 = vunpack.c.l.b16 %v3572
      %v3605 = vunpack.c.l.b16 %v3573
      %v3606 = vunpack.c.l.b16 %v3574
      %v3607 = vunpack.c.l.b16 %v3575
      %v3608 = vpack.c.b16 %v3593, %v3592
      %v3609 = vpack.c.b16 %v3595, %v3594
      %v3610 = vpack.c.b16 %v3597, %v3596
      %v3611 = vpack.c.b16 %v3599, %v3598
      %v3612 = vpack.c.b16 %v3601, %v3600
      %v3613 = vpack.c.b16 %v3603, %v3602
      %v3614 = vpack.c.b16 %v3605, %v3604
      %v3615 = vpack.c.b16 %v3607, %v3606
      %3624 = vmatprep.subr.bf16.mxu0 %v3558
      %3625 = vmatpush1.bf16.msra.mxu0 %v3557
      %3626 = vmatprep.subr.bf16.mxu0 %v3556
      %3627 = vmatpush1.bf16.msra.mxu0 %v3555
      %3628 = vmatprep.subr.bf16.mxu0 %v3554
      %3629 = vmatpush1.bf16.msra.mxu0 %v3553
      %3630 = vmatprep.subr.bf16.mxu0 %v3552
      %3631 = vmatpush1.bf16.msra.mxu0 %v3551
      %3632 = vmatprep.subr.bf16.mxu0 %v3550
      %3633 = vmatpush1.bf16.msra.mxu0 %v3549
      %3634 = vmatprep.subr.bf16.mxu0 %v3548
      %3635 = vmatpush1.bf16.msra.mxu0 %v3547
      %3636 = vmatprep.subr.bf16.mxu0 %v3546
      %3637 = vmatpush1.bf16.msra.mxu0 %v3545
      %3638 = vmatprep.subr.bf16.mxu0 %v3544
      %3639 = vmatpush1.bf16.msra.mxu0 %v3543
      %3640 = vmatprep.subr.bf16.mxu0 0
      %3641 = vmatpush2.bf16.msra.mxu0 0
      %3642 = vmatprep.subr.bf16.mxu0 0
      %3643 = vmatpush2.bf16.msra.mxu0 0
      %3644 = vmatprep.subr.bf16.mxu0 0
      %3645 = vmatpush2.bf16.msra.mxu0 0
      %3646 = vmatprep.subr.bf16.mxu0 0
      %3647 = vmatpush2.bf16.msra.mxu0 0
      %3648 = vmatprep.subr.bf16.mxu0 0
      %3649 = vmatpush2.bf16.msra.mxu0 0
      %3650 = vmatprep.subr.bf16.mxu0 0
      %3651 = vmatpush2.bf16.msra.mxu0 0
      %3652 = vmatprep.subr.bf16.mxu0 0
      %3653 = vmatpush2.bf16.msra.mxu0 0
      %3654 = vmatprep.subr.bf16.mxu0 0
      %3655 = vmatpush2.bf16.msra.mxu0 0
      %3656 = vmatprep.mubr.bf16.mxu0 0
      %3657 = vmatmul.mubr.bf16.gmra.mxu0 %v3608
      %v3658 = vpop.f32.mrf.mxu0
      %v3659 = vadd.f32 0.0, %v3658
      %v3660 = vpop.f32.mrf.mxu0
      %v3661 = vadd.f32 0.0, %v3660
      %v3662 = vpop.f32.mrf.mxu0
      %v3663 = vadd.f32 0.0, %v3662
      %v3664 = vpop.f32.mrf.mxu0
      %v3665 = vadd.f32 0.0, %v3664
      %3666 = vmatprep.mubr.bf16.mxu0 0
      %3667 = vmatmul.mubr.bf16.gmra.mxu0 %v3609
      %v3668 = vpop.f32.mrf.mxu0
      %v3669 = vadd.f32 0.0, %v3668
      %v3670 = vpop.f32.mrf.mxu0
      %v3671 = vadd.f32 0.0, %v3670
      %v3672 = vpop.f32.mrf.mxu0
      %v3673 = vadd.f32 0.0, %v3672
      %v3674 = vpop.f32.mrf.mxu0
      %v3675 = vadd.f32 0.0, %v3674
      %3676 = vmatprep.mubr.bf16.mxu0 0
      %3677 = vmatmul.mubr.bf16.gmra.mxu0 %v3610
      %v3678 = vpop.f32.mrf.mxu0
      %v3679 = vadd.f32 0.0, %v3678
      %v3680 = vpop.f32.mrf.mxu0
      %v3681 = vadd.f32 0.0, %v3680
      %v3682 = vpop.f32.mrf.mxu0
      %v3683 = vadd.f32 0.0, %v3682
      %v3684 = vpop.f32.mrf.mxu0
      %v3685 = vadd.f32 0.0, %v3684
      %3686 = vmatprep.mubr.bf16.mxu0 0
      %3687 = vmatmul.mubr.bf16.gmra.mxu0 %v3611
      %v3688 = vpop.f32.mrf.mxu0
      %v3689 = vadd.f32 0.0, %v3688
      %v3690 = vpop.f32.mrf.mxu0
      %v3691 = vadd.f32 0.0, %v3690
      %v3692 = vpop.f32.mrf.mxu0
      %v3693 = vadd.f32 0.0, %v3692
      %v3694 = vpop.f32.mrf.mxu0
      %v3695 = vadd.f32 0.0, %v3694
      %3696 = vmatprep.mubr.bf16.mxu0 0
      %3697 = vmatmul.mubr.bf16.gmra.mxu0 %v3612
      %v3698 = vpop.f32.mrf.mxu0
      %v3699 = vadd.f32 0.0, %v3698
      %v3700 = vpop.f32.mrf.mxu0
      %v3701 = vadd.f32 0.0, %v3700
      %v3702 = vpop.f32.mrf.mxu0
      %v3703 = vadd.f32 0.0, %v3702
      %v3704 = vpop.f32.mrf.mxu0
      %v3705 = vadd.f32 0.0, %v3704
      %3706 = vmatprep.mubr.bf16.mxu0 0
      %3707 = vmatmul.mubr.bf16.gmra.mxu0 %v3613
      %v3708 = vpop.f32.mrf.mxu0
      %v3709 = vadd.f32 0.0, %v3708
      %v3710 = vpop.f32.mrf.mxu0
      %v3711 = vadd.f32 0.0, %v3710
      %v3712 = vpop.f32.mrf.mxu0
      %v3713 = vadd.f32 0.0, %v3712
      %v3714 = vpop.f32.mrf.mxu0
      %v3715 = vadd.f32 0.0, %v3714
      %3716 = vmatprep.mubr.bf16.mxu0 0
      %3717 = vmatmul.mubr.bf16.gmra.mxu0 %v3614
      %v3718 = vpop.f32.mrf.mxu0
      %v3719 = vadd.f32 0.0, %v3718
      %v3720 = vpop.f32.mrf.mxu0
      %v3721 = vadd.f32 0.0, %v3720
      %v3722 = vpop.f32.mrf.mxu0
      %v3723 = vadd.f32 0.0, %v3722
      %v3724 = vpop.f32.mrf.mxu0
      %v3725 = vadd.f32 0.0, %v3724
      %3726 = vmatprep.mubr.bf16.mxu0 0
      %3727 = vmatmul.mubr.bf16.gmra.mxu0 %v3615
      %v3728 = vpop.f32.mrf.mxu0
      %v3729 = vadd.f32 0.0, %v3728
      %v3730 = vpop.f32.mrf.mxu0
      %v3731 = vadd.f32 0.0, %v3730
      %v3732 = vpop.f32.mrf.mxu0
      %v3733 = vadd.f32 0.0, %v3732
      %v3734 = vpop.f32.mrf.mxu0
      %v3735 = vadd.f32 0.0, %v3734
      %3736 = vdwg.mxu0
      %3737 = vset.pattern.permute.xlu0 11
      %3738 = vperm.xlu0 %3737, %v625
      %v3739 = vpop.permute.xlu0 %3738
      %3741 = vset.pattern.permute.xlu0 11
      %3742 = vperm.xlu0 %3741, %v626
      %v3743 = vpop.permute.xlu0 %3742
      %3745 = vset.pattern.permute.xlu0 11
      %3746 = vperm.xlu0 %3745, %v627
      %v3747 = vpop.permute.xlu0 %3746
      %3749 = vset.pattern.permute.xlu0 11
      %3750 = vperm.xlu0 %3749, %v628
      %v3751 = vpop.permute.xlu0 %3750
      %3753 = vset.pattern.permute.xlu0 11
      %3754 = vperm.xlu0 %3753, %v629
      %v3755 = vpop.permute.xlu0 %3754
      %3757 = vset.pattern.permute.xlu0 11
      %3758 = vperm.xlu0 %3757, %v630
      %v3759 = vpop.permute.xlu0 %3758
      %3761 = vset.pattern.permute.xlu0 11
      %3762 = vperm.xlu0 %3761, %v631
      %v3763 = vpop.permute.xlu0 %3762
      %3765 = vset.pattern.permute.xlu0 11
      %3766 = vperm.xlu0 %3765, %v632
      %v3767 = vpop.permute.xlu0 %3766
      %3769 = vset.pattern.permute.xlu0 11
      %3770 = vperm.xlu0 %3769, %v633
      %v3771 = vpop.permute.xlu0 %3770
      %3773 = vset.pattern.permute.xlu0 11
      %3774 = vperm.xlu0 %3773, %v634
      %v3775 = vpop.permute.xlu0 %3774
      %3777 = vset.pattern.permute.xlu0 11
      %3778 = vperm.xlu0 %3777, %v635
      %v3779 = vpop.permute.xlu0 %3778
      %3781 = vset.pattern.permute.xlu0 11
      %3782 = vperm.xlu0 %3781, %v636
      %v3783 = vpop.permute.xlu0 %3782
      %3785 = vset.pattern.permute.xlu0 11
      %3786 = vperm.xlu0 %3785, %v637
      %v3787 = vpop.permute.xlu0 %3786
      %3789 = vset.pattern.permute.xlu0 11
      %3790 = vperm.xlu0 %3789, %v638
      %v3791 = vpop.permute.xlu0 %3790
      %3793 = vset.pattern.permute.xlu0 11
      %3794 = vperm.xlu0 %3793, %v639
      %v3795 = vpop.permute.xlu0 %3794
      %3797 = vset.pattern.permute.xlu0 11
      %3798 = vperm.xlu0 %3797, %v640
      %v3799 = vpop.permute.xlu0 %3798
      %v3801 = vmul.f32 %v3659, %v3739
      %v3802 = vmul.f32 %v3661, %v3739
      %v3803 = vmul.f32 %v3663, %v3743
      %v3804 = vmul.f32 %v3665, %v3743
      %v3805 = vmul.f32 %v3669, %v3747
      %v3806 = vmul.f32 %v3671, %v3747
      %v3807 = vmul.f32 %v3673, %v3751
      %v3808 = vmul.f32 %v3675, %v3751
      %v3809 = vmul.f32 %v3679, %v3755
      %v3810 = vmul.f32 %v3681, %v3755
      %v3811 = vmul.f32 %v3683, %v3759
      %v3812 = vmul.f32 %v3685, %v3759
      %v3813 = vmul.f32 %v3689, %v3763
      %v3814 = vmul.f32 %v3691, %v3763
      %v3815 = vmul.f32 %v3693, %v3767
      %v3816 = vmul.f32 %v3695, %v3767
      %v3817 = vmul.f32 %v3699, %v3771
      %v3818 = vmul.f32 %v3701, %v3771
      %v3819 = vmul.f32 %v3703, %v3775
      %v3820 = vmul.f32 %v3705, %v3775
      %v3821 = vmul.f32 %v3709, %v3779
      %v3822 = vmul.f32 %v3711, %v3779
      %v3823 = vmul.f32 %v3713, %v3783
      %v3824 = vmul.f32 %v3715, %v3783
      %v3825 = vmul.f32 %v3719, %v3787
      %v3826 = vmul.f32 %v3721, %v3787
      %v3827 = vmul.f32 %v3723, %v3791
      %v3828 = vmul.f32 %v3725, %v3791
      %v3829 = vmul.f32 %v3729, %v3795
      %v3830 = vmul.f32 %v3731, %v3795
      %v3831 = vmul.f32 %v3733, %v3799
      %v3832 = vmul.f32 %v3735, %v3799
      %v3833 = vld [vmem:[%s591] sm:$0x3]
      %v3835 = vlaneseq
      %v3836 = vshrl.u32 %v3835, 7
      %v3837 = vsub.s32 0, %v3836
      %v3838 = vrot.slane %v3833, %v3837
      %v3839 = vlaneseq
      %v3840 = vshrl.u32 %v3839, 7
      %v3841 = vsub.s32 1, %v3840
      %v3842 = vrot.slane %v3833, %v3841
      %v3845 = vadd.f32 %v3801, %v3838
      %v3846 = vadd.f32 %v3802, %v3842
      %v3847 = vadd.f32 %v3803, %v3838
      %v3848 = vadd.f32 %v3804, %v3842
      %v3849 = vadd.f32 %v3805, %v3838
      %v3850 = vadd.f32 %v3806, %v3842
      %v3851 = vadd.f32 %v3807, %v3838
      %v3852 = vadd.f32 %v3808, %v3842
      %v3853 = vadd.f32 %v3809, %v3838
      %v3854 = vadd.f32 %v3810, %v3842
      %v3855 = vadd.f32 %v3811, %v3838
      %v3856 = vadd.f32 %v3812, %v3842
      %v3857 = vadd.f32 %v3813, %v3838
      %v3858 = vadd.f32 %v3814, %v3842
      %v3859 = vadd.f32 %v3815, %v3838
      %v3860 = vadd.f32 %v3816, %v3842
      %v3861 = vadd.f32 %v3817, %v3838
      %v3862 = vadd.f32 %v3818, %v3842
      %v3863 = vadd.f32 %v3819, %v3838
      %v3864 = vadd.f32 %v3820, %v3842
      %v3865 = vadd.f32 %v3821, %v3838
      %v3866 = vadd.f32 %v3822, %v3842
      %v3867 = vadd.f32 %v3823, %v3838
      %v3868 = vadd.f32 %v3824, %v3842
      %v3869 = vadd.f32 %v3825, %v3838
      %v3870 = vadd.f32 %v3826, %v3842
      %v3871 = vadd.f32 %v3827, %v3838
      %v3872 = vadd.f32 %v3828, %v3842
      %v3873 = vadd.f32 %v3829, %v3838
      %v3874 = vadd.f32 %v3830, %v3842
      %v3875 = vadd.f32 %v3831, %v3838
      %v3876 = vadd.f32 %v3832, %v3842
      %3877 = vset.pattern.permute.xlu0 4
      %3878 = vperm.xlu0 %3877, %v659
      %v3879 = vpop.permute.xlu0 %3878
      %3881 = vset.pattern.permute.xlu0 4
      %3882 = vperm.xlu0 %3881, %v660
      %v3883 = vpop.permute.xlu0 %3882
      %3885 = vset.pattern.permute.xlu0 4
      %3886 = vperm.xlu0 %3885, %v661
      %v3887 = vpop.permute.xlu0 %3886
      %3889 = vset.pattern.permute.xlu0 4
      %3890 = vperm.xlu0 %3889, %v662
      %v3891 = vpop.permute.xlu0 %3890
      %3893 = vset.pattern.permute.xlu0 4
      %3894 = vperm.xlu0 %3893, %v663
      %v3895 = vpop.permute.xlu0 %3894
      %3897 = vset.pattern.permute.xlu0 4
      %3898 = vperm.xlu0 %3897, %v664
      %v3899 = vpop.permute.xlu0 %3898
      %3901 = vset.pattern.permute.xlu0 4
      %3902 = vperm.xlu0 %3901, %v665
      %v3903 = vpop.permute.xlu0 %3902
      %3905 = vset.pattern.permute.xlu0 4
      %3906 = vperm.xlu0 %3905, %v666
      %v3907 = vpop.permute.xlu0 %3906
      %3909 = vset.pattern.permute.xlu0 4
      %3910 = vperm.xlu0 %3909, %v667
      %v3911 = vpop.permute.xlu0 %3910
      %3913 = vset.pattern.permute.xlu0 4
      %3914 = vperm.xlu0 %3913, %v668
      %v3915 = vpop.permute.xlu0 %3914
      %3917 = vset.pattern.permute.xlu0 4
      %3918 = vperm.xlu0 %3917, %v669
      %v3919 = vpop.permute.xlu0 %3918
      %3921 = vset.pattern.permute.xlu0 4
      %3922 = vperm.xlu0 %3921, %v670
      %v3923 = vpop.permute.xlu0 %3922
      %3925 = vset.pattern.permute.xlu0 4
      %3926 = vperm.xlu0 %3925, %v671
      %v3927 = vpop.permute.xlu0 %3926
      %3929 = vset.pattern.permute.xlu0 4
      %3930 = vperm.xlu0 %3929, %v672
      %v3931 = vpop.permute.xlu0 %3930
      %3933 = vset.pattern.permute.xlu0 4
      %3934 = vperm.xlu0 %3933, %v673
      %v3935 = vpop.permute.xlu0 %3934
      %3937 = vset.pattern.permute.xlu0 4
      %3938 = vperm.xlu0 %3937, %v674
      %v3939 = vpop.permute.xlu0 %3938
      %v3941 = vadd.f32 %v3845, %v3879
      %v3942 = vadd.f32 %v3846, %v3879
      %v3943 = vadd.f32 %v3847, %v3883
      %v3944 = vadd.f32 %v3848, %v3883
      %v3945 = vadd.f32 %v3849, %v3887
      %v3946 = vadd.f32 %v3850, %v3887
      %v3947 = vadd.f32 %v3851, %v3891
      %v3948 = vadd.f32 %v3852, %v3891
      %v3949 = vadd.f32 %v3853, %v3895
      %v3950 = vadd.f32 %v3854, %v3895
      %v3951 = vadd.f32 %v3855, %v3899
      %v3952 = vadd.f32 %v3856, %v3899
      %v3953 = vadd.f32 %v3857, %v3903
      %v3954 = vadd.f32 %v3858, %v3903
      %v3955 = vadd.f32 %v3859, %v3907
      %v3956 = vadd.f32 %v3860, %v3907
      %v3957 = vadd.f32 %v3861, %v3911
      %v3958 = vadd.f32 %v3862, %v3911
      %v3959 = vadd.f32 %v3863, %v3915
      %v3960 = vadd.f32 %v3864, %v3915
      %v3961 = vadd.f32 %v3865, %v3919
      %v3962 = vadd.f32 %v3866, %v3919
      %v3963 = vadd.f32 %v3867, %v3923
      %v3964 = vadd.f32 %v3868, %v3923
      %v3965 = vadd.f32 %v3869, %v3927
      %v3966 = vadd.f32 %v3870, %v3927
      %v3967 = vadd.f32 %v3871, %v3931
      %v3968 = vadd.f32 %v3872, %v3931
      %v3969 = vadd.f32 %v3873, %v3935
      %v3970 = vadd.f32 %v3874, %v3935
      %v3971 = vadd.f32 %v3875, %v3939
      %v3972 = vadd.f32 %v3876, %v3939
      %vm3973 = vcmp.ge.f32.partialorder %v3941, 0.0
      %vm3974 = vcmp.ge.f32.partialorder %v3942, 0.0
      %vm3975 = vcmp.ge.f32.partialorder %v3943, 0.0
      %vm3976 = vcmp.ge.f32.partialorder %v3944, 0.0
      %vm3977 = vcmp.ge.f32.partialorder %v3945, 0.0
      %vm3978 = vcmp.ge.f32.partialorder %v3946, 0.0
      %vm3979 = vcmp.ge.f32.partialorder %v3947, 0.0
      %vm3980 = vcmp.ge.f32.partialorder %v3948, 0.0
      %vm3981 = vcmp.ge.f32.partialorder %v3949, 0.0
      %vm3982 = vcmp.ge.f32.partialorder %v3950, 0.0
      %vm3983 = vcmp.ge.f32.partialorder %v3951, 0.0
      %vm3984 = vcmp.ge.f32.partialorder %v3952, 0.0
      %vm3985 = vcmp.ge.f32.partialorder %v3953, 0.0
      %vm3986 = vcmp.ge.f32.partialorder %v3954, 0.0
      %vm3987 = vcmp.ge.f32.partialorder %v3955, 0.0
      %vm3988 = vcmp.ge.f32.partialorder %v3956, 0.0
      %vm3989 = vcmp.ge.f32.partialorder %v3957, 0.0
      %vm3990 = vcmp.ge.f32.partialorder %v3958, 0.0
      %vm3991 = vcmp.ge.f32.partialorder %v3959, 0.0
      %vm3992 = vcmp.ge.f32.partialorder %v3960, 0.0
      %vm3993 = vcmp.ge.f32.partialorder %v3961, 0.0
      %vm3994 = vcmp.ge.f32.partialorder %v3962, 0.0
      %vm3995 = vcmp.ge.f32.partialorder %v3963, 0.0
      %vm3996 = vcmp.ge.f32.partialorder %v3964, 0.0
      %vm3997 = vcmp.ge.f32.partialorder %v3965, 0.0
      %vm3998 = vcmp.ge.f32.partialorder %v3966, 0.0
      %vm3999 = vcmp.ge.f32.partialorder %v3967, 0.0
      %vm4000 = vcmp.ge.f32.partialorder %v3968, 0.0
      %vm4001 = vcmp.ge.f32.partialorder %v3969, 0.0
      %vm4002 = vcmp.ge.f32.partialorder %v3970, 0.0
      %vm4003 = vcmp.ge.f32.partialorder %v3971, 0.0
      %vm4004 = vcmp.ge.f32.partialorder %v3972, 0.0
      %v4005 = vmul.f32 %v3941, 0.2
      %v4006 = vmul.f32 %v3942, 0.2
      %v4007 = vmul.f32 %v3943, 0.2
      %v4008 = vmul.f32 %v3944, 0.2
      %v4009 = vmul.f32 %v3945, 0.2
      %v4010 = vmul.f32 %v3946, 0.2
      %v4011 = vmul.f32 %v3947, 0.2
      %v4012 = vmul.f32 %v3948, 0.2
      %v4013 = vmul.f32 %v3949, 0.2
      %v4014 = vmul.f32 %v3950, 0.2
      %v4015 = vmul.f32 %v3951, 0.2
      %v4016 = vmul.f32 %v3952, 0.2
      %v4017 = vmul.f32 %v3953, 0.2
      %v4018 = vmul.f32 %v3954, 0.2
      %v4019 = vmul.f32 %v3955, 0.2
      %v4020 = vmul.f32 %v3956, 0.2
      %v4021 = vmul.f32 %v3957, 0.2
      %v4022 = vmul.f32 %v3958, 0.2
      %v4023 = vmul.f32 %v3959, 0.2
      %v4024 = vmul.f32 %v3960, 0.2
      %v4025 = vmul.f32 %v3961, 0.2
      %v4026 = vmul.f32 %v3962, 0.2
      %v4027 = vmul.f32 %v3963, 0.2
      %v4028 = vmul.f32 %v3964, 0.2
      %v4029 = vmul.f32 %v3965, 0.2
      %v4030 = vmul.f32 %v3966, 0.2
      %v4031 = vmul.f32 %v3967, 0.2
      %v4032 = vmul.f32 %v3968, 0.2
      %v4033 = vmul.f32 %v3969, 0.2
      %v4034 = vmul.f32 %v3970, 0.2
      %v4035 = vmul.f32 %v3971, 0.2
      %v4036 = vmul.f32 %v3972, 0.2
      %v4037 = vsel %vm3973, %v3941, %v4005
      %v4038 = vsel %vm3974, %v3942, %v4006
      %v4039 = vsel %vm3975, %v3943, %v4007
      %v4040 = vsel %vm3976, %v3944, %v4008
      %v4041 = vsel %vm3977, %v3945, %v4009
      %v4042 = vsel %vm3978, %v3946, %v4010
      %v4043 = vsel %vm3979, %v3947, %v4011
      %v4044 = vsel %vm3980, %v3948, %v4012
      %v4045 = vsel %vm3981, %v3949, %v4013
      %v4046 = vsel %vm3982, %v3950, %v4014
      %v4047 = vsel %vm3983, %v3951, %v4015
      %v4048 = vsel %vm3984, %v3952, %v4016
      %v4049 = vsel %vm3985, %v3953, %v4017
      %v4050 = vsel %vm3986, %v3954, %v4018
      %v4051 = vsel %vm3987, %v3955, %v4019
      %v4052 = vsel %vm3988, %v3956, %v4020
      %v4053 = vsel %vm3989, %v3957, %v4021
      %v4054 = vsel %vm3990, %v3958, %v4022
      %v4055 = vsel %vm3991, %v3959, %v4023
      %v4056 = vsel %vm3992, %v3960, %v4024
      %v4057 = vsel %vm3993, %v3961, %v4025
      %v4058 = vsel %vm3994, %v3962, %v4026
      %v4059 = vsel %vm3995, %v3963, %v4027
      %v4060 = vsel %vm3996, %v3964, %v4028
      %v4061 = vsel %vm3997, %v3965, %v4029
      %v4062 = vsel %vm3998, %v3966, %v4030
      %v4063 = vsel %vm3999, %v3967, %v4031
      %v4064 = vsel %vm4000, %v3968, %v4032
      %v4065 = vsel %vm4001, %v3969, %v4033
      %v4066 = vsel %vm4002, %v3970, %v4034
      %v4067 = vsel %vm4003, %v3971, %v4035
      %v4068 = vsel %vm4004, %v3972, %v4036
      %v4069 = vpack.c.bf16 %v4039, %v4037
      %v4070 = vpack.c.bf16 %v4040, %v4038
      %v4071 = vpack.c.bf16 %v4043, %v4041
      %v4072 = vpack.c.bf16 %v4044, %v4042
      %v4073 = vpack.c.bf16 %v4047, %v4045
      %v4074 = vpack.c.bf16 %v4048, %v4046
      %v4075 = vpack.c.bf16 %v4051, %v4049
      %v4076 = vpack.c.bf16 %v4052, %v4050
      %v4077 = vpack.c.bf16 %v4055, %v4053
      %v4078 = vpack.c.bf16 %v4056, %v4054
      %v4079 = vpack.c.bf16 %v4059, %v4057
      %v4080 = vpack.c.bf16 %v4060, %v4058
      %v4081 = vpack.c.bf16 %v4063, %v4061
      %v4082 = vpack.c.bf16 %v4064, %v4062
      %v4083 = vpack.c.bf16 %v4067, %v4065
      %v4084 = vpack.c.bf16 %v4068, %v4066
      %v4085 = vpack.c.bf16 %v2670, %v2670
      %v4087 = vsel %vm3069, %v4085, 0
      %4089 = vmatprep.subr.bf16.mxu0 0
      %4090 = vmatpush1.bf16.msra.mxu0 0
      %4091 = vmatprep.subr.bf16.mxu0 0
      %4092 = vmatpush1.bf16.msra.mxu0 0
      %4093 = vmatprep.subr.bf16.mxu0 0
      %4094 = vmatpush1.bf16.msra.mxu0 0
      %4095 = vmatprep.subr.bf16.mxu0 0
      %4096 = vmatpush1.bf16.msra.mxu0 0
      %4097 = vmatprep.subr.bf16.mxu0 %v3060
      %4098 = vmatpush1.bf16.msra.mxu0 %v3059
      %4099 = vmatprep.subr.bf16.mxu0 %v3058
      %4100 = vmatpush1.bf16.msra.mxu0 %v3057
      %4101 = vmatprep.subr.bf16.mxu0 %v3056
      %4102 = vmatpush1.bf16.msra.mxu0 %v3055
      %4103 = vmatprep.subr.bf16.mxu0 %v3054
      %4104 = vmatpush1.bf16.msra.mxu0 %v3053
      %4105 = vmatprep.subr.bf16.mxu0 0
      %4106 = vmatpush2.bf16.msra.mxu0 0
      %4107 = vmatprep.subr.bf16.mxu0 0
      %4108 = vmatpush2.bf16.msra.mxu0 0
      %4109 = vmatprep.subr.bf16.mxu0 0
      %4110 = vmatpush2.bf16.msra.mxu0 0
      %4111 = vmatprep.subr.bf16.mxu0 0
      %4112 = vmatpush2.bf16.msra.mxu0 0
      %4113 = vmatprep.subr.bf16.mxu0 0
      %4114 = vmatpush2.bf16.msra.mxu0 0
      %4115 = vmatprep.subr.bf16.mxu0 0
      %4116 = vmatpush2.bf16.msra.mxu0 0
      %4117 = vmatprep.subr.bf16.mxu0 0
      %4118 = vmatpush2.bf16.msra.mxu0 0
      %4119 = vmatprep.subr.bf16.mxu0 0
      %4120 = vmatpush2.bf16.msra.mxu0 0
      %4121 = vmatprep.mubr.bf16.mxu0 0
      %4122 = vmatmul.mubr.bf16.gmra.mxu0 %v4087
      %v4123 = vpop.f32.mrf.mxu0
      %v4124 = vadd.f32 0.0, %v4123
      %v4125 = vpop.f32.mrf.mxu0
      %v4126 = vadd.f32 0.0, %v4125
      %v4127 = vpop.f32.mrf.mxu0
      %v4128 = vpop.f32.mrf.mxu0
      %4129 = vdwg.mxu0
      %v4130 = vunpack.c.l.bf16 %v4069
      %v4131 = vunpack.c.l.bf16 %v4070
      %v4132 = vunpack.c.h.bf16 %v4069
      %v4133 = vunpack.c.h.bf16 %v4070
      %v4134 = vunpack.c.l.bf16 %v4071
      %v4135 = vunpack.c.l.bf16 %v4072
      %v4136 = vunpack.c.h.bf16 %v4071
      %v4137 = vunpack.c.h.bf16 %v4072
      %v4138 = vunpack.c.l.bf16 %v4073
      %v4139 = vunpack.c.l.bf16 %v4074
      %v4140 = vunpack.c.h.bf16 %v4073
      %v4141 = vunpack.c.h.bf16 %v4074
      %v4142 = vunpack.c.l.bf16 %v4075
      %v4143 = vunpack.c.l.bf16 %v4076
      %v4144 = vunpack.c.h.bf16 %v4075
      %v4145 = vunpack.c.h.bf16 %v4076
      %v4146 = vunpack.c.l.bf16 %v4077
      %v4147 = vunpack.c.l.bf16 %v4078
      %v4148 = vunpack.c.h.bf16 %v4077
      %v4149 = vunpack.c.h.bf16 %v4078
      %v4150 = vunpack.c.l.bf16 %v4079
      %v4151 = vunpack.c.l.bf16 %v4080
      %v4152 = vunpack.c.h.bf16 %v4079
      %v4153 = vunpack.c.h.bf16 %v4080
      %v4154 = vunpack.c.l.bf16 %v4081
      %v4155 = vunpack.c.l.bf16 %v4082
      %v4156 = vunpack.c.h.bf16 %v4081
      %v4157 = vunpack.c.h.bf16 %v4082
      %v4158 = vunpack.c.l.bf16 %v4083
      %v4159 = vunpack.c.l.bf16 %v4084
      %v4160 = vunpack.c.h.bf16 %v4083
      %v4161 = vunpack.c.h.bf16 %v4084
      %4162 = vset.pattern.permute.xlu0 16
      %4163 = vperm.xlu0 %4162, %v625
      %v4164 = vpop.permute.xlu0 %4163
      %4166 = vset.pattern.permute.xlu0 16
      %4167 = vperm.xlu0 %4166, %v626
      %v4168 = vpop.permute.xlu0 %4167
      %4170 = vset.pattern.permute.xlu0 16
      %4171 = vperm.xlu0 %4170, %v627
      %v4172 = vpop.permute.xlu0 %4171
      %4174 = vset.pattern.permute.xlu0 16
      %4175 = vperm.xlu0 %4174, %v628
      %v4176 = vpop.permute.xlu0 %4175
      %4178 = vset.pattern.permute.xlu0 16
      %4179 = vperm.xlu0 %4178, %v629
      %v4180 = vpop.permute.xlu0 %4179
      %4182 = vset.pattern.permute.xlu0 16
      %4183 = vperm.xlu0 %4182, %v630
      %v4184 = vpop.permute.xlu0 %4183
      %4186 = vset.pattern.permute.xlu0 16
      %4187 = vperm.xlu0 %4186, %v631
      %v4188 = vpop.permute.xlu0 %4187
      %4190 = vset.pattern.permute.xlu0 16
      %4191 = vperm.xlu0 %4190, %v632
      %v4192 = vpop.permute.xlu0 %4191
      %4194 = vset.pattern.permute.xlu0 16
      %4195 = vperm.xlu0 %4194, %v633
      %v4196 = vpop.permute.xlu0 %4195
      %4198 = vset.pattern.permute.xlu0 16
      %4199 = vperm.xlu0 %4198, %v634
      %v4200 = vpop.permute.xlu0 %4199
      %4202 = vset.pattern.permute.xlu0 16
      %4203 = vperm.xlu0 %4202, %v635
      %v4204 = vpop.permute.xlu0 %4203
      %4206 = vset.pattern.permute.xlu0 16
      %4207 = vperm.xlu0 %4206, %v636
      %v4208 = vpop.permute.xlu0 %4207
      %4210 = vset.pattern.permute.xlu0 16
      %4211 = vperm.xlu0 %4210, %v637
      %v4212 = vpop.permute.xlu0 %4211
      %4214 = vset.pattern.permute.xlu0 16
      %4215 = vperm.xlu0 %4214, %v638
      %v4216 = vpop.permute.xlu0 %4215
      %4218 = vset.pattern.permute.xlu0 16
      %4219 = vperm.xlu0 %4218, %v639
      %v4220 = vpop.permute.xlu0 %4219
      %4222 = vset.pattern.permute.xlu0 16
      %4223 = vperm.xlu0 %4222, %v640
      %v4224 = vpop.permute.xlu0 %4223
      %v4226 = vmul.f32 %v4130, %v4164
      %v4227 = vmul.f32 %v4131, %v4164
      %v4228 = vmul.f32 %v4132, %v4168
      %v4229 = vmul.f32 %v4133, %v4168
      %v4230 = vmul.f32 %v4134, %v4172
      %v4231 = vmul.f32 %v4135, %v4172
      %v4232 = vmul.f32 %v4136, %v4176
      %v4233 = vmul.f32 %v4137, %v4176
      %v4234 = vmul.f32 %v4138, %v4180
      %v4235 = vmul.f32 %v4139, %v4180
      %v4236 = vmul.f32 %v4140, %v4184
      %v4237 = vmul.f32 %v4141, %v4184
      %v4238 = vmul.f32 %v4142, %v4188
      %v4239 = vmul.f32 %v4143, %v4188
      %v4240 = vmul.f32 %v4144, %v4192
      %v4241 = vmul.f32 %v4145, %v4192
      %v4242 = vmul.f32 %v4146, %v4196
      %v4243 = vmul.f32 %v4147, %v4196
      %v4244 = vmul.f32 %v4148, %v4200
      %v4245 = vmul.f32 %v4149, %v4200
      %v4246 = vmul.f32 %v4150, %v4204
      %v4247 = vmul.f32 %v4151, %v4204
      %v4248 = vmul.f32 %v4152, %v4208
      %v4249 = vmul.f32 %v4153, %v4208
      %v4250 = vmul.f32 %v4154, %v4212
      %v4251 = vmul.f32 %v4155, %v4212
      %v4252 = vmul.f32 %v4156, %v4216
      %v4253 = vmul.f32 %v4157, %v4216
      %v4254 = vmul.f32 %v4158, %v4220
      %v4255 = vmul.f32 %v4159, %v4220
      %v4256 = vmul.f32 %v4160, %v4224
      %v4257 = vmul.f32 %v4161, %v4224
      %v4258 = vpack.c.bf16 %v4228, %v4226
      %v4259 = vpack.c.bf16 %v4229, %v4227
      %v4260 = vpack.c.bf16 %v4232, %v4230
      %v4261 = vpack.c.bf16 %v4233, %v4231
      %v4262 = vpack.c.bf16 %v4236, %v4234
      %v4263 = vpack.c.bf16 %v4237, %v4235
      %v4264 = vpack.c.bf16 %v4240, %v4238
      %v4265 = vpack.c.bf16 %v4241, %v4239
      %v4266 = vpack.c.bf16 %v4244, %v4242
      %v4267 = vpack.c.bf16 %v4245, %v4243
      %v4268 = vpack.c.bf16 %v4248, %v4246
      %v4269 = vpack.c.bf16 %v4249, %v4247
      %v4270 = vpack.c.bf16 %v4252, %v4250
      %v4271 = vpack.c.bf16 %v4253, %v4251
      %v4272 = vpack.c.bf16 %v4256, %v4254
      %v4273 = vpack.c.bf16 %v4257, %v4255
      %s4274 = scalar_lea.vmem %s3, 8
      %v4275 = vld [vmem:[%s4274] sm:$0xf]
      %4276 = vset.pattern.permute.xlu0 9
      %4277 = vperm.xlu0 %4276, %v659
      %v4278 = vpop.permute.xlu0 %4277
      %4280 = vmatprep.subr.bf16.mxu0 %v4273
      %4281 = vmatpush1.bf16.msra.mxu0 %v4272
      %4282 = vmatprep.subr.bf16.mxu0 %v4271
      %4283 = vmatpush1.bf16.msra.mxu0 %v4270
      %4284 = vmatprep.subr.bf16.mxu0 %v4269
      %4285 = vmatpush1.bf16.msra.mxu0 %v4268
      %4286 = vmatprep.subr.bf16.mxu0 %v4267
      %4287 = vmatpush1.bf16.msra.mxu0 %v4266
      %4288 = vmatprep.subr.bf16.mxu0 %v4265
      %4289 = vmatpush1.bf16.msra.mxu0 %v4264
      %4290 = vmatprep.subr.bf16.mxu0 %v4263
      %4291 = vmatpush1.bf16.msra.mxu0 %v4262
      %4292 = vmatprep.subr.bf16.mxu0 %v4261
      %4293 = vmatpush1.bf16.msra.mxu0 %v4260
      %4294 = vmatprep.subr.bf16.mxu0 %v4259
      %4295 = vmatpush1.bf16.msra.mxu0 %v4258
      %4296 = vmatprep.subr.bf16.mxu0 0
      %4297 = vmatpush2.bf16.msra.mxu0 0
      %4298 = vmatprep.subr.bf16.mxu0 0
      %4299 = vmatpush2.bf16.msra.mxu0 0
      %4300 = vmatprep.subr.bf16.mxu0 0
      %4301 = vmatpush2.bf16.msra.mxu0 0
      %4302 = vmatprep.subr.bf16.mxu0 0
      %4303 = vmatpush2.bf16.msra.mxu0 0
      %4304 = vmatprep.subr.bf16.mxu0 0
      %4305 = vmatpush2.bf16.msra.mxu0 0
      %4306 = vmatprep.subr.bf16.mxu0 0
      %4307 = vmatpush2.bf16.msra.mxu0 0
      %4308 = vmatprep.subr.bf16.mxu0 0
      %4309 = vmatpush2.bf16.msra.mxu0 0
      %4310 = vmatprep.subr.bf16.mxu0 0
      %4311 = vmatpush2.bf16.msra.mxu0 0
      %4312 = vmatprep.mubr.bf16.mxu0 0
      %4313 = vmatmul.mubr.bf16.gmra.mxu0 %v4275
      %v4314 = vpop.f32.mrf.mxu0
      %v4315 = vadd.f32 %v4278, %v4314
      %v4316 = vpop.f32.mrf.mxu0
      %v4317 = vadd.f32 %v4278, %v4316
      %v4318 = vpop.f32.mrf.mxu0
      %v4319 = vpop.f32.mrf.mxu0
      %4320 = vdwg.mxu0
      %v4321 = vadd.f32 %v4315, %v4124
      %v4322 = vadd.f32 %v4317, %v4126
      %v4323 = vld [vmem:[%s14] sm:$0xff]
      %v4324 = vld [vmem:[%s14 + $0x8] sm:$0xff]
      %v4325 = vld [vmem:[%s14 + $0x10] sm:$0xff]
      %v4326 = vld [vmem:[%s14 + $0x18] sm:$0xff]
      %v4327 = vld [vmem:[%s14 + $0x20] sm:$0xff]
      %v4328 = vld [vmem:[%s14 + $0x28] sm:$0xff]
      %v4329 = vld [vmem:[%s14 + $0x30] sm:$0xff]
      %v4330 = vld [vmem:[%s14 + $0x38] sm:$0xff]
      %v4331 = vld [vmem:[%s14 + $0x40] sm:$0xff]
      %v4332 = vld [vmem:[%s14 + $0x48] sm:$0xff]
      %v4333 = vld [vmem:[%s14 + $0x50] sm:$0xff]
      %v4334 = vld [vmem:[%s14 + $0x58] sm:$0xff]
      %v4335 = vld [vmem:[%s14 + $0x60] sm:$0xff]
      %v4336 = vld [vmem:[%s14 + $0x68] sm:$0xff]
      %v4337 = vld [vmem:[%s14 + $0x70] sm:$0xff]
      %v4338 = vld [vmem:[%s14 + $0x78] sm:$0xff]
      %v4339 = vld [vmem:[%s14 + $0x80] sm:$0xff]
      %v4340 = vld [vmem:[%s14 + $0x88] sm:$0xff]
      %v4341 = vld [vmem:[%s14 + $0x90] sm:$0xff]
      %v4342 = vld [vmem:[%s14 + $0x98] sm:$0xff]
      %v4343 = vld [vmem:[%s14 + $0xa0] sm:$0xff]
      %v4344 = vld [vmem:[%s14 + $0xa8] sm:$0xff]
      %v4345 = vld [vmem:[%s14 + $0xb0] sm:$0xff]
      %v4346 = vld [vmem:[%s14 + $0xb8] sm:$0xff]
      %v4347 = vld [vmem:[%s14 + $0xc0] sm:$0xff]
      %v4348 = vld [vmem:[%s14 + $0xc8] sm:$0xff]
      %v4349 = vld [vmem:[%s14 + $0xd0] sm:$0xff]
      %v4350 = vld [vmem:[%s14 + $0xd8] sm:$0xff]
      %v4351 = vld [vmem:[%s14 + $0xe0] sm:$0xff]
      %v4352 = vld [vmem:[%s14 + $0xe8] sm:$0xff]
      %v4353 = vld [vmem:[%s14 + $0xf0] sm:$0xff]
      %v4354 = vld [vmem:[%s14 + $0xf8] sm:$0xff]
      %v4355 = vld [vmem:[%s14 + $0x100] sm:$0xff]
      %v4356 = vld [vmem:[%s14 + $0x108] sm:$0xff]
      %v4357 = vld [vmem:[%s14 + $0x110] sm:$0xff]
      %v4358 = vld [vmem:[%s14 + $0x118] sm:$0xff]
      %v4359 = vld [vmem:[%s14 + $0x120] sm:$0xff]
      %v4360 = vld [vmem:[%s14 + $0x128] sm:$0xff]
      %v4361 = vld [vmem:[%s14 + $0x130] sm:$0xff]
      %v4362 = vld [vmem:[%s14 + $0x138] sm:$0xff]
      %v4363 = vld [vmem:[%s14 + $0x140] sm:$0xff]
      %v4364 = vld [vmem:[%s14 + $0x148] sm:$0xff]
      %v4365 = vld [vmem:[%s14 + $0x150] sm:$0xff]
      %v4366 = vld [vmem:[%s14 + $0x158] sm:$0xff]
      %v4367 = vld [vmem:[%s14 + $0x160] sm:$0xff]
      %v4368 = vld [vmem:[%s14 + $0x168] sm:$0xff]
      %v4369 = vld [vmem:[%s14 + $0x170] sm:$0xff]
      %v4370 = vld [vmem:[%s14 + $0x178] sm:$0xff]
      %v4371 = vld [vmem:[%s14 + $0x180] sm:$0xff]
      %v4372 = vld [vmem:[%s14 + $0x188] sm:$0xff]
      %v4373 = vld [vmem:[%s14 + $0x190] sm:$0xff]
      %v4374 = vld [vmem:[%s14 + $0x198] sm:$0xff]
      %v4375 = vld [vmem:[%s14 + $0x1a0] sm:$0xff]
      %v4376 = vld [vmem:[%s14 + $0x1a8] sm:$0xff]
      %v4377 = vld [vmem:[%s14 + $0x1b0] sm:$0xff]
      %v4378 = vld [vmem:[%s14 + $0x1b8] sm:$0xff]
      %v4379 = vld [vmem:[%s14 + $0x1c0] sm:$0xff]
      %v4380 = vld [vmem:[%s14 + $0x1c8] sm:$0xff]
      %v4381 = vld [vmem:[%s14 + $0x1d0] sm:$0xff]
      %v4382 = vld [vmem:[%s14 + $0x1d8] sm:$0xff]
      %v4383 = vld [vmem:[%s14 + $0x1e0] sm:$0xff]
      %v4384 = vld [vmem:[%s14 + $0x1e8] sm:$0xff]
      %v4385 = vld [vmem:[%s14 + $0x1f0] sm:$0xff]
      %v4386 = vld [vmem:[%s14 + $0x1f8] sm:$0xff]
      %v4387 = vld [vmem:[%s14 + $0x200] sm:$0xff]
      %v4388 = vld [vmem:[%s14 + $0x208] sm:$0xff]
      %v4389 = vld [vmem:[%s14 + $0x210] sm:$0xff]
      %v4390 = vld [vmem:[%s14 + $0x218] sm:$0xff]
      %v4391 = vld [vmem:[%s14 + $0x220] sm:$0xff]
      %v4392 = vld [vmem:[%s14 + $0x228] sm:$0xff]
      %v4393 = vld [vmem:[%s14 + $0x230] sm:$0xff]
      %v4394 = vld [vmem:[%s14 + $0x238] sm:$0xff]
      %v4395 = vld [vmem:[%s14 + $0x240] sm:$0xff]
      %v4396 = vld [vmem:[%s14 + $0x248] sm:$0xff]
      %v4397 = vld [vmem:[%s14 + $0x250] sm:$0xff]
      %v4398 = vld [vmem:[%s14 + $0x258] sm:$0xff]
      %v4399 = vld [vmem:[%s14 + $0x260] sm:$0xff]
      %v4400 = vld [vmem:[%s14 + $0x268] sm:$0xff]
      %v4401 = vld [vmem:[%s14 + $0x270] sm:$0xff]
      %v4402 = vld [vmem:[%s14 + $0x278] sm:$0xff]
      %v4403 = vld [vmem:[%s14 + $0x280] sm:$0xff]
      %v4404 = vld [vmem:[%s14 + $0x288] sm:$0xff]
      %v4405 = vld [vmem:[%s14 + $0x290] sm:$0xff]
      %v4406 = vld [vmem:[%s14 + $0x298] sm:$0xff]
      %v4407 = vld [vmem:[%s14 + $0x2a0] sm:$0xff]
      %v4408 = vld [vmem:[%s14 + $0x2a8] sm:$0xff]
      %v4409 = vld [vmem:[%s14 + $0x2b0] sm:$0xff]
      %v4410 = vld [vmem:[%s14 + $0x2b8] sm:$0xff]
      %v4411 = vld [vmem:[%s14 + $0x2c0] sm:$0xff]
      %v4412 = vld [vmem:[%s14 + $0x2c8] sm:$0xff]
      %v4413 = vld [vmem:[%s14 + $0x2d0] sm:$0xff]
      %v4414 = vld [vmem:[%s14 + $0x2d8] sm:$0xff]
      %v4415 = vld [vmem:[%s14 + $0x2e0] sm:$0xff]
      %v4416 = vld [vmem:[%s14 + $0x2e8] sm:$0xff]
      %v4417 = vld [vmem:[%s14 + $0x2f0] sm:$0xff]
      %v4418 = vld [vmem:[%s14 + $0x2f8] sm:$0xff]
      %v4419 = vld [vmem:[%s14 + $0x300] sm:$0xff]
      %v4420 = vld [vmem:[%s14 + $0x308] sm:$0xff]
      %v4421 = vld [vmem:[%s14 + $0x310] sm:$0xff]
      %v4422 = vld [vmem:[%s14 + $0x318] sm:$0xff]
      %v4423 = vld [vmem:[%s14 + $0x320] sm:$0xff]
      %v4424 = vld [vmem:[%s14 + $0x328] sm:$0xff]
      %v4425 = vld [vmem:[%s14 + $0x330] sm:$0xff]
      %v4426 = vld [vmem:[%s14 + $0x338] sm:$0xff]
      %v4427 = vld [vmem:[%s14 + $0x340] sm:$0xff]
      %v4428 = vld [vmem:[%s14 + $0x348] sm:$0xff]
      %v4429 = vld [vmem:[%s14 + $0x350] sm:$0xff]
      %v4430 = vld [vmem:[%s14 + $0x358] sm:$0xff]
      %v4431 = vld [vmem:[%s14 + $0x360] sm:$0xff]
      %v4432 = vld [vmem:[%s14 + $0x368] sm:$0xff]
      %v4433 = vld [vmem:[%s14 + $0x370] sm:$0xff]
      %v4434 = vld [vmem:[%s14 + $0x378] sm:$0xff]
      %v4435 = vld [vmem:[%s14 + $0x380] sm:$0xff]
      %v4436 = vld [vmem:[%s14 + $0x388] sm:$0xff]
      %v4437 = vld [vmem:[%s14 + $0x390] sm:$0xff]
      %v4438 = vld [vmem:[%s14 + $0x398] sm:$0xff]
      %v4439 = vld [vmem:[%s14 + $0x3a0] sm:$0xff]
      %v4440 = vld [vmem:[%s14 + $0x3a8] sm:$0xff]
      %v4441 = vld [vmem:[%s14 + $0x3b0] sm:$0xff]
      %v4442 = vld [vmem:[%s14 + $0x3b8] sm:$0xff]
      %v4443 = vld [vmem:[%s14 + $0x3c0] sm:$0xff]
      %v4444 = vld [vmem:[%s14 + $0x3c8] sm:$0xff]
      %v4445 = vld [vmem:[%s14 + $0x3d0] sm:$0xff]
      %v4446 = vld [vmem:[%s14 + $0x3d8] sm:$0xff]
      %v4447 = vld [vmem:[%s14 + $0x3e0] sm:$0xff]
      %v4448 = vld [vmem:[%s14 + $0x3e8] sm:$0xff]
      %v4449 = vld [vmem:[%s14 + $0x3f0] sm:$0xff]
      %v4450 = vld [vmem:[%s14 + $0x3f8] sm:$0xff]
      %4451 = vset.pattern.permute.xlu0 5
      %4452 = vperm.xlu0 %4451, %v625
      %v4453 = vpop.permute.xlu0 %4452
      %4455 = vset.pattern.permute.xlu0 5
      %4456 = vperm.xlu0 %4455, %v626
      %v4457 = vpop.permute.xlu0 %4456
      %4459 = vset.pattern.permute.xlu0 5
      %4460 = vperm.xlu0 %4459, %v627
      %v4461 = vpop.permute.xlu0 %4460
      %4463 = vset.pattern.permute.xlu0 5
      %4464 = vperm.xlu0 %4463, %v628
      %v4465 = vpop.permute.xlu0 %4464
      %4467 = vset.pattern.permute.xlu0 5
      %4468 = vperm.xlu0 %4467, %v629
      %v4469 = vpop.permute.xlu0 %4468
      %4471 = vset.pattern.permute.xlu0 5
      %4472 = vperm.xlu0 %4471, %v630
      %v4473 = vpop.permute.xlu0 %4472
      %4475 = vset.pattern.permute.xlu0 5
      %4476 = vperm.xlu0 %4475, %v631
      %v4477 = vpop.permute.xlu0 %4476
      %4479 = vset.pattern.permute.xlu0 5
      %4480 = vperm.xlu0 %4479, %v632
      %v4481 = vpop.permute.xlu0 %4480
      %4483 = vset.pattern.permute.xlu0 5
      %4484 = vperm.xlu0 %4483, %v633
      %v4485 = vpop.permute.xlu0 %4484
      %4487 = vset.pattern.permute.xlu0 5
      %4488 = vperm.xlu0 %4487, %v634
      %v4489 = vpop.permute.xlu0 %4488
      %4491 = vset.pattern.permute.xlu0 5
      %4492 = vperm.xlu0 %4491, %v635
      %v4493 = vpop.permute.xlu0 %4492
      %4495 = vset.pattern.permute.xlu0 5
      %4496 = vperm.xlu0 %4495, %v636
      %v4497 = vpop.permute.xlu0 %4496
      %4499 = vset.pattern.permute.xlu0 5
      %4500 = vperm.xlu0 %4499, %v637
      %v4501 = vpop.permute.xlu0 %4500
      %4503 = vset.pattern.permute.xlu0 5
      %4504 = vperm.xlu0 %4503, %v638
      %v4505 = vpop.permute.xlu0 %4504
      %4507 = vset.pattern.permute.xlu0 5
      %4508 = vperm.xlu0 %4507, %v639
      %v4509 = vpop.permute.xlu0 %4508
      %4511 = vset.pattern.permute.xlu0 5
      %4512 = vperm.xlu0 %4511, %v640
      %v4513 = vpop.permute.xlu0 %4512
      %v4515 = vmul.f32 %v4130, %v4453
      %v4516 = vmul.f32 %v4131, %v4453
      %v4517 = vmul.f32 %v4132, %v4457
      %v4518 = vmul.f32 %v4133, %v4457
      %v4519 = vmul.f32 %v4134, %v4461
      %v4520 = vmul.f32 %v4135, %v4461
      %v4521 = vmul.f32 %v4136, %v4465
      %v4522 = vmul.f32 %v4137, %v4465
      %v4523 = vmul.f32 %v4138, %v4469
      %v4524 = vmul.f32 %v4139, %v4469
      %v4525 = vmul.f32 %v4140, %v4473
      %v4526 = vmul.f32 %v4141, %v4473
      %v4527 = vmul.f32 %v4142, %v4477
      %v4528 = vmul.f32 %v4143, %v4477
      %v4529 = vmul.f32 %v4144, %v4481
      %v4530 = vmul.f32 %v4145, %v4481
      %v4531 = vmul.f32 %v4146, %v4485
      %v4532 = vmul.f32 %v4147, %v4485
      %v4533 = vmul.f32 %v4148, %v4489
      %v4534 = vmul.f32 %v4149, %v4489
      %v4535 = vmul.f32 %v4150, %v4493
      %v4536 = vmul.f32 %v4151, %v4493
      %v4537 = vmul.f32 %v4152, %v4497
      %v4538 = vmul.f32 %v4153, %v4497
      %v4539 = vmul.f32 %v4154, %v4501
      %v4540 = vmul.f32 %v4155, %v4501
      %v4541 = vmul.f32 %v4156, %v4505
      %v4542 = vmul.f32 %v4157, %v4505
      %v4543 = vmul.f32 %v4158, %v4509
      %v4544 = vmul.f32 %v4159, %v4509
      %v4545 = vmul.f32 %v4160, %v4513
      %v4546 = vmul.f32 %v4161, %v4513
      %v4547 = vpack.c.bf16 %v4517, %v4515
      %v4548 = vpack.c.bf16 %v4518, %v4516
      %v4549 = vpack.c.bf16 %v4521, %v4519
      %v4550 = vpack.c.bf16 %v4522, %v4520
      %v4551 = vpack.c.bf16 %v4525, %v4523
      %v4552 = vpack.c.bf16 %v4526, %v4524
      %v4553 = vpack.c.bf16 %v4529, %v4527
      %v4554 = vpack.c.bf16 %v4530, %v4528
      %v4555 = vpack.c.bf16 %v4533, %v4531
      %v4556 = vpack.c.bf16 %v4534, %v4532
      %v4557 = vpack.c.bf16 %v4537, %v4535
      %v4558 = vpack.c.bf16 %v4538, %v4536
      %v4559 = vpack.c.bf16 %v4541, %v4539
      %v4560 = vpack.c.bf16 %v4542, %v4540
      %v4561 = vpack.c.bf16 %v4545, %v4543
      %v4562 = vpack.c.bf16 %v4546, %v4544
      %s4563 = scalar_lea.vmem %s2, 320
      %v4564 = vld [vmem:[%s4563] sm:$0xf]
      %v4565 = vld [vmem:[%s4563 + $0x4] sm:$0xf]
      %v4566 = vld [vmem:[%s4563 + $0x8] sm:$0xf]
      %v4567 = vld [vmem:[%s4563 + $0xc] sm:$0xf]
      %v4568 = vld [vmem:[%s4563 + $0x10] sm:$0xf]
      %v4569 = vld [vmem:[%s4563 + $0x14] sm:$0xf]
      %v4570 = vld [vmem:[%s4563 + $0x18] sm:$0xf]
      %v4571 = vld [vmem:[%s4563 + $0x1c] sm:$0xf]
      %v4572 = vld [vmem:[%s4563 + $0x20] sm:$0xf]
      %v4573 = vld [vmem:[%s4563 + $0x24] sm:$0xf]
      %v4574 = vld [vmem:[%s4563 + $0x28] sm:$0xf]
      %v4575 = vld [vmem:[%s4563 + $0x2c] sm:$0xf]
      %v4576 = vld [vmem:[%s4563 + $0x30] sm:$0xf]
      %v4577 = vld [vmem:[%s4563 + $0x34] sm:$0xf]
      %v4578 = vld [vmem:[%s4563 + $0x38] sm:$0xf]
      %v4579 = vld [vmem:[%s4563 + $0x3c] sm:$0xf]
      %v4596 = vunpack.c.l.b16 %v4564
      %v4597 = vunpack.c.l.b16 %v4565
      %v4598 = vunpack.c.l.b16 %v4566
      %v4599 = vunpack.c.l.b16 %v4567
      %v4600 = vunpack.c.l.b16 %v4568
      %v4601 = vunpack.c.l.b16 %v4569
      %v4602 = vunpack.c.l.b16 %v4570
      %v4603 = vunpack.c.l.b16 %v4571
      %v4604 = vunpack.c.l.b16 %v4572
      %v4605 = vunpack.c.l.b16 %v4573
      %v4606 = vunpack.c.l.b16 %v4574
      %v4607 = vunpack.c.l.b16 %v4575
      %v4608 = vunpack.c.l.b16 %v4576
      %v4609 = vunpack.c.l.b16 %v4577
      %v4610 = vunpack.c.l.b16 %v4578
      %v4611 = vunpack.c.l.b16 %v4579
      %v4612 = vpack.c.b16 %v4597, %v4596
      %v4613 = vpack.c.b16 %v4599, %v4598
      %v4614 = vpack.c.b16 %v4601, %v4600
      %v4615 = vpack.c.b16 %v4603, %v4602
      %v4616 = vpack.c.b16 %v4605, %v4604
      %v4617 = vpack.c.b16 %v4607, %v4606
      %v4618 = vpack.c.b16 %v4609, %v4608
      %v4619 = vpack.c.b16 %v4611, %v4610
      %4628 = vmatprep.subr.bf16.mxu0 %v4562
      %4629 = vmatpush1.bf16.msra.mxu0 %v4561
      %4630 = vmatprep.subr.bf16.mxu0 %v4560
      %4631 = vmatpush1.bf16.msra.mxu0 %v4559
      %4632 = vmatprep.subr.bf16.mxu0 %v4558
      %4633 = vmatpush1.bf16.msra.mxu0 %v4557
      %4634 = vmatprep.subr.bf16.mxu0 %v4556
      %4635 = vmatpush1.bf16.msra.mxu0 %v4555
      %4636 = vmatprep.subr.bf16.mxu0 %v4554
      %4637 = vmatpush1.bf16.msra.mxu0 %v4553
      %4638 = vmatprep.subr.bf16.mxu0 %v4552
      %4639 = vmatpush1.bf16.msra.mxu0 %v4551
      %4640 = vmatprep.subr.bf16.mxu0 %v4550
      %4641 = vmatpush1.bf16.msra.mxu0 %v4549
      %4642 = vmatprep.subr.bf16.mxu0 %v4548
      %4643 = vmatpush1.bf16.msra.mxu0 %v4547
      %4644 = vmatprep.subr.bf16.mxu0 0
      %4645 = vmatpush2.bf16.msra.mxu0 0
      %4646 = vmatprep.subr.bf16.mxu0 0
      %4647 = vmatpush2.bf16.msra.mxu0 0
      %4648 = vmatprep.subr.bf16.mxu0 0
      %4649 = vmatpush2.bf16.msra.mxu0 0
      %4650 = vmatprep.subr.bf16.mxu0 0
      %4651 = vmatpush2.bf16.msra.mxu0 0
      %4652 = vmatprep.subr.bf16.mxu0 0
      %4653 = vmatpush2.bf16.msra.mxu0 0
      %4654 = vmatprep.subr.bf16.mxu0 0
      %4655 = vmatpush2.bf16.msra.mxu0 0
      %4656 = vmatprep.subr.bf16.mxu0 0
      %4657 = vmatpush2.bf16.msra.mxu0 0
      %4658 = vmatprep.subr.bf16.mxu0 0
      %4659 = vmatpush2.bf16.msra.mxu0 0
      %4660 = vmatprep.mubr.bf16.mxu0 0
      %4661 = vmatmul.mubr.bf16.gmra.mxu0 %v4612
      %v4662 = vpop.f32.mrf.mxu0
      %v4663 = vadd.f32 0.0, %v4662
      %v4664 = vpop.f32.mrf.mxu0
      %v4665 = vadd.f32 0.0, %v4664
      %v4666 = vpop.f32.mrf.mxu0
      %v4667 = vadd.f32 0.0, %v4666
      %v4668 = vpop.f32.mrf.mxu0
      %v4669 = vadd.f32 0.0, %v4668
      %4670 = vmatprep.mubr.bf16.mxu0 0
      %4671 = vmatmul.mubr.bf16.gmra.mxu0 %v4613
      %v4672 = vpop.f32.mrf.mxu0
      %v4673 = vadd.f32 0.0, %v4672
      %v4674 = vpop.f32.mrf.mxu0
      %v4675 = vadd.f32 0.0, %v4674
      %v4676 = vpop.f32.mrf.mxu0
      %v4677 = vadd.f32 0.0, %v4676
      %v4678 = vpop.f32.mrf.mxu0
      %v4679 = vadd.f32 0.0, %v4678
      %4680 = vmatprep.mubr.bf16.mxu0 0
      %4681 = vmatmul.mubr.bf16.gmra.mxu0 %v4614
      %v4682 = vpop.f32.mrf.mxu0
      %v4683 = vadd.f32 0.0, %v4682
      %v4684 = vpop.f32.mrf.mxu0
      %v4685 = vadd.f32 0.0, %v4684
      %v4686 = vpop.f32.mrf.mxu0
      %v4687 = vadd.f32 0.0, %v4686
      %v4688 = vpop.f32.mrf.mxu0
      %v4689 = vadd.f32 0.0, %v4688
      %4690 = vmatprep.mubr.bf16.mxu0 0
      %4691 = vmatmul.mubr.bf16.gmra.mxu0 %v4615
      %v4692 = vpop.f32.mrf.mxu0
      %v4693 = vadd.f32 0.0, %v4692
      %v4694 = vpop.f32.mrf.mxu0
      %v4695 = vadd.f32 0.0, %v4694
      %v4696 = vpop.f32.mrf.mxu0
      %v4697 = vadd.f32 0.0, %v4696
      %v4698 = vpop.f32.mrf.mxu0
      %v4699 = vadd.f32 0.0, %v4698
      %4700 = vmatprep.mubr.bf16.mxu0 0
      %4701 = vmatmul.mubr.bf16.gmra.mxu0 %v4616
      %v4702 = vpop.f32.mrf.mxu0
      %v4703 = vadd.f32 0.0, %v4702
      %v4704 = vpop.f32.mrf.mxu0
      %v4705 = vadd.f32 0.0, %v4704
      %v4706 = vpop.f32.mrf.mxu0
      %v4707 = vadd.f32 0.0, %v4706
      %v4708 = vpop.f32.mrf.mxu0
      %v4709 = vadd.f32 0.0, %v4708
      %4710 = vmatprep.mubr.bf16.mxu0 0
      %4711 = vmatmul.mubr.bf16.gmra.mxu0 %v4617
      %v4712 = vpop.f32.mrf.mxu0
      %v4713 = vadd.f32 0.0, %v4712
      %v4714 = vpop.f32.mrf.mxu0
      %v4715 = vadd.f32 0.0, %v4714
      %v4716 = vpop.f32.mrf.mxu0
      %v4717 = vadd.f32 0.0, %v4716
      %v4718 = vpop.f32.mrf.mxu0
      %v4719 = vadd.f32 0.0, %v4718
      %4720 = vmatprep.mubr.bf16.mxu0 0
      %4721 = vmatmul.mubr.bf16.gmra.mxu0 %v4618
      %v4722 = vpop.f32.mrf.mxu0
      %v4723 = vadd.f32 0.0, %v4722
      %v4724 = vpop.f32.mrf.mxu0
      %v4725 = vadd.f32 0.0, %v4724
      %v4726 = vpop.f32.mrf.mxu0
      %v4727 = vadd.f32 0.0, %v4726
      %v4728 = vpop.f32.mrf.mxu0
      %v4729 = vadd.f32 0.0, %v4728
      %4730 = vmatprep.mubr.bf16.mxu0 0
      %4731 = vmatmul.mubr.bf16.gmra.mxu0 %v4619
      %v4732 = vpop.f32.mrf.mxu0
      %v4733 = vadd.f32 0.0, %v4732
      %v4734 = vpop.f32.mrf.mxu0
      %v4735 = vadd.f32 0.0, %v4734
      %v4736 = vpop.f32.mrf.mxu0
      %v4737 = vadd.f32 0.0, %v4736
      %v4738 = vpop.f32.mrf.mxu0
      %v4739 = vadd.f32 0.0, %v4738
      %4740 = vdwg.mxu0
      %4741 = vset.pattern.permute.xlu0 12
      %4742 = vperm.xlu0 %4741, %v625
      %v4743 = vpop.permute.xlu0 %4742
      %4745 = vset.pattern.permute.xlu0 12
      %4746 = vperm.xlu0 %4745, %v626
      %v4747 = vpop.permute.xlu0 %4746
      %4749 = vset.pattern.permute.xlu0 12
      %4750 = vperm.xlu0 %4749, %v627
      %v4751 = vpop.permute.xlu0 %4750
      %4753 = vset.pattern.permute.xlu0 12
      %4754 = vperm.xlu0 %4753, %v628
      %v4755 = vpop.permute.xlu0 %4754
      %4757 = vset.pattern.permute.xlu0 12
      %4758 = vperm.xlu0 %4757, %v629
      %v4759 = vpop.permute.xlu0 %4758
      %4761 = vset.pattern.permute.xlu0 12
      %4762 = vperm.xlu0 %4761, %v630
      %v4763 = vpop.permute.xlu0 %4762
      %4765 = vset.pattern.permute.xlu0 12
      %4766 = vperm.xlu0 %4765, %v631
      %v4767 = vpop.permute.xlu0 %4766
      %4769 = vset.pattern.permute.xlu0 12
      %4770 = vperm.xlu0 %4769, %v632
      %v4771 = vpop.permute.xlu0 %4770
      %4773 = vset.pattern.permute.xlu0 12
      %4774 = vperm.xlu0 %4773, %v633
      %v4775 = vpop.permute.xlu0 %4774
      %4777 = vset.pattern.permute.xlu0 12
      %4778 = vperm.xlu0 %4777, %v634
      %v4779 = vpop.permute.xlu0 %4778
      %4781 = vset.pattern.permute.xlu0 12
      %4782 = vperm.xlu0 %4781, %v635
      %v4783 = vpop.permute.xlu0 %4782
      %4785 = vset.pattern.permute.xlu0 12
      %4786 = vperm.xlu0 %4785, %v636
      %v4787 = vpop.permute.xlu0 %4786
      %4789 = vset.pattern.permute.xlu0 12
      %4790 = vperm.xlu0 %4789, %v637
      %v4791 = vpop.permute.xlu0 %4790
      %4793 = vset.pattern.permute.xlu0 12
      %4794 = vperm.xlu0 %4793, %v638
      %v4795 = vpop.permute.xlu0 %4794
      %4797 = vset.pattern.permute.xlu0 12
      %4798 = vperm.xlu0 %4797, %v639
      %v4799 = vpop.permute.xlu0 %4798
      %4801 = vset.pattern.permute.xlu0 12
      %4802 = vperm.xlu0 %4801, %v640
      %v4803 = vpop.permute.xlu0 %4802
      %v4805 = vmul.f32 %v4663, %v4743
      %v4806 = vmul.f32 %v4665, %v4743
      %v4807 = vmul.f32 %v4667, %v4747
      %v4808 = vmul.f32 %v4669, %v4747
      %v4809 = vmul.f32 %v4673, %v4751
      %v4810 = vmul.f32 %v4675, %v4751
      %v4811 = vmul.f32 %v4677, %v4755
      %v4812 = vmul.f32 %v4679, %v4755
      %v4813 = vmul.f32 %v4683, %v4759
      %v4814 = vmul.f32 %v4685, %v4759
      %v4815 = vmul.f32 %v4687, %v4763
      %v4816 = vmul.f32 %v4689, %v4763
      %v4817 = vmul.f32 %v4693, %v4767
      %v4818 = vmul.f32 %v4695, %v4767
      %v4819 = vmul.f32 %v4697, %v4771
      %v4820 = vmul.f32 %v4699, %v4771
      %v4821 = vmul.f32 %v4703, %v4775
      %v4822 = vmul.f32 %v4705, %v4775
      %v4823 = vmul.f32 %v4707, %v4779
      %v4824 = vmul.f32 %v4709, %v4779
      %v4825 = vmul.f32 %v4713, %v4783
      %v4826 = vmul.f32 %v4715, %v4783
      %v4827 = vmul.f32 %v4717, %v4787
      %v4828 = vmul.f32 %v4719, %v4787
      %v4829 = vmul.f32 %v4723, %v4791
      %v4830 = vmul.f32 %v4725, %v4791
      %v4831 = vmul.f32 %v4727, %v4795
      %v4832 = vmul.f32 %v4729, %v4795
      %v4833 = vmul.f32 %v4733, %v4799
      %v4834 = vmul.f32 %v4735, %v4799
      %v4835 = vmul.f32 %v4737, %v4803
      %v4836 = vmul.f32 %v4739, %v4803
      %v4837 = vpack.c.bf16 %v4807, %v4805
      %v4838 = vpack.c.bf16 %v4808, %v4806
      %v4839 = vpack.c.bf16 %v4811, %v4809
      %v4840 = vpack.c.bf16 %v4812, %v4810
      %v4841 = vpack.c.bf16 %v4815, %v4813
      %v4842 = vpack.c.bf16 %v4816, %v4814
      %v4843 = vpack.c.bf16 %v4819, %v4817
      %v4844 = vpack.c.bf16 %v4820, %v4818
      %v4845 = vpack.c.bf16 %v4823, %v4821
      %v4846 = vpack.c.bf16 %v4824, %v4822
      %v4847 = vpack.c.bf16 %v4827, %v4825
      %v4848 = vpack.c.bf16 %v4828, %v4826
      %v4849 = vpack.c.bf16 %v4831, %v4829
      %v4850 = vpack.c.bf16 %v4832, %v4830
      %v4851 = vpack.c.bf16 %v4835, %v4833
      %v4852 = vpack.c.bf16 %v4836, %v4834
      %v4853 = vld [vmem:[%s595] sm:$0xff]
      %v4855 = vlaneseq
      %v4856 = vshrl.u32 %v4855, 7
      %v4857 = vsub.s32 0, %v4856
      %v4858 = vrot.slane %v4853, %v4857
      %v4859 = vlaneseq
      %v4860 = vshrl.u32 %v4859, 7
      %v4861 = vsub.s32 1, %v4860
      %v4862 = vrot.slane %v4853, %v4861
      %v4863 = vlaneseq
      %v4864 = vshrl.u32 %v4863, 7
      %v4865 = vsub.s32 2, %v4864
      %v4866 = vrot.slane %v4853, %v4865
      %v4867 = vlaneseq
      %v4868 = vshrl.u32 %v4867, 7
      %v4869 = vsub.s32 3, %v4868
      %v4870 = vrot.slane %v4853, %v4869
      %v4871 = vlaneseq
      %v4872 = vshrl.u32 %v4871, 7
      %v4873 = vsub.s32 4, %v4872
      %v4874 = vrot.slane %v4853, %v4873
      %v4875 = vlaneseq
      %v4876 = vshrl.u32 %v4875, 7
      %v4877 = vsub.s32 5, %v4876
      %v4878 = vrot.slane %v4853, %v4877
      %v4879 = vlaneseq
      %v4880 = vshrl.u32 %v4879, 7
      %v4881 = vsub.s32 6, %v4880
      %v4882 = vrot.slane %v4853, %v4881
      %v4883 = vlaneseq
      %v4884 = vshrl.u32 %v4883, 7
      %v4885 = vsub.s32 7, %v4884
      %v4886 = vrot.slane %v4853, %v4885
      %v5023 = vunpack.c.l.b16 %v4323
      %v5024 = vunpack.c.h.b16 %v4323
      %v5025 = vunpack.c.l.b16 %v4324
      %v5026 = vunpack.c.h.b16 %v4324
      %v5027 = vunpack.c.l.b16 %v4325
      %v5028 = vunpack.c.h.b16 %v4325
      %v5029 = vunpack.c.l.b16 %v4326
      %v5030 = vunpack.c.h.b16 %v4326
      %v5031 = vunpack.c.l.b16 %v4327
      %v5032 = vunpack.c.h.b16 %v4327
      %v5033 = vunpack.c.l.b16 %v4328
      %v5034 = vunpack.c.h.b16 %v4328
      %v5035 = vunpack.c.l.b16 %v4329
      %v5036 = vunpack.c.h.b16 %v4329
      %v5037 = vunpack.c.l.b16 %v4330
      %v5038 = vunpack.c.h.b16 %v4330
      %v5039 = vunpack.c.l.b16 %v4331
      %v5040 = vunpack.c.h.b16 %v4331
      %v5041 = vunpack.c.l.b16 %v4332
      %v5042 = vunpack.c.h.b16 %v4332
      %v5043 = vunpack.c.l.b16 %v4333
      %v5044 = vunpack.c.h.b16 %v4333
      %v5045 = vunpack.c.l.b16 %v4334
      %v5046 = vunpack.c.h.b16 %v4334
      %v5047 = vunpack.c.l.b16 %v4335
      %v5048 = vunpack.c.h.b16 %v4335
      %v5049 = vunpack.c.l.b16 %v4336
      %v5050 = vunpack.c.h.b16 %v4336
      %v5051 = vunpack.c.l.b16 %v4337
      %v5052 = vunpack.c.h.b16 %v4337
      %v5053 = vunpack.c.l.b16 %v4338
      %v5054 = vunpack.c.h.b16 %v4338
      %v5055 = vunpack.c.l.b16 %v4339
      %v5056 = vunpack.c.h.b16 %v4339
      %v5057 = vunpack.c.l.b16 %v4340
      %v5058 = vunpack.c.h.b16 %v4340
      %v5059 = vunpack.c.l.b16 %v4341
      %v5060 = vunpack.c.h.b16 %v4341
      %v5061 = vunpack.c.l.b16 %v4342
      %v5062 = vunpack.c.h.b16 %v4342
      %v5063 = vunpack.c.l.b16 %v4343
      %v5064 = vunpack.c.h.b16 %v4343
      %v5065 = vunpack.c.l.b16 %v4344
      %v5066 = vunpack.c.h.b16 %v4344
      %v5067 = vunpack.c.l.b16 %v4345
      %v5068 = vunpack.c.h.b16 %v4345
      %v5069 = vunpack.c.l.b16 %v4346
      %v5070 = vunpack.c.h.b16 %v4346
      %v5071 = vunpack.c.l.b16 %v4347
      %v5072 = vunpack.c.h.b16 %v4347
      %v5073 = vunpack.c.l.b16 %v4348
      %v5074 = vunpack.c.h.b16 %v4348
      %v5075 = vunpack.c.l.b16 %v4349
      %v5076 = vunpack.c.h.b16 %v4349
      %v5077 = vunpack.c.l.b16 %v4350
      %v5078 = vunpack.c.h.b16 %v4350
      %v5079 = vunpack.c.l.b16 %v4351
      %v5080 = vunpack.c.h.b16 %v4351
      %v5081 = vunpack.c.l.b16 %v4352
      %v5082 = vunpack.c.h.b16 %v4352
      %v5083 = vunpack.c.l.b16 %v4353
      %v5084 = vunpack.c.h.b16 %v4353
      %v5085 = vunpack.c.l.b16 %v4354
      %v5086 = vunpack.c.h.b16 %v4354
      %v5087 = vunpack.c.l.b16 %v4355
      %v5088 = vunpack.c.h.b16 %v4355
      %v5089 = vunpack.c.l.b16 %v4356
      %v5090 = vunpack.c.h.b16 %v4356
      %v5091 = vunpack.c.l.b16 %v4357
      %v5092 = vunpack.c.h.b16 %v4357
      %v5093 = vunpack.c.l.b16 %v4358
      %v5094 = vunpack.c.h.b16 %v4358
      %v5095 = vunpack.c.l.b16 %v4359
      %v5096 = vunpack.c.h.b16 %v4359
      %v5097 = vunpack.c.l.b16 %v4360
      %v5098 = vunpack.c.h.b16 %v4360
      %v5099 = vunpack.c.l.b16 %v4361
      %v5100 = vunpack.c.h.b16 %v4361
      %v5101 = vunpack.c.l.b16 %v4362
      %v5102 = vunpack.c.h.b16 %v4362
      %v5103 = vunpack.c.l.b16 %v4363
      %v5104 = vunpack.c.h.b16 %v4363
      %v5105 = vunpack.c.l.b16 %v4364
      %v5106 = vunpack.c.h.b16 %v4364
      %v5107 = vunpack.c.l.b16 %v4365
      %v5108 = vunpack.c.h.b16 %v4365
      %v5109 = vunpack.c.l.b16 %v4366
      %v5110 = vunpack.c.h.b16 %v4366
      %v5111 = vunpack.c.l.b16 %v4367
      %v5112 = vunpack.c.h.b16 %v4367
      %v5113 = vunpack.c.l.b16 %v4368
      %v5114 = vunpack.c.h.b16 %v4368
      %v5115 = vunpack.c.l.b16 %v4369
      %v5116 = vunpack.c.h.b16 %v4369
      %v5117 = vunpack.c.l.b16 %v4370
      %v5118 = vunpack.c.h.b16 %v4370
      %v5119 = vunpack.c.l.b16 %v4371
      %v5120 = vunpack.c.h.b16 %v4371
      %v5121 = vunpack.c.l.b16 %v4372
      %v5122 = vunpack.c.h.b16 %v4372
      %v5123 = vunpack.c.l.b16 %v4373
      %v5124 = vunpack.c.h.b16 %v4373
      %v5125 = vunpack.c.l.b16 %v4374
      %v5126 = vunpack.c.h.b16 %v4374
      %v5127 = vunpack.c.l.b16 %v4375
      %v5128 = vunpack.c.h.b16 %v4375
      %v5129 = vunpack.c.l.b16 %v4376
      %v5130 = vunpack.c.h.b16 %v4376
      %v5131 = vunpack.c.l.b16 %v4377
      %v5132 = vunpack.c.h.b16 %v4377
      %v5133 = vunpack.c.l.b16 %v4378
      %v5134 = vunpack.c.h.b16 %v4378
      %v5135 = vunpack.c.l.b16 %v4379
      %v5136 = vunpack.c.h.b16 %v4379
      %v5137 = vunpack.c.l.b16 %v4380
      %v5138 = vunpack.c.h.b16 %v4380
      %v5139 = vunpack.c.l.b16 %v4381
      %v5140 = vunpack.c.h.b16 %v4381
      %v5141 = vunpack.c.l.b16 %v4382
      %v5142 = vunpack.c.h.b16 %v4382
      %v5143 = vunpack.c.l.b16 %v4383
      %v5144 = vunpack.c.h.b16 %v4383
      %v5145 = vunpack.c.l.b16 %v4384
      %v5146 = vunpack.c.h.b16 %v4384
      %v5147 = vunpack.c.l.b16 %v4385
      %v5148 = vunpack.c.h.b16 %v4385
      %v5149 = vunpack.c.l.b16 %v4386
      %v5150 = vunpack.c.h.b16 %v4386
      %v5151 = vunpack.c.l.b16 %v4387
      %v5152 = vunpack.c.h.b16 %v4387
      %v5153 = vunpack.c.l.b16 %v4388
      %v5154 = vunpack.c.h.b16 %v4388
      %v5155 = vunpack.c.l.b16 %v4389
      %v5156 = vunpack.c.h.b16 %v4389
      %v5157 = vunpack.c.l.b16 %v4390
      %v5158 = vunpack.c.h.b16 %v4390
      %v5159 = vunpack.c.l.b16 %v4391
      %v5160 = vunpack.c.h.b16 %v4391
      %v5161 = vunpack.c.l.b16 %v4392
      %v5162 = vunpack.c.h.b16 %v4392
      %v5163 = vunpack.c.l.b16 %v4393
      %v5164 = vunpack.c.h.b16 %v4393
      %v5165 = vunpack.c.l.b16 %v4394
      %v5166 = vunpack.c.h.b16 %v4394
      %v5167 = vunpack.c.l.b16 %v4395
      %v5168 = vunpack.c.h.b16 %v4395
      %v5169 = vunpack.c.l.b16 %v4396
      %v5170 = vunpack.c.h.b16 %v4396
      %v5171 = vunpack.c.l.b16 %v4397
      %v5172 = vunpack.c.h.b16 %v4397
      %v5173 = vunpack.c.l.b16 %v4398
      %v5174 = vunpack.c.h.b16 %v4398
      %v5175 = vunpack.c.l.b16 %v4399
      %v5176 = vunpack.c.h.b16 %v4399
      %v5177 = vunpack.c.l.b16 %v4400
      %v5178 = vunpack.c.h.b16 %v4400
      %v5179 = vunpack.c.l.b16 %v4401
      %v5180 = vunpack.c.h.b16 %v4401
      %v5181 = vunpack.c.l.b16 %v4402
      %v5182 = vunpack.c.h.b16 %v4402
      %v5183 = vunpack.c.l.b16 %v4403
      %v5184 = vunpack.c.h.b16 %v4403
      %v5185 = vunpack.c.l.b16 %v4404
      %v5186 = vunpack.c.h.b16 %v4404
      %v5187 = vunpack.c.l.b16 %v4405
      %v5188 = vunpack.c.h.b16 %v4405
      %v5189 = vunpack.c.l.b16 %v4406
      %v5190 = vunpack.c.h.b16 %v4406
      %v5191 = vunpack.c.l.b16 %v4407
      %v5192 = vunpack.c.h.b16 %v4407
      %v5193 = vunpack.c.l.b16 %v4408
      %v5194 = vunpack.c.h.b16 %v4408
      %v5195 = vunpack.c.l.b16 %v4409
      %v5196 = vunpack.c.h.b16 %v4409
      %v5197 = vunpack.c.l.b16 %v4410
      %v5198 = vunpack.c.h.b16 %v4410
      %v5199 = vunpack.c.l.b16 %v4411
      %v5200 = vunpack.c.h.b16 %v4411
      %v5201 = vunpack.c.l.b16 %v4412
      %v5202 = vunpack.c.h.b16 %v4412
      %v5203 = vunpack.c.l.b16 %v4413
      %v5204 = vunpack.c.h.b16 %v4413
      %v5205 = vunpack.c.l.b16 %v4414
      %v5206 = vunpack.c.h.b16 %v4414
      %v5207 = vunpack.c.l.b16 %v4415
      %v5208 = vunpack.c.h.b16 %v4415
      %v5209 = vunpack.c.l.b16 %v4416
      %v5210 = vunpack.c.h.b16 %v4416
      %v5211 = vunpack.c.l.b16 %v4417
      %v5212 = vunpack.c.h.b16 %v4417
      %v5213 = vunpack.c.l.b16 %v4418
      %v5214 = vunpack.c.h.b16 %v4418
      %v5215 = vunpack.c.l.b16 %v4419
      %v5216 = vunpack.c.h.b16 %v4419
      %v5217 = vunpack.c.l.b16 %v4420
      %v5218 = vunpack.c.h.b16 %v4420
      %v5219 = vunpack.c.l.b16 %v4421
      %v5220 = vunpack.c.h.b16 %v4421
      %v5221 = vunpack.c.l.b16 %v4422
      %v5222 = vunpack.c.h.b16 %v4422
      %v5223 = vunpack.c.l.b16 %v4423
      %v5224 = vunpack.c.h.b16 %v4423
      %v5225 = vunpack.c.l.b16 %v4424
      %v5226 = vunpack.c.h.b16 %v4424
      %v5227 = vunpack.c.l.b16 %v4425
      %v5228 = vunpack.c.h.b16 %v4425
      %v5229 = vunpack.c.l.b16 %v4426
      %v5230 = vunpack.c.h.b16 %v4426
      %v5231 = vunpack.c.l.b16 %v4427
      %v5232 = vunpack.c.h.b16 %v4427
      %v5233 = vunpack.c.l.b16 %v4428
      %v5234 = vunpack.c.h.b16 %v4428
      %v5235 = vunpack.c.l.b16 %v4429
      %v5236 = vunpack.c.h.b16 %v4429
      %v5237 = vunpack.c.l.b16 %v4430
      %v5238 = vunpack.c.h.b16 %v4430
      %v5239 = vunpack.c.l.b16 %v4431
      %v5240 = vunpack.c.h.b16 %v4431
      %v5241 = vunpack.c.l.b16 %v4432
      %v5242 = vunpack.c.h.b16 %v4432
      %v5243 = vunpack.c.l.b16 %v4433
      %v5244 = vunpack.c.h.b16 %v4433
      %v5245 = vunpack.c.l.b16 %v4434
      %v5246 = vunpack.c.h.b16 %v4434
      %v5247 = vunpack.c.l.b16 %v4435
      %v5248 = vunpack.c.h.b16 %v4435
      %v5249 = vunpack.c.l.b16 %v4436
      %v5250 = vunpack.c.h.b16 %v4436
      %v5251 = vunpack.c.l.b16 %v4437
      %v5252 = vunpack.c.h.b16 %v4437
      %v5253 = vunpack.c.l.b16 %v4438
      %v5254 = vunpack.c.h.b16 %v4438
      %v5255 = vunpack.c.l.b16 %v4439
      %v5256 = vunpack.c.h.b16 %v4439
      %v5257 = vunpack.c.l.b16 %v4440
      %v5258 = vunpack.c.h.b16 %v4440
      %v5259 = vunpack.c.l.b16 %v4441
      %v5260 = vunpack.c.h.b16 %v4441
      %v5261 = vunpack.c.l.b16 %v4442
      %v5262 = vunpack.c.h.b16 %v4442
      %v5263 = vunpack.c.l.b16 %v4443
      %v5264 = vunpack.c.h.b16 %v4443
      %v5265 = vunpack.c.l.b16 %v4444
      %v5266 = vunpack.c.h.b16 %v4444
      %v5267 = vunpack.c.l.b16 %v4445
      %v5268 = vunpack.c.h.b16 %v4445
      %v5269 = vunpack.c.l.b16 %v4446
      %v5270 = vunpack.c.h.b16 %v4446
      %v5271 = vunpack.c.l.b16 %v4447
      %v5272 = vunpack.c.h.b16 %v4447
      %v5273 = vunpack.c.l.b16 %v4448
      %v5274 = vunpack.c.h.b16 %v4448
      %v5275 = vunpack.c.l.b16 %v4449
      %v5276 = vunpack.c.h.b16 %v4449
      %v5277 = vunpack.c.l.b16 %v4450
      %v5278 = vunpack.c.h.b16 %v4450
      %v5279 = vpack.c.b16 %v5031, %v5023
      %v5280 = vpack.c.b16 %v5032, %v5024
      %v5281 = vpack.c.b16 %v5033, %v5025
      %v5282 = vpack.c.b16 %v5034, %v5026
      %v5283 = vpack.c.b16 %v5035, %v5027
      %v5284 = vpack.c.b16 %v5036, %v5028
      %v5285 = vpack.c.b16 %v5037, %v5029
      %v5286 = vpack.c.b16 %v5038, %v5030
      %v5287 = vpack.c.b16 %v5047, %v5039
      %v5288 = vpack.c.b16 %v5048, %v5040
      %v5289 = vpack.c.b16 %v5049, %v5041
      %v5290 = vpack.c.b16 %v5050, %v5042
      %v5291 = vpack.c.b16 %v5051, %v5043
      %v5292 = vpack.c.b16 %v5052, %v5044
      %v5293 = vpack.c.b16 %v5053, %v5045
      %v5294 = vpack.c.b16 %v5054, %v5046
      %v5295 = vpack.c.b16 %v5063, %v5055
      %v5296 = vpack.c.b16 %v5064, %v5056
      %v5297 = vpack.c.b16 %v5065, %v5057
      %v5298 = vpack.c.b16 %v5066, %v5058
      %v5299 = vpack.c.b16 %v5067, %v5059
      %v5300 = vpack.c.b16 %v5068, %v5060
      %v5301 = vpack.c.b16 %v5069, %v5061
      %v5302 = vpack.c.b16 %v5070, %v5062
      %v5303 = vpack.c.b16 %v5079, %v5071
      %v5304 = vpack.c.b16 %v5080, %v5072
      %v5305 = vpack.c.b16 %v5081, %v5073
      %v5306 = vpack.c.b16 %v5082, %v5074
      %v5307 = vpack.c.b16 %v5083, %v5075
      %v5308 = vpack.c.b16 %v5084, %v5076
      %v5309 = vpack.c.b16 %v5085, %v5077
      %v5310 = vpack.c.b16 %v5086, %v5078
      %v5311 = vpack.c.b16 %v5095, %v5087
      %v5312 = vpack.c.b16 %v5096, %v5088
      %v5313 = vpack.c.b16 %v5097, %v5089
      %v5314 = vpack.c.b16 %v5098, %v5090
      %v5315 = vpack.c.b16 %v5099, %v5091
      %v5316 = vpack.c.b16 %v5100, %v5092
      %v5317 = vpack.c.b16 %v5101, %v5093
      %v5318 = vpack.c.b16 %v5102, %v5094
      %v5319 = vpack.c.b16 %v5111, %v5103
      %v5320 = vpack.c.b16 %v5112, %v5104
      %v5321 = vpack.c.b16 %v5113, %v5105
      %v5322 = vpack.c.b16 %v5114, %v5106
      %v5323 = vpack.c.b16 %v5115, %v5107
      %v5324 = vpack.c.b16 %v5116, %v5108
      %v5325 = vpack.c.b16 %v5117, %v5109
      %v5326 = vpack.c.b16 %v5118, %v5110
      %v5327 = vpack.c.b16 %v5127, %v5119
      %v5328 = vpack.c.b16 %v5128, %v5120
      %v5329 = vpack.c.b16 %v5129, %v5121
      %v5330 = vpack.c.b16 %v5130, %v5122
      %v5331 = vpack.c.b16 %v5131, %v5123
      %v5332 = vpack.c.b16 %v5132, %v5124
      %v5333 = vpack.c.b16 %v5133, %v5125
      %v5334 = vpack.c.b16 %v5134, %v5126
      %v5335 = vpack.c.b16 %v5143, %v5135
      %v5336 = vpack.c.b16 %v5144, %v5136
      %v5337 = vpack.c.b16 %v5145, %v5137
      %v5338 = vpack.c.b16 %v5146, %v5138
      %v5339 = vpack.c.b16 %v5147, %v5139
      %v5340 = vpack.c.b16 %v5148, %v5140
      %v5341 = vpack.c.b16 %v5149, %v5141
      %v5342 = vpack.c.b16 %v5150, %v5142
      %v5343 = vpack.c.b16 %v5159, %v5151
      %v5344 = vpack.c.b16 %v5160, %v5152
      %v5345 = vpack.c.b16 %v5161, %v5153
      %v5346 = vpack.c.b16 %v5162, %v5154
      %v5347 = vpack.c.b16 %v5163, %v5155
      %v5348 = vpack.c.b16 %v5164, %v5156
      %v5349 = vpack.c.b16 %v5165, %v5157
      %v5350 = vpack.c.b16 %v5166, %v5158
      %v5351 = vpack.c.b16 %v5175, %v5167
      %v5352 = vpack.c.b16 %v5176, %v5168
      %v5353 = vpack.c.b16 %v5177, %v5169
      %v5354 = vpack.c.b16 %v5178, %v5170
      %v5355 = vpack.c.b16 %v5179, %v5171
      %v5356 = vpack.c.b16 %v5180, %v5172
      %v5357 = vpack.c.b16 %v5181, %v5173
      %v5358 = vpack.c.b16 %v5182, %v5174
      %v5359 = vpack.c.b16 %v5191, %v5183
      %v5360 = vpack.c.b16 %v5192, %v5184
      %v5361 = vpack.c.b16 %v5193, %v5185
      %v5362 = vpack.c.b16 %v5194, %v5186
      %v5363 = vpack.c.b16 %v5195, %v5187
      %v5364 = vpack.c.b16 %v5196, %v5188
      %v5365 = vpack.c.b16 %v5197, %v5189
      %v5366 = vpack.c.b16 %v5198, %v5190
      %v5367 = vpack.c.b16 %v5207, %v5199
      %v5368 = vpack.c.b16 %v5208, %v5200
      %v5369 = vpack.c.b16 %v5209, %v5201
      %v5370 = vpack.c.b16 %v5210, %v5202
      %v5371 = vpack.c.b16 %v5211, %v5203
      %v5372 = vpack.c.b16 %v5212, %v5204
      %v5373 = vpack.c.b16 %v5213, %v5205
      %v5374 = vpack.c.b16 %v5214, %v5206
      %v5375 = vpack.c.b16 %v5223, %v5215
      %v5376 = vpack.c.b16 %v5224, %v5216
      %v5377 = vpack.c.b16 %v5225, %v5217
      %v5378 = vpack.c.b16 %v5226, %v5218
      %v5379 = vpack.c.b16 %v5227, %v5219
      %v5380 = vpack.c.b16 %v5228, %v5220
      %v5381 = vpack.c.b16 %v5229, %v5221
      %v5382 = vpack.c.b16 %v5230, %v5222
      %v5383 = vpack.c.b16 %v5239, %v5231
      %v5384 = vpack.c.b16 %v5240, %v5232
      %v5385 = vpack.c.b16 %v5241, %v5233
      %v5386 = vpack.c.b16 %v5242, %v5234
      %v5387 = vpack.c.b16 %v5243, %v5235
      %v5388 = vpack.c.b16 %v5244, %v5236
      %v5389 = vpack.c.b16 %v5245, %v5237
      %v5390 = vpack.c.b16 %v5246, %v5238
      %v5391 = vpack.c.b16 %v5255, %v5247
      %v5392 = vpack.c.b16 %v5256, %v5248
      %v5393 = vpack.c.b16 %v5257, %v5249
      %v5394 = vpack.c.b16 %v5258, %v5250
      %v5395 = vpack.c.b16 %v5259, %v5251
      %v5396 = vpack.c.b16 %v5260, %v5252
      %v5397 = vpack.c.b16 %v5261, %v5253
      %v5398 = vpack.c.b16 %v5262, %v5254
      %v5399 = vpack.c.b16 %v5271, %v5263
      %v5400 = vpack.c.b16 %v5272, %v5264
      %v5401 = vpack.c.b16 %v5273, %v5265
      %v5402 = vpack.c.b16 %v5274, %v5266
      %v5403 = vpack.c.b16 %v5275, %v5267
      %v5404 = vpack.c.b16 %v5276, %v5268
      %v5405 = vpack.c.b16 %v5277, %v5269
      %v5406 = vpack.c.b16 %v5278, %v5270
      %5535 = vmatprep.subr.bf16.mxu0 %v5336
      %5536 = vmatpush1.bf16.msra.mxu0 %v5335
      %5537 = vmatprep.subr.bf16.mxu0 %v5328
      %5538 = vmatpush1.bf16.msra.mxu0 %v5327
      %5539 = vmatprep.subr.bf16.mxu0 %v5320
      %5540 = vmatpush1.bf16.msra.mxu0 %v5319
      %5541 = vmatprep.subr.bf16.mxu0 %v5312
      %5542 = vmatpush1.bf16.msra.mxu0 %v5311
      %5543 = vmatprep.subr.bf16.mxu0 %v5304
      %5544 = vmatpush1.bf16.msra.mxu0 %v5303
      %5545 = vmatprep.subr.bf16.mxu0 %v5296
      %5546 = vmatpush1.bf16.msra.mxu0 %v5295
      %5547 = vmatprep.subr.bf16.mxu0 %v5288
      %5548 = vmatpush1.bf16.msra.mxu0 %v5287
      %5549 = vmatprep.subr.bf16.mxu0 %v5280
      %5550 = vmatpush1.bf16.msra.mxu0 %v5279
      %5551 = vmatprep.subr.bf16.mxu0 %v5400
      %5552 = vmatpush2.bf16.msra.mxu0 %v5399
      %5553 = vmatprep.subr.bf16.mxu0 %v5392
      %5554 = vmatpush2.bf16.msra.mxu0 %v5391
      %5555 = vmatprep.subr.bf16.mxu0 %v5384
      %5556 = vmatpush2.bf16.msra.mxu0 %v5383
      %5557 = vmatprep.subr.bf16.mxu0 %v5376
      %5558 = vmatpush2.bf16.msra.mxu0 %v5375
      %5559 = vmatprep.subr.bf16.mxu0 %v5368
      %5560 = vmatpush2.bf16.msra.mxu0 %v5367
      %5561 = vmatprep.subr.bf16.mxu0 %v5360
      %5562 = vmatpush2.bf16.msra.mxu0 %v5359
      %5563 = vmatprep.subr.bf16.mxu0 %v5352
      %5564 = vmatpush2.bf16.msra.mxu0 %v5351
      %5565 = vmatprep.subr.bf16.mxu0 %v5344
      %5566 = vmatpush2.bf16.msra.mxu0 %v5343
      %5567 = vmatprep.mubr.bf16.mxu0 %v4838
      %5568 = vmatmul.mubr.bf16.gmra.mxu0 %v4837
      %v5569 = vpop.f32.mrf.mxu0
      %v5570 = vadd.f32 %v4858, %v5569
      %v5571 = vpop.f32.mrf.mxu0
      %v5572 = vadd.f32 %v4862, %v5571
      %v5573 = vpop.f32.mrf.mxu0
      %v5574 = vadd.f32 %v4858, %v5573
      %v5575 = vpop.f32.mrf.mxu0
      %v5576 = vadd.f32 %v4862, %v5575
      %5577 = vmatprep.mubr.bf16.mxu0 %v4840
      %5578 = vmatmul.mubr.bf16.gmra.mxu0 %v4839
      %v5579 = vpop.f32.mrf.mxu0
      %v5580 = vadd.f32 %v4858, %v5579
      %v5581 = vpop.f32.mrf.mxu0
      %v5582 = vadd.f32 %v4862, %v5581
      %v5583 = vpop.f32.mrf.mxu0
      %v5584 = vadd.f32 %v4858, %v5583
      %v5585 = vpop.f32.mrf.mxu0
      %v5586 = vadd.f32 %v4862, %v5585
      %5587 = vmatprep.mubr.bf16.mxu0 %v4842
      %5588 = vmatmul.mubr.bf16.gmra.mxu0 %v4841
      %v5589 = vpop.f32.mrf.mxu0
      %v5590 = vadd.f32 %v4858, %v5589
      %v5591 = vpop.f32.mrf.mxu0
      %v5592 = vadd.f32 %v4862, %v5591
      %v5593 = vpop.f32.mrf.mxu0
      %v5594 = vadd.f32 %v4858, %v5593
      %v5595 = vpop.f32.mrf.mxu0
      %v5596 = vadd.f32 %v4862, %v5595
      %5597 = vmatprep.mubr.bf16.mxu0 %v4844
      %5598 = vmatmul.mubr.bf16.gmra.mxu0 %v4843
      %v5599 = vpop.f32.mrf.mxu0
      %v5600 = vadd.f32 %v4858, %v5599
      %v5601 = vpop.f32.mrf.mxu0
      %v5602 = vadd.f32 %v4862, %v5601
      %v5603 = vpop.f32.mrf.mxu0
      %v5604 = vadd.f32 %v4858, %v5603
      %v5605 = vpop.f32.mrf.mxu0
      %v5606 = vadd.f32 %v4862, %v5605
      %5607 = vmatprep.mubr.bf16.mxu0 %v4846
      %5608 = vmatmul.mubr.bf16.gmra.mxu0 %v4845
      %v5609 = vpop.f32.mrf.mxu0
      %v5610 = vadd.f32 %v4858, %v5609
      %v5611 = vpop.f32.mrf.mxu0
      %v5612 = vadd.f32 %v4862, %v5611
      %v5613 = vpop.f32.mrf.mxu0
      %v5614 = vadd.f32 %v4858, %v5613
      %v5615 = vpop.f32.mrf.mxu0
      %v5616 = vadd.f32 %v4862, %v5615
      %5617 = vmatprep.mubr.bf16.mxu0 %v4848
      %5618 = vmatmul.mubr.bf16.gmra.mxu0 %v4847
      %v5619 = vpop.f32.mrf.mxu0
      %v5620 = vadd.f32 %v4858, %v5619
      %v5621 = vpop.f32.mrf.mxu0
      %v5622 = vadd.f32 %v4862, %v5621
      %v5623 = vpop.f32.mrf.mxu0
      %v5624 = vadd.f32 %v4858, %v5623
      %v5625 = vpop.f32.mrf.mxu0
      %v5626 = vadd.f32 %v4862, %v5625
      %5627 = vmatprep.mubr.bf16.mxu0 %v4850
      %5628 = vmatmul.mubr.bf16.gmra.mxu0 %v4849
      %v5629 = vpop.f32.mrf.mxu0
      %v5630 = vadd.f32 %v4858, %v5629
      %v5631 = vpop.f32.mrf.mxu0
      %v5632 = vadd.f32 %v4862, %v5631
      %v5633 = vpop.f32.mrf.mxu0
      %v5634 = vadd.f32 %v4858, %v5633
      %v5635 = vpop.f32.mrf.mxu0
      %v5636 = vadd.f32 %v4862, %v5635
      %5637 = vmatprep.mubr.bf16.mxu0 %v4852
      %5638 = vmatmul.mubr.bf16.gmra.mxu0 %v4851
      %v5639 = vpop.f32.mrf.mxu0
      %v5640 = vadd.f32 %v4858, %v5639
      %v5641 = vpop.f32.mrf.mxu0
      %v5642 = vadd.f32 %v4862, %v5641
      %v5643 = vpop.f32.mrf.mxu0
      %v5644 = vadd.f32 %v4858, %v5643
      %v5645 = vpop.f32.mrf.mxu0
      %v5646 = vadd.f32 %v4862, %v5645
      %5647 = vdwg.mxu0
      %5648 = vmatprep.subr.bf16.mxu0 %v5338
      %5649 = vmatpush1.bf16.msra.mxu0 %v5337
      %5650 = vmatprep.subr.bf16.mxu0 %v5330
      %5651 = vmatpush1.bf16.msra.mxu0 %v5329
      %5652 = vmatprep.subr.bf16.mxu0 %v5322
      %5653 = vmatpush1.bf16.msra.mxu0 %v5321
      %5654 = vmatprep.subr.bf16.mxu0 %v5314
      %5655 = vmatpush1.bf16.msra.mxu0 %v5313
      %5656 = vmatprep.subr.bf16.mxu0 %v5306
      %5657 = vmatpush1.bf16.msra.mxu0 %v5305
      %5658 = vmatprep.subr.bf16.mxu0 %v5298
      %5659 = vmatpush1.bf16.msra.mxu0 %v5297
      %5660 = vmatprep.subr.bf16.mxu0 %v5290
      %5661 = vmatpush1.bf16.msra.mxu0 %v5289
      %5662 = vmatprep.subr.bf16.mxu0 %v5282
      %5663 = vmatpush1.bf16.msra.mxu0 %v5281
      %5664 = vmatprep.subr.bf16.mxu0 %v5402
      %5665 = vmatpush2.bf16.msra.mxu0 %v5401
      %5666 = vmatprep.subr.bf16.mxu0 %v5394
      %5667 = vmatpush2.bf16.msra.mxu0 %v5393
      %5668 = vmatprep.subr.bf16.mxu0 %v5386
      %5669 = vmatpush2.bf16.msra.mxu0 %v5385
      %5670 = vmatprep.subr.bf16.mxu0 %v5378
      %5671 = vmatpush2.bf16.msra.mxu0 %v5377
      %5672 = vmatprep.subr.bf16.mxu0 %v5370
      %5673 = vmatpush2.bf16.msra.mxu0 %v5369
      %5674 = vmatprep.subr.bf16.mxu0 %v5362
      %5675 = vmatpush2.bf16.msra.mxu0 %v5361
      %5676 = vmatprep.subr.bf16.mxu0 %v5354
      %5677 = vmatpush2.bf16.msra.mxu0 %v5353
      %5678 = vmatprep.subr.bf16.mxu0 %v5346
      %5679 = vmatpush2.bf16.msra.mxu0 %v5345
      %5680 = vmatprep.mubr.bf16.mxu0 %v4838
      %5681 = vmatmul.mubr.bf16.gmra.mxu0 %v4837
      %v5682 = vpop.f32.mrf.mxu0
      %v5683 = vadd.f32 %v4866, %v5682
      %v5684 = vpop.f32.mrf.mxu0
      %v5685 = vadd.f32 %v4870, %v5684
      %v5686 = vpop.f32.mrf.mxu0
      %v5687 = vadd.f32 %v4866, %v5686
      %v5688 = vpop.f32.mrf.mxu0
      %v5689 = vadd.f32 %v4870, %v5688
      %5690 = vmatprep.mubr.bf16.mxu0 %v4840
      %5691 = vmatmul.mubr.bf16.gmra.mxu0 %v4839
      %v5692 = vpop.f32.mrf.mxu0
      %v5693 = vadd.f32 %v4866, %v5692
      %v5694 = vpop.f32.mrf.mxu0
      %v5695 = vadd.f32 %v4870, %v5694
      %v5696 = vpop.f32.mrf.mxu0
      %v5697 = vadd.f32 %v4866, %v5696
      %v5698 = vpop.f32.mrf.mxu0
      %v5699 = vadd.f32 %v4870, %v5698
      %5700 = vmatprep.mubr.bf16.mxu0 %v4842
      %5701 = vmatmul.mubr.bf16.gmra.mxu0 %v4841
      %v5702 = vpop.f32.mrf.mxu0
      %v5703 = vadd.f32 %v4866, %v5702
      %v5704 = vpop.f32.mrf.mxu0
      %v5705 = vadd.f32 %v4870, %v5704
      %v5706 = vpop.f32.mrf.mxu0
      %v5707 = vadd.f32 %v4866, %v5706
      %v5708 = vpop.f32.mrf.mxu0
      %v5709 = vadd.f32 %v4870, %v5708
      %5710 = vmatprep.mubr.bf16.mxu0 %v4844
      %5711 = vmatmul.mubr.bf16.gmra.mxu0 %v4843
      %v5712 = vpop.f32.mrf.mxu0
      %v5713 = vadd.f32 %v4866, %v5712
      %v5714 = vpop.f32.mrf.mxu0
      %v5715 = vadd.f32 %v4870, %v5714
      %v5716 = vpop.f32.mrf.mxu0
      %v5717 = vadd.f32 %v4866, %v5716
      %v5718 = vpop.f32.mrf.mxu0
      %v5719 = vadd.f32 %v4870, %v5718
      %5720 = vmatprep.mubr.bf16.mxu0 %v4846
      %5721 = vmatmul.mubr.bf16.gmra.mxu0 %v4845
      %v5722 = vpop.f32.mrf.mxu0
      %v5723 = vadd.f32 %v4866, %v5722
      %v5724 = vpop.f32.mrf.mxu0
      %v5725 = vadd.f32 %v4870, %v5724
      %v5726 = vpop.f32.mrf.mxu0
      %v5727 = vadd.f32 %v4866, %v5726
      %v5728 = vpop.f32.mrf.mxu0
      %v5729 = vadd.f32 %v4870, %v5728
      %5730 = vmatprep.mubr.bf16.mxu0 %v4848
      %5731 = vmatmul.mubr.bf16.gmra.mxu0 %v4847
      %v5732 = vpop.f32.mrf.mxu0
      %v5733 = vadd.f32 %v4866, %v5732
      %v5734 = vpop.f32.mrf.mxu0
      %v5735 = vadd.f32 %v4870, %v5734
      %v5736 = vpop.f32.mrf.mxu0
      %v5737 = vadd.f32 %v4866, %v5736
      %v5738 = vpop.f32.mrf.mxu0
      %v5739 = vadd.f32 %v4870, %v5738
      %5740 = vmatprep.mubr.bf16.mxu0 %v4850
      %5741 = vmatmul.mubr.bf16.gmra.mxu0 %v4849
      %v5742 = vpop.f32.mrf.mxu0
      %v5743 = vadd.f32 %v4866, %v5742
      %v5744 = vpop.f32.mrf.mxu0
      %v5745 = vadd.f32 %v4870, %v5744
      %v5746 = vpop.f32.mrf.mxu0
      %v5747 = vadd.f32 %v4866, %v5746
      %v5748 = vpop.f32.mrf.mxu0
      %v5749 = vadd.f32 %v4870, %v5748
      %5750 = vmatprep.mubr.bf16.mxu0 %v4852
      %5751 = vmatmul.mubr.bf16.gmra.mxu0 %v4851
      %v5752 = vpop.f32.mrf.mxu0
      %v5753 = vadd.f32 %v4866, %v5752
      %v5754 = vpop.f32.mrf.mxu0
      %v5755 = vadd.f32 %v4870, %v5754
      %v5756 = vpop.f32.mrf.mxu0
      %v5757 = vadd.f32 %v4866, %v5756
      %v5758 = vpop.f32.mrf.mxu0
      %v5759 = vadd.f32 %v4870, %v5758
      %5760 = vdwg.mxu0
      %5761 = vmatprep.subr.bf16.mxu0 %v5340
      %5762 = vmatpush1.bf16.msra.mxu0 %v5339
      %5763 = vmatprep.subr.bf16.mxu0 %v5332
      %5764 = vmatpush1.bf16.msra.mxu0 %v5331
      %5765 = vmatprep.subr.bf16.mxu0 %v5324
      %5766 = vmatpush1.bf16.msra.mxu0 %v5323
      %5767 = vmatprep.subr.bf16.mxu0 %v5316
      %5768 = vmatpush1.bf16.msra.mxu0 %v5315
      %5769 = vmatprep.subr.bf16.mxu0 %v5308
      %5770 = vmatpush1.bf16.msra.mxu0 %v5307
      %5771 = vmatprep.subr.bf16.mxu0 %v5300
      %5772 = vmatpush1.bf16.msra.mxu0 %v5299
      %5773 = vmatprep.subr.bf16.mxu0 %v5292
      %5774 = vmatpush1.bf16.msra.mxu0 %v5291
      %5775 = vmatprep.subr.bf16.mxu0 %v5284
      %5776 = vmatpush1.bf16.msra.mxu0 %v5283
      %5777 = vmatprep.subr.bf16.mxu0 %v5404
      %5778 = vmatpush2.bf16.msra.mxu0 %v5403
      %5779 = vmatprep.subr.bf16.mxu0 %v5396
      %5780 = vmatpush2.bf16.msra.mxu0 %v5395
      %5781 = vmatprep.subr.bf16.mxu0 %v5388
      %5782 = vmatpush2.bf16.msra.mxu0 %v5387
      %5783 = vmatprep.subr.bf16.mxu0 %v5380
      %5784 = vmatpush2.bf16.msra.mxu0 %v5379
      %5785 = vmatprep.subr.bf16.mxu0 %v5372
      %5786 = vmatpush2.bf16.msra.mxu0 %v5371
      %5787 = vmatprep.subr.bf16.mxu0 %v5364
      %5788 = vmatpush2.bf16.msra.mxu0 %v5363
      %5789 = vmatprep.subr.bf16.mxu0 %v5356
      %5790 = vmatpush2.bf16.msra.mxu0 %v5355
      %5791 = vmatprep.subr.bf16.mxu0 %v5348
      %5792 = vmatpush2.bf16.msra.mxu0 %v5347
      %5793 = vmatprep.mubr.bf16.mxu0 %v4838
      %5794 = vmatmul.mubr.bf16.gmra.mxu0 %v4837
      %v5795 = vpop.f32.mrf.mxu0
      %v5796 = vadd.f32 %v4874, %v5795
      %v5797 = vpop.f32.mrf.mxu0
      %v5798 = vadd.f32 %v4878, %v5797
      %v5799 = vpop.f32.mrf.mxu0
      %v5800 = vadd.f32 %v4874, %v5799
      %v5801 = vpop.f32.mrf.mxu0
      %v5802 = vadd.f32 %v4878, %v5801
      %5803 = vmatprep.mubr.bf16.mxu0 %v4840
      %5804 = vmatmul.mubr.bf16.gmra.mxu0 %v4839
      %v5805 = vpop.f32.mrf.mxu0
      %v5806 = vadd.f32 %v4874, %v5805
      %v5807 = vpop.f32.mrf.mxu0
      %v5808 = vadd.f32 %v4878, %v5807
      %v5809 = vpop.f32.mrf.mxu0
      %v5810 = vadd.f32 %v4874, %v5809
      %v5811 = vpop.f32.mrf.mxu0
      %v5812 = vadd.f32 %v4878, %v5811
      %5813 = vmatprep.mubr.bf16.mxu0 %v4842
      %5814 = vmatmul.mubr.bf16.gmra.mxu0 %v4841
      %v5815 = vpop.f32.mrf.mxu0
      %v5816 = vadd.f32 %v4874, %v5815
      %v5817 = vpop.f32.mrf.mxu0
      %v5818 = vadd.f32 %v4878, %v5817
      %v5819 = vpop.f32.mrf.mxu0
      %v5820 = vadd.f32 %v4874, %v5819
      %v5821 = vpop.f32.mrf.mxu0
      %v5822 = vadd.f32 %v4878, %v5821
      %5823 = vmatprep.mubr.bf16.mxu0 %v4844
      %5824 = vmatmul.mubr.bf16.gmra.mxu0 %v4843
      %v5825 = vpop.f32.mrf.mxu0
      %v5826 = vadd.f32 %v4874, %v5825
      %v5827 = vpop.f32.mrf.mxu0
      %v5828 = vadd.f32 %v4878, %v5827
      %v5829 = vpop.f32.mrf.mxu0
      %v5830 = vadd.f32 %v4874, %v5829
      %v5831 = vpop.f32.mrf.mxu0
      %v5832 = vadd.f32 %v4878, %v5831
      %5833 = vmatprep.mubr.bf16.mxu0 %v4846
      %5834 = vmatmul.mubr.bf16.gmra.mxu0 %v4845
      %v5835 = vpop.f32.mrf.mxu0
      %v5836 = vadd.f32 %v4874, %v5835
      %v5837 = vpop.f32.mrf.mxu0
      %v5838 = vadd.f32 %v4878, %v5837
      %v5839 = vpop.f32.mrf.mxu0
      %v5840 = vadd.f32 %v4874, %v5839
      %v5841 = vpop.f32.mrf.mxu0
      %v5842 = vadd.f32 %v4878, %v5841
      %5843 = vmatprep.mubr.bf16.mxu0 %v4848
      %5844 = vmatmul.mubr.bf16.gmra.mxu0 %v4847
      %v5845 = vpop.f32.mrf.mxu0
      %v5846 = vadd.f32 %v4874, %v5845
      %v5847 = vpop.f32.mrf.mxu0
      %v5848 = vadd.f32 %v4878, %v5847
      %v5849 = vpop.f32.mrf.mxu0
      %v5850 = vadd.f32 %v4874, %v5849
      %v5851 = vpop.f32.mrf.mxu0
      %v5852 = vadd.f32 %v4878, %v5851
      %5853 = vmatprep.mubr.bf16.mxu0 %v4850
      %5854 = vmatmul.mubr.bf16.gmra.mxu0 %v4849
      %v5855 = vpop.f32.mrf.mxu0
      %v5856 = vadd.f32 %v4874, %v5855
      %v5857 = vpop.f32.mrf.mxu0
      %v5858 = vadd.f32 %v4878, %v5857
      %v5859 = vpop.f32.mrf.mxu0
      %v5860 = vadd.f32 %v4874, %v5859
      %v5861 = vpop.f32.mrf.mxu0
      %v5862 = vadd.f32 %v4878, %v5861
      %5863 = vmatprep.mubr.bf16.mxu0 %v4852
      %5864 = vmatmul.mubr.bf16.gmra.mxu0 %v4851
      %v5865 = vpop.f32.mrf.mxu0
      %v5866 = vadd.f32 %v4874, %v5865
      %v5867 = vpop.f32.mrf.mxu0
      %v5868 = vadd.f32 %v4878, %v5867
      %v5869 = vpop.f32.mrf.mxu0
      %v5870 = vadd.f32 %v4874, %v5869
      %v5871 = vpop.f32.mrf.mxu0
      %v5872 = vadd.f32 %v4878, %v5871
      %5873 = vdwg.mxu0
      %5874 = vmatprep.subr.bf16.mxu0 %v5342
      %5875 = vmatpush1.bf16.msra.mxu0 %v5341
      %5876 = vmatprep.subr.bf16.mxu0 %v5334
      %5877 = vmatpush1.bf16.msra.mxu0 %v5333
      %5878 = vmatprep.subr.bf16.mxu0 %v5326
      %5879 = vmatpush1.bf16.msra.mxu0 %v5325
      %5880 = vmatprep.subr.bf16.mxu0 %v5318
      %5881 = vmatpush1.bf16.msra.mxu0 %v5317
      %5882 = vmatprep.subr.bf16.mxu0 %v5310
      %5883 = vmatpush1.bf16.msra.mxu0 %v5309
      %5884 = vmatprep.subr.bf16.mxu0 %v5302
      %5885 = vmatpush1.bf16.msra.mxu0 %v5301
      %5886 = vmatprep.subr.bf16.mxu0 %v5294
      %5887 = vmatpush1.bf16.msra.mxu0 %v5293
      %5888 = vmatprep.subr.bf16.mxu0 %v5286
      %5889 = vmatpush1.bf16.msra.mxu0 %v5285
      %5890 = vmatprep.subr.bf16.mxu0 %v5406
      %5891 = vmatpush2.bf16.msra.mxu0 %v5405
      %5892 = vmatprep.subr.bf16.mxu0 %v5398
      %5893 = vmatpush2.bf16.msra.mxu0 %v5397
      %5894 = vmatprep.subr.bf16.mxu0 %v5390
      %5895 = vmatpush2.bf16.msra.mxu0 %v5389
      %5896 = vmatprep.subr.bf16.mxu0 %v5382
      %5897 = vmatpush2.bf16.msra.mxu0 %v5381
      %5898 = vmatprep.subr.bf16.mxu0 %v5374
      %5899 = vmatpush2.bf16.msra.mxu0 %v5373
      %5900 = vmatprep.subr.bf16.mxu0 %v5366
      %5901 = vmatpush2.bf16.msra.mxu0 %v5365
      %5902 = vmatprep.subr.bf16.mxu0 %v5358
      %5903 = vmatpush2.bf16.msra.mxu0 %v5357
      %5904 = vmatprep.subr.bf16.mxu0 %v5350
      %5905 = vmatpush2.bf16.msra.mxu0 %v5349
      %5906 = vmatprep.mubr.bf16.mxu0 %v4838
      %5907 = vmatmul.mubr.bf16.gmra.mxu0 %v4837
      %v5908 = vpop.f32.mrf.mxu0
      %v5909 = vadd.f32 %v4882, %v5908
      %v5910 = vpop.f32.mrf.mxu0
      %v5911 = vadd.f32 %v4886, %v5910
      %v5912 = vpop.f32.mrf.mxu0
      %v5913 = vadd.f32 %v4882, %v5912
      %v5914 = vpop.f32.mrf.mxu0
      %v5915 = vadd.f32 %v4886, %v5914
      %5916 = vmatprep.mubr.bf16.mxu0 %v4840
      %5917 = vmatmul.mubr.bf16.gmra.mxu0 %v4839
      %v5918 = vpop.f32.mrf.mxu0
      %v5919 = vadd.f32 %v4882, %v5918
      %v5920 = vpop.f32.mrf.mxu0
      %v5921 = vadd.f32 %v4886, %v5920
      %v5922 = vpop.f32.mrf.mxu0
      %v5923 = vadd.f32 %v4882, %v5922
      %v5924 = vpop.f32.mrf.mxu0
      %v5925 = vadd.f32 %v4886, %v5924
      %5926 = vmatprep.mubr.bf16.mxu0 %v4842
      %5927 = vmatmul.mubr.bf16.gmra.mxu0 %v4841
      %v5928 = vpop.f32.mrf.mxu0
      %v5929 = vadd.f32 %v4882, %v5928
      %v5930 = vpop.f32.mrf.mxu0
      %v5931 = vadd.f32 %v4886, %v5930
      %v5932 = vpop.f32.mrf.mxu0
      %v5933 = vadd.f32 %v4882, %v5932
      %v5934 = vpop.f32.mrf.mxu0
      %v5935 = vadd.f32 %v4886, %v5934
      %5936 = vmatprep.mubr.bf16.mxu0 %v4844
      %5937 = vmatmul.mubr.bf16.gmra.mxu0 %v4843
      %v5938 = vpop.f32.mrf.mxu0
      %v5939 = vadd.f32 %v4882, %v5938
      %v5940 = vpop.f32.mrf.mxu0
      %v5941 = vadd.f32 %v4886, %v5940
      %v5942 = vpop.f32.mrf.mxu0
      %v5943 = vadd.f32 %v4882, %v5942
      %v5944 = vpop.f32.mrf.mxu0
      %v5945 = vadd.f32 %v4886, %v5944
      %5946 = vmatprep.mubr.bf16.mxu0 %v4846
      %5947 = vmatmul.mubr.bf16.gmra.mxu0 %v4845
      %v5948 = vpop.f32.mrf.mxu0
      %v5949 = vadd.f32 %v4882, %v5948
      %v5950 = vpop.f32.mrf.mxu0
      %v5951 = vadd.f32 %v4886, %v5950
      %v5952 = vpop.f32.mrf.mxu0
      %v5953 = vadd.f32 %v4882, %v5952
      %v5954 = vpop.f32.mrf.mxu0
      %v5955 = vadd.f32 %v4886, %v5954
      %5956 = vmatprep.mubr.bf16.mxu0 %v4848
      %5957 = vmatmul.mubr.bf16.gmra.mxu0 %v4847
      %v5958 = vpop.f32.mrf.mxu0
      %v5959 = vadd.f32 %v4882, %v5958
      %v5960 = vpop.f32.mrf.mxu0
      %v5961 = vadd.f32 %v4886, %v5960
      %v5962 = vpop.f32.mrf.mxu0
      %v5963 = vadd.f32 %v4882, %v5962
      %v5964 = vpop.f32.mrf.mxu0
      %v5965 = vadd.f32 %v4886, %v5964
      %5966 = vmatprep.mubr.bf16.mxu0 %v4850
      %5967 = vmatmul.mubr.bf16.gmra.mxu0 %v4849
      %v5968 = vpop.f32.mrf.mxu0
      %v5969 = vadd.f32 %v4882, %v5968
      %v5970 = vpop.f32.mrf.mxu0
      %v5971 = vadd.f32 %v4886, %v5970
      %v5972 = vpop.f32.mrf.mxu0
      %v5973 = vadd.f32 %v4882, %v5972
      %v5974 = vpop.f32.mrf.mxu0
      %v5975 = vadd.f32 %v4886, %v5974
      %5976 = vmatprep.mubr.bf16.mxu0 %v4852
      %5977 = vmatmul.mubr.bf16.gmra.mxu0 %v4851
      %v5978 = vpop.f32.mrf.mxu0
      %v5979 = vadd.f32 %v4882, %v5978
      %v5980 = vpop.f32.mrf.mxu0
      %v5981 = vadd.f32 %v4886, %v5980
      %v5982 = vpop.f32.mrf.mxu0
      %v5983 = vadd.f32 %v4882, %v5982
      %v5984 = vpop.f32.mrf.mxu0
      %v5985 = vadd.f32 %v4886, %v5984
      %5986 = vdwg.mxu0
      %5987 = vset.pattern.permute.xlu0 5
      %5988 = vperm.xlu0 %5987, %v659
      %v5989 = vpop.permute.xlu0 %5988
      %5991 = vset.pattern.permute.xlu0 5
      %5992 = vperm.xlu0 %5991, %v660
      %v5993 = vpop.permute.xlu0 %5992
      %5995 = vset.pattern.permute.xlu0 5
      %5996 = vperm.xlu0 %5995, %v661
      %v5997 = vpop.permute.xlu0 %5996
      %5999 = vset.pattern.permute.xlu0 5
      %6000 = vperm.xlu0 %5999, %v662
      %v6001 = vpop.permute.xlu0 %6000
      %6003 = vset.pattern.permute.xlu0 5
      %6004 = vperm.xlu0 %6003, %v663
      %v6005 = vpop.permute.xlu0 %6004
      %6007 = vset.pattern.permute.xlu0 5
      %6008 = vperm.xlu0 %6007, %v664
      %v6009 = vpop.permute.xlu0 %6008
      %6011 = vset.pattern.permute.xlu0 5
      %6012 = vperm.xlu0 %6011, %v665
      %v6013 = vpop.permute.xlu0 %6012
      %6015 = vset.pattern.permute.xlu0 5
      %6016 = vperm.xlu0 %6015, %v666
      %v6017 = vpop.permute.xlu0 %6016
      %6019 = vset.pattern.permute.xlu0 5
      %6020 = vperm.xlu0 %6019, %v667
      %v6021 = vpop.permute.xlu0 %6020
      %6023 = vset.pattern.permute.xlu0 5
      %6024 = vperm.xlu0 %6023, %v668
      %v6025 = vpop.permute.xlu0 %6024
      %6027 = vset.pattern.permute.xlu0 5
      %6028 = vperm.xlu0 %6027, %v669
      %v6029 = vpop.permute.xlu0 %6028
      %6031 = vset.pattern.permute.xlu0 5
      %6032 = vperm.xlu0 %6031, %v670
      %v6033 = vpop.permute.xlu0 %6032
      %6035 = vset.pattern.permute.xlu0 5
      %6036 = vperm.xlu0 %6035, %v671
      %v6037 = vpop.permute.xlu0 %6036
      %6039 = vset.pattern.permute.xlu0 5
      %6040 = vperm.xlu0 %6039, %v672
      %v6041 = vpop.permute.xlu0 %6040
      %6043 = vset.pattern.permute.xlu0 5
      %6044 = vperm.xlu0 %6043, %v673
      %v6045 = vpop.permute.xlu0 %6044
      %6047 = vset.pattern.permute.xlu0 5
      %6048 = vperm.xlu0 %6047, %v674
      %v6049 = vpop.permute.xlu0 %6048
      %v6051 = vadd.f32 %v5570, %v5989
      %v6052 = vadd.f32 %v5572, %v5989
      %v6053 = vadd.f32 %v5683, %v5989
      %v6054 = vadd.f32 %v5685, %v5989
      %v6055 = vadd.f32 %v5796, %v5989
      %v6056 = vadd.f32 %v5798, %v5989
      %v6057 = vadd.f32 %v5909, %v5989
      %v6058 = vadd.f32 %v5911, %v5989
      %v6059 = vadd.f32 %v5574, %v5993
      %v6060 = vadd.f32 %v5576, %v5993
      %v6061 = vadd.f32 %v5687, %v5993
      %v6062 = vadd.f32 %v5689, %v5993
      %v6063 = vadd.f32 %v5800, %v5993
      %v6064 = vadd.f32 %v5802, %v5993
      %v6065 = vadd.f32 %v5913, %v5993
      %v6066 = vadd.f32 %v5915, %v5993
      %v6067 = vadd.f32 %v5580, %v5997
      %v6068 = vadd.f32 %v5582, %v5997
      %v6069 = vadd.f32 %v5693, %v5997
      %v6070 = vadd.f32 %v5695, %v5997
      %v6071 = vadd.f32 %v5806, %v5997
      %v6072 = vadd.f32 %v5808, %v5997
      %v6073 = vadd.f32 %v5919, %v5997
      %v6074 = vadd.f32 %v5921, %v5997
      %v6075 = vadd.f32 %v5584, %v6001
      %v6076 = vadd.f32 %v5586, %v6001
      %v6077 = vadd.f32 %v5697, %v6001
      %v6078 = vadd.f32 %v5699, %v6001
      %v6079 = vadd.f32 %v5810, %v6001
      %v6080 = vadd.f32 %v5812, %v6001
      %v6081 = vadd.f32 %v5923, %v6001
      %v6082 = vadd.f32 %v5925, %v6001
      %v6083 = vadd.f32 %v5590, %v6005
      %v6084 = vadd.f32 %v5592, %v6005
      %v6085 = vadd.f32 %v5703, %v6005
      %v6086 = vadd.f32 %v5705, %v6005
      %v6087 = vadd.f32 %v5816, %v6005
      %v6088 = vadd.f32 %v5818, %v6005
      %v6089 = vadd.f32 %v5929, %v6005
      %v6090 = vadd.f32 %v5931, %v6005
      %v6091 = vadd.f32 %v5594, %v6009
      %v6092 = vadd.f32 %v5596, %v6009
      %v6093 = vadd.f32 %v5707, %v6009
      %v6094 = vadd.f32 %v5709, %v6009
      %v6095 = vadd.f32 %v5820, %v6009
      %v6096 = vadd.f32 %v5822, %v6009
      %v6097 = vadd.f32 %v5933, %v6009
      %v6098 = vadd.f32 %v5935, %v6009
      %v6099 = vadd.f32 %v5600, %v6013
      %v6100 = vadd.f32 %v5602, %v6013
      %v6101 = vadd.f32 %v5713, %v6013
      %v6102 = vadd.f32 %v5715, %v6013
      %v6103 = vadd.f32 %v5826, %v6013
      %v6104 = vadd.f32 %v5828, %v6013
      %v6105 = vadd.f32 %v5939, %v6013
      %v6106 = vadd.f32 %v5941, %v6013
      %v6107 = vadd.f32 %v5604, %v6017
      %v6108 = vadd.f32 %v5606, %v6017
      %v6109 = vadd.f32 %v5717, %v6017
      %v6110 = vadd.f32 %v5719, %v6017
      %v6111 = vadd.f32 %v5830, %v6017
      %v6112 = vadd.f32 %v5832, %v6017
      %v6113 = vadd.f32 %v5943, %v6017
      %v6114 = vadd.f32 %v5945, %v6017
      %v6115 = vadd.f32 %v5610, %v6021
      %v6116 = vadd.f32 %v5612, %v6021
      %v6117 = vadd.f32 %v5723, %v6021
      %v6118 = vadd.f32 %v5725, %v6021
      %v6119 = vadd.f32 %v5836, %v6021
      %v6120 = vadd.f32 %v5838, %v6021
      %v6121 = vadd.f32 %v5949, %v6021
      %v6122 = vadd.f32 %v5951, %v6021
      %v6123 = vadd.f32 %v5614, %v6025
      %v6124 = vadd.f32 %v5616, %v6025
      %v6125 = vadd.f32 %v5727, %v6025
      %v6126 = vadd.f32 %v5729, %v6025
      %v6127 = vadd.f32 %v5840, %v6025
      %v6128 = vadd.f32 %v5842, %v6025
      %v6129 = vadd.f32 %v5953, %v6025
      %v6130 = vadd.f32 %v5955, %v6025
      %v6131 = vadd.f32 %v5620, %v6029
      %v6132 = vadd.f32 %v5622, %v6029
      %v6133 = vadd.f32 %v5733, %v6029
      %v6134 = vadd.f32 %v5735, %v6029
      %v6135 = vadd.f32 %v5846, %v6029
      %v6136 = vadd.f32 %v5848, %v6029
      %v6137 = vadd.f32 %v5959, %v6029
      %v6138 = vadd.f32 %v5961, %v6029
      %v6139 = vadd.f32 %v5624, %v6033
      %v6140 = vadd.f32 %v5626, %v6033
      %v6141 = vadd.f32 %v5737, %v6033
      %v6142 = vadd.f32 %v5739, %v6033
      %v6143 = vadd.f32 %v5850, %v6033
      %v6144 = vadd.f32 %v5852, %v6033
      %v6145 = vadd.f32 %v5963, %v6033
      %v6146 = vadd.f32 %v5965, %v6033
      %v6147 = vadd.f32 %v5630, %v6037
      %v6148 = vadd.f32 %v5632, %v6037
      %v6149 = vadd.f32 %v5743, %v6037
      %v6150 = vadd.f32 %v5745, %v6037
      %v6151 = vadd.f32 %v5856, %v6037
      %v6152 = vadd.f32 %v5858, %v6037
      %v6153 = vadd.f32 %v5969, %v6037
      %v6154 = vadd.f32 %v5971, %v6037
      %v6155 = vadd.f32 %v5634, %v6041
      %v6156 = vadd.f32 %v5636, %v6041
      %v6157 = vadd.f32 %v5747, %v6041
      %v6158 = vadd.f32 %v5749, %v6041
      %v6159 = vadd.f32 %v5860, %v6041
      %v6160 = vadd.f32 %v5862, %v6041
      %v6161 = vadd.f32 %v5973, %v6041
      %v6162 = vadd.f32 %v5975, %v6041
      %v6163 = vadd.f32 %v5640, %v6045
      %v6164 = vadd.f32 %v5642, %v6045
      %v6165 = vadd.f32 %v5753, %v6045
      %v6166 = vadd.f32 %v5755, %v6045
      %v6167 = vadd.f32 %v5866, %v6045
      %v6168 = vadd.f32 %v5868, %v6045
      %v6169 = vadd.f32 %v5979, %v6045
      %v6170 = vadd.f32 %v5981, %v6045
      %v6171 = vadd.f32 %v5644, %v6049
      %v6172 = vadd.f32 %v5646, %v6049
      %v6173 = vadd.f32 %v5757, %v6049
      %v6174 = vadd.f32 %v5759, %v6049
      %v6175 = vadd.f32 %v5870, %v6049
      %v6176 = vadd.f32 %v5872, %v6049
      %v6177 = vadd.f32 %v5983, %v6049
      %v6178 = vadd.f32 %v5985, %v6049
      %vm6179 = vcmp.ge.f32.partialorder %v6051, 0.0
      %vm6180 = vcmp.ge.f32.partialorder %v6052, 0.0
      %vm6181 = vcmp.ge.f32.partialorder %v6053, 0.0
      %vm6182 = vcmp.ge.f32.partialorder %v6054, 0.0
      %vm6183 = vcmp.ge.f32.partialorder %v6055, 0.0
      %vm6184 = vcmp.ge.f32.partialorder %v6056, 0.0
      %vm6185 = vcmp.ge.f32.partialorder %v6057, 0.0
      %vm6186 = vcmp.ge.f32.partialorder %v6058, 0.0
      %vm6187 = vcmp.ge.f32.partialorder %v6059, 0.0
      %vm6188 = vcmp.ge.f32.partialorder %v6060, 0.0
      %vm6189 = vcmp.ge.f32.partialorder %v6061, 0.0
      %vm6190 = vcmp.ge.f32.partialorder %v6062, 0.0
      %vm6191 = vcmp.ge.f32.partialorder %v6063, 0.0
      %vm6192 = vcmp.ge.f32.partialorder %v6064, 0.0
      %vm6193 = vcmp.ge.f32.partialorder %v6065, 0.0
      %vm6194 = vcmp.ge.f32.partialorder %v6066, 0.0
      %vm6195 = vcmp.ge.f32.partialorder %v6067, 0.0
      %vm6196 = vcmp.ge.f32.partialorder %v6068, 0.0
      %vm6197 = vcmp.ge.f32.partialorder %v6069, 0.0
      %vm6198 = vcmp.ge.f32.partialorder %v6070, 0.0
      %vm6199 = vcmp.ge.f32.partialorder %v6071, 0.0
      %vm6200 = vcmp.ge.f32.partialorder %v6072, 0.0
      %vm6201 = vcmp.ge.f32.partialorder %v6073, 0.0
      %vm6202 = vcmp.ge.f32.partialorder %v6074, 0.0
      %vm6203 = vcmp.ge.f32.partialorder %v6075, 0.0
      %vm6204 = vcmp.ge.f32.partialorder %v6076, 0.0
      %vm6205 = vcmp.ge.f32.partialorder %v6077, 0.0
      %vm6206 = vcmp.ge.f32.partialorder %v6078, 0.0
      %vm6207 = vcmp.ge.f32.partialorder %v6079, 0.0
      %vm6208 = vcmp.ge.f32.partialorder %v6080, 0.0
      %vm6209 = vcmp.ge.f32.partialorder %v6081, 0.0
      %vm6210 = vcmp.ge.f32.partialorder %v6082, 0.0
      %vm6211 = vcmp.ge.f32.partialorder %v6083, 0.0
      %vm6212 = vcmp.ge.f32.partialorder %v6084, 0.0
      %vm6213 = vcmp.ge.f32.partialorder %v6085, 0.0
      %vm6214 = vcmp.ge.f32.partialorder %v6086, 0.0
      %vm6215 = vcmp.ge.f32.partialorder %v6087, 0.0
      %vm6216 = vcmp.ge.f32.partialorder %v6088, 0.0
      %vm6217 = vcmp.ge.f32.partialorder %v6089, 0.0
      %vm6218 = vcmp.ge.f32.partialorder %v6090, 0.0
      %vm6219 = vcmp.ge.f32.partialorder %v6091, 0.0
      %vm6220 = vcmp.ge.f32.partialorder %v6092, 0.0
      %vm6221 = vcmp.ge.f32.partialorder %v6093, 0.0
      %vm6222 = vcmp.ge.f32.partialorder %v6094, 0.0
      %vm6223 = vcmp.ge.f32.partialorder %v6095, 0.0
      %vm6224 = vcmp.ge.f32.partialorder %v6096, 0.0
      %vm6225 = vcmp.ge.f32.partialorder %v6097, 0.0
      %vm6226 = vcmp.ge.f32.partialorder %v6098, 0.0
      %vm6227 = vcmp.ge.f32.partialorder %v6099, 0.0
      %vm6228 = vcmp.ge.f32.partialorder %v6100, 0.0
      %vm6229 = vcmp.ge.f32.partialorder %v6101, 0.0
      %vm6230 = vcmp.ge.f32.partialorder %v6102, 0.0
      %vm6231 = vcmp.ge.f32.partialorder %v6103, 0.0
      %vm6232 = vcmp.ge.f32.partialorder %v6104, 0.0
      %vm6233 = vcmp.ge.f32.partialorder %v6105, 0.0
      %vm6234 = vcmp.ge.f32.partialorder %v6106, 0.0
      %vm6235 = vcmp.ge.f32.partialorder %v6107, 0.0
      %vm6236 = vcmp.ge.f32.partialorder %v6108, 0.0
      %vm6237 = vcmp.ge.f32.partialorder %v6109, 0.0
      %vm6238 = vcmp.ge.f32.partialorder %v6110, 0.0
      %vm6239 = vcmp.ge.f32.partialorder %v6111, 0.0
      %vm6240 = vcmp.ge.f32.partialorder %v6112, 0.0
      %vm6241 = vcmp.ge.f32.partialorder %v6113, 0.0
      %vm6242 = vcmp.ge.f32.partialorder %v6114, 0.0
      %vm6243 = vcmp.ge.f32.partialorder %v6115, 0.0
      %vm6244 = vcmp.ge.f32.partialorder %v6116, 0.0
      %vm6245 = vcmp.ge.f32.partialorder %v6117, 0.0
      %vm6246 = vcmp.ge.f32.partialorder %v6118, 0.0
      %vm6247 = vcmp.ge.f32.partialorder %v6119, 0.0
      %vm6248 = vcmp.ge.f32.partialorder %v6120, 0.0
      %vm6249 = vcmp.ge.f32.partialorder %v6121, 0.0
      %vm6250 = vcmp.ge.f32.partialorder %v6122, 0.0
      %vm6251 = vcmp.ge.f32.partialorder %v6123, 0.0
      %vm6252 = vcmp.ge.f32.partialorder %v6124, 0.0
      %vm6253 = vcmp.ge.f32.partialorder %v6125, 0.0
      %vm6254 = vcmp.ge.f32.partialorder %v6126, 0.0
      %vm6255 = vcmp.ge.f32.partialorder %v6127, 0.0
      %vm6256 = vcmp.ge.f32.partialorder %v6128, 0.0
      %vm6257 = vcmp.ge.f32.partialorder %v6129, 0.0
      %vm6258 = vcmp.ge.f32.partialorder %v6130, 0.0
      %vm6259 = vcmp.ge.f32.partialorder %v6131, 0.0
      %vm6260 = vcmp.ge.f32.partialorder %v6132, 0.0
      %vm6261 = vcmp.ge.f32.partialorder %v6133, 0.0
      %vm6262 = vcmp.ge.f32.partialorder %v6134, 0.0
      %vm6263 = vcmp.ge.f32.partialorder %v6135, 0.0
      %vm6264 = vcmp.ge.f32.partialorder %v6136, 0.0
      %vm6265 = vcmp.ge.f32.partialorder %v6137, 0.0
      %vm6266 = vcmp.ge.f32.partialorder %v6138, 0.0
      %vm6267 = vcmp.ge.f32.partialorder %v6139, 0.0
      %vm6268 = vcmp.ge.f32.partialorder %v6140, 0.0
      %vm6269 = vcmp.ge.f32.partialorder %v6141, 0.0
      %vm6270 = vcmp.ge.f32.partialorder %v6142, 0.0
      %vm6271 = vcmp.ge.f32.partialorder %v6143, 0.0
      %vm6272 = vcmp.ge.f32.partialorder %v6144, 0.0
      %vm6273 = vcmp.ge.f32.partialorder %v6145, 0.0
      %vm6274 = vcmp.ge.f32.partialorder %v6146, 0.0
      %vm6275 = vcmp.ge.f32.partialorder %v6147, 0.0
      %vm6276 = vcmp.ge.f32.partialorder %v6148, 0.0
      %vm6277 = vcmp.ge.f32.partialorder %v6149, 0.0
      %vm6278 = vcmp.ge.f32.partialorder %v6150, 0.0
      %vm6279 = vcmp.ge.f32.partialorder %v6151, 0.0
      %vm6280 = vcmp.ge.f32.partialorder %v6152, 0.0
      %vm6281 = vcmp.ge.f32.partialorder %v6153, 0.0
      %vm6282 = vcmp.ge.f32.partialorder %v6154, 0.0
      %vm6283 = vcmp.ge.f32.partialorder %v6155, 0.0
      %vm6284 = vcmp.ge.f32.partialorder %v6156, 0.0
      %vm6285 = vcmp.ge.f32.partialorder %v6157, 0.0
      %vm6286 = vcmp.ge.f32.partialorder %v6158, 0.0
      %vm6287 = vcmp.ge.f32.partialorder %v6159, 0.0
      %vm6288 = vcmp.ge.f32.partialorder %v6160, 0.0
      %vm6289 = vcmp.ge.f32.partialorder %v6161, 0.0
      %vm6290 = vcmp.ge.f32.partialorder %v6162, 0.0
      %vm6291 = vcmp.ge.f32.partialorder %v6163, 0.0
      %vm6292 = vcmp.ge.f32.partialorder %v6164, 0.0
      %vm6293 = vcmp.ge.f32.partialorder %v6165, 0.0
      %vm6294 = vcmp.ge.f32.partialorder %v6166, 0.0
      %vm6295 = vcmp.ge.f32.partialorder %v6167, 0.0
      %vm6296 = vcmp.ge.f32.partialorder %v6168, 0.0
      %vm6297 = vcmp.ge.f32.partialorder %v6169, 0.0
      %vm6298 = vcmp.ge.f32.partialorder %v6170, 0.0
      %vm6299 = vcmp.ge.f32.partialorder %v6171, 0.0
      %vm6300 = vcmp.ge.f32.partialorder %v6172, 0.0
      %vm6301 = vcmp.ge.f32.partialorder %v6173, 0.0
      %vm6302 = vcmp.ge.f32.partialorder %v6174, 0.0
      %vm6303 = vcmp.ge.f32.partialorder %v6175, 0.0
      %vm6304 = vcmp.ge.f32.partialorder %v6176, 0.0
      %vm6305 = vcmp.ge.f32.partialorder %v6177, 0.0
      %vm6306 = vcmp.ge.f32.partialorder %v6178, 0.0
      %v6307 = vmul.f32 %v6051, 0.2
      %v6308 = vmul.f32 %v6052, 0.2
      %v6309 = vmul.f32 %v6053, 0.2
      %v6310 = vmul.f32 %v6054, 0.2
      %v6311 = vmul.f32 %v6055, 0.2
      %v6312 = vmul.f32 %v6056, 0.2
      %v6313 = vmul.f32 %v6057, 0.2
      %v6314 = vmul.f32 %v6058, 0.2
      %v6315 = vmul.f32 %v6059, 0.2
      %v6316 = vmul.f32 %v6060, 0.2
      %v6317 = vmul.f32 %v6061, 0.2
      %v6318 = vmul.f32 %v6062, 0.2
      %v6319 = vmul.f32 %v6063, 0.2
      %v6320 = vmul.f32 %v6064, 0.2
      %v6321 = vmul.f32 %v6065, 0.2
      %v6322 = vmul.f32 %v6066, 0.2
      %v6323 = vmul.f32 %v6067, 0.2
      %v6324 = vmul.f32 %v6068, 0.2
      %v6325 = vmul.f32 %v6069, 0.2
      %v6326 = vmul.f32 %v6070, 0.2
      %v6327 = vmul.f32 %v6071, 0.2
      %v6328 = vmul.f32 %v6072, 0.2
      %v6329 = vmul.f32 %v6073, 0.2
      %v6330 = vmul.f32 %v6074, 0.2
      %v6331 = vmul.f32 %v6075, 0.2
      %v6332 = vmul.f32 %v6076, 0.2
      %v6333 = vmul.f32 %v6077, 0.2
      %v6334 = vmul.f32 %v6078, 0.2
      %v6335 = vmul.f32 %v6079, 0.2
      %v6336 = vmul.f32 %v6080, 0.2
      %v6337 = vmul.f32 %v6081, 0.2
      %v6338 = vmul.f32 %v6082, 0.2
      %v6339 = vmul.f32 %v6083, 0.2
      %v6340 = vmul.f32 %v6084, 0.2
      %v6341 = vmul.f32 %v6085, 0.2
      %v6342 = vmul.f32 %v6086, 0.2
      %v6343 = vmul.f32 %v6087, 0.2
      %v6344 = vmul.f32 %v6088, 0.2
      %v6345 = vmul.f32 %v6089, 0.2
      %v6346 = vmul.f32 %v6090, 0.2
      %v6347 = vmul.f32 %v6091, 0.2
      %v6348 = vmul.f32 %v6092, 0.2
      %v6349 = vmul.f32 %v6093, 0.2
      %v6350 = vmul.f32 %v6094, 0.2
      %v6351 = vmul.f32 %v6095, 0.2
      %v6352 = vmul.f32 %v6096, 0.2
      %v6353 = vmul.f32 %v6097, 0.2
      %v6354 = vmul.f32 %v6098, 0.2
      %v6355 = vmul.f32 %v6099, 0.2
      %v6356 = vmul.f32 %v6100, 0.2
      %v6357 = vmul.f32 %v6101, 0.2
      %v6358 = vmul.f32 %v6102, 0.2
      %v6359 = vmul.f32 %v6103, 0.2
      %v6360 = vmul.f32 %v6104, 0.2
      %v6361 = vmul.f32 %v6105, 0.2
      %v6362 = vmul.f32 %v6106, 0.2
      %v6363 = vmul.f32 %v6107, 0.2
      %v6364 = vmul.f32 %v6108, 0.2
      %v6365 = vmul.f32 %v6109, 0.2
      %v6366 = vmul.f32 %v6110, 0.2
      %v6367 = vmul.f32 %v6111, 0.2
      %v6368 = vmul.f32 %v6112, 0.2
      %v6369 = vmul.f32 %v6113, 0.2
      %v6370 = vmul.f32 %v6114, 0.2
      %v6371 = vmul.f32 %v6115, 0.2
      %v6372 = vmul.f32 %v6116, 0.2
      %v6373 = vmul.f32 %v6117, 0.2
      %v6374 = vmul.f32 %v6118, 0.2
      %v6375 = vmul.f32 %v6119, 0.2
      %v6376 = vmul.f32 %v6120, 0.2
      %v6377 = vmul.f32 %v6121, 0.2
      %v6378 = vmul.f32 %v6122, 0.2
      %v6379 = vmul.f32 %v6123, 0.2
      %v6380 = vmul.f32 %v6124, 0.2
      %v6381 = vmul.f32 %v6125, 0.2
      %v6382 = vmul.f32 %v6126, 0.2
      %v6383 = vmul.f32 %v6127, 0.2
      %v6384 = vmul.f32 %v6128, 0.2
      %v6385 = vmul.f32 %v6129, 0.2
      %v6386 = vmul.f32 %v6130, 0.2
      %v6387 = vmul.f32 %v6131, 0.2
      %v6388 = vmul.f32 %v6132, 0.2
      %v6389 = vmul.f32 %v6133, 0.2
      %v6390 = vmul.f32 %v6134, 0.2
      %v6391 = vmul.f32 %v6135, 0.2
      %v6392 = vmul.f32 %v6136, 0.2
      %v6393 = vmul.f32 %v6137, 0.2
      %v6394 = vmul.f32 %v6138, 0.2
      %v6395 = vmul.f32 %v6139, 0.2
      %v6396 = vmul.f32 %v6140, 0.2
      %v6397 = vmul.f32 %v6141, 0.2
      %v6398 = vmul.f32 %v6142, 0.2
      %v6399 = vmul.f32 %v6143, 0.2
      %v6400 = vmul.f32 %v6144, 0.2
      %v6401 = vmul.f32 %v6145, 0.2
      %v6402 = vmul.f32 %v6146, 0.2
      %v6403 = vmul.f32 %v6147, 0.2
      %v6404 = vmul.f32 %v6148, 0.2
      %v6405 = vmul.f32 %v6149, 0.2
      %v6406 = vmul.f32 %v6150, 0.2
      %v6407 = vmul.f32 %v6151, 0.2
      %v6408 = vmul.f32 %v6152, 0.2
      %v6409 = vmul.f32 %v6153, 0.2
      %v6410 = vmul.f32 %v6154, 0.2
      %v6411 = vmul.f32 %v6155, 0.2
      %v6412 = vmul.f32 %v6156, 0.2
      %v6413 = vmul.f32 %v6157, 0.2
      %v6414 = vmul.f32 %v6158, 0.2
      %v6415 = vmul.f32 %v6159, 0.2
      %v6416 = vmul.f32 %v6160, 0.2
      %v6417 = vmul.f32 %v6161, 0.2
      %v6418 = vmul.f32 %v6162, 0.2
      %v6419 = vmul.f32 %v6163, 0.2
      %v6420 = vmul.f32 %v6164, 0.2
      %v6421 = vmul.f32 %v6165, 0.2
      %v6422 = vmul.f32 %v6166, 0.2
      %v6423 = vmul.f32 %v6167, 0.2
      %v6424 = vmul.f32 %v6168, 0.2
      %v6425 = vmul.f32 %v6169, 0.2
      %v6426 = vmul.f32 %v6170, 0.2
      %v6427 = vmul.f32 %v6171, 0.2
      %v6428 = vmul.f32 %v6172, 0.2
      %v6429 = vmul.f32 %v6173, 0.2
      %v6430 = vmul.f32 %v6174, 0.2
      %v6431 = vmul.f32 %v6175, 0.2
      %v6432 = vmul.f32 %v6176, 0.2
      %v6433 = vmul.f32 %v6177, 0.2
      %v6434 = vmul.f32 %v6178, 0.2
      %v6435 = vsel %vm6179, %v6051, %v6307
      %v6436 = vsel %vm6180, %v6052, %v6308
      %v6437 = vsel %vm6181, %v6053, %v6309
      %v6438 = vsel %vm6182, %v6054, %v6310
      %v6439 = vsel %vm6183, %v6055, %v6311
      %v6440 = vsel %vm6184, %v6056, %v6312
      %v6441 = vsel %vm6185, %v6057, %v6313
      %v6442 = vsel %vm6186, %v6058, %v6314
      %v6443 = vsel %vm6187, %v6059, %v6315
      %v6444 = vsel %vm6188, %v6060, %v6316
      %v6445 = vsel %vm6189, %v6061, %v6317
      %v6446 = vsel %vm6190, %v6062, %v6318
      %v6447 = vsel %vm6191, %v6063, %v6319
      %v6448 = vsel %vm6192, %v6064, %v6320
      %v6449 = vsel %vm6193, %v6065, %v6321
      %v6450 = vsel %vm6194, %v6066, %v6322
      %v6451 = vsel %vm6195, %v6067, %v6323
      %v6452 = vsel %vm6196, %v6068, %v6324
      %v6453 = vsel %vm6197, %v6069, %v6325
      %v6454 = vsel %vm6198, %v6070, %v6326
      %v6455 = vsel %vm6199, %v6071, %v6327
      %v6456 = vsel %vm6200, %v6072, %v6328
      %v6457 = vsel %vm6201, %v6073, %v6329
      %v6458 = vsel %vm6202, %v6074, %v6330
      %v6459 = vsel %vm6203, %v6075, %v6331
      %v6460 = vsel %vm6204, %v6076, %v6332
      %v6461 = vsel %vm6205, %v6077, %v6333
      %v6462 = vsel %vm6206, %v6078, %v6334
      %v6463 = vsel %vm6207, %v6079, %v6335
      %v6464 = vsel %vm6208, %v6080, %v6336
      %v6465 = vsel %vm6209, %v6081, %v6337
      %v6466 = vsel %vm6210, %v6082, %v6338
      %v6467 = vsel %vm6211, %v6083, %v6339
      %v6468 = vsel %vm6212, %v6084, %v6340
      %v6469 = vsel %vm6213, %v6085, %v6341
      %v6470 = vsel %vm6214, %v6086, %v6342
      %v6471 = vsel %vm6215, %v6087, %v6343
      %v6472 = vsel %vm6216, %v6088, %v6344
      %v6473 = vsel %vm6217, %v6089, %v6345
      %v6474 = vsel %vm6218, %v6090, %v6346
      %v6475 = vsel %vm6219, %v6091, %v6347
      %v6476 = vsel %vm6220, %v6092, %v6348
      %v6477 = vsel %vm6221, %v6093, %v6349
      %v6478 = vsel %vm6222, %v6094, %v6350
      %v6479 = vsel %vm6223, %v6095, %v6351
      %v6480 = vsel %vm6224, %v6096, %v6352
      %v6481 = vsel %vm6225, %v6097, %v6353
      %v6482 = vsel %vm6226, %v6098, %v6354
      %v6483 = vsel %vm6227, %v6099, %v6355
      %v6484 = vsel %vm6228, %v6100, %v6356
      %v6485 = vsel %vm6229, %v6101, %v6357
      %v6486 = vsel %vm6230, %v6102, %v6358
      %v6487 = vsel %vm6231, %v6103, %v6359
      %v6488 = vsel %vm6232, %v6104, %v6360
      %v6489 = vsel %vm6233, %v6105, %v6361
      %v6490 = vsel %vm6234, %v6106, %v6362
      %v6491 = vsel %vm6235, %v6107, %v6363
      %v6492 = vsel %vm6236, %v6108, %v6364
      %v6493 = vsel %vm6237, %v6109, %v6365
      %v6494 = vsel %vm6238, %v6110, %v6366
      %v6495 = vsel %vm6239, %v6111, %v6367
      %v6496 = vsel %vm6240, %v6112, %v6368
      %v6497 = vsel %vm6241, %v6113, %v6369
      %v6498 = vsel %vm6242, %v6114, %v6370
      %v6499 = vsel %vm6243, %v6115, %v6371
      %v6500 = vsel %vm6244, %v6116, %v6372
      %v6501 = vsel %vm6245, %v6117, %v6373
      %v6502 = vsel %vm6246, %v6118, %v6374
      %v6503 = vsel %vm6247, %v6119, %v6375
      %v6504 = vsel %vm6248, %v6120, %v6376
      %v6505 = vsel %vm6249, %v6121, %v6377
      %v6506 = vsel %vm6250, %v6122, %v6378
      %v6507 = vsel %vm6251, %v6123, %v6379
      %v6508 = vsel %vm6252, %v6124, %v6380
      %v6509 = vsel %vm6253, %v6125, %v6381
      %v6510 = vsel %vm6254, %v6126, %v6382
      %v6511 = vsel %vm6255, %v6127, %v6383
      %v6512 = vsel %vm6256, %v6128, %v6384
      %v6513 = vsel %vm6257, %v6129, %v6385
      %v6514 = vsel %vm6258, %v6130, %v6386
      %v6515 = vsel %vm6259, %v6131, %v6387
      %v6516 = vsel %vm6260, %v6132, %v6388
      %v6517 = vsel %vm6261, %v6133, %v6389
      %v6518 = vsel %vm6262, %v6134, %v6390
      %v6519 = vsel %vm6263, %v6135, %v6391
      %v6520 = vsel %vm6264, %v6136, %v6392
      %v6521 = vsel %vm6265, %v6137, %v6393
      %v6522 = vsel %vm6266, %v6138, %v6394
      %v6523 = vsel %vm6267, %v6139, %v6395
      %v6524 = vsel %vm6268, %v6140, %v6396
      %v6525 = vsel %vm6269, %v6141, %v6397
      %v6526 = vsel %vm6270, %v6142, %v6398
      %v6527 = vsel %vm6271, %v6143, %v6399
      %v6528 = vsel %vm6272, %v6144, %v6400
      %v6529 = vsel %vm6273, %v6145, %v6401
      %v6530 = vsel %vm6274, %v6146, %v6402
      %v6531 = vsel %vm6275, %v6147, %v6403
      %v6532 = vsel %vm6276, %v6148, %v6404
      %v6533 = vsel %vm6277, %v6149, %v6405
      %v6534 = vsel %vm6278, %v6150, %v6406
      %v6535 = vsel %vm6279, %v6151, %v6407
      %v6536 = vsel %vm6280, %v6152, %v6408
      %v6537 = vsel %vm6281, %v6153, %v6409
      %v6538 = vsel %vm6282, %v6154, %v6410
      %v6539 = vsel %vm6283, %v6155, %v6411
      %v6540 = vsel %vm6284, %v6156, %v6412
      %v6541 = vsel %vm6285, %v6157, %v6413
      %v6542 = vsel %vm6286, %v6158, %v6414
      %v6543 = vsel %vm6287, %v6159, %v6415
      %v6544 = vsel %vm6288, %v6160, %v6416
      %v6545 = vsel %vm6289, %v6161, %v6417
      %v6546 = vsel %vm6290, %v6162, %v6418
      %v6547 = vsel %vm6291, %v6163, %v6419
      %v6548 = vsel %vm6292, %v6164, %v6420
      %v6549 = vsel %vm6293, %v6165, %v6421
      %v6550 = vsel %vm6294, %v6166, %v6422
      %v6551 = vsel %vm6295, %v6167, %v6423
      %v6552 = vsel %vm6296, %v6168, %v6424
      %v6553 = vsel %vm6297, %v6169, %v6425
      %v6554 = vsel %vm6298, %v6170, %v6426
      %v6555 = vsel %vm6299, %v6171, %v6427
      %v6556 = vsel %vm6300, %v6172, %v6428
      %v6557 = vsel %vm6301, %v6173, %v6429
      %v6558 = vsel %vm6302, %v6174, %v6430
      %v6559 = vsel %vm6303, %v6175, %v6431
      %v6560 = vsel %vm6304, %v6176, %v6432
      %v6561 = vsel %vm6305, %v6177, %v6433
      %v6562 = vsel %vm6306, %v6178, %v6434
      %v6563 = vpack.c.bf16 %v6443, %v6435
      %v6564 = vpack.c.bf16 %v6444, %v6436
      %v6565 = vpack.c.bf16 %v6445, %v6437
      %v6566 = vpack.c.bf16 %v6446, %v6438
      %v6567 = vpack.c.bf16 %v6447, %v6439
      %v6568 = vpack.c.bf16 %v6448, %v6440
      %v6569 = vpack.c.bf16 %v6449, %v6441
      %v6570 = vpack.c.bf16 %v6450, %v6442
      %v6571 = vpack.c.bf16 %v6459, %v6451
      %v6572 = vpack.c.bf16 %v6460, %v6452
      %v6573 = vpack.c.bf16 %v6461, %v6453
      %v6574 = vpack.c.bf16 %v6462, %v6454
      %v6575 = vpack.c.bf16 %v6463, %v6455
      %v6576 = vpack.c.bf16 %v6464, %v6456
      %v6577 = vpack.c.bf16 %v6465, %v6457
      %v6578 = vpack.c.bf16 %v6466, %v6458
      %v6579 = vpack.c.bf16 %v6475, %v6467
      %v6580 = vpack.c.bf16 %v6476, %v6468
      %v6581 = vpack.c.bf16 %v6477, %v6469
      %v6582 = vpack.c.bf16 %v6478, %v6470
      %v6583 = vpack.c.bf16 %v6479, %v6471
      %v6584 = vpack.c.bf16 %v6480, %v6472
      %v6585 = vpack.c.bf16 %v6481, %v6473
      %v6586 = vpack.c.bf16 %v6482, %v6474
      %v6587 = vpack.c.bf16 %v6491, %v6483
      %v6588 = vpack.c.bf16 %v6492, %v6484
      %v6589 = vpack.c.bf16 %v6493, %v6485
      %v6590 = vpack.c.bf16 %v6494, %v6486
      %v6591 = vpack.c.bf16 %v6495, %v6487
      %v6592 = vpack.c.bf16 %v6496, %v6488
      %v6593 = vpack.c.bf16 %v6497, %v6489
      %v6594 = vpack.c.bf16 %v6498, %v6490
      %v6595 = vpack.c.bf16 %v6507, %v6499
      %v6596 = vpack.c.bf16 %v6508, %v6500
      %v6597 = vpack.c.bf16 %v6509, %v6501
      %v6598 = vpack.c.bf16 %v6510, %v6502
      %v6599 = vpack.c.bf16 %v6511, %v6503
      %v6600 = vpack.c.bf16 %v6512, %v6504
      %v6601 = vpack.c.bf16 %v6513, %v6505
      %v6602 = vpack.c.bf16 %v6514, %v6506
      %v6603 = vpack.c.bf16 %v6523, %v6515
      %v6604 = vpack.c.bf16 %v6524, %v6516
      %v6605 = vpack.c.bf16 %v6525, %v6517
      %v6606 = vpack.c.bf16 %v6526, %v6518
      %v6607 = vpack.c.bf16 %v6527, %v6519
      %v6608 = vpack.c.bf16 %v6528, %v6520
      %v6609 = vpack.c.bf16 %v6529, %v6521
      %v6610 = vpack.c.bf16 %v6530, %v6522
      %v6611 = vpack.c.bf16 %v6539, %v6531
      %v6612 = vpack.c.bf16 %v6540, %v6532
      %v6613 = vpack.c.bf16 %v6541, %v6533
      %v6614 = vpack.c.bf16 %v6542, %v6534
      %v6615 = vpack.c.bf16 %v6543, %v6535
      %v6616 = vpack.c.bf16 %v6544, %v6536
      %v6617 = vpack.c.bf16 %v6545, %v6537
      %v6618 = vpack.c.bf16 %v6546, %v6538
      %v6619 = vpack.c.bf16 %v6555, %v6547
      %v6620 = vpack.c.bf16 %v6556, %v6548
      %v6621 = vpack.c.bf16 %v6557, %v6549
      %v6622 = vpack.c.bf16 %v6558, %v6550
      %v6623 = vpack.c.bf16 %v6559, %v6551
      %v6624 = vpack.c.bf16 %v6560, %v6552
      %v6625 = vpack.c.bf16 %v6561, %v6553
      %v6626 = vpack.c.bf16 %v6562, %v6554
      %v6627 = vunpack.c.l.bf16 %v6563
      %v6628 = vunpack.c.l.bf16 %v6564
      %v6629 = vunpack.c.l.bf16 %v6565
      %v6630 = vunpack.c.l.bf16 %v6566
      %v6631 = vunpack.c.l.bf16 %v6567
      %v6632 = vunpack.c.l.bf16 %v6568
      %v6633 = vunpack.c.l.bf16 %v6569
      %v6634 = vunpack.c.l.bf16 %v6570
      %v6635 = vunpack.c.h.bf16 %v6563
      %v6636 = vunpack.c.h.bf16 %v6564
      %v6637 = vunpack.c.h.bf16 %v6565
      %v6638 = vunpack.c.h.bf16 %v6566
      %v6639 = vunpack.c.h.bf16 %v6567
      %v6640 = vunpack.c.h.bf16 %v6568
      %v6641 = vunpack.c.h.bf16 %v6569
      %v6642 = vunpack.c.h.bf16 %v6570
      %v6643 = vunpack.c.l.bf16 %v6571
      %v6644 = vunpack.c.l.bf16 %v6572
      %v6645 = vunpack.c.l.bf16 %v6573
      %v6646 = vunpack.c.l.bf16 %v6574
      %v6647 = vunpack.c.l.bf16 %v6575
      %v6648 = vunpack.c.l.bf16 %v6576
      %v6649 = vunpack.c.l.bf16 %v6577
      %v6650 = vunpack.c.l.bf16 %v6578
      %v6651 = vunpack.c.h.bf16 %v6571
      %v6652 = vunpack.c.h.bf16 %v6572
      %v6653 = vunpack.c.h.bf16 %v6573
      %v6654 = vunpack.c.h.bf16 %v6574
      %v6655 = vunpack.c.h.bf16 %v6575
      %v6656 = vunpack.c.h.bf16 %v6576
      %v6657 = vunpack.c.h.bf16 %v6577
      %v6658 = vunpack.c.h.bf16 %v6578
      %v6659 = vunpack.c.l.bf16 %v6579
      %v6660 = vunpack.c.l.bf16 %v6580
      %v6661 = vunpack.c.l.bf16 %v6581
      %v6662 = vunpack.c.l.bf16 %v6582
      %v6663 = vunpack.c.l.bf16 %v6583
      %v6664 = vunpack.c.l.bf16 %v6584
      %v6665 = vunpack.c.l.bf16 %v6585
      %v6666 = vunpack.c.l.bf16 %v6586
      %v6667 = vunpack.c.h.bf16 %v6579
      %v6668 = vunpack.c.h.bf16 %v6580
      %v6669 = vunpack.c.h.bf16 %v6581
      %v6670 = vunpack.c.h.bf16 %v6582
      %v6671 = vunpack.c.h.bf16 %v6583
      %v6672 = vunpack.c.h.bf16 %v6584
      %v6673 = vunpack.c.h.bf16 %v6585
      %v6674 = vunpack.c.h.bf16 %v6586
      %v6675 = vunpack.c.l.bf16 %v6587
      %v6676 = vunpack.c.l.bf16 %v6588
      %v6677 = vunpack.c.l.bf16 %v6589
      %v6678 = vunpack.c.l.bf16 %v6590
      %v6679 = vunpack.c.l.bf16 %v6591
      %v6680 = vunpack.c.l.bf16 %v6592
      %v6681 = vunpack.c.l.bf16 %v6593
      %v6682 = vunpack.c.l.bf16 %v6594
      %v6683 = vunpack.c.h.bf16 %v6587
      %v6684 = vunpack.c.h.bf16 %v6588
      %v6685 = vunpack.c.h.bf16 %v6589
      %v6686 = vunpack.c.h.bf16 %v6590
      %v6687 = vunpack.c.h.bf16 %v6591
      %v6688 = vunpack.c.h.bf16 %v6592
      %v6689 = vunpack.c.h.bf16 %v6593
      %v6690 = vunpack.c.h.bf16 %v6594
      %v6691 = vunpack.c.l.bf16 %v6595
      %v6692 = vunpack.c.l.bf16 %v6596
      %v6693 = vunpack.c.l.bf16 %v6597
      %v6694 = vunpack.c.l.bf16 %v6598
      %v6695 = vunpack.c.l.bf16 %v6599
      %v6696 = vunpack.c.l.bf16 %v6600
      %v6697 = vunpack.c.l.bf16 %v6601
      %v6698 = vunpack.c.l.bf16 %v6602
      %v6699 = vunpack.c.h.bf16 %v6595
      %v6700 = vunpack.c.h.bf16 %v6596
      %v6701 = vunpack.c.h.bf16 %v6597
      %v6702 = vunpack.c.h.bf16 %v6598
      %v6703 = vunpack.c.h.bf16 %v6599
      %v6704 = vunpack.c.h.bf16 %v6600
      %v6705 = vunpack.c.h.bf16 %v6601
      %v6706 = vunpack.c.h.bf16 %v6602
      %v6707 = vunpack.c.l.bf16 %v6603
      %v6708 = vunpack.c.l.bf16 %v6604
      %v6709 = vunpack.c.l.bf16 %v6605
      %v6710 = vunpack.c.l.bf16 %v6606
      %v6711 = vunpack.c.l.bf16 %v6607
      %v6712 = vunpack.c.l.bf16 %v6608
      %v6713 = vunpack.c.l.bf16 %v6609
      %v6714 = vunpack.c.l.bf16 %v6610
      %v6715 = vunpack.c.h.bf16 %v6603
      %v6716 = vunpack.c.h.bf16 %v6604
      %v6717 = vunpack.c.h.bf16 %v6605
      %v6718 = vunpack.c.h.bf16 %v6606
      %v6719 = vunpack.c.h.bf16 %v6607
      %v6720 = vunpack.c.h.bf16 %v6608
      %v6721 = vunpack.c.h.bf16 %v6609
      %v6722 = vunpack.c.h.bf16 %v6610
      %v6723 = vunpack.c.l.bf16 %v6611
      %v6724 = vunpack.c.l.bf16 %v6612
      %v6725 = vunpack.c.l.bf16 %v6613
      %v6726 = vunpack.c.l.bf16 %v6614
      %v6727 = vunpack.c.l.bf16 %v6615
      %v6728 = vunpack.c.l.bf16 %v6616
      %v6729 = vunpack.c.l.bf16 %v6617
      %v6730 = vunpack.c.l.bf16 %v6618
      %v6731 = vunpack.c.h.bf16 %v6611
      %v6732 = vunpack.c.h.bf16 %v6612
      %v6733 = vunpack.c.h.bf16 %v6613
      %v6734 = vunpack.c.h.bf16 %v6614
      %v6735 = vunpack.c.h.bf16 %v6615
      %v6736 = vunpack.c.h.bf16 %v6616
      %v6737 = vunpack.c.h.bf16 %v6617
      %v6738 = vunpack.c.h.bf16 %v6618
      %v6739 = vunpack.c.l.bf16 %v6619
      %v6740 = vunpack.c.l.bf16 %v6620
      %v6741 = vunpack.c.l.bf16 %v6621
      %v6742 = vunpack.c.l.bf16 %v6622
      %v6743 = vunpack.c.l.bf16 %v6623
      %v6744 = vunpack.c.l.bf16 %v6624
      %v6745 = vunpack.c.l.bf16 %v6625
      %v6746 = vunpack.c.l.bf16 %v6626
      %v6747 = vunpack.c.h.bf16 %v6619
      %v6748 = vunpack.c.h.bf16 %v6620
      %v6749 = vunpack.c.h.bf16 %v6621
      %v6750 = vunpack.c.h.bf16 %v6622
      %v6751 = vunpack.c.h.bf16 %v6623
      %v6752 = vunpack.c.h.bf16 %v6624
      %v6753 = vunpack.c.h.bf16 %v6625
      %v6754 = vunpack.c.h.bf16 %v6626
      %6755 = vset.pattern.permute.xlu0 6
      %6756 = vperm.xlu0 %6755, %v625
      %v6757 = vpop.permute.xlu0 %6756
      %6759 = vset.pattern.permute.xlu0 6
      %6760 = vperm.xlu0 %6759, %v626
      %v6761 = vpop.permute.xlu0 %6760
      %6763 = vset.pattern.permute.xlu0 6
      %6764 = vperm.xlu0 %6763, %v627
      %v6765 = vpop.permute.xlu0 %6764
      %6767 = vset.pattern.permute.xlu0 6
      %6768 = vperm.xlu0 %6767, %v628
      %v6769 = vpop.permute.xlu0 %6768
      %6771 = vset.pattern.permute.xlu0 6
      %6772 = vperm.xlu0 %6771, %v629
      %v6773 = vpop.permute.xlu0 %6772
      %6775 = vset.pattern.permute.xlu0 6
      %6776 = vperm.xlu0 %6775, %v630
      %v6777 = vpop.permute.xlu0 %6776
      %6779 = vset.pattern.permute.xlu0 6
      %6780 = vperm.xlu0 %6779, %v631
      %v6781 = vpop.permute.xlu0 %6780
      %6783 = vset.pattern.permute.xlu0 6
      %6784 = vperm.xlu0 %6783, %v632
      %v6785 = vpop.permute.xlu0 %6784
      %6787 = vset.pattern.permute.xlu0 6
      %6788 = vperm.xlu0 %6787, %v633
      %v6789 = vpop.permute.xlu0 %6788
      %6791 = vset.pattern.permute.xlu0 6
      %6792 = vperm.xlu0 %6791, %v634
      %v6793 = vpop.permute.xlu0 %6792
      %6795 = vset.pattern.permute.xlu0 6
      %6796 = vperm.xlu0 %6795, %v635
      %v6797 = vpop.permute.xlu0 %6796
      %6799 = vset.pattern.permute.xlu0 6
      %6800 = vperm.xlu0 %6799, %v636
      %v6801 = vpop.permute.xlu0 %6800
      %6803 = vset.pattern.permute.xlu0 6
      %6804 = vperm.xlu0 %6803, %v637
      %v6805 = vpop.permute.xlu0 %6804
      %6807 = vset.pattern.permute.xlu0 6
      %6808 = vperm.xlu0 %6807, %v638
      %v6809 = vpop.permute.xlu0 %6808
      %6811 = vset.pattern.permute.xlu0 6
      %6812 = vperm.xlu0 %6811, %v639
      %v6813 = vpop.permute.xlu0 %6812
      %6815 = vset.pattern.permute.xlu0 6
      %6816 = vperm.xlu0 %6815, %v640
      %v6817 = vpop.permute.xlu0 %6816
      %v6819 = vmul.f32 %v6627, %v6757
      %v6820 = vmul.f32 %v6628, %v6757
      %v6821 = vmul.f32 %v6629, %v6757
      %v6822 = vmul.f32 %v6630, %v6757
      %v6823 = vmul.f32 %v6631, %v6757
      %v6824 = vmul.f32 %v6632, %v6757
      %v6825 = vmul.f32 %v6633, %v6757
      %v6826 = vmul.f32 %v6634, %v6757
      %v6827 = vmul.f32 %v6635, %v6761
      %v6828 = vmul.f32 %v6636, %v6761
      %v6829 = vmul.f32 %v6637, %v6761
      %v6830 = vmul.f32 %v6638, %v6761
      %v6831 = vmul.f32 %v6639, %v6761
      %v6832 = vmul.f32 %v6640, %v6761
      %v6833 = vmul.f32 %v6641, %v6761
      %v6834 = vmul.f32 %v6642, %v6761
      %v6835 = vmul.f32 %v6643, %v6765
      %v6836 = vmul.f32 %v6644, %v6765
      %v6837 = vmul.f32 %v6645, %v6765
      %v6838 = vmul.f32 %v6646, %v6765
      %v6839 = vmul.f32 %v6647, %v6765
      %v6840 = vmul.f32 %v6648, %v6765
      %v6841 = vmul.f32 %v6649, %v6765
      %v6842 = vmul.f32 %v6650, %v6765
      %v6843 = vmul.f32 %v6651, %v6769
      %v6844 = vmul.f32 %v6652, %v6769
      %v6845 = vmul.f32 %v6653, %v6769
      %v6846 = vmul.f32 %v6654, %v6769
      %v6847 = vmul.f32 %v6655, %v6769
      %v6848 = vmul.f32 %v6656, %v6769
      %v6849 = vmul.f32 %v6657, %v6769
      %v6850 = vmul.f32 %v6658, %v6769
      %v6851 = vmul.f32 %v6659, %v6773
      %v6852 = vmul.f32 %v6660, %v6773
      %v6853 = vmul.f32 %v6661, %v6773
      %v6854 = vmul.f32 %v6662, %v6773
      %v6855 = vmul.f32 %v6663, %v6773
      %v6856 = vmul.f32 %v6664, %v6773
      %v6857 = vmul.f32 %v6665, %v6773
      %v6858 = vmul.f32 %v6666, %v6773
      %v6859 = vmul.f32 %v6667, %v6777
      %v6860 = vmul.f32 %v6668, %v6777
      %v6861 = vmul.f32 %v6669, %v6777
      %v6862 = vmul.f32 %v6670, %v6777
      %v6863 = vmul.f32 %v6671, %v6777
      %v6864 = vmul.f32 %v6672, %v6777
      %v6865 = vmul.f32 %v6673, %v6777
      %v6866 = vmul.f32 %v6674, %v6777
      %v6867 = vmul.f32 %v6675, %v6781
      %v6868 = vmul.f32 %v6676, %v6781
      %v6869 = vmul.f32 %v6677, %v6781
      %v6870 = vmul.f32 %v6678, %v6781
      %v6871 = vmul.f32 %v6679, %v6781
      %v6872 = vmul.f32 %v6680, %v6781
      %v6873 = vmul.f32 %v6681, %v6781
      %v6874 = vmul.f32 %v6682, %v6781
      %v6875 = vmul.f32 %v6683, %v6785
      %v6876 = vmul.f32 %v6684, %v6785
      %v6877 = vmul.f32 %v6685, %v6785
      %v6878 = vmul.f32 %v6686, %v6785
      %v6879 = vmul.f32 %v6687, %v6785
      %v6880 = vmul.f32 %v6688, %v6785
      %v6881 = vmul.f32 %v6689, %v6785
      %v6882 = vmul.f32 %v6690, %v6785
      %v6883 = vmul.f32 %v6691, %v6789
      %v6884 = vmul.f32 %v6692, %v6789
      %v6885 = vmul.f32 %v6693, %v6789
      %v6886 = vmul.f32 %v6694, %v6789
      %v6887 = vmul.f32 %v6695, %v6789
      %v6888 = vmul.f32 %v6696, %v6789
      %v6889 = vmul.f32 %v6697, %v6789
      %v6890 = vmul.f32 %v6698, %v6789
      %v6891 = vmul.f32 %v6699, %v6793
      %v6892 = vmul.f32 %v6700, %v6793
      %v6893 = vmul.f32 %v6701, %v6793
      %v6894 = vmul.f32 %v6702, %v6793
      %v6895 = vmul.f32 %v6703, %v6793
      %v6896 = vmul.f32 %v6704, %v6793
      %v6897 = vmul.f32 %v6705, %v6793
      %v6898 = vmul.f32 %v6706, %v6793
      %v6899 = vmul.f32 %v6707, %v6797
      %v6900 = vmul.f32 %v6708, %v6797
      %v6901 = vmul.f32 %v6709, %v6797
      %v6902 = vmul.f32 %v6710, %v6797
      %v6903 = vmul.f32 %v6711, %v6797
      %v6904 = vmul.f32 %v6712, %v6797
      %v6905 = vmul.f32 %v6713, %v6797
      %v6906 = vmul.f32 %v6714, %v6797
      %v6907 = vmul.f32 %v6715, %v6801
      %v6908 = vmul.f32 %v6716, %v6801
      %v6909 = vmul.f32 %v6717, %v6801
      %v6910 = vmul.f32 %v6718, %v6801
      %v6911 = vmul.f32 %v6719, %v6801
      %v6912 = vmul.f32 %v6720, %v6801
      %v6913 = vmul.f32 %v6721, %v6801
      %v6914 = vmul.f32 %v6722, %v6801
      %v6915 = vmul.f32 %v6723, %v6805
      %v6916 = vmul.f32 %v6724, %v6805
      %v6917 = vmul.f32 %v6725, %v6805
      %v6918 = vmul.f32 %v6726, %v6805
      %v6919 = vmul.f32 %v6727, %v6805
      %v6920 = vmul.f32 %v6728, %v6805
      %v6921 = vmul.f32 %v6729, %v6805
      %v6922 = vmul.f32 %v6730, %v6805
      %v6923 = vmul.f32 %v6731, %v6809
      %v6924 = vmul.f32 %v6732, %v6809
      %v6925 = vmul.f32 %v6733, %v6809
      %v6926 = vmul.f32 %v6734, %v6809
      %v6927 = vmul.f32 %v6735, %v6809
      %v6928 = vmul.f32 %v6736, %v6809
      %v6929 = vmul.f32 %v6737, %v6809
      %v6930 = vmul.f32 %v6738, %v6809
      %v6931 = vmul.f32 %v6739, %v6813
      %v6932 = vmul.f32 %v6740, %v6813
      %v6933 = vmul.f32 %v6741, %v6813
      %v6934 = vmul.f32 %v6742, %v6813
      %v6935 = vmul.f32 %v6743, %v6813
      %v6936 = vmul.f32 %v6744, %v6813
      %v6937 = vmul.f32 %v6745, %v6813
      %v6938 = vmul.f32 %v6746, %v6813
      %v6939 = vmul.f32 %v6747, %v6817
      %v6940 = vmul.f32 %v6748, %v6817
      %v6941 = vmul.f32 %v6749, %v6817
      %v6942 = vmul.f32 %v6750, %v6817
      %v6943 = vmul.f32 %v6751, %v6817
      %v6944 = vmul.f32 %v6752, %v6817
      %v6945 = vmul.f32 %v6753, %v6817
      %v6946 = vmul.f32 %v6754, %v6817
      %v6947 = vpack.c.bf16 %v6827, %v6819
      %v6948 = vpack.c.bf16 %v6828, %v6820
      %v6949 = vpack.c.bf16 %v6829, %v6821
      %v6950 = vpack.c.bf16 %v6830, %v6822
      %v6951 = vpack.c.bf16 %v6831, %v6823
      %v6952 = vpack.c.bf16 %v6832, %v6824
      %v6953 = vpack.c.bf16 %v6833, %v6825
      %v6954 = vpack.c.bf16 %v6834, %v6826
      %v6955 = vpack.c.bf16 %v6843, %v6835
      %v6956 = vpack.c.bf16 %v6844, %v6836
      %v6957 = vpack.c.bf16 %v6845, %v6837
      %v6958 = vpack.c.bf16 %v6846, %v6838
      %v6959 = vpack.c.bf16 %v6847, %v6839
      %v6960 = vpack.c.bf16 %v6848, %v6840
      %v6961 = vpack.c.bf16 %v6849, %v6841
      %v6962 = vpack.c.bf16 %v6850, %v6842
      %v6963 = vpack.c.bf16 %v6859, %v6851
      %v6964 = vpack.c.bf16 %v6860, %v6852
      %v6965 = vpack.c.bf16 %v6861, %v6853
      %v6966 = vpack.c.bf16 %v6862, %v6854
      %v6967 = vpack.c.bf16 %v6863, %v6855
      %v6968 = vpack.c.bf16 %v6864, %v6856
      %v6969 = vpack.c.bf16 %v6865, %v6857
      %v6970 = vpack.c.bf16 %v6866, %v6858
      %v6971 = vpack.c.bf16 %v6875, %v6867
      %v6972 = vpack.c.bf16 %v6876, %v6868
      %v6973 = vpack.c.bf16 %v6877, %v6869
      %v6974 = vpack.c.bf16 %v6878, %v6870
      %v6975 = vpack.c.bf16 %v6879, %v6871
      %v6976 = vpack.c.bf16 %v6880, %v6872
      %v6977 = vpack.c.bf16 %v6881, %v6873
      %v6978 = vpack.c.bf16 %v6882, %v6874
      %v6979 = vpack.c.bf16 %v6891, %v6883
      %v6980 = vpack.c.bf16 %v6892, %v6884
      %v6981 = vpack.c.bf16 %v6893, %v6885
      %v6982 = vpack.c.bf16 %v6894, %v6886
      %v6983 = vpack.c.bf16 %v6895, %v6887
      %v6984 = vpack.c.bf16 %v6896, %v6888
      %v6985 = vpack.c.bf16 %v6897, %v6889
      %v6986 = vpack.c.bf16 %v6898, %v6890
      %v6987 = vpack.c.bf16 %v6907, %v6899
      %v6988 = vpack.c.bf16 %v6908, %v6900
      %v6989 = vpack.c.bf16 %v6909, %v6901
      %v6990 = vpack.c.bf16 %v6910, %v6902
      %v6991 = vpack.c.bf16 %v6911, %v6903
      %v6992 = vpack.c.bf16 %v6912, %v6904
      %v6993 = vpack.c.bf16 %v6913, %v6905
      %v6994 = vpack.c.bf16 %v6914, %v6906
      %v6995 = vpack.c.bf16 %v6923, %v6915
      %v6996 = vpack.c.bf16 %v6924, %v6916
      %v6997 = vpack.c.bf16 %v6925, %v6917
      %v6998 = vpack.c.bf16 %v6926, %v6918
      %v6999 = vpack.c.bf16 %v6927, %v6919
      %v7000 = vpack.c.bf16 %v6928, %v6920
      %v7001 = vpack.c.bf16 %v6929, %v6921
      %v7002 = vpack.c.bf16 %v6930, %v6922
      %v7003 = vpack.c.bf16 %v6939, %v6931
      %v7004 = vpack.c.bf16 %v6940, %v6932
      %v7005 = vpack.c.bf16 %v6941, %v6933
      %v7006 = vpack.c.bf16 %v6942, %v6934
      %v7007 = vpack.c.bf16 %v6943, %v6935
      %v7008 = vpack.c.bf16 %v6944, %v6936
      %v7009 = vpack.c.bf16 %v6945, %v6937
      %v7010 = vpack.c.bf16 %v6946, %v6938
      %s7011 = scalar_lea.vmem %s2, 384
      %v7012 = vld [vmem:[%s7011] sm:$0xf]
      %v7013 = vld [vmem:[%s7011 + $0x4] sm:$0xf]
      %v7014 = vld [vmem:[%s7011 + $0x8] sm:$0xf]
      %v7015 = vld [vmem:[%s7011 + $0xc] sm:$0xf]
      %v7016 = vld [vmem:[%s7011 + $0x10] sm:$0xf]
      %v7017 = vld [vmem:[%s7011 + $0x14] sm:$0xf]
      %v7018 = vld [vmem:[%s7011 + $0x18] sm:$0xf]
      %v7019 = vld [vmem:[%s7011 + $0x1c] sm:$0xf]
      %v7020 = vld [vmem:[%s7011 + $0x20] sm:$0xf]
      %v7021 = vld [vmem:[%s7011 + $0x24] sm:$0xf]
      %v7022 = vld [vmem:[%s7011 + $0x28] sm:$0xf]
      %v7023 = vld [vmem:[%s7011 + $0x2c] sm:$0xf]
      %v7024 = vld [vmem:[%s7011 + $0x30] sm:$0xf]
      %v7025 = vld [vmem:[%s7011 + $0x34] sm:$0xf]
      %v7026 = vld [vmem:[%s7011 + $0x38] sm:$0xf]
      %v7027 = vld [vmem:[%s7011 + $0x3c] sm:$0xf]
      %v7044 = vunpack.c.l.b16 %v7012
      %v7045 = vunpack.c.l.b16 %v7013
      %v7046 = vunpack.c.l.b16 %v7014
      %v7047 = vunpack.c.l.b16 %v7015
      %v7048 = vunpack.c.l.b16 %v7016
      %v7049 = vunpack.c.l.b16 %v7017
      %v7050 = vunpack.c.l.b16 %v7018
      %v7051 = vunpack.c.l.b16 %v7019
      %v7052 = vunpack.c.l.b16 %v7020
      %v7053 = vunpack.c.l.b16 %v7021
      %v7054 = vunpack.c.l.b16 %v7022
      %v7055 = vunpack.c.l.b16 %v7023
      %v7056 = vunpack.c.l.b16 %v7024
      %v7057 = vunpack.c.l.b16 %v7025
      %v7058 = vunpack.c.l.b16 %v7026
      %v7059 = vunpack.c.l.b16 %v7027
      %v7060 = vpack.c.b16 %v7045, %v7044
      %v7061 = vpack.c.b16 %v7047, %v7046
      %v7062 = vpack.c.b16 %v7049, %v7048
      %v7063 = vpack.c.b16 %v7051, %v7050
      %v7064 = vpack.c.b16 %v7053, %v7052
      %v7065 = vpack.c.b16 %v7055, %v7054
      %v7066 = vpack.c.b16 %v7057, %v7056
      %v7067 = vpack.c.b16 %v7059, %v7058
      %7076 = vmatprep.subr.bf16.mxu0 %v7004
      %7077 = vmatpush1.bf16.msra.mxu0 %v7003
      %7078 = vmatprep.subr.bf16.mxu0 %v6996
      %7079 = vmatpush1.bf16.msra.mxu0 %v6995
      %7080 = vmatprep.subr.bf16.mxu0 %v6988
      %7081 = vmatpush1.bf16.msra.mxu0 %v6987
      %7082 = vmatprep.subr.bf16.mxu0 %v6980
      %7083 = vmatpush1.bf16.msra.mxu0 %v6979
      %7084 = vmatprep.subr.bf16.mxu0 %v6972
      %7085 = vmatpush1.bf16.msra.mxu0 %v6971
      %7086 = vmatprep.subr.bf16.mxu0 %v6964
      %7087 = vmatpush1.bf16.msra.mxu0 %v6963
      %7088 = vmatprep.subr.bf16.mxu0 %v6956
      %7089 = vmatpush1.bf16.msra.mxu0 %v6955
      %7090 = vmatprep.subr.bf16.mxu0 %v6948
      %7091 = vmatpush1.bf16.msra.mxu0 %v6947
      %7092 = vmatprep.subr.bf16.mxu0 0
      %7093 = vmatpush2.bf16.msra.mxu0 0
      %7094 = vmatprep.subr.bf16.mxu0 0
      %7095 = vmatpush2.bf16.msra.mxu0 0
      %7096 = vmatprep.subr.bf16.mxu0 0
      %7097 = vmatpush2.bf16.msra.mxu0 0
      %7098 = vmatprep.subr.bf16.mxu0 0
      %7099 = vmatpush2.bf16.msra.mxu0 0
      %7100 = vmatprep.subr.bf16.mxu0 0
      %7101 = vmatpush2.bf16.msra.mxu0 0
      %7102 = vmatprep.subr.bf16.mxu0 0
      %7103 = vmatpush2.bf16.msra.mxu0 0
      %7104 = vmatprep.subr.bf16.mxu0 0
      %7105 = vmatpush2.bf16.msra.mxu0 0
      %7106 = vmatprep.subr.bf16.mxu0 0
      %7107 = vmatpush2.bf16.msra.mxu0 0
      %7108 = vmatprep.mubr.bf16.mxu0 0
      %7109 = vmatmul.mubr.bf16.gmra.mxu0 %v7060
      %v7110 = vpop.f32.mrf.mxu0
      %v7111 = vadd.f32 0.0, %v7110
      %v7112 = vpop.f32.mrf.mxu0
      %v7113 = vadd.f32 0.0, %v7112
      %v7114 = vpop.f32.mrf.mxu0
      %v7115 = vadd.f32 0.0, %v7114
      %v7116 = vpop.f32.mrf.mxu0
      %v7117 = vadd.f32 0.0, %v7116
      %7118 = vmatprep.mubr.bf16.mxu0 0
      %7119 = vmatmul.mubr.bf16.gmra.mxu0 %v7061
      %v7120 = vpop.f32.mrf.mxu0
      %v7121 = vadd.f32 0.0, %v7120
      %v7122 = vpop.f32.mrf.mxu0
      %v7123 = vadd.f32 0.0, %v7122
      %v7124 = vpop.f32.mrf.mxu0
      %v7125 = vadd.f32 0.0, %v7124
      %v7126 = vpop.f32.mrf.mxu0
      %v7127 = vadd.f32 0.0, %v7126
      %7128 = vmatprep.mubr.bf16.mxu0 0
      %7129 = vmatmul.mubr.bf16.gmra.mxu0 %v7062
      %v7130 = vpop.f32.mrf.mxu0
      %v7131 = vadd.f32 0.0, %v7130
      %v7132 = vpop.f32.mrf.mxu0
      %v7133 = vadd.f32 0.0, %v7132
      %v7134 = vpop.f32.mrf.mxu0
      %v7135 = vadd.f32 0.0, %v7134
      %v7136 = vpop.f32.mrf.mxu0
      %v7137 = vadd.f32 0.0, %v7136
      %7138 = vmatprep.mubr.bf16.mxu0 0
      %7139 = vmatmul.mubr.bf16.gmra.mxu0 %v7063
      %v7140 = vpop.f32.mrf.mxu0
      %v7141 = vadd.f32 0.0, %v7140
      %v7142 = vpop.f32.mrf.mxu0
      %v7143 = vadd.f32 0.0, %v7142
      %v7144 = vpop.f32.mrf.mxu0
      %v7145 = vadd.f32 0.0, %v7144
      %v7146 = vpop.f32.mrf.mxu0
      %v7147 = vadd.f32 0.0, %v7146
      %7148 = vmatprep.mubr.bf16.mxu0 0
      %7149 = vmatmul.mubr.bf16.gmra.mxu0 %v7064
      %v7150 = vpop.f32.mrf.mxu0
      %v7151 = vadd.f32 0.0, %v7150
      %v7152 = vpop.f32.mrf.mxu0
      %v7153 = vadd.f32 0.0, %v7152
      %v7154 = vpop.f32.mrf.mxu0
      %v7155 = vadd.f32 0.0, %v7154
      %v7156 = vpop.f32.mrf.mxu0
      %v7157 = vadd.f32 0.0, %v7156
      %7158 = vmatprep.mubr.bf16.mxu0 0
      %7159 = vmatmul.mubr.bf16.gmra.mxu0 %v7065
      %v7160 = vpop.f32.mrf.mxu0
      %v7161 = vadd.f32 0.0, %v7160
      %v7162 = vpop.f32.mrf.mxu0
      %v7163 = vadd.f32 0.0, %v7162
      %v7164 = vpop.f32.mrf.mxu0
      %v7165 = vadd.f32 0.0, %v7164
      %v7166 = vpop.f32.mrf.mxu0
      %v7167 = vadd.f32 0.0, %v7166
      %7168 = vmatprep.mubr.bf16.mxu0 0
      %7169 = vmatmul.mubr.bf16.gmra.mxu0 %v7066
      %v7170 = vpop.f32.mrf.mxu0
      %v7171 = vadd.f32 0.0, %v7170
      %v7172 = vpop.f32.mrf.mxu0
      %v7173 = vadd.f32 0.0, %v7172
      %v7174 = vpop.f32.mrf.mxu0
      %v7175 = vadd.f32 0.0, %v7174
      %v7176 = vpop.f32.mrf.mxu0
      %v7177 = vadd.f32 0.0, %v7176
      %7178 = vmatprep.mubr.bf16.mxu0 0
      %7179 = vmatmul.mubr.bf16.gmra.mxu0 %v7067
      %v7180 = vpop.f32.mrf.mxu0
      %v7181 = vadd.f32 0.0, %v7180
      %v7182 = vpop.f32.mrf.mxu0
      %v7183 = vadd.f32 0.0, %v7182
      %v7184 = vpop.f32.mrf.mxu0
      %v7185 = vadd.f32 0.0, %v7184
      %v7186 = vpop.f32.mrf.mxu0
      %v7187 = vadd.f32 0.0, %v7186
      %7188 = vdwg.mxu0
      %7189 = vmatprep.subr.bf16.mxu0 %v7006
      %7190 = vmatpush1.bf16.msra.mxu0 %v7005
      %7191 = vmatprep.subr.bf16.mxu0 %v6998
      %7192 = vmatpush1.bf16.msra.mxu0 %v6997
      %7193 = vmatprep.subr.bf16.mxu0 %v6990
      %7194 = vmatpush1.bf16.msra.mxu0 %v6989
      %7195 = vmatprep.subr.bf16.mxu0 %v6982
      %7196 = vmatpush1.bf16.msra.mxu0 %v6981
      %7197 = vmatprep.subr.bf16.mxu0 %v6974
      %7198 = vmatpush1.bf16.msra.mxu0 %v6973
      %7199 = vmatprep.subr.bf16.mxu0 %v6966
      %7200 = vmatpush1.bf16.msra.mxu0 %v6965
      %7201 = vmatprep.subr.bf16.mxu0 %v6958
      %7202 = vmatpush1.bf16.msra.mxu0 %v6957
      %7203 = vmatprep.subr.bf16.mxu0 %v6950
      %7204 = vmatpush1.bf16.msra.mxu0 %v6949
      %7205 = vmatprep.subr.bf16.mxu0 0
      %7206 = vmatpush2.bf16.msra.mxu0 0
      %7207 = vmatprep.subr.bf16.mxu0 0
      %7208 = vmatpush2.bf16.msra.mxu0 0
      %7209 = vmatprep.subr.bf16.mxu0 0
      %7210 = vmatpush2.bf16.msra.mxu0 0
      %7211 = vmatprep.subr.bf16.mxu0 0
      %7212 = vmatpush2.bf16.msra.mxu0 0
      %7213 = vmatprep.subr.bf16.mxu0 0
      %7214 = vmatpush2.bf16.msra.mxu0 0
      %7215 = vmatprep.subr.bf16.mxu0 0
      %7216 = vmatpush2.bf16.msra.mxu0 0
      %7217 = vmatprep.subr.bf16.mxu0 0
      %7218 = vmatpush2.bf16.msra.mxu0 0
      %7219 = vmatprep.subr.bf16.mxu0 0
      %7220 = vmatpush2.bf16.msra.mxu0 0
      %7221 = vmatprep.mubr.bf16.mxu0 0
      %7222 = vmatmul.mubr.bf16.gmra.mxu0 %v7060
      %v7223 = vpop.f32.mrf.mxu0
      %v7224 = vadd.f32 0.0, %v7223
      %v7225 = vpop.f32.mrf.mxu0
      %v7226 = vadd.f32 0.0, %v7225
      %v7227 = vpop.f32.mrf.mxu0
      %v7228 = vadd.f32 0.0, %v7227
      %v7229 = vpop.f32.mrf.mxu0
      %v7230 = vadd.f32 0.0, %v7229
      %7231 = vmatprep.mubr.bf16.mxu0 0
      %7232 = vmatmul.mubr.bf16.gmra.mxu0 %v7061
      %v7233 = vpop.f32.mrf.mxu0
      %v7234 = vadd.f32 0.0, %v7233
      %v7235 = vpop.f32.mrf.mxu0
      %v7236 = vadd.f32 0.0, %v7235
      %v7237 = vpop.f32.mrf.mxu0
      %v7238 = vadd.f32 0.0, %v7237
      %v7239 = vpop.f32.mrf.mxu0
      %v7240 = vadd.f32 0.0, %v7239
      %7241 = vmatprep.mubr.bf16.mxu0 0
      %7242 = vmatmul.mubr.bf16.gmra.mxu0 %v7062
      %v7243 = vpop.f32.mrf.mxu0
      %v7244 = vadd.f32 0.0, %v7243
      %v7245 = vpop.f32.mrf.mxu0
      %v7246 = vadd.f32 0.0, %v7245
      %v7247 = vpop.f32.mrf.mxu0
      %v7248 = vadd.f32 0.0, %v7247
      %v7249 = vpop.f32.mrf.mxu0
      %v7250 = vadd.f32 0.0, %v7249
      %7251 = vmatprep.mubr.bf16.mxu0 0
      %7252 = vmatmul.mubr.bf16.gmra.mxu0 %v7063
      %v7253 = vpop.f32.mrf.mxu0
      %v7254 = vadd.f32 0.0, %v7253
      %v7255 = vpop.f32.mrf.mxu0
      %v7256 = vadd.f32 0.0, %v7255
      %v7257 = vpop.f32.mrf.mxu0
      %v7258 = vadd.f32 0.0, %v7257
      %v7259 = vpop.f32.mrf.mxu0
      %v7260 = vadd.f32 0.0, %v7259
      %7261 = vmatprep.mubr.bf16.mxu0 0
      %7262 = vmatmul.mubr.bf16.gmra.mxu0 %v7064
      %v7263 = vpop.f32.mrf.mxu0
      %v7264 = vadd.f32 0.0, %v7263
      %v7265 = vpop.f32.mrf.mxu0
      %v7266 = vadd.f32 0.0, %v7265
      %v7267 = vpop.f32.mrf.mxu0
      %v7268 = vadd.f32 0.0, %v7267
      %v7269 = vpop.f32.mrf.mxu0
      %v7270 = vadd.f32 0.0, %v7269
      %7271 = vmatprep.mubr.bf16.mxu0 0
      %7272 = vmatmul.mubr.bf16.gmra.mxu0 %v7065
      %v7273 = vpop.f32.mrf.mxu0
      %v7274 = vadd.f32 0.0, %v7273
      %v7275 = vpop.f32.mrf.mxu0
      %v7276 = vadd.f32 0.0, %v7275
      %v7277 = vpop.f32.mrf.mxu0
      %v7278 = vadd.f32 0.0, %v7277
      %v7279 = vpop.f32.mrf.mxu0
      %v7280 = vadd.f32 0.0, %v7279
      %7281 = vmatprep.mubr.bf16.mxu0 0
      %7282 = vmatmul.mubr.bf16.gmra.mxu0 %v7066
      %v7283 = vpop.f32.mrf.mxu0
      %v7284 = vadd.f32 0.0, %v7283
      %v7285 = vpop.f32.mrf.mxu0
      %v7286 = vadd.f32 0.0, %v7285
      %v7287 = vpop.f32.mrf.mxu0
      %v7288 = vadd.f32 0.0, %v7287
      %v7289 = vpop.f32.mrf.mxu0
      %v7290 = vadd.f32 0.0, %v7289
      %7291 = vmatprep.mubr.bf16.mxu0 0
      %7292 = vmatmul.mubr.bf16.gmra.mxu0 %v7067
      %v7293 = vpop.f32.mrf.mxu0
      %v7294 = vadd.f32 0.0, %v7293
      %v7295 = vpop.f32.mrf.mxu0
      %v7296 = vadd.f32 0.0, %v7295
      %v7297 = vpop.f32.mrf.mxu0
      %v7298 = vadd.f32 0.0, %v7297
      %v7299 = vpop.f32.mrf.mxu0
      %v7300 = vadd.f32 0.0, %v7299
      %7301 = vdwg.mxu0
      %7302 = vmatprep.subr.bf16.mxu0 %v7008
      %7303 = vmatpush1.bf16.msra.mxu0 %v7007
      %7304 = vmatprep.subr.bf16.mxu0 %v7000
      %7305 = vmatpush1.bf16.msra.mxu0 %v6999
      %7306 = vmatprep.subr.bf16.mxu0 %v6992
      %7307 = vmatpush1.bf16.msra.mxu0 %v6991
      %7308 = vmatprep.subr.bf16.mxu0 %v6984
      %7309 = vmatpush1.bf16.msra.mxu0 %v6983
      %7310 = vmatprep.subr.bf16.mxu0 %v6976
      %7311 = vmatpush1.bf16.msra.mxu0 %v6975
      %7312 = vmatprep.subr.bf16.mxu0 %v6968
      %7313 = vmatpush1.bf16.msra.mxu0 %v6967
      %7314 = vmatprep.subr.bf16.mxu0 %v6960
      %7315 = vmatpush1.bf16.msra.mxu0 %v6959
      %7316 = vmatprep.subr.bf16.mxu0 %v6952
      %7317 = vmatpush1.bf16.msra.mxu0 %v6951
      %7318 = vmatprep.subr.bf16.mxu0 0
      %7319 = vmatpush2.bf16.msra.mxu0 0
      %7320 = vmatprep.subr.bf16.mxu0 0
      %7321 = vmatpush2.bf16.msra.mxu0 0
      %7322 = vmatprep.subr.bf16.mxu0 0
      %7323 = vmatpush2.bf16.msra.mxu0 0
      %7324 = vmatprep.subr.bf16.mxu0 0
      %7325 = vmatpush2.bf16.msra.mxu0 0
      %7326 = vmatprep.subr.bf16.mxu0 0
      %7327 = vmatpush2.bf16.msra.mxu0 0
      %7328 = vmatprep.subr.bf16.mxu0 0
      %7329 = vmatpush2.bf16.msra.mxu0 0
      %7330 = vmatprep.subr.bf16.mxu0 0
      %7331 = vmatpush2.bf16.msra.mxu0 0
      %7332 = vmatprep.subr.bf16.mxu0 0
      %7333 = vmatpush2.bf16.msra.mxu0 0
      %7334 = vmatprep.mubr.bf16.mxu0 0
      %7335 = vmatmul.mubr.bf16.gmra.mxu0 %v7060
      %v7336 = vpop.f32.mrf.mxu0
      %v7337 = vadd.f32 0.0, %v7336
      %v7338 = vpop.f32.mrf.mxu0
      %v7339 = vadd.f32 0.0, %v7338
      %v7340 = vpop.f32.mrf.mxu0
      %v7341 = vadd.f32 0.0, %v7340
      %v7342 = vpop.f32.mrf.mxu0
      %v7343 = vadd.f32 0.0, %v7342
      %7344 = vmatprep.mubr.bf16.mxu0 0
      %7345 = vmatmul.mubr.bf16.gmra.mxu0 %v7061
      %v7346 = vpop.f32.mrf.mxu0
      %v7347 = vadd.f32 0.0, %v7346
      %v7348 = vpop.f32.mrf.mxu0
      %v7349 = vadd.f32 0.0, %v7348
      %v7350 = vpop.f32.mrf.mxu0
      %v7351 = vadd.f32 0.0, %v7350
      %v7352 = vpop.f32.mrf.mxu0
      %v7353 = vadd.f32 0.0, %v7352
      %7354 = vmatprep.mubr.bf16.mxu0 0
      %7355 = vmatmul.mubr.bf16.gmra.mxu0 %v7062
      %v7356 = vpop.f32.mrf.mxu0
      %v7357 = vadd.f32 0.0, %v7356
      %v7358 = vpop.f32.mrf.mxu0
      %v7359 = vadd.f32 0.0, %v7358
      %v7360 = vpop.f32.mrf.mxu0
      %v7361 = vadd.f32 0.0, %v7360
      %v7362 = vpop.f32.mrf.mxu0
      %v7363 = vadd.f32 0.0, %v7362
      %7364 = vmatprep.mubr.bf16.mxu0 0
      %7365 = vmatmul.mubr.bf16.gmra.mxu0 %v7063
      %v7366 = vpop.f32.mrf.mxu0
      %v7367 = vadd.f32 0.0, %v7366
      %v7368 = vpop.f32.mrf.mxu0
      %v7369 = vadd.f32 0.0, %v7368
      %v7370 = vpop.f32.mrf.mxu0
      %v7371 = vadd.f32 0.0, %v7370
      %v7372 = vpop.f32.mrf.mxu0
      %v7373 = vadd.f32 0.0, %v7372
      %7374 = vmatprep.mubr.bf16.mxu0 0
      %7375 = vmatmul.mubr.bf16.gmra.mxu0 %v7064
      %v7376 = vpop.f32.mrf.mxu0
      %v7377 = vadd.f32 0.0, %v7376
      %v7378 = vpop.f32.mrf.mxu0
      %v7379 = vadd.f32 0.0, %v7378
      %v7380 = vpop.f32.mrf.mxu0
      %v7381 = vadd.f32 0.0, %v7380
      %v7382 = vpop.f32.mrf.mxu0
      %v7383 = vadd.f32 0.0, %v7382
      %7384 = vmatprep.mubr.bf16.mxu0 0
      %7385 = vmatmul.mubr.bf16.gmra.mxu0 %v7065
      %v7386 = vpop.f32.mrf.mxu0
      %v7387 = vadd.f32 0.0, %v7386
      %v7388 = vpop.f32.mrf.mxu0
      %v7389 = vadd.f32 0.0, %v7388
      %v7390 = vpop.f32.mrf.mxu0
      %v7391 = vadd.f32 0.0, %v7390
      %v7392 = vpop.f32.mrf.mxu0
      %v7393 = vadd.f32 0.0, %v7392
      %7394 = vmatprep.mubr.bf16.mxu0 0
      %7395 = vmatmul.mubr.bf16.gmra.mxu0 %v7066
      %v7396 = vpop.f32.mrf.mxu0
      %v7397 = vadd.f32 0.0, %v7396
      %v7398 = vpop.f32.mrf.mxu0
      %v7399 = vadd.f32 0.0, %v7398
      %v7400 = vpop.f32.mrf.mxu0
      %v7401 = vadd.f32 0.0, %v7400
      %v7402 = vpop.f32.mrf.mxu0
      %v7403 = vadd.f32 0.0, %v7402
      %7404 = vmatprep.mubr.bf16.mxu0 0
      %7405 = vmatmul.mubr.bf16.gmra.mxu0 %v7067
      %v7406 = vpop.f32.mrf.mxu0
      %v7407 = vadd.f32 0.0, %v7406
      %v7408 = vpop.f32.mrf.mxu0
      %v7409 = vadd.f32 0.0, %v7408
      %v7410 = vpop.f32.mrf.mxu0
      %v7411 = vadd.f32 0.0, %v7410
      %v7412 = vpop.f32.mrf.mxu0
      %v7413 = vadd.f32 0.0, %v7412
      %7414 = vdwg.mxu0
      %7415 = vmatprep.subr.bf16.mxu0 %v7010
      %7416 = vmatpush1.bf16.msra.mxu0 %v7009
      %7417 = vmatprep.subr.bf16.mxu0 %v7002
      %7418 = vmatpush1.bf16.msra.mxu0 %v7001
      %7419 = vmatprep.subr.bf16.mxu0 %v6994
      %7420 = vmatpush1.bf16.msra.mxu0 %v6993
      %7421 = vmatprep.subr.bf16.mxu0 %v6986
      %7422 = vmatpush1.bf16.msra.mxu0 %v6985
      %7423 = vmatprep.subr.bf16.mxu0 %v6978
      %7424 = vmatpush1.bf16.msra.mxu0 %v6977
      %7425 = vmatprep.subr.bf16.mxu0 %v6970
      %7426 = vmatpush1.bf16.msra.mxu0 %v6969
      %7427 = vmatprep.subr.bf16.mxu0 %v6962
      %7428 = vmatpush1.bf16.msra.mxu0 %v6961
      %7429 = vmatprep.subr.bf16.mxu0 %v6954
      %7430 = vmatpush1.bf16.msra.mxu0 %v6953
      %7431 = vmatprep.subr.bf16.mxu0 0
      %7432 = vmatpush2.bf16.msra.mxu0 0
      %7433 = vmatprep.subr.bf16.mxu0 0
      %7434 = vmatpush2.bf16.msra.mxu0 0
      %7435 = vmatprep.subr.bf16.mxu0 0
      %7436 = vmatpush2.bf16.msra.mxu0 0
      %7437 = vmatprep.subr.bf16.mxu0 0
      %7438 = vmatpush2.bf16.msra.mxu0 0
      %7439 = vmatprep.subr.bf16.mxu0 0
      %7440 = vmatpush2.bf16.msra.mxu0 0
      %7441 = vmatprep.subr.bf16.mxu0 0
      %7442 = vmatpush2.bf16.msra.mxu0 0
      %7443 = vmatprep.subr.bf16.mxu0 0
      %7444 = vmatpush2.bf16.msra.mxu0 0
      %7445 = vmatprep.subr.bf16.mxu0 0
      %7446 = vmatpush2.bf16.msra.mxu0 0
      %7447 = vmatprep.mubr.bf16.mxu0 0
      %7448 = vmatmul.mubr.bf16.gmra.mxu0 %v7060
      %v7449 = vpop.f32.mrf.mxu0
      %v7450 = vadd.f32 0.0, %v7449
      %v7451 = vpop.f32.mrf.mxu0
      %v7452 = vadd.f32 0.0, %v7451
      %v7453 = vpop.f32.mrf.mxu0
      %v7454 = vadd.f32 0.0, %v7453
      %v7455 = vpop.f32.mrf.mxu0
      %v7456 = vadd.f32 0.0, %v7455
      %7457 = vmatprep.mubr.bf16.mxu0 0
      %7458 = vmatmul.mubr.bf16.gmra.mxu0 %v7061
      %v7459 = vpop.f32.mrf.mxu0
      %v7460 = vadd.f32 0.0, %v7459
      %v7461 = vpop.f32.mrf.mxu0
      %v7462 = vadd.f32 0.0, %v7461
      %v7463 = vpop.f32.mrf.mxu0
      %v7464 = vadd.f32 0.0, %v7463
      %v7465 = vpop.f32.mrf.mxu0
      %v7466 = vadd.f32 0.0, %v7465
      %7467 = vmatprep.mubr.bf16.mxu0 0
      %7468 = vmatmul.mubr.bf16.gmra.mxu0 %v7062
      %v7469 = vpop.f32.mrf.mxu0
      %v7470 = vadd.f32 0.0, %v7469
      %v7471 = vpop.f32.mrf.mxu0
      %v7472 = vadd.f32 0.0, %v7471
      %v7473 = vpop.f32.mrf.mxu0
      %v7474 = vadd.f32 0.0, %v7473
      %v7475 = vpop.f32.mrf.mxu0
      %v7476 = vadd.f32 0.0, %v7475
      %7477 = vmatprep.mubr.bf16.mxu0 0
      %7478 = vmatmul.mubr.bf16.gmra.mxu0 %v7063
      %v7479 = vpop.f32.mrf.mxu0
      %v7480 = vadd.f32 0.0, %v7479
      %v7481 = vpop.f32.mrf.mxu0
      %v7482 = vadd.f32 0.0, %v7481
      %v7483 = vpop.f32.mrf.mxu0
      %v7484 = vadd.f32 0.0, %v7483
      %v7485 = vpop.f32.mrf.mxu0
      %v7486 = vadd.f32 0.0, %v7485
      %7487 = vmatprep.mubr.bf16.mxu0 0
      %7488 = vmatmul.mubr.bf16.gmra.mxu0 %v7064
      %v7489 = vpop.f32.mrf.mxu0
      %v7490 = vadd.f32 0.0, %v7489
      %v7491 = vpop.f32.mrf.mxu0
      %v7492 = vadd.f32 0.0, %v7491
      %v7493 = vpop.f32.mrf.mxu0
      %v7494 = vadd.f32 0.0, %v7493
      %v7495 = vpop.f32.mrf.mxu0
      %v7496 = vadd.f32 0.0, %v7495
      %7497 = vmatprep.mubr.bf16.mxu0 0
      %7498 = vmatmul.mubr.bf16.gmra.mxu0 %v7065
      %v7499 = vpop.f32.mrf.mxu0
      %v7500 = vadd.f32 0.0, %v7499
      %v7501 = vpop.f32.mrf.mxu0
      %v7502 = vadd.f32 0.0, %v7501
      %v7503 = vpop.f32.mrf.mxu0
      %v7504 = vadd.f32 0.0, %v7503
      %v7505 = vpop.f32.mrf.mxu0
      %v7506 = vadd.f32 0.0, %v7505
      %7507 = vmatprep.mubr.bf16.mxu0 0
      %7508 = vmatmul.mubr.bf16.gmra.mxu0 %v7066
      %v7509 = vpop.f32.mrf.mxu0
      %v7510 = vadd.f32 0.0, %v7509
      %v7511 = vpop.f32.mrf.mxu0
      %v7512 = vadd.f32 0.0, %v7511
      %v7513 = vpop.f32.mrf.mxu0
      %v7514 = vadd.f32 0.0, %v7513
      %v7515 = vpop.f32.mrf.mxu0
      %v7516 = vadd.f32 0.0, %v7515
      %7517 = vmatprep.mubr.bf16.mxu0 0
      %7518 = vmatmul.mubr.bf16.gmra.mxu0 %v7067
      %v7519 = vpop.f32.mrf.mxu0
      %v7520 = vadd.f32 0.0, %v7519
      %v7521 = vpop.f32.mrf.mxu0
      %v7522 = vadd.f32 0.0, %v7521
      %v7523 = vpop.f32.mrf.mxu0
      %v7524 = vadd.f32 0.0, %v7523
      %v7525 = vpop.f32.mrf.mxu0
      %v7526 = vadd.f32 0.0, %v7525
      %7527 = vdwg.mxu0
      %7528 = vset.pattern.permute.xlu0 13
      %7529 = vperm.xlu0 %7528, %v625
      %v7530 = vpop.permute.xlu0 %7529
      %7532 = vset.pattern.permute.xlu0 13
      %7533 = vperm.xlu0 %7532, %v626
      %v7534 = vpop.permute.xlu0 %7533
      %7536 = vset.pattern.permute.xlu0 13
      %7537 = vperm.xlu0 %7536, %v627
      %v7538 = vpop.permute.xlu0 %7537
      %7540 = vset.pattern.permute.xlu0 13
      %7541 = vperm.xlu0 %7540, %v628
      %v7542 = vpop.permute.xlu0 %7541
      %7544 = vset.pattern.permute.xlu0 13
      %7545 = vperm.xlu0 %7544, %v629
      %v7546 = vpop.permute.xlu0 %7545
      %7548 = vset.pattern.permute.xlu0 13
      %7549 = vperm.xlu0 %7548, %v630
      %v7550 = vpop.permute.xlu0 %7549
      %7552 = vset.pattern.permute.xlu0 13
      %7553 = vperm.xlu0 %7552, %v631
      %v7554 = vpop.permute.xlu0 %7553
      %7556 = vset.pattern.permute.xlu0 13
      %7557 = vperm.xlu0 %7556, %v632
      %v7558 = vpop.permute.xlu0 %7557
      %7560 = vset.pattern.permute.xlu0 13
      %7561 = vperm.xlu0 %7560, %v633
      %v7562 = vpop.permute.xlu0 %7561
      %7564 = vset.pattern.permute.xlu0 13
      %7565 = vperm.xlu0 %7564, %v634
      %v7566 = vpop.permute.xlu0 %7565
      %7568 = vset.pattern.permute.xlu0 13
      %7569 = vperm.xlu0 %7568, %v635
      %v7570 = vpop.permute.xlu0 %7569
      %7572 = vset.pattern.permute.xlu0 13
      %7573 = vperm.xlu0 %7572, %v636
      %v7574 = vpop.permute.xlu0 %7573
      %7576 = vset.pattern.permute.xlu0 13
      %7577 = vperm.xlu0 %7576, %v637
      %v7578 = vpop.permute.xlu0 %7577
      %7580 = vset.pattern.permute.xlu0 13
      %7581 = vperm.xlu0 %7580, %v638
      %v7582 = vpop.permute.xlu0 %7581
      %7584 = vset.pattern.permute.xlu0 13
      %7585 = vperm.xlu0 %7584, %v639
      %v7586 = vpop.permute.xlu0 %7585
      %7588 = vset.pattern.permute.xlu0 13
      %7589 = vperm.xlu0 %7588, %v640
      %v7590 = vpop.permute.xlu0 %7589
      %v7592 = vmul.f32 %v7111, %v7530
      %v7593 = vmul.f32 %v7113, %v7530
      %v7594 = vmul.f32 %v7224, %v7530
      %v7595 = vmul.f32 %v7226, %v7530
      %v7596 = vmul.f32 %v7337, %v7530
      %v7597 = vmul.f32 %v7339, %v7530
      %v7598 = vmul.f32 %v7450, %v7530
      %v7599 = vmul.f32 %v7452, %v7530
      %v7600 = vmul.f32 %v7115, %v7534
      %v7601 = vmul.f32 %v7117, %v7534
      %v7602 = vmul.f32 %v7228, %v7534
      %v7603 = vmul.f32 %v7230, %v7534
      %v7604 = vmul.f32 %v7341, %v7534
      %v7605 = vmul.f32 %v7343, %v7534
      %v7606 = vmul.f32 %v7454, %v7534
      %v7607 = vmul.f32 %v7456, %v7534
      %v7608 = vmul.f32 %v7121, %v7538
      %v7609 = vmul.f32 %v7123, %v7538
      %v7610 = vmul.f32 %v7234, %v7538
      %v7611 = vmul.f32 %v7236, %v7538
      %v7612 = vmul.f32 %v7347, %v7538
      %v7613 = vmul.f32 %v7349, %v7538
      %v7614 = vmul.f32 %v7460, %v7538
      %v7615 = vmul.f32 %v7462, %v7538
      %v7616 = vmul.f32 %v7125, %v7542
      %v7617 = vmul.f32 %v7127, %v7542
      %v7618 = vmul.f32 %v7238, %v7542
      %v7619 = vmul.f32 %v7240, %v7542
      %v7620 = vmul.f32 %v7351, %v7542
      %v7621 = vmul.f32 %v7353, %v7542
      %v7622 = vmul.f32 %v7464, %v7542
      %v7623 = vmul.f32 %v7466, %v7542
      %v7624 = vmul.f32 %v7131, %v7546
      %v7625 = vmul.f32 %v7133, %v7546
      %v7626 = vmul.f32 %v7244, %v7546
      %v7627 = vmul.f32 %v7246, %v7546
      %v7628 = vmul.f32 %v7357, %v7546
      %v7629 = vmul.f32 %v7359, %v7546
      %v7630 = vmul.f32 %v7470, %v7546
      %v7631 = vmul.f32 %v7472, %v7546
      %v7632 = vmul.f32 %v7135, %v7550
      %v7633 = vmul.f32 %v7137, %v7550
      %v7634 = vmul.f32 %v7248, %v7550
      %v7635 = vmul.f32 %v7250, %v7550
      %v7636 = vmul.f32 %v7361, %v7550
      %v7637 = vmul.f32 %v7363, %v7550
      %v7638 = vmul.f32 %v7474, %v7550
      %v7639 = vmul.f32 %v7476, %v7550
      %v7640 = vmul.f32 %v7141, %v7554
      %v7641 = vmul.f32 %v7143, %v7554
      %v7642 = vmul.f32 %v7254, %v7554
      %v7643 = vmul.f32 %v7256, %v7554
      %v7644 = vmul.f32 %v7367, %v7554
      %v7645 = vmul.f32 %v7369, %v7554
      %v7646 = vmul.f32 %v7480, %v7554
      %v7647 = vmul.f32 %v7482, %v7554
      %v7648 = vmul.f32 %v7145, %v7558
      %v7649 = vmul.f32 %v7147, %v7558
      %v7650 = vmul.f32 %v7258, %v7558
      %v7651 = vmul.f32 %v7260, %v7558
      %v7652 = vmul.f32 %v7371, %v7558
      %v7653 = vmul.f32 %v7373, %v7558
      %v7654 = vmul.f32 %v7484, %v7558
      %v7655 = vmul.f32 %v7486, %v7558
      %v7656 = vmul.f32 %v7151, %v7562
      %v7657 = vmul.f32 %v7153, %v7562
      %v7658 = vmul.f32 %v7264, %v7562
      %v7659 = vmul.f32 %v7266, %v7562
      %v7660 = vmul.f32 %v7377, %v7562
      %v7661 = vmul.f32 %v7379, %v7562
      %v7662 = vmul.f32 %v7490, %v7562
      %v7663 = vmul.f32 %v7492, %v7562
      %v7664 = vmul.f32 %v7155, %v7566
      %v7665 = vmul.f32 %v7157, %v7566
      %v7666 = vmul.f32 %v7268, %v7566
      %v7667 = vmul.f32 %v7270, %v7566
      %v7668 = vmul.f32 %v7381, %v7566
      %v7669 = vmul.f32 %v7383, %v7566
      %v7670 = vmul.f32 %v7494, %v7566
      %v7671 = vmul.f32 %v7496, %v7566
      %v7672 = vmul.f32 %v7161, %v7570
      %v7673 = vmul.f32 %v7163, %v7570
      %v7674 = vmul.f32 %v7274, %v7570
      %v7675 = vmul.f32 %v7276, %v7570
      %v7676 = vmul.f32 %v7387, %v7570
      %v7677 = vmul.f32 %v7389, %v7570
      %v7678 = vmul.f32 %v7500, %v7570
      %v7679 = vmul.f32 %v7502, %v7570
      %v7680 = vmul.f32 %v7165, %v7574
      %v7681 = vmul.f32 %v7167, %v7574
      %v7682 = vmul.f32 %v7278, %v7574
      %v7683 = vmul.f32 %v7280, %v7574
      %v7684 = vmul.f32 %v7391, %v7574
      %v7685 = vmul.f32 %v7393, %v7574
      %v7686 = vmul.f32 %v7504, %v7574
      %v7687 = vmul.f32 %v7506, %v7574
      %v7688 = vmul.f32 %v7171, %v7578
      %v7689 = vmul.f32 %v7173, %v7578
      %v7690 = vmul.f32 %v7284, %v7578
      %v7691 = vmul.f32 %v7286, %v7578
      %v7692 = vmul.f32 %v7397, %v7578
      %v7693 = vmul.f32 %v7399, %v7578
      %v7694 = vmul.f32 %v7510, %v7578
      %v7695 = vmul.f32 %v7512, %v7578
      %v7696 = vmul.f32 %v7175, %v7582
      %v7697 = vmul.f32 %v7177, %v7582
      %v7698 = vmul.f32 %v7288, %v7582
      %v7699 = vmul.f32 %v7290, %v7582
      %v7700 = vmul.f32 %v7401, %v7582
      %v7701 = vmul.f32 %v7403, %v7582
      %v7702 = vmul.f32 %v7514, %v7582
      %v7703 = vmul.f32 %v7516, %v7582
      %v7704 = vmul.f32 %v7181, %v7586
      %v7705 = vmul.f32 %v7183, %v7586
      %v7706 = vmul.f32 %v7294, %v7586
      %v7707 = vmul.f32 %v7296, %v7586
      %v7708 = vmul.f32 %v7407, %v7586
      %v7709 = vmul.f32 %v7409, %v7586
      %v7710 = vmul.f32 %v7520, %v7586
      %v7711 = vmul.f32 %v7522, %v7586
      %v7712 = vmul.f32 %v7185, %v7590
      %v7713 = vmul.f32 %v7187, %v7590
      %v7714 = vmul.f32 %v7298, %v7590
      %v7715 = vmul.f32 %v7300, %v7590
      %v7716 = vmul.f32 %v7411, %v7590
      %v7717 = vmul.f32 %v7413, %v7590
      %v7718 = vmul.f32 %v7524, %v7590
      %v7719 = vmul.f32 %v7526, %v7590
      %v7720 = vld [vmem:[%s599] sm:$0xff]
      %v7722 = vlaneseq
      %v7723 = vshrl.u32 %v7722, 7
      %v7724 = vsub.s32 0, %v7723
      %v7725 = vrot.slane %v7720, %v7724
      %v7726 = vlaneseq
      %v7727 = vshrl.u32 %v7726, 7
      %v7728 = vsub.s32 1, %v7727
      %v7729 = vrot.slane %v7720, %v7728
      %v7730 = vlaneseq
      %v7731 = vshrl.u32 %v7730, 7
      %v7732 = vsub.s32 2, %v7731
      %v7733 = vrot.slane %v7720, %v7732
      %v7734 = vlaneseq
      %v7735 = vshrl.u32 %v7734, 7
      %v7736 = vsub.s32 3, %v7735
      %v7737 = vrot.slane %v7720, %v7736
      %v7738 = vlaneseq
      %v7739 = vshrl.u32 %v7738, 7
      %v7740 = vsub.s32 4, %v7739
      %v7741 = vrot.slane %v7720, %v7740
      %v7742 = vlaneseq
      %v7743 = vshrl.u32 %v7742, 7
      %v7744 = vsub.s32 5, %v7743
      %v7745 = vrot.slane %v7720, %v7744
      %v7746 = vlaneseq
      %v7747 = vshrl.u32 %v7746, 7
      %v7748 = vsub.s32 6, %v7747
      %v7749 = vrot.slane %v7720, %v7748
      %v7750 = vlaneseq
      %v7751 = vshrl.u32 %v7750, 7
      %v7752 = vsub.s32 7, %v7751
      %v7753 = vrot.slane %v7720, %v7752
      %v7762 = vadd.f32 %v7592, %v7725
      %v7763 = vadd.f32 %v7593, %v7729
      %v7764 = vadd.f32 %v7594, %v7733
      %v7765 = vadd.f32 %v7595, %v7737
      %v7766 = vadd.f32 %v7596, %v7741
      %v7767 = vadd.f32 %v7597, %v7745
      %v7768 = vadd.f32 %v7598, %v7749
      %v7769 = vadd.f32 %v7599, %v7753
      %v7770 = vadd.f32 %v7600, %v7725
      %v7771 = vadd.f32 %v7601, %v7729
      %v7772 = vadd.f32 %v7602, %v7733
      %v7773 = vadd.f32 %v7603, %v7737
      %v7774 = vadd.f32 %v7604, %v7741
      %v7775 = vadd.f32 %v7605, %v7745
      %v7776 = vadd.f32 %v7606, %v7749
      %v7777 = vadd.f32 %v7607, %v7753
      %v7778 = vadd.f32 %v7608, %v7725
      %v7779 = vadd.f32 %v7609, %v7729
      %v7780 = vadd.f32 %v7610, %v7733
      %v7781 = vadd.f32 %v7611, %v7737
      %v7782 = vadd.f32 %v7612, %v7741
      %v7783 = vadd.f32 %v7613, %v7745
      %v7784 = vadd.f32 %v7614, %v7749
      %v7785 = vadd.f32 %v7615, %v7753
      %v7786 = vadd.f32 %v7616, %v7725
      %v7787 = vadd.f32 %v7617, %v7729
      %v7788 = vadd.f32 %v7618, %v7733
      %v7789 = vadd.f32 %v7619, %v7737
      %v7790 = vadd.f32 %v7620, %v7741
      %v7791 = vadd.f32 %v7621, %v7745
      %v7792 = vadd.f32 %v7622, %v7749
      %v7793 = vadd.f32 %v7623, %v7753
      %v7794 = vadd.f32 %v7624, %v7725
      %v7795 = vadd.f32 %v7625, %v7729
      %v7796 = vadd.f32 %v7626, %v7733
      %v7797 = vadd.f32 %v7627, %v7737
      %v7798 = vadd.f32 %v7628, %v7741
      %v7799 = vadd.f32 %v7629, %v7745
      %v7800 = vadd.f32 %v7630, %v7749
      %v7801 = vadd.f32 %v7631, %v7753
      %v7802 = vadd.f32 %v7632, %v7725
      %v7803 = vadd.f32 %v7633, %v7729
      %v7804 = vadd.f32 %v7634, %v7733
      %v7805 = vadd.f32 %v7635, %v7737
      %v7806 = vadd.f32 %v7636, %v7741
      %v7807 = vadd.f32 %v7637, %v7745
      %v7808 = vadd.f32 %v7638, %v7749
      %v7809 = vadd.f32 %v7639, %v7753
      %v7810 = vadd.f32 %v7640, %v7725
      %v7811 = vadd.f32 %v7641, %v7729
      %v7812 = vadd.f32 %v7642, %v7733
      %v7813 = vadd.f32 %v7643, %v7737
      %v7814 = vadd.f32 %v7644, %v7741
      %v7815 = vadd.f32 %v7645, %v7745
      %v7816 = vadd.f32 %v7646, %v7749
      %v7817 = vadd.f32 %v7647, %v7753
      %v7818 = vadd.f32 %v7648, %v7725
      %v7819 = vadd.f32 %v7649, %v7729
      %v7820 = vadd.f32 %v7650, %v7733
      %v7821 = vadd.f32 %v7651, %v7737
      %v7822 = vadd.f32 %v7652, %v7741
      %v7823 = vadd.f32 %v7653, %v7745
      %v7824 = vadd.f32 %v7654, %v7749
      %v7825 = vadd.f32 %v7655, %v7753
      %v7826 = vadd.f32 %v7656, %v7725
      %v7827 = vadd.f32 %v7657, %v7729
      %v7828 = vadd.f32 %v7658, %v7733
      %v7829 = vadd.f32 %v7659, %v7737
      %v7830 = vadd.f32 %v7660, %v7741
      %v7831 = vadd.f32 %v7661, %v7745
      %v7832 = vadd.f32 %v7662, %v7749
      %v7833 = vadd.f32 %v7663, %v7753
      %v7834 = vadd.f32 %v7664, %v7725
      %v7835 = vadd.f32 %v7665, %v7729
      %v7836 = vadd.f32 %v7666, %v7733
      %v7837 = vadd.f32 %v7667, %v7737
      %v7838 = vadd.f32 %v7668, %v7741
      %v7839 = vadd.f32 %v7669, %v7745
      %v7840 = vadd.f32 %v7670, %v7749
      %v7841 = vadd.f32 %v7671, %v7753
      %v7842 = vadd.f32 %v7672, %v7725
      %v7843 = vadd.f32 %v7673, %v7729
      %v7844 = vadd.f32 %v7674, %v7733
      %v7845 = vadd.f32 %v7675, %v7737
      %v7846 = vadd.f32 %v7676, %v7741
      %v7847 = vadd.f32 %v7677, %v7745
      %v7848 = vadd.f32 %v7678, %v7749
      %v7849 = vadd.f32 %v7679, %v7753
      %v7850 = vadd.f32 %v7680, %v7725
      %v7851 = vadd.f32 %v7681, %v7729
      %v7852 = vadd.f32 %v7682, %v7733
      %v7853 = vadd.f32 %v7683, %v7737
      %v7854 = vadd.f32 %v7684, %v7741
      %v7855 = vadd.f32 %v7685, %v7745
      %v7856 = vadd.f32 %v7686, %v7749
      %v7857 = vadd.f32 %v7687, %v7753
      %v7858 = vadd.f32 %v7688, %v7725
      %v7859 = vadd.f32 %v7689, %v7729
      %v7860 = vadd.f32 %v7690, %v7733
      %v7861 = vadd.f32 %v7691, %v7737
      %v7862 = vadd.f32 %v7692, %v7741
      %v7863 = vadd.f32 %v7693, %v7745
      %v7864 = vadd.f32 %v7694, %v7749
      %v7865 = vadd.f32 %v7695, %v7753
      %v7866 = vadd.f32 %v7696, %v7725
      %v7867 = vadd.f32 %v7697, %v7729
      %v7868 = vadd.f32 %v7698, %v7733
      %v7869 = vadd.f32 %v7699, %v7737
      %v7870 = vadd.f32 %v7700, %v7741
      %v7871 = vadd.f32 %v7701, %v7745
      %v7872 = vadd.f32 %v7702, %v7749
      %v7873 = vadd.f32 %v7703, %v7753
      %v7874 = vadd.f32 %v7704, %v7725
      %v7875 = vadd.f32 %v7705, %v7729
      %v7876 = vadd.f32 %v7706, %v7733
      %v7877 = vadd.f32 %v7707, %v7737
      %v7878 = vadd.f32 %v7708, %v7741
      %v7879 = vadd.f32 %v7709, %v7745
      %v7880 = vadd.f32 %v7710, %v7749
      %v7881 = vadd.f32 %v7711, %v7753
      %v7882 = vadd.f32 %v7712, %v7725
      %v7883 = vadd.f32 %v7713, %v7729
      %v7884 = vadd.f32 %v7714, %v7733
      %v7885 = vadd.f32 %v7715, %v7737
      %v7886 = vadd.f32 %v7716, %v7741
      %v7887 = vadd.f32 %v7717, %v7745
      %v7888 = vadd.f32 %v7718, %v7749
      %v7889 = vadd.f32 %v7719, %v7753
      %7890 = vset.pattern.permute.xlu0 6
      %7891 = vperm.xlu0 %7890, %v659
      %v7892 = vpop.permute.xlu0 %7891
      %7894 = vset.pattern.permute.xlu0 6
      %7895 = vperm.xlu0 %7894, %v660
      %v7896 = vpop.permute.xlu0 %7895
      %7898 = vset.pattern.permute.xlu0 6
      %7899 = vperm.xlu0 %7898, %v661
      %v7900 = vpop.permute.xlu0 %7899
      %7902 = vset.pattern.permute.xlu0 6
      %7903 = vperm.xlu0 %7902, %v662
      %v7904 = vpop.permute.xlu0 %7903
      %7906 = vset.pattern.permute.xlu0 6
      %7907 = vperm.xlu0 %7906, %v663
      %v7908 = vpop.permute.xlu0 %7907
      %7910 = vset.pattern.permute.xlu0 6
      %7911 = vperm.xlu0 %7910, %v664
      %v7912 = vpop.permute.xlu0 %7911
      %7914 = vset.pattern.permute.xlu0 6
      %7915 = vperm.xlu0 %7914, %v665
      %v7916 = vpop.permute.xlu0 %7915
      %7918 = vset.pattern.permute.xlu0 6
      %7919 = vperm.xlu0 %7918, %v666
      %v7920 = vpop.permute.xlu0 %7919
      %7922 = vset.pattern.permute.xlu0 6
      %7923 = vperm.xlu0 %7922, %v667
      %v7924 = vpop.permute.xlu0 %7923
      %7926 = vset.pattern.permute.xlu0 6
      %7927 = vperm.xlu0 %7926, %v668
      %v7928 = vpop.permute.xlu0 %7927
      %7930 = vset.pattern.permute.xlu0 6
      %7931 = vperm.xlu0 %7930, %v669
      %v7932 = vpop.permute.xlu0 %7931
      %7934 = vset.pattern.permute.xlu0 6
      %7935 = vperm.xlu0 %7934, %v670
      %v7936 = vpop.permute.xlu0 %7935
      %7938 = vset.pattern.permute.xlu0 6
      %7939 = vperm.xlu0 %7938, %v671
      %v7940 = vpop.permute.xlu0 %7939
      %7942 = vset.pattern.permute.xlu0 6
      %7943 = vperm.xlu0 %7942, %v672
      %v7944 = vpop.permute.xlu0 %7943
      %7946 = vset.pattern.permute.xlu0 6
      %7947 = vperm.xlu0 %7946, %v673
      %v7948 = vpop.permute.xlu0 %7947
      %7950 = vset.pattern.permute.xlu0 6
      %7951 = vperm.xlu0 %7950, %v674
      %v7952 = vpop.permute.xlu0 %7951
      %v7954 = vadd.f32 %v7762, %v7892
      %v7955 = vadd.f32 %v7763, %v7892
      %v7956 = vadd.f32 %v7764, %v7892
      %v7957 = vadd.f32 %v7765, %v7892
      %v7958 = vadd.f32 %v7766, %v7892
      %v7959 = vadd.f32 %v7767, %v7892
      %v7960 = vadd.f32 %v7768, %v7892
      %v7961 = vadd.f32 %v7769, %v7892
      %v7962 = vadd.f32 %v7770, %v7896
      %v7963 = vadd.f32 %v7771, %v7896
      %v7964 = vadd.f32 %v7772, %v7896
      %v7965 = vadd.f32 %v7773, %v7896
      %v7966 = vadd.f32 %v7774, %v7896
      %v7967 = vadd.f32 %v7775, %v7896
      %v7968 = vadd.f32 %v7776, %v7896
      %v7969 = vadd.f32 %v7777, %v7896
      %v7970 = vadd.f32 %v7778, %v7900
      %v7971 = vadd.f32 %v7779, %v7900
      %v7972 = vadd.f32 %v7780, %v7900
      %v7973 = vadd.f32 %v7781, %v7900
      %v7974 = vadd.f32 %v7782, %v7900
      %v7975 = vadd.f32 %v7783, %v7900
      %v7976 = vadd.f32 %v7784, %v7900
      %v7977 = vadd.f32 %v7785, %v7900
      %v7978 = vadd.f32 %v7786, %v7904
      %v7979 = vadd.f32 %v7787, %v7904
      %v7980 = vadd.f32 %v7788, %v7904
      %v7981 = vadd.f32 %v7789, %v7904
      %v7982 = vadd.f32 %v7790, %v7904
      %v7983 = vadd.f32 %v7791, %v7904
      %v7984 = vadd.f32 %v7792, %v7904
      %v7985 = vadd.f32 %v7793, %v7904
      %v7986 = vadd.f32 %v7794, %v7908
      %v7987 = vadd.f32 %v7795, %v7908
      %v7988 = vadd.f32 %v7796, %v7908
      %v7989 = vadd.f32 %v7797, %v7908
      %v7990 = vadd.f32 %v7798, %v7908
      %v7991 = vadd.f32 %v7799, %v7908
      %v7992 = vadd.f32 %v7800, %v7908
      %v7993 = vadd.f32 %v7801, %v7908
      %v7994 = vadd.f32 %v7802, %v7912
      %v7995 = vadd.f32 %v7803, %v7912
      %v7996 = vadd.f32 %v7804, %v7912
      %v7997 = vadd.f32 %v7805, %v7912
      %v7998 = vadd.f32 %v7806, %v7912
      %v7999 = vadd.f32 %v7807, %v7912
      %v8000 = vadd.f32 %v7808, %v7912
      %v8001 = vadd.f32 %v7809, %v7912
      %v8002 = vadd.f32 %v7810, %v7916
      %v8003 = vadd.f32 %v7811, %v7916
      %v8004 = vadd.f32 %v7812, %v7916
      %v8005 = vadd.f32 %v7813, %v7916
      %v8006 = vadd.f32 %v7814, %v7916
      %v8007 = vadd.f32 %v7815, %v7916
      %v8008 = vadd.f32 %v7816, %v7916
      %v8009 = vadd.f32 %v7817, %v7916
      %v8010 = vadd.f32 %v7818, %v7920
      %v8011 = vadd.f32 %v7819, %v7920
      %v8012 = vadd.f32 %v7820, %v7920
      %v8013 = vadd.f32 %v7821, %v7920
      %v8014 = vadd.f32 %v7822, %v7920
      %v8015 = vadd.f32 %v7823, %v7920
      %v8016 = vadd.f32 %v7824, %v7920
      %v8017 = vadd.f32 %v7825, %v7920
      %v8018 = vadd.f32 %v7826, %v7924
      %v8019 = vadd.f32 %v7827, %v7924
      %v8020 = vadd.f32 %v7828, %v7924
      %v8021 = vadd.f32 %v7829, %v7924
      %v8022 = vadd.f32 %v7830, %v7924
      %v8023 = vadd.f32 %v7831, %v7924
      %v8024 = vadd.f32 %v7832, %v7924
      %v8025 = vadd.f32 %v7833, %v7924
      %v8026 = vadd.f32 %v7834, %v7928
      %v8027 = vadd.f32 %v7835, %v7928
      %v8028 = vadd.f32 %v7836, %v7928
      %v8029 = vadd.f32 %v7837, %v7928
      %v8030 = vadd.f32 %v7838, %v7928
      %v8031 = vadd.f32 %v7839, %v7928
      %v8032 = vadd.f32 %v7840, %v7928
      %v8033 = vadd.f32 %v7841, %v7928
      %v8034 = vadd.f32 %v7842, %v7932
      %v8035 = vadd.f32 %v7843, %v7932
      %v8036 = vadd.f32 %v7844, %v7932
      %v8037 = vadd.f32 %v7845, %v7932
      %v8038 = vadd.f32 %v7846, %v7932
      %v8039 = vadd.f32 %v7847, %v7932
      %v8040 = vadd.f32 %v7848, %v7932
      %v8041 = vadd.f32 %v7849, %v7932
      %v8042 = vadd.f32 %v7850, %v7936
      %v8043 = vadd.f32 %v7851, %v7936
      %v8044 = vadd.f32 %v7852, %v7936
      %v8045 = vadd.f32 %v7853, %v7936
      %v8046 = vadd.f32 %v7854, %v7936
      %v8047 = vadd.f32 %v7855, %v7936
      %v8048 = vadd.f32 %v7856, %v7936
      %v8049 = vadd.f32 %v7857, %v7936
      %v8050 = vadd.f32 %v7858, %v7940
      %v8051 = vadd.f32 %v7859, %v7940
      %v8052 = vadd.f32 %v7860, %v7940
      %v8053 = vadd.f32 %v7861, %v7940
      %v8054 = vadd.f32 %v7862, %v7940
      %v8055 = vadd.f32 %v7863, %v7940
      %v8056 = vadd.f32 %v7864, %v7940
      %v8057 = vadd.f32 %v7865, %v7940
      %v8058 = vadd.f32 %v7866, %v7944
      %v8059 = vadd.f32 %v7867, %v7944
      %v8060 = vadd.f32 %v7868, %v7944
      %v8061 = vadd.f32 %v7869, %v7944
      %v8062 = vadd.f32 %v7870, %v7944
      %v8063 = vadd.f32 %v7871, %v7944
      %v8064 = vadd.f32 %v7872, %v7944
      %v8065 = vadd.f32 %v7873, %v7944
      %v8066 = vadd.f32 %v7874, %v7948
      %v8067 = vadd.f32 %v7875, %v7948
      %v8068 = vadd.f32 %v7876, %v7948
      %v8069 = vadd.f32 %v7877, %v7948
      %v8070 = vadd.f32 %v7878, %v7948
      %v8071 = vadd.f32 %v7879, %v7948
      %v8072 = vadd.f32 %v7880, %v7948
      %v8073 = vadd.f32 %v7881, %v7948
      %v8074 = vadd.f32 %v7882, %v7952
      %v8075 = vadd.f32 %v7883, %v7952
      %v8076 = vadd.f32 %v7884, %v7952
      %v8077 = vadd.f32 %v7885, %v7952
      %v8078 = vadd.f32 %v7886, %v7952
      %v8079 = vadd.f32 %v7887, %v7952
      %v8080 = vadd.f32 %v7888, %v7952
      %v8081 = vadd.f32 %v7889, %v7952
      %vm8082 = vcmp.ge.f32.partialorder %v7954, 0.0
      %vm8083 = vcmp.ge.f32.partialorder %v7955, 0.0
      %vm8084 = vcmp.ge.f32.partialorder %v7956, 0.0
      %vm8085 = vcmp.ge.f32.partialorder %v7957, 0.0
      %vm8086 = vcmp.ge.f32.partialorder %v7958, 0.0
      %vm8087 = vcmp.ge.f32.partialorder %v7959, 0.0
      %vm8088 = vcmp.ge.f32.partialorder %v7960, 0.0
      %vm8089 = vcmp.ge.f32.partialorder %v7961, 0.0
      %vm8090 = vcmp.ge.f32.partialorder %v7962, 0.0
      %vm8091 = vcmp.ge.f32.partialorder %v7963, 0.0
      %vm8092 = vcmp.ge.f32.partialorder %v7964, 0.0
      %vm8093 = vcmp.ge.f32.partialorder %v7965, 0.0
      %vm8094 = vcmp.ge.f32.partialorder %v7966, 0.0
      %vm8095 = vcmp.ge.f32.partialorder %v7967, 0.0
      %vm8096 = vcmp.ge.f32.partialorder %v7968, 0.0
      %vm8097 = vcmp.ge.f32.partialorder %v7969, 0.0
      %vm8098 = vcmp.ge.f32.partialorder %v7970, 0.0
      %vm8099 = vcmp.ge.f32.partialorder %v7971, 0.0
      %vm8100 = vcmp.ge.f32.partialorder %v7972, 0.0
      %vm8101 = vcmp.ge.f32.partialorder %v7973, 0.0
      %vm8102 = vcmp.ge.f32.partialorder %v7974, 0.0
      %vm8103 = vcmp.ge.f32.partialorder %v7975, 0.0
      %vm8104 = vcmp.ge.f32.partialorder %v7976, 0.0
      %vm8105 = vcmp.ge.f32.partialorder %v7977, 0.0
      %vm8106 = vcmp.ge.f32.partialorder %v7978, 0.0
      %vm8107 = vcmp.ge.f32.partialorder %v7979, 0.0
      %vm8108 = vcmp.ge.f32.partialorder %v7980, 0.0
      %vm8109 = vcmp.ge.f32.partialorder %v7981, 0.0
      %vm8110 = vcmp.ge.f32.partialorder %v7982, 0.0
      %vm8111 = vcmp.ge.f32.partialorder %v7983, 0.0
      %vm8112 = vcmp.ge.f32.partialorder %v7984, 0.0
      %vm8113 = vcmp.ge.f32.partialorder %v7985, 0.0
      %vm8114 = vcmp.ge.f32.partialorder %v7986, 0.0
      %vm8115 = vcmp.ge.f32.partialorder %v7987, 0.0
      %vm8116 = vcmp.ge.f32.partialorder %v7988, 0.0
      %vm8117 = vcmp.ge.f32.partialorder %v7989, 0.0
      %vm8118 = vcmp.ge.f32.partialorder %v7990, 0.0
      %vm8119 = vcmp.ge.f32.partialorder %v7991, 0.0
      %vm8120 = vcmp.ge.f32.partialorder %v7992, 0.0
      %vm8121 = vcmp.ge.f32.partialorder %v7993, 0.0
      %vm8122 = vcmp.ge.f32.partialorder %v7994, 0.0
      %vm8123 = vcmp.ge.f32.partialorder %v7995, 0.0
      %vm8124 = vcmp.ge.f32.partialorder %v7996, 0.0
      %vm8125 = vcmp.ge.f32.partialorder %v7997, 0.0
      %vm8126 = vcmp.ge.f32.partialorder %v7998, 0.0
      %vm8127 = vcmp.ge.f32.partialorder %v7999, 0.0
      %vm8128 = vcmp.ge.f32.partialorder %v8000, 0.0
      %vm8129 = vcmp.ge.f32.partialorder %v8001, 0.0
      %vm8130 = vcmp.ge.f32.partialorder %v8002, 0.0
      %vm8131 = vcmp.ge.f32.partialorder %v8003, 0.0
      %vm8132 = vcmp.ge.f32.partialorder %v8004, 0.0
      %vm8133 = vcmp.ge.f32.partialorder %v8005, 0.0
      %vm8134 = vcmp.ge.f32.partialorder %v8006, 0.0
      %vm8135 = vcmp.ge.f32.partialorder %v8007, 0.0
      %vm8136 = vcmp.ge.f32.partialorder %v8008, 0.0
      %vm8137 = vcmp.ge.f32.partialorder %v8009, 0.0
      %vm8138 = vcmp.ge.f32.partialorder %v8010, 0.0
      %vm8139 = vcmp.ge.f32.partialorder %v8011, 0.0
      %vm8140 = vcmp.ge.f32.partialorder %v8012, 0.0
      %vm8141 = vcmp.ge.f32.partialorder %v8013, 0.0
      %vm8142 = vcmp.ge.f32.partialorder %v8014, 0.0
      %vm8143 = vcmp.ge.f32.partialorder %v8015, 0.0
      %vm8144 = vcmp.ge.f32.partialorder %v8016, 0.0
      %vm8145 = vcmp.ge.f32.partialorder %v8017, 0.0
      %vm8146 = vcmp.ge.f32.partialorder %v8018, 0.0
      %vm8147 = vcmp.ge.f32.partialorder %v8019, 0.0
      %vm8148 = vcmp.ge.f32.partialorder %v8020, 0.0
      %vm8149 = vcmp.ge.f32.partialorder %v8021, 0.0
      %vm8150 = vcmp.ge.f32.partialorder %v8022, 0.0
      %vm8151 = vcmp.ge.f32.partialorder %v8023, 0.0
      %vm8152 = vcmp.ge.f32.partialorder %v8024, 0.0
      %vm8153 = vcmp.ge.f32.partialorder %v8025, 0.0
      %vm8154 = vcmp.ge.f32.partialorder %v8026, 0.0
      %vm8155 = vcmp.ge.f32.partialorder %v8027, 0.0
      %vm8156 = vcmp.ge.f32.partialorder %v8028, 0.0
      %vm8157 = vcmp.ge.f32.partialorder %v8029, 0.0
      %vm8158 = vcmp.ge.f32.partialorder %v8030, 0.0
      %vm8159 = vcmp.ge.f32.partialorder %v8031, 0.0
      %vm8160 = vcmp.ge.f32.partialorder %v8032, 0.0
      %vm8161 = vcmp.ge.f32.partialorder %v8033, 0.0
      %vm8162 = vcmp.ge.f32.partialorder %v8034, 0.0
      %vm8163 = vcmp.ge.f32.partialorder %v8035, 0.0
      %vm8164 = vcmp.ge.f32.partialorder %v8036, 0.0
      %vm8165 = vcmp.ge.f32.partialorder %v8037, 0.0
      %vm8166 = vcmp.ge.f32.partialorder %v8038, 0.0
      %vm8167 = vcmp.ge.f32.partialorder %v8039, 0.0
      %vm8168 = vcmp.ge.f32.partialorder %v8040, 0.0
      %vm8169 = vcmp.ge.f32.partialorder %v8041, 0.0
      %vm8170 = vcmp.ge.f32.partialorder %v8042, 0.0
      %vm8171 = vcmp.ge.f32.partialorder %v8043, 0.0
      %vm8172 = vcmp.ge.f32.partialorder %v8044, 0.0
      %vm8173 = vcmp.ge.f32.partialorder %v8045, 0.0
      %vm8174 = vcmp.ge.f32.partialorder %v8046, 0.0
      %vm8175 = vcmp.ge.f32.partialorder %v8047, 0.0
      %vm8176 = vcmp.ge.f32.partialorder %v8048, 0.0
      %vm8177 = vcmp.ge.f32.partialorder %v8049, 0.0
      %vm8178 = vcmp.ge.f32.partialorder %v8050, 0.0
      %vm8179 = vcmp.ge.f32.partialorder %v8051, 0.0
      %vm8180 = vcmp.ge.f32.partialorder %v8052, 0.0
      %vm8181 = vcmp.ge.f32.partialorder %v8053, 0.0
      %vm8182 = vcmp.ge.f32.partialorder %v8054, 0.0
      %vm8183 = vcmp.ge.f32.partialorder %v8055, 0.0
      %vm8184 = vcmp.ge.f32.partialorder %v8056, 0.0
      %vm8185 = vcmp.ge.f32.partialorder %v8057, 0.0
      %vm8186 = vcmp.ge.f32.partialorder %v8058, 0.0
      %vm8187 = vcmp.ge.f32.partialorder %v8059, 0.0
      %vm8188 = vcmp.ge.f32.partialorder %v8060, 0.0
      %vm8189 = vcmp.ge.f32.partialorder %v8061, 0.0
      %vm8190 = vcmp.ge.f32.partialorder %v8062, 0.0
      %vm8191 = vcmp.ge.f32.partialorder %v8063, 0.0
      %vm8192 = vcmp.ge.f32.partialorder %v8064, 0.0
      %vm8193 = vcmp.ge.f32.partialorder %v8065, 0.0
      %vm8194 = vcmp.ge.f32.partialorder %v8066, 0.0
      %vm8195 = vcmp.ge.f32.partialorder %v8067, 0.0
      %vm8196 = vcmp.ge.f32.partialorder %v8068, 0.0
      %vm8197 = vcmp.ge.f32.partialorder %v8069, 0.0
      %vm8198 = vcmp.ge.f32.partialorder %v8070, 0.0
      %vm8199 = vcmp.ge.f32.partialorder %v8071, 0.0
      %vm8200 = vcmp.ge.f32.partialorder %v8072, 0.0
      %vm8201 = vcmp.ge.f32.partialorder %v8073, 0.0
      %vm8202 = vcmp.ge.f32.partialorder %v8074, 0.0
      %vm8203 = vcmp.ge.f32.partialorder %v8075, 0.0
      %vm8204 = vcmp.ge.f32.partialorder %v8076, 0.0
      %vm8205 = vcmp.ge.f32.partialorder %v8077, 0.0
      %vm8206 = vcmp.ge.f32.partialorder %v8078, 0.0
      %vm8207 = vcmp.ge.f32.partialorder %v8079, 0.0
      %vm8208 = vcmp.ge.f32.partialorder %v8080, 0.0
      %vm8209 = vcmp.ge.f32.partialorder %v8081, 0.0
      %v8210 = vmul.f32 %v7954, 0.2
      %v8211 = vmul.f32 %v7955, 0.2
      %v8212 = vmul.f32 %v7956, 0.2
      %v8213 = vmul.f32 %v7957, 0.2
      %v8214 = vmul.f32 %v7958, 0.2
      %v8215 = vmul.f32 %v7959, 0.2
      %v8216 = vmul.f32 %v7960, 0.2
      %v8217 = vmul.f32 %v7961, 0.2
      %v8218 = vmul.f32 %v7962, 0.2
      %v8219 = vmul.f32 %v7963, 0.2
      %v8220 = vmul.f32 %v7964, 0.2
      %v8221 = vmul.f32 %v7965, 0.2
      %v8222 = vmul.f32 %v7966, 0.2
      %v8223 = vmul.f32 %v7967, 0.2
      %v8224 = vmul.f32 %v7968, 0.2
      %v8225 = vmul.f32 %v7969, 0.2
      %v8226 = vmul.f32 %v7970, 0.2
      %v8227 = vmul.f32 %v7971, 0.2
      %v8228 = vmul.f32 %v7972, 0.2
      %v8229 = vmul.f32 %v7973, 0.2
      %v8230 = vmul.f32 %v7974, 0.2
      %v8231 = vmul.f32 %v7975, 0.2
      %v8232 = vmul.f32 %v7976, 0.2
      %v8233 = vmul.f32 %v7977, 0.2
      %v8234 = vmul.f32 %v7978, 0.2
      %v8235 = vmul.f32 %v7979, 0.2
      %v8236 = vmul.f32 %v7980, 0.2
      %v8237 = vmul.f32 %v7981, 0.2
      %v8238 = vmul.f32 %v7982, 0.2
      %v8239 = vmul.f32 %v7983, 0.2
      %v8240 = vmul.f32 %v7984, 0.2
      %v8241 = vmul.f32 %v7985, 0.2
      %v8242 = vmul.f32 %v7986, 0.2
      %v8243 = vmul.f32 %v7987, 0.2
      %v8244 = vmul.f32 %v7988, 0.2
      %v8245 = vmul.f32 %v7989, 0.2
      %v8246 = vmul.f32 %v7990, 0.2
      %v8247 = vmul.f32 %v7991, 0.2
      %v8248 = vmul.f32 %v7992, 0.2
      %v8249 = vmul.f32 %v7993, 0.2
      %v8250 = vmul.f32 %v7994, 0.2
      %v8251 = vmul.f32 %v7995, 0.2
      %v8252 = vmul.f32 %v7996, 0.2
      %v8253 = vmul.f32 %v7997, 0.2
      %v8254 = vmul.f32 %v7998, 0.2
      %v8255 = vmul.f32 %v7999, 0.2
      %v8256 = vmul.f32 %v8000, 0.2
      %v8257 = vmul.f32 %v8001, 0.2
      %v8258 = vmul.f32 %v8002, 0.2
      %v8259 = vmul.f32 %v8003, 0.2
      %v8260 = vmul.f32 %v8004, 0.2
      %v8261 = vmul.f32 %v8005, 0.2
      %v8262 = vmul.f32 %v8006, 0.2
      %v8263 = vmul.f32 %v8007, 0.2
      %v8264 = vmul.f32 %v8008, 0.2
      %v8265 = vmul.f32 %v8009, 0.2
      %v8266 = vmul.f32 %v8010, 0.2
      %v8267 = vmul.f32 %v8011, 0.2
      %v8268 = vmul.f32 %v8012, 0.2
      %v8269 = vmul.f32 %v8013, 0.2
      %v8270 = vmul.f32 %v8014, 0.2
      %v8271 = vmul.f32 %v8015, 0.2
      %v8272 = vmul.f32 %v8016, 0.2
      %v8273 = vmul.f32 %v8017, 0.2
      %v8274 = vmul.f32 %v8018, 0.2
      %v8275 = vmul.f32 %v8019, 0.2
      %v8276 = vmul.f32 %v8020, 0.2
      %v8277 = vmul.f32 %v8021, 0.2
      %v8278 = vmul.f32 %v8022, 0.2
      %v8279 = vmul.f32 %v8023, 0.2
      %v8280 = vmul.f32 %v8024, 0.2
      %v8281 = vmul.f32 %v8025, 0.2
      %v8282 = vmul.f32 %v8026, 0.2
      %v8283 = vmul.f32 %v8027, 0.2
      %v8284 = vmul.f32 %v8028, 0.2
      %v8285 = vmul.f32 %v8029, 0.2
      %v8286 = vmul.f32 %v8030, 0.2
      %v8287 = vmul.f32 %v8031, 0.2
      %v8288 = vmul.f32 %v8032, 0.2
      %v8289 = vmul.f32 %v8033, 0.2
      %v8290 = vmul.f32 %v8034, 0.2
      %v8291 = vmul.f32 %v8035, 0.2
      %v8292 = vmul.f32 %v8036, 0.2
      %v8293 = vmul.f32 %v8037, 0.2
      %v8294 = vmul.f32 %v8038, 0.2
      %v8295 = vmul.f32 %v8039, 0.2
      %v8296 = vmul.f32 %v8040, 0.2
      %v8297 = vmul.f32 %v8041, 0.2
      %v8298 = vmul.f32 %v8042, 0.2
      %v8299 = vmul.f32 %v8043, 0.2
      %v8300 = vmul.f32 %v8044, 0.2
      %v8301 = vmul.f32 %v8045, 0.2
      %v8302 = vmul.f32 %v8046, 0.2
      %v8303 = vmul.f32 %v8047, 0.2
      %v8304 = vmul.f32 %v8048, 0.2
      %v8305 = vmul.f32 %v8049, 0.2
      %v8306 = vmul.f32 %v8050, 0.2
      %v8307 = vmul.f32 %v8051, 0.2
      %v8308 = vmul.f32 %v8052, 0.2
      %v8309 = vmul.f32 %v8053, 0.2
      %v8310 = vmul.f32 %v8054, 0.2
      %v8311 = vmul.f32 %v8055, 0.2
      %v8312 = vmul.f32 %v8056, 0.2
      %v8313 = vmul.f32 %v8057, 0.2
      %v8314 = vmul.f32 %v8058, 0.2
      %v8315 = vmul.f32 %v8059, 0.2
      %v8316 = vmul.f32 %v8060, 0.2
      %v8317 = vmul.f32 %v8061, 0.2
      %v8318 = vmul.f32 %v8062, 0.2
      %v8319 = vmul.f32 %v8063, 0.2
      %v8320 = vmul.f32 %v8064, 0.2
      %v8321 = vmul.f32 %v8065, 0.2
      %v8322 = vmul.f32 %v8066, 0.2
      %v8323 = vmul.f32 %v8067, 0.2
      %v8324 = vmul.f32 %v8068, 0.2
      %v8325 = vmul.f32 %v8069, 0.2
      %v8326 = vmul.f32 %v8070, 0.2
      %v8327 = vmul.f32 %v8071, 0.2
      %v8328 = vmul.f32 %v8072, 0.2
      %v8329 = vmul.f32 %v8073, 0.2
      %v8330 = vmul.f32 %v8074, 0.2
      %v8331 = vmul.f32 %v8075, 0.2
      %v8332 = vmul.f32 %v8076, 0.2
      %v8333 = vmul.f32 %v8077, 0.2
      %v8334 = vmul.f32 %v8078, 0.2
      %v8335 = vmul.f32 %v8079, 0.2
      %v8336 = vmul.f32 %v8080, 0.2
      %v8337 = vmul.f32 %v8081, 0.2
      %v8338 = vsel %vm8082, %v7954, %v8210
      %v8339 = vsel %vm8083, %v7955, %v8211
      %v8340 = vsel %vm8084, %v7956, %v8212
      %v8341 = vsel %vm8085, %v7957, %v8213
      %v8342 = vsel %vm8086, %v7958, %v8214
      %v8343 = vsel %vm8087, %v7959, %v8215
      %v8344 = vsel %vm8088, %v7960, %v8216
      %v8345 = vsel %vm8089, %v7961, %v8217
      %v8346 = vsel %vm8090, %v7962, %v8218
      %v8347 = vsel %vm8091, %v7963, %v8219
      %v8348 = vsel %vm8092, %v7964, %v8220
      %v8349 = vsel %vm8093, %v7965, %v8221
      %v8350 = vsel %vm8094, %v7966, %v8222
      %v8351 = vsel %vm8095, %v7967, %v8223
      %v8352 = vsel %vm8096, %v7968, %v8224
      %v8353 = vsel %vm8097, %v7969, %v8225
      %v8354 = vsel %vm8098, %v7970, %v8226
      %v8355 = vsel %vm8099, %v7971, %v8227
      %v8356 = vsel %vm8100, %v7972, %v8228
      %v8357 = vsel %vm8101, %v7973, %v8229
      %v8358 = vsel %vm8102, %v7974, %v8230
      %v8359 = vsel %vm8103, %v7975, %v8231
      %v8360 = vsel %vm8104, %v7976, %v8232
      %v8361 = vsel %vm8105, %v7977, %v8233
      %v8362 = vsel %vm8106, %v7978, %v8234
      %v8363 = vsel %vm8107, %v7979, %v8235
      %v8364 = vsel %vm8108, %v7980, %v8236
      %v8365 = vsel %vm8109, %v7981, %v8237
      %v8366 = vsel %vm8110, %v7982, %v8238
      %v8367 = vsel %vm8111, %v7983, %v8239
      %v8368 = vsel %vm8112, %v7984, %v8240
      %v8369 = vsel %vm8113, %v7985, %v8241
      %v8370 = vsel %vm8114, %v7986, %v8242
      %v8371 = vsel %vm8115, %v7987, %v8243
      %v8372 = vsel %vm8116, %v7988, %v8244
      %v8373 = vsel %vm8117, %v7989, %v8245
      %v8374 = vsel %vm8118, %v7990, %v8246
      %v8375 = vsel %vm8119, %v7991, %v8247
      %v8376 = vsel %vm8120, %v7992, %v8248
      %v8377 = vsel %vm8121, %v7993, %v8249
      %v8378 = vsel %vm8122, %v7994, %v8250
      %v8379 = vsel %vm8123, %v7995, %v8251
      %v8380 = vsel %vm8124, %v7996, %v8252
      %v8381 = vsel %vm8125, %v7997, %v8253
      %v8382 = vsel %vm8126, %v7998, %v8254
      %v8383 = vsel %vm8127, %v7999, %v8255
      %v8384 = vsel %vm8128, %v8000, %v8256
      %v8385 = vsel %vm8129, %v8001, %v8257
      %v8386 = vsel %vm8130, %v8002, %v8258
      %v8387 = vsel %vm8131, %v8003, %v8259
      %v8388 = vsel %vm8132, %v8004, %v8260
      %v8389 = vsel %vm8133, %v8005, %v8261
      %v8390 = vsel %vm8134, %v8006, %v8262
      %v8391 = vsel %vm8135, %v8007, %v8263
      %v8392 = vsel %vm8136, %v8008, %v8264
      %v8393 = vsel %vm8137, %v8009, %v8265
      %v8394 = vsel %vm8138, %v8010, %v8266
      %v8395 = vsel %vm8139, %v8011, %v8267
      %v8396 = vsel %vm8140, %v8012, %v8268
      %v8397 = vsel %vm8141, %v8013, %v8269
      %v8398 = vsel %vm8142, %v8014, %v8270
      %v8399 = vsel %vm8143, %v8015, %v8271
      %v8400 = vsel %vm8144, %v8016, %v8272
      %v8401 = vsel %vm8145, %v8017, %v8273
      %v8402 = vsel %vm8146, %v8018, %v8274
      %v8403 = vsel %vm8147, %v8019, %v8275
      %v8404 = vsel %vm8148, %v8020, %v8276
      %v8405 = vsel %vm8149, %v8021, %v8277
      %v8406 = vsel %vm8150, %v8022, %v8278
      %v8407 = vsel %vm8151, %v8023, %v8279
      %v8408 = vsel %vm8152, %v8024, %v8280
      %v8409 = vsel %vm8153, %v8025, %v8281
      %v8410 = vsel %vm8154, %v8026, %v8282
      %v8411 = vsel %vm8155, %v8027, %v8283
      %v8412 = vsel %vm8156, %v8028, %v8284
      %v8413 = vsel %vm8157, %v8029, %v8285
      %v8414 = vsel %vm8158, %v8030, %v8286
      %v8415 = vsel %vm8159, %v8031, %v8287
      %v8416 = vsel %vm8160, %v8032, %v8288
      %v8417 = vsel %vm8161, %v8033, %v8289
      %v8418 = vsel %vm8162, %v8034, %v8290
      %v8419 = vsel %vm8163, %v8035, %v8291
      %v8420 = vsel %vm8164, %v8036, %v8292
      %v8421 = vsel %vm8165, %v8037, %v8293
      %v8422 = vsel %vm8166, %v8038, %v8294
      %v8423 = vsel %vm8167, %v8039, %v8295
      %v8424 = vsel %vm8168, %v8040, %v8296
      %v8425 = vsel %vm8169, %v8041, %v8297
      %v8426 = vsel %vm8170, %v8042, %v8298
      %v8427 = vsel %vm8171, %v8043, %v8299
      %v8428 = vsel %vm8172, %v8044, %v8300
      %v8429 = vsel %vm8173, %v8045, %v8301
      %v8430 = vsel %vm8174, %v8046, %v8302
      %v8431 = vsel %vm8175, %v8047, %v8303
      %v8432 = vsel %vm8176, %v8048, %v8304
      %v8433 = vsel %vm8177, %v8049, %v8305
      %v8434 = vsel %vm8178, %v8050, %v8306
      %v8435 = vsel %vm8179, %v8051, %v8307
      %v8436 = vsel %vm8180, %v8052, %v8308
      %v8437 = vsel %vm8181, %v8053, %v8309
      %v8438 = vsel %vm8182, %v8054, %v8310
      %v8439 = vsel %vm8183, %v8055, %v8311
      %v8440 = vsel %vm8184, %v8056, %v8312
      %v8441 = vsel %vm8185, %v8057, %v8313
      %v8442 = vsel %vm8186, %v8058, %v8314
      %v8443 = vsel %vm8187, %v8059, %v8315
      %v8444 = vsel %vm8188, %v8060, %v8316
      %v8445 = vsel %vm8189, %v8061, %v8317
      %v8446 = vsel %vm8190, %v8062, %v8318
      %v8447 = vsel %vm8191, %v8063, %v8319
      %v8448 = vsel %vm8192, %v8064, %v8320
      %v8449 = vsel %vm8193, %v8065, %v8321
      %v8450 = vsel %vm8194, %v8066, %v8322
      %v8451 = vsel %vm8195, %v8067, %v8323
      %v8452 = vsel %vm8196, %v8068, %v8324
      %v8453 = vsel %vm8197, %v8069, %v8325
      %v8454 = vsel %vm8198, %v8070, %v8326
      %v8455 = vsel %vm8199, %v8071, %v8327
      %v8456 = vsel %vm8200, %v8072, %v8328
      %v8457 = vsel %vm8201, %v8073, %v8329
      %v8458 = vsel %vm8202, %v8074, %v8330
      %v8459 = vsel %vm8203, %v8075, %v8331
      %v8460 = vsel %vm8204, %v8076, %v8332
      %v8461 = vsel %vm8205, %v8077, %v8333
      %v8462 = vsel %vm8206, %v8078, %v8334
      %v8463 = vsel %vm8207, %v8079, %v8335
      %v8464 = vsel %vm8208, %v8080, %v8336
      %v8465 = vsel %vm8209, %v8081, %v8337
      %v8466 = vpack.c.bf16 %v8346, %v8338
      %v8467 = vpack.c.bf16 %v8347, %v8339
      %v8468 = vpack.c.bf16 %v8348, %v8340
      %v8469 = vpack.c.bf16 %v8349, %v8341
      %v8470 = vpack.c.bf16 %v8350, %v8342
      %v8471 = vpack.c.bf16 %v8351, %v8343
      %v8472 = vpack.c.bf16 %v8352, %v8344
      %v8473 = vpack.c.bf16 %v8353, %v8345
      %v8474 = vpack.c.bf16 %v8362, %v8354
      %v8475 = vpack.c.bf16 %v8363, %v8355
      %v8476 = vpack.c.bf16 %v8364, %v8356
      %v8477 = vpack.c.bf16 %v8365, %v8357
      %v8478 = vpack.c.bf16 %v8366, %v8358
      %v8479 = vpack.c.bf16 %v8367, %v8359
      %v8480 = vpack.c.bf16 %v8368, %v8360
      %v8481 = vpack.c.bf16 %v8369, %v8361
      %v8482 = vpack.c.bf16 %v8378, %v8370
      %v8483 = vpack.c.bf16 %v8379, %v8371
      %v8484 = vpack.c.bf16 %v8380, %v8372
      %v8485 = vpack.c.bf16 %v8381, %v8373
      %v8486 = vpack.c.bf16 %v8382, %v8374
      %v8487 = vpack.c.bf16 %v8383, %v8375
      %v8488 = vpack.c.bf16 %v8384, %v8376
      %v8489 = vpack.c.bf16 %v8385, %v8377
      %v8490 = vpack.c.bf16 %v8394, %v8386
      %v8491 = vpack.c.bf16 %v8395, %v8387
      %v8492 = vpack.c.bf16 %v8396, %v8388
      %v8493 = vpack.c.bf16 %v8397, %v8389
      %v8494 = vpack.c.bf16 %v8398, %v8390
      %v8495 = vpack.c.bf16 %v8399, %v8391
      %v8496 = vpack.c.bf16 %v8400, %v8392
      %v8497 = vpack.c.bf16 %v8401, %v8393
      %v8498 = vpack.c.bf16 %v8410, %v8402
      %v8499 = vpack.c.bf16 %v8411, %v8403
      %v8500 = vpack.c.bf16 %v8412, %v8404
      %v8501 = vpack.c.bf16 %v8413, %v8405
      %v8502 = vpack.c.bf16 %v8414, %v8406
      %v8503 = vpack.c.bf16 %v8415, %v8407
      %v8504 = vpack.c.bf16 %v8416, %v8408
      %v8505 = vpack.c.bf16 %v8417, %v8409
      %v8506 = vpack.c.bf16 %v8426, %v8418
      %v8507 = vpack.c.bf16 %v8427, %v8419
      %v8508 = vpack.c.bf16 %v8428, %v8420
      %v8509 = vpack.c.bf16 %v8429, %v8421
      %v8510 = vpack.c.bf16 %v8430, %v8422
      %v8511 = vpack.c.bf16 %v8431, %v8423
      %v8512 = vpack.c.bf16 %v8432, %v8424
      %v8513 = vpack.c.bf16 %v8433, %v8425
      %v8514 = vpack.c.bf16 %v8442, %v8434
      %v8515 = vpack.c.bf16 %v8443, %v8435
      %v8516 = vpack.c.bf16 %v8444, %v8436
      %v8517 = vpack.c.bf16 %v8445, %v8437
      %v8518 = vpack.c.bf16 %v8446, %v8438
      %v8519 = vpack.c.bf16 %v8447, %v8439
      %v8520 = vpack.c.bf16 %v8448, %v8440
      %v8521 = vpack.c.bf16 %v8449, %v8441
      %v8522 = vpack.c.bf16 %v8458, %v8450
      %v8523 = vpack.c.bf16 %v8459, %v8451
      %v8524 = vpack.c.bf16 %v8460, %v8452
      %v8525 = vpack.c.bf16 %v8461, %v8453
      %v8526 = vpack.c.bf16 %v8462, %v8454
      %v8527 = vpack.c.bf16 %v8463, %v8455
      %v8528 = vpack.c.bf16 %v8464, %v8456
      %v8529 = vpack.c.bf16 %v8465, %v8457
      %v8530 = vpack.c.bf16 %v4321, %v4321
      %v8531 = vpack.c.bf16 %v4322, %v4322
      %8532 = vmatprep.subr.bf16.mxu0 %v5336
      %8533 = vmatpush1.bf16.msra.mxu0 %v5335
      %8534 = vmatprep.subr.bf16.mxu0 %v5328
      %8535 = vmatpush1.bf16.msra.mxu0 %v5327
      %8536 = vmatprep.subr.bf16.mxu0 %v5320
      %8537 = vmatpush1.bf16.msra.mxu0 %v5319
      %8538 = vmatprep.subr.bf16.mxu0 %v5312
      %8539 = vmatpush1.bf16.msra.mxu0 %v5311
      %8540 = vmatprep.subr.bf16.mxu0 %v5304
      %8541 = vmatpush1.bf16.msra.mxu0 %v5303
      %8542 = vmatprep.subr.bf16.mxu0 %v5296
      %8543 = vmatpush1.bf16.msra.mxu0 %v5295
      %8544 = vmatprep.subr.bf16.mxu0 %v5288
      %8545 = vmatpush1.bf16.msra.mxu0 %v5287
      %8546 = vmatprep.subr.bf16.mxu0 %v5280
      %8547 = vmatpush1.bf16.msra.mxu0 %v5279
      %8548 = vmatprep.subr.bf16.mxu0 %v5400
      %8549 = vmatpush2.bf16.msra.mxu0 %v5399
      %8550 = vmatprep.subr.bf16.mxu0 %v5392
      %8551 = vmatpush2.bf16.msra.mxu0 %v5391
      %8552 = vmatprep.subr.bf16.mxu0 %v5384
      %8553 = vmatpush2.bf16.msra.mxu0 %v5383
      %8554 = vmatprep.subr.bf16.mxu0 %v5376
      %8555 = vmatpush2.bf16.msra.mxu0 %v5375
      %8556 = vmatprep.subr.bf16.mxu0 %v5368
      %8557 = vmatpush2.bf16.msra.mxu0 %v5367
      %8558 = vmatprep.subr.bf16.mxu0 %v5360
      %8559 = vmatpush2.bf16.msra.mxu0 %v5359
      %8560 = vmatprep.subr.bf16.mxu0 %v5352
      %8561 = vmatpush2.bf16.msra.mxu0 %v5351
      %8562 = vmatprep.subr.bf16.mxu0 %v5344
      %8563 = vmatpush2.bf16.msra.mxu0 %v5343
      %8564 = vmatprep.mubr.bf16.mxu0 %v8531
      %8565 = vmatmul.mubr.bf16.gmra.mxu0 %v8530
      %v8566 = vpop.f32.mrf.mxu0
      %v8567 = vadd.f32 0.0, %v8566
      %v8568 = vpop.f32.mrf.mxu0
      %v8569 = vadd.f32 0.0, %v8568
      %v8570 = vpop.f32.mrf.mxu0
      %v8571 = vpop.f32.mrf.mxu0
      %8572 = vdwg.mxu0
      %8573 = vmatprep.subr.bf16.mxu0 %v5338
      %8574 = vmatpush1.bf16.msra.mxu0 %v5337
      %8575 = vmatprep.subr.bf16.mxu0 %v5330
      %8576 = vmatpush1.bf16.msra.mxu0 %v5329
      %8577 = vmatprep.subr.bf16.mxu0 %v5322
      %8578 = vmatpush1.bf16.msra.mxu0 %v5321
      %8579 = vmatprep.subr.bf16.mxu0 %v5314
      %8580 = vmatpush1.bf16.msra.mxu0 %v5313
      %8581 = vmatprep.subr.bf16.mxu0 %v5306
      %8582 = vmatpush1.bf16.msra.mxu0 %v5305
      %8583 = vmatprep.subr.bf16.mxu0 %v5298
      %8584 = vmatpush1.bf16.msra.mxu0 %v5297
      %8585 = vmatprep.subr.bf16.mxu0 %v5290
      %8586 = vmatpush1.bf16.msra.mxu0 %v5289
      %8587 = vmatprep.subr.bf16.mxu0 %v5282
      %8588 = vmatpush1.bf16.msra.mxu0 %v5281
      %8589 = vmatprep.subr.bf16.mxu0 %v5402
      %8590 = vmatpush2.bf16.msra.mxu0 %v5401
      %8591 = vmatprep.subr.bf16.mxu0 %v5394
      %8592 = vmatpush2.bf16.msra.mxu0 %v5393
      %8593 = vmatprep.subr.bf16.mxu0 %v5386
      %8594 = vmatpush2.bf16.msra.mxu0 %v5385
      %8595 = vmatprep.subr.bf16.mxu0 %v5378
      %8596 = vmatpush2.bf16.msra.mxu0 %v5377
      %8597 = vmatprep.subr.bf16.mxu0 %v5370
      %8598 = vmatpush2.bf16.msra.mxu0 %v5369
      %8599 = vmatprep.subr.bf16.mxu0 %v5362
      %8600 = vmatpush2.bf16.msra.mxu0 %v5361
      %8601 = vmatprep.subr.bf16.mxu0 %v5354
      %8602 = vmatpush2.bf16.msra.mxu0 %v5353
      %8603 = vmatprep.subr.bf16.mxu0 %v5346
      %8604 = vmatpush2.bf16.msra.mxu0 %v5345
      %8605 = vmatprep.mubr.bf16.mxu0 %v8531
      %8606 = vmatmul.mubr.bf16.gmra.mxu0 %v8530
      %v8607 = vpop.f32.mrf.mxu0
      %v8608 = vadd.f32 0.0, %v8607
      %v8609 = vpop.f32.mrf.mxu0
      %v8610 = vadd.f32 0.0, %v8609
      %v8611 = vpop.f32.mrf.mxu0
      %v8612 = vpop.f32.mrf.mxu0
      %8613 = vdwg.mxu0
      %8614 = vmatprep.subr.bf16.mxu0 %v5340
      %8615 = vmatpush1.bf16.msra.mxu0 %v5339
      %8616 = vmatprep.subr.bf16.mxu0 %v5332
      %8617 = vmatpush1.bf16.msra.mxu0 %v5331
      %8618 = vmatprep.subr.bf16.mxu0 %v5324
      %8619 = vmatpush1.bf16.msra.mxu0 %v5323
      %8620 = vmatprep.subr.bf16.mxu0 %v5316
      %8621 = vmatpush1.bf16.msra.mxu0 %v5315
      %8622 = vmatprep.subr.bf16.mxu0 %v5308
      %8623 = vmatpush1.bf16.msra.mxu0 %v5307
      %8624 = vmatprep.subr.bf16.mxu0 %v5300
      %8625 = vmatpush1.bf16.msra.mxu0 %v5299
      %8626 = vmatprep.subr.bf16.mxu0 %v5292
      %8627 = vmatpush1.bf16.msra.mxu0 %v5291
      %8628 = vmatprep.subr.bf16.mxu0 %v5284
      %8629 = vmatpush1.bf16.msra.mxu0 %v5283
      %8630 = vmatprep.subr.bf16.mxu0 %v5404
      %8631 = vmatpush2.bf16.msra.mxu0 %v5403
      %8632 = vmatprep.subr.bf16.mxu0 %v5396
      %8633 = vmatpush2.bf16.msra.mxu0 %v5395
      %8634 = vmatprep.subr.bf16.mxu0 %v5388
      %8635 = vmatpush2.bf16.msra.mxu0 %v5387
      %8636 = vmatprep.subr.bf16.mxu0 %v5380
      %8637 = vmatpush2.bf16.msra.mxu0 %v5379
      %8638 = vmatprep.subr.bf16.mxu0 %v5372
      %8639 = vmatpush2.bf16.msra.mxu0 %v5371
      %8640 = vmatprep.subr.bf16.mxu0 %v5364
      %8641 = vmatpush2.bf16.msra.mxu0 %v5363
      %8642 = vmatprep.subr.bf16.mxu0 %v5356
      %8643 = vmatpush2.bf16.msra.mxu0 %v5355
      %8644 = vmatprep.subr.bf16.mxu0 %v5348
      %8645 = vmatpush2.bf16.msra.mxu0 %v5347
      %8646 = vmatprep.mubr.bf16.mxu0 %v8531
      %8647 = vmatmul.mubr.bf16.gmra.mxu0 %v8530
      %v8648 = vpop.f32.mrf.mxu0
      %v8649 = vadd.f32 0.0, %v8648
      %v8650 = vpop.f32.mrf.mxu0
      %v8651 = vadd.f32 0.0, %v8650
      %v8652 = vpop.f32.mrf.mxu0
      %v8653 = vpop.f32.mrf.mxu0
      %8654 = vdwg.mxu0
      %8655 = vmatprep.subr.bf16.mxu0 %v5342
      %8656 = vmatpush1.bf16.msra.mxu0 %v5341
      %8657 = vmatprep.subr.bf16.mxu0 %v5334
      %8658 = vmatpush1.bf16.msra.mxu0 %v5333
      %8659 = vmatprep.subr.bf16.mxu0 %v5326
      %8660 = vmatpush1.bf16.msra.mxu0 %v5325
      %8661 = vmatprep.subr.bf16.mxu0 %v5318
      %8662 = vmatpush1.bf16.msra.mxu0 %v5317
      %8663 = vmatprep.subr.bf16.mxu0 %v5310
      %8664 = vmatpush1.bf16.msra.mxu0 %v5309
      %8665 = vmatprep.subr.bf16.mxu0 %v5302
      %8666 = vmatpush1.bf16.msra.mxu0 %v5301
      %8667 = vmatprep.subr.bf16.mxu0 %v5294
      %8668 = vmatpush1.bf16.msra.mxu0 %v5293
      %8669 = vmatprep.subr.bf16.mxu0 %v5286
      %8670 = vmatpush1.bf16.msra.mxu0 %v5285
      %8671 = vmatprep.subr.bf16.mxu0 %v5406
      %8672 = vmatpush2.bf16.msra.mxu0 %v5405
      %8673 = vmatprep.subr.bf16.mxu0 %v5398
      %8674 = vmatpush2.bf16.msra.mxu0 %v5397
      %8675 = vmatprep.subr.bf16.mxu0 %v5390
      %8676 = vmatpush2.bf16.msra.mxu0 %v5389
      %8677 = vmatprep.subr.bf16.mxu0 %v5382
      %8678 = vmatpush2.bf16.msra.mxu0 %v5381
      %8679 = vmatprep.subr.bf16.mxu0 %v5374
      %8680 = vmatpush2.bf16.msra.mxu0 %v5373
      %8681 = vmatprep.subr.bf16.mxu0 %v5366
      %8682 = vmatpush2.bf16.msra.mxu0 %v5365
      %8683 = vmatprep.subr.bf16.mxu0 %v5358
      %8684 = vmatpush2.bf16.msra.mxu0 %v5357
      %8685 = vmatprep.subr.bf16.mxu0 %v5350
      %8686 = vmatpush2.bf16.msra.mxu0 %v5349
      %8687 = vmatprep.mubr.bf16.mxu0 %v8531
      %8688 = vmatmul.mubr.bf16.gmra.mxu0 %v8530
      %v8689 = vpop.f32.mrf.mxu0
      %v8690 = vadd.f32 0.0, %v8689
      %v8691 = vpop.f32.mrf.mxu0
      %v8692 = vadd.f32 0.0, %v8691
      %v8693 = vpop.f32.mrf.mxu0
      %v8694 = vpop.f32.mrf.mxu0
      %8695 = vdwg.mxu0
      %v8696 = vunpack.c.l.bf16 %v8466
      %v8697 = vunpack.c.l.bf16 %v8467
      %v8698 = vunpack.c.l.bf16 %v8468
      %v8699 = vunpack.c.l.bf16 %v8469
      %v8700 = vunpack.c.l.bf16 %v8470
      %v8701 = vunpack.c.l.bf16 %v8471
      %v8702 = vunpack.c.l.bf16 %v8472
      %v8703 = vunpack.c.l.bf16 %v8473
      %v8704 = vunpack.c.h.bf16 %v8466
      %v8705 = vunpack.c.h.bf16 %v8467
      %v8706 = vunpack.c.h.bf16 %v8468
      %v8707 = vunpack.c.h.bf16 %v8469
      %v8708 = vunpack.c.h.bf16 %v8470
      %v8709 = vunpack.c.h.bf16 %v8471
      %v8710 = vunpack.c.h.bf16 %v8472
      %v8711 = vunpack.c.h.bf16 %v8473
      %v8712 = vunpack.c.l.bf16 %v8474
      %v8713 = vunpack.c.l.bf16 %v8475
      %v8714 = vunpack.c.l.bf16 %v8476
      %v8715 = vunpack.c.l.bf16 %v8477
      %v8716 = vunpack.c.l.bf16 %v8478
      %v8717 = vunpack.c.l.bf16 %v8479
      %v8718 = vunpack.c.l.bf16 %v8480
      %v8719 = vunpack.c.l.bf16 %v8481
      %v8720 = vunpack.c.h.bf16 %v8474
      %v8721 = vunpack.c.h.bf16 %v8475
      %v8722 = vunpack.c.h.bf16 %v8476
      %v8723 = vunpack.c.h.bf16 %v8477
      %v8724 = vunpack.c.h.bf16 %v8478
      %v8725 = vunpack.c.h.bf16 %v8479
      %v8726 = vunpack.c.h.bf16 %v8480
      %v8727 = vunpack.c.h.bf16 %v8481
      %v8728 = vunpack.c.l.bf16 %v8482
      %v8729 = vunpack.c.l.bf16 %v8483
      %v8730 = vunpack.c.l.bf16 %v8484
      %v8731 = vunpack.c.l.bf16 %v8485
      %v8732 = vunpack.c.l.bf16 %v8486
      %v8733 = vunpack.c.l.bf16 %v8487
      %v8734 = vunpack.c.l.bf16 %v8488
      %v8735 = vunpack.c.l.bf16 %v8489
      %v8736 = vunpack.c.h.bf16 %v8482
      %v8737 = vunpack.c.h.bf16 %v8483
      %v8738 = vunpack.c.h.bf16 %v8484
      %v8739 = vunpack.c.h.bf16 %v8485
      %v8740 = vunpack.c.h.bf16 %v8486
      %v8741 = vunpack.c.h.bf16 %v8487
      %v8742 = vunpack.c.h.bf16 %v8488
      %v8743 = vunpack.c.h.bf16 %v8489
      %v8744 = vunpack.c.l.bf16 %v8490
      %v8745 = vunpack.c.l.bf16 %v8491
      %v8746 = vunpack.c.l.bf16 %v8492
      %v8747 = vunpack.c.l.bf16 %v8493
      %v8748 = vunpack.c.l.bf16 %v8494
      %v8749 = vunpack.c.l.bf16 %v8495
      %v8750 = vunpack.c.l.bf16 %v8496
      %v8751 = vunpack.c.l.bf16 %v8497
      %v8752 = vunpack.c.h.bf16 %v8490
      %v8753 = vunpack.c.h.bf16 %v8491
      %v8754 = vunpack.c.h.bf16 %v8492
      %v8755 = vunpack.c.h.bf16 %v8493
      %v8756 = vunpack.c.h.bf16 %v8494
      %v8757 = vunpack.c.h.bf16 %v8495
      %v8758 = vunpack.c.h.bf16 %v8496
      %v8759 = vunpack.c.h.bf16 %v8497
      %v8760 = vunpack.c.l.bf16 %v8498
      %v8761 = vunpack.c.l.bf16 %v8499
      %v8762 = vunpack.c.l.bf16 %v8500
      %v8763 = vunpack.c.l.bf16 %v8501
      %v8764 = vunpack.c.l.bf16 %v8502
      %v8765 = vunpack.c.l.bf16 %v8503
      %v8766 = vunpack.c.l.bf16 %v8504
      %v8767 = vunpack.c.l.bf16 %v8505
      %v8768 = vunpack.c.h.bf16 %v8498
      %v8769 = vunpack.c.h.bf16 %v8499
      %v8770 = vunpack.c.h.bf16 %v8500
      %v8771 = vunpack.c.h.bf16 %v8501
      %v8772 = vunpack.c.h.bf16 %v8502
      %v8773 = vunpack.c.h.bf16 %v8503
      %v8774 = vunpack.c.h.bf16 %v8504
      %v8775 = vunpack.c.h.bf16 %v8505
      %v8776 = vunpack.c.l.bf16 %v8506
      %v8777 = vunpack.c.l.bf16 %v8507
      %v8778 = vunpack.c.l.bf16 %v8508
      %v8779 = vunpack.c.l.bf16 %v8509
      %v8780 = vunpack.c.l.bf16 %v8510
      %v8781 = vunpack.c.l.bf16 %v8511
      %v8782 = vunpack.c.l.bf16 %v8512
      %v8783 = vunpack.c.l.bf16 %v8513
      %v8784 = vunpack.c.h.bf16 %v8506
      %v8785 = vunpack.c.h.bf16 %v8507
      %v8786 = vunpack.c.h.bf16 %v8508
      %v8787 = vunpack.c.h.bf16 %v8509
      %v8788 = vunpack.c.h.bf16 %v8510
      %v8789 = vunpack.c.h.bf16 %v8511
      %v8790 = vunpack.c.h.bf16 %v8512
      %v8791 = vunpack.c.h.bf16 %v8513
      %v8792 = vunpack.c.l.bf16 %v8514
      %v8793 = vunpack.c.l.bf16 %v8515
      %v8794 = vunpack.c.l.bf16 %v8516
      %v8795 = vunpack.c.l.bf16 %v8517
      %v8796 = vunpack.c.l.bf16 %v8518
      %v8797 = vunpack.c.l.bf16 %v8519
      %v8798 = vunpack.c.l.bf16 %v8520
      %v8799 = vunpack.c.l.bf16 %v8521
      %v8800 = vunpack.c.h.bf16 %v8514
      %v8801 = vunpack.c.h.bf16 %v8515
      %v8802 = vunpack.c.h.bf16 %v8516
      %v8803 = vunpack.c.h.bf16 %v8517
      %v8804 = vunpack.c.h.bf16 %v8518
      %v8805 = vunpack.c.h.bf16 %v8519
      %v8806 = vunpack.c.h.bf16 %v8520
      %v8807 = vunpack.c.h.bf16 %v8521
      %v8808 = vunpack.c.l.bf16 %v8522
      %v8809 = vunpack.c.l.bf16 %v8523
      %v8810 = vunpack.c.l.bf16 %v8524
      %v8811 = vunpack.c.l.bf16 %v8525
      %v8812 = vunpack.c.l.bf16 %v8526
      %v8813 = vunpack.c.l.bf16 %v8527
      %v8814 = vunpack.c.l.bf16 %v8528
      %v8815 = vunpack.c.l.bf16 %v8529
      %v8816 = vunpack.c.h.bf16 %v8522
      %v8817 = vunpack.c.h.bf16 %v8523
      %v8818 = vunpack.c.h.bf16 %v8524
      %v8819 = vunpack.c.h.bf16 %v8525
      %v8820 = vunpack.c.h.bf16 %v8526
      %v8821 = vunpack.c.h.bf16 %v8527
      %v8822 = vunpack.c.h.bf16 %v8528
      %v8823 = vunpack.c.h.bf16 %v8529
      %8824 = vset.pattern.permute.xlu0 17
      %8825 = vperm.xlu0 %8824, %v625
      %v8826 = vpop.permute.xlu0 %8825
      %8828 = vset.pattern.permute.xlu0 17
      %8829 = vperm.xlu0 %8828, %v626
      %v8830 = vpop.permute.xlu0 %8829
      %8832 = vset.pattern.permute.xlu0 17
      %8833 = vperm.xlu0 %8832, %v627
      %v8834 = vpop.permute.xlu0 %8833
      %8836 = vset.pattern.permute.xlu0 17
      %8837 = vperm.xlu0 %8836, %v628
      %v8838 = vpop.permute.xlu0 %8837
      %8840 = vset.pattern.permute.xlu0 17
      %8841 = vperm.xlu0 %8840, %v629
      %v8842 = vpop.permute.xlu0 %8841
      %8844 = vset.pattern.permute.xlu0 17
      %8845 = vperm.xlu0 %8844, %v630
      %v8846 = vpop.permute.xlu0 %8845
      %8848 = vset.pattern.permute.xlu0 17
      %8849 = vperm.xlu0 %8848, %v631
      %v8850 = vpop.permute.xlu0 %8849
      %8852 = vset.pattern.permute.xlu0 17
      %8853 = vperm.xlu0 %8852, %v632
      %v8854 = vpop.permute.xlu0 %8853
      %8856 = vset.pattern.permute.xlu0 17
      %8857 = vperm.xlu0 %8856, %v633
      %v8858 = vpop.permute.xlu0 %8857
      %8860 = vset.pattern.permute.xlu0 17
      %8861 = vperm.xlu0 %8860, %v634
      %v8862 = vpop.permute.xlu0 %8861
      %8864 = vset.pattern.permute.xlu0 17
      %8865 = vperm.xlu0 %8864, %v635
      %v8866 = vpop.permute.xlu0 %8865
      %8868 = vset.pattern.permute.xlu0 17
      %8869 = vperm.xlu0 %8868, %v636
      %v8870 = vpop.permute.xlu0 %8869
      %8872 = vset.pattern.permute.xlu0 17
      %8873 = vperm.xlu0 %8872, %v637
      %v8874 = vpop.permute.xlu0 %8873
      %8876 = vset.pattern.permute.xlu0 17
      %8877 = vperm.xlu0 %8876, %v638
      %v8878 = vpop.permute.xlu0 %8877
      %8880 = vset.pattern.permute.xlu0 17
      %8881 = vperm.xlu0 %8880, %v639
      %v8882 = vpop.permute.xlu0 %8881
      %8884 = vset.pattern.permute.xlu0 17
      %8885 = vperm.xlu0 %8884, %v640
      %v8886 = vpop.permute.xlu0 %8885
      %v8888 = vmul.f32 %v8696, %v8826
      %v8889 = vmul.f32 %v8697, %v8826
      %v8890 = vmul.f32 %v8698, %v8826
      %v8891 = vmul.f32 %v8699, %v8826
      %v8892 = vmul.f32 %v8700, %v8826
      %v8893 = vmul.f32 %v8701, %v8826
      %v8894 = vmul.f32 %v8702, %v8826
      %v8895 = vmul.f32 %v8703, %v8826
      %v8896 = vmul.f32 %v8704, %v8830
      %v8897 = vmul.f32 %v8705, %v8830
      %v8898 = vmul.f32 %v8706, %v8830
      %v8899 = vmul.f32 %v8707, %v8830
      %v8900 = vmul.f32 %v8708, %v8830
      %v8901 = vmul.f32 %v8709, %v8830
      %v8902 = vmul.f32 %v8710, %v8830
      %v8903 = vmul.f32 %v8711, %v8830
      %v8904 = vmul.f32 %v8712, %v8834
      %v8905 = vmul.f32 %v8713, %v8834
      %v8906 = vmul.f32 %v8714, %v8834
      %v8907 = vmul.f32 %v8715, %v8834
      %v8908 = vmul.f32 %v8716, %v8834
      %v8909 = vmul.f32 %v8717, %v8834
      %v8910 = vmul.f32 %v8718, %v8834
      %v8911 = vmul.f32 %v8719, %v8834
      %v8912 = vmul.f32 %v8720, %v8838
      %v8913 = vmul.f32 %v8721, %v8838
      %v8914 = vmul.f32 %v8722, %v8838
      %v8915 = vmul.f32 %v8723, %v8838
      %v8916 = vmul.f32 %v8724, %v8838
      %v8917 = vmul.f32 %v8725, %v8838
      %v8918 = vmul.f32 %v8726, %v8838
      %v8919 = vmul.f32 %v8727, %v8838
      %v8920 = vmul.f32 %v8728, %v8842
      %v8921 = vmul.f32 %v8729, %v8842
      %v8922 = vmul.f32 %v8730, %v8842
      %v8923 = vmul.f32 %v8731, %v8842
      %v8924 = vmul.f32 %v8732, %v8842
      %v8925 = vmul.f32 %v8733, %v8842
      %v8926 = vmul.f32 %v8734, %v8842
      %v8927 = vmul.f32 %v8735, %v8842
      %v8928 = vmul.f32 %v8736, %v8846
      %v8929 = vmul.f32 %v8737, %v8846
      %v8930 = vmul.f32 %v8738, %v8846
      %v8931 = vmul.f32 %v8739, %v8846
      %v8932 = vmul.f32 %v8740, %v8846
      %v8933 = vmul.f32 %v8741, %v8846
      %v8934 = vmul.f32 %v8742, %v8846
      %v8935 = vmul.f32 %v8743, %v8846
      %v8936 = vmul.f32 %v8744, %v8850
      %v8937 = vmul.f32 %v8745, %v8850
      %v8938 = vmul.f32 %v8746, %v8850
      %v8939 = vmul.f32 %v8747, %v8850
      %v8940 = vmul.f32 %v8748, %v8850
      %v8941 = vmul.f32 %v8749, %v8850
      %v8942 = vmul.f32 %v8750, %v8850
      %v8943 = vmul.f32 %v8751, %v8850
      %v8944 = vmul.f32 %v8752, %v8854
      %v8945 = vmul.f32 %v8753, %v8854
      %v8946 = vmul.f32 %v8754, %v8854
      %v8947 = vmul.f32 %v8755, %v8854
      %v8948 = vmul.f32 %v8756, %v8854
      %v8949 = vmul.f32 %v8757, %v8854
      %v8950 = vmul.f32 %v8758, %v8854
      %v8951 = vmul.f32 %v8759, %v8854
      %v8952 = vmul.f32 %v8760, %v8858
      %v8953 = vmul.f32 %v8761, %v8858
      %v8954 = vmul.f32 %v8762, %v8858
      %v8955 = vmul.f32 %v8763, %v8858
      %v8956 = vmul.f32 %v8764, %v8858
      %v8957 = vmul.f32 %v8765, %v8858
      %v8958 = vmul.f32 %v8766, %v8858
      %v8959 = vmul.f32 %v8767, %v8858
      %v8960 = vmul.f32 %v8768, %v8862
      %v8961 = vmul.f32 %v8769, %v8862
      %v8962 = vmul.f32 %v8770, %v8862
      %v8963 = vmul.f32 %v8771, %v8862
      %v8964 = vmul.f32 %v8772, %v8862
      %v8965 = vmul.f32 %v8773, %v8862
      %v8966 = vmul.f32 %v8774, %v8862
      %v8967 = vmul.f32 %v8775, %v8862
      %v8968 = vmul.f32 %v8776, %v8866
      %v8969 = vmul.f32 %v8777, %v8866
      %v8970 = vmul.f32 %v8778, %v8866
      %v8971 = vmul.f32 %v8779, %v8866
      %v8972 = vmul.f32 %v8780, %v8866
      %v8973 = vmul.f32 %v8781, %v8866
      %v8974 = vmul.f32 %v8782, %v8866
      %v8975 = vmul.f32 %v8783, %v8866
      %v8976 = vmul.f32 %v8784, %v8870
      %v8977 = vmul.f32 %v8785, %v8870
      %v8978 = vmul.f32 %v8786, %v8870
      %v8979 = vmul.f32 %v8787, %v8870
      %v8980 = vmul.f32 %v8788, %v8870
      %v8981 = vmul.f32 %v8789, %v8870
      %v8982 = vmul.f32 %v8790, %v8870
      %v8983 = vmul.f32 %v8791, %v8870
      %v8984 = vmul.f32 %v8792, %v8874
      %v8985 = vmul.f32 %v8793, %v8874
      %v8986 = vmul.f32 %v8794, %v8874
      %v8987 = vmul.f32 %v8795, %v8874
      %v8988 = vmul.f32 %v8796, %v8874
      %v8989 = vmul.f32 %v8797, %v8874
      %v8990 = vmul.f32 %v8798, %v8874
      %v8991 = vmul.f32 %v8799, %v8874
      %v8992 = vmul.f32 %v8800, %v8878
      %v8993 = vmul.f32 %v8801, %v8878
      %v8994 = vmul.f32 %v8802, %v8878
      %v8995 = vmul.f32 %v8803, %v8878
      %v8996 = vmul.f32 %v8804, %v8878
      %v8997 = vmul.f32 %v8805, %v8878
      %v8998 = vmul.f32 %v8806, %v8878
      %v8999 = vmul.f32 %v8807, %v8878
      %v9000 = vmul.f32 %v8808, %v8882
      %v9001 = vmul.f32 %v8809, %v8882
      %v9002 = vmul.f32 %v8810, %v8882
      %v9003 = vmul.f32 %v8811, %v8882
      %v9004 = vmul.f32 %v8812, %v8882
      %v9005 = vmul.f32 %v8813, %v8882
      %v9006 = vmul.f32 %v8814, %v8882
      %v9007 = vmul.f32 %v8815, %v8882
      %v9008 = vmul.f32 %v8816, %v8886
      %v9009 = vmul.f32 %v8817, %v8886
      %v9010 = vmul.f32 %v8818, %v8886
      %v9011 = vmul.f32 %v8819, %v8886
      %v9012 = vmul.f32 %v8820, %v8886
      %v9013 = vmul.f32 %v8821, %v8886
      %v9014 = vmul.f32 %v8822, %v8886
      %v9015 = vmul.f32 %v8823, %v8886
      %v9016 = vpack.c.bf16 %v8896, %v8888
      %v9017 = vpack.c.bf16 %v8897, %v8889
      %v9018 = vpack.c.bf16 %v8898, %v8890
      %v9019 = vpack.c.bf16 %v8899, %v8891
      %v9020 = vpack.c.bf16 %v8900, %v8892
      %v9021 = vpack.c.bf16 %v8901, %v8893
      %v9022 = vpack.c.bf16 %v8902, %v8894
      %v9023 = vpack.c.bf16 %v8903, %v8895
      %v9024 = vpack.c.bf16 %v8912, %v8904
      %v9025 = vpack.c.bf16 %v8913, %v8905
      %v9026 = vpack.c.bf16 %v8914, %v8906
      %v9027 = vpack.c.bf16 %v8915, %v8907
      %v9028 = vpack.c.bf16 %v8916, %v8908
      %v9029 = vpack.c.bf16 %v8917, %v8909
      %v9030 = vpack.c.bf16 %v8918, %v8910
      %v9031 = vpack.c.bf16 %v8919, %v8911
      %v9032 = vpack.c.bf16 %v8928, %v8920
      %v9033 = vpack.c.bf16 %v8929, %v8921
      %v9034 = vpack.c.bf16 %v8930, %v8922
      %v9035 = vpack.c.bf16 %v8931, %v8923
      %v9036 = vpack.c.bf16 %v8932, %v8924
      %v9037 = vpack.c.bf16 %v8933, %v8925
      %v9038 = vpack.c.bf16 %v8934, %v8926
      %v9039 = vpack.c.bf16 %v8935, %v8927
      %v9040 = vpack.c.bf16 %v8944, %v8936
      %v9041 = vpack.c.bf16 %v8945, %v8937
      %v9042 = vpack.c.bf16 %v8946, %v8938
      %v9043 = vpack.c.bf16 %v8947, %v8939
      %v9044 = vpack.c.bf16 %v8948, %v8940
      %v9045 = vpack.c.bf16 %v8949, %v8941
      %v9046 = vpack.c.bf16 %v8950, %v8942
      %v9047 = vpack.c.bf16 %v8951, %v8943
      %v9048 = vpack.c.bf16 %v8960, %v8952
      %v9049 = vpack.c.bf16 %v8961, %v8953
      %v9050 = vpack.c.bf16 %v8962, %v8954
      %v9051 = vpack.c.bf16 %v8963, %v8955
      %v9052 = vpack.c.bf16 %v8964, %v8956
      %v9053 = vpack.c.bf16 %v8965, %v8957
      %v9054 = vpack.c.bf16 %v8966, %v8958
      %v9055 = vpack.c.bf16 %v8967, %v8959
      %v9056 = vpack.c.bf16 %v8976, %v8968
      %v9057 = vpack.c.bf16 %v8977, %v8969
      %v9058 = vpack.c.bf16 %v8978, %v8970
      %v9059 = vpack.c.bf16 %v8979, %v8971
      %v9060 = vpack.c.bf16 %v8980, %v8972
      %v9061 = vpack.c.bf16 %v8981, %v8973
      %v9062 = vpack.c.bf16 %v8982, %v8974
      %v9063 = vpack.c.bf16 %v8983, %v8975
      %v9064 = vpack.c.bf16 %v8992, %v8984
      %v9065 = vpack.c.bf16 %v8993, %v8985
      %v9066 = vpack.c.bf16 %v8994, %v8986
      %v9067 = vpack.c.bf16 %v8995, %v8987
      %v9068 = vpack.c.bf16 %v8996, %v8988
      %v9069 = vpack.c.bf16 %v8997, %v8989
      %v9070 = vpack.c.bf16 %v8998, %v8990
      %v9071 = vpack.c.bf16 %v8999, %v8991
      %v9072 = vpack.c.bf16 %v9008, %v9000
      %v9073 = vpack.c.bf16 %v9009, %v9001
      %v9074 = vpack.c.bf16 %v9010, %v9002
      %v9075 = vpack.c.bf16 %v9011, %v9003
      %v9076 = vpack.c.bf16 %v9012, %v9004
      %v9077 = vpack.c.bf16 %v9013, %v9005
      %v9078 = vpack.c.bf16 %v9014, %v9006
      %v9079 = vpack.c.bf16 %v9015, %v9007
      %s9080 = scalar_lea.vmem %s3, 12
      %v9081 = vld [vmem:[%s9080] sm:$0xf]
      %9082 = vset.pattern.permute.xlu0 10
      %9083 = vperm.xlu0 %9082, %v659
      %v9084 = vpop.permute.xlu0 %9083
      %9086 = vmatprep.subr.bf16.mxu0 %v9073
      %9087 = vmatpush1.bf16.msra.mxu0 %v9072
      %9088 = vmatprep.subr.bf16.mxu0 %v9065
      %9089 = vmatpush1.bf16.msra.mxu0 %v9064
      %9090 = vmatprep.subr.bf16.mxu0 %v9057
      %9091 = vmatpush1.bf16.msra.mxu0 %v9056
      %9092 = vmatprep.subr.bf16.mxu0 %v9049
      %9093 = vmatpush1.bf16.msra.mxu0 %v9048
      %9094 = vmatprep.subr.bf16.mxu0 %v9041
      %9095 = vmatpush1.bf16.msra.mxu0 %v9040
      %9096 = vmatprep.subr.bf16.mxu0 %v9033
      %9097 = vmatpush1.bf16.msra.mxu0 %v9032
      %9098 = vmatprep.subr.bf16.mxu0 %v9025
      %9099 = vmatpush1.bf16.msra.mxu0 %v9024
      %9100 = vmatprep.subr.bf16.mxu0 %v9017
      %9101 = vmatpush1.bf16.msra.mxu0 %v9016
      %9102 = vmatprep.subr.bf16.mxu0 0
      %9103 = vmatpush2.bf16.msra.mxu0 0
      %9104 = vmatprep.subr.bf16.mxu0 0
      %9105 = vmatpush2.bf16.msra.mxu0 0
      %9106 = vmatprep.subr.bf16.mxu0 0
      %9107 = vmatpush2.bf16.msra.mxu0 0
      %9108 = vmatprep.subr.bf16.mxu0 0
      %9109 = vmatpush2.bf16.msra.mxu0 0
      %9110 = vmatprep.subr.bf16.mxu0 0
      %9111 = vmatpush2.bf16.msra.mxu0 0
      %9112 = vmatprep.subr.bf16.mxu0 0
      %9113 = vmatpush2.bf16.msra.mxu0 0
      %9114 = vmatprep.subr.bf16.mxu0 0
      %9115 = vmatpush2.bf16.msra.mxu0 0
      %9116 = vmatprep.subr.bf16.mxu0 0
      %9117 = vmatpush2.bf16.msra.mxu0 0
      %9118 = vmatprep.mubr.bf16.mxu0 0
      %9119 = vmatmul.mubr.bf16.gmra.mxu0 %v9081
      %v9120 = vpop.f32.mrf.mxu0
      %v9121 = vadd.f32 %v9084, %v9120
      %v9122 = vpop.f32.mrf.mxu0
      %v9123 = vadd.f32 %v9084, %v9122
      %v9124 = vpop.f32.mrf.mxu0
      %v9125 = vpop.f32.mrf.mxu0
      %9126 = vdwg.mxu0
      %9127 = vmatprep.subr.bf16.mxu0 %v9075
      %9128 = vmatpush1.bf16.msra.mxu0 %v9074
      %9129 = vmatprep.subr.bf16.mxu0 %v9067
      %9130 = vmatpush1.bf16.msra.mxu0 %v9066
      %9131 = vmatprep.subr.bf16.mxu0 %v9059
      %9132 = vmatpush1.bf16.msra.mxu0 %v9058
      %9133 = vmatprep.subr.bf16.mxu0 %v9051
      %9134 = vmatpush1.bf16.msra.mxu0 %v9050
      %9135 = vmatprep.subr.bf16.mxu0 %v9043
      %9136 = vmatpush1.bf16.msra.mxu0 %v9042
      %9137 = vmatprep.subr.bf16.mxu0 %v9035
      %9138 = vmatpush1.bf16.msra.mxu0 %v9034
      %9139 = vmatprep.subr.bf16.mxu0 %v9027
      %9140 = vmatpush1.bf16.msra.mxu0 %v9026
      %9141 = vmatprep.subr.bf16.mxu0 %v9019
      %9142 = vmatpush1.bf16.msra.mxu0 %v9018
      %9143 = vmatprep.subr.bf16.mxu0 0
      %9144 = vmatpush2.bf16.msra.mxu0 0
      %9145 = vmatprep.subr.bf16.mxu0 0
      %9146 = vmatpush2.bf16.msra.mxu0 0
      %9147 = vmatprep.subr.bf16.mxu0 0
      %9148 = vmatpush2.bf16.msra.mxu0 0
      %9149 = vmatprep.subr.bf16.mxu0 0
      %9150 = vmatpush2.bf16.msra.mxu0 0
      %9151 = vmatprep.subr.bf16.mxu0 0
      %9152 = vmatpush2.bf16.msra.mxu0 0
      %9153 = vmatprep.subr.bf16.mxu0 0
      %9154 = vmatpush2.bf16.msra.mxu0 0
      %9155 = vmatprep.subr.bf16.mxu0 0
      %9156 = vmatpush2.bf16.msra.mxu0 0
      %9157 = vmatprep.subr.bf16.mxu0 0
      %9158 = vmatpush2.bf16.msra.mxu0 0
      %9159 = vmatprep.mubr.bf16.mxu0 0
      %9160 = vmatmul.mubr.bf16.gmra.mxu0 %v9081
      %v9161 = vpop.f32.mrf.mxu0
      %v9162 = vadd.f32 %v9084, %v9161
      %v9163 = vpop.f32.mrf.mxu0
      %v9164 = vadd.f32 %v9084, %v9163
      %v9165 = vpop.f32.mrf.mxu0
      %v9166 = vpop.f32.mrf.mxu0
      %9167 = vdwg.mxu0
      %9168 = vmatprep.subr.bf16.mxu0 %v9077
      %9169 = vmatpush1.bf16.msra.mxu0 %v9076
      %9170 = vmatprep.subr.bf16.mxu0 %v9069
      %9171 = vmatpush1.bf16.msra.mxu0 %v9068
      %9172 = vmatprep.subr.bf16.mxu0 %v9061
      %9173 = vmatpush1.bf16.msra.mxu0 %v9060
      %9174 = vmatprep.subr.bf16.mxu0 %v9053
      %9175 = vmatpush1.bf16.msra.mxu0 %v9052
      %9176 = vmatprep.subr.bf16.mxu0 %v9045
      %9177 = vmatpush1.bf16.msra.mxu0 %v9044
      %9178 = vmatprep.subr.bf16.mxu0 %v9037
      %9179 = vmatpush1.bf16.msra.mxu0 %v9036
      %9180 = vmatprep.subr.bf16.mxu0 %v9029
      %9181 = vmatpush1.bf16.msra.mxu0 %v9028
      %9182 = vmatprep.subr.bf16.mxu0 %v9021
      %9183 = vmatpush1.bf16.msra.mxu0 %v9020
      %9184 = vmatprep.subr.bf16.mxu0 0
      %9185 = vmatpush2.bf16.msra.mxu0 0
      %9186 = vmatprep.subr.bf16.mxu0 0
      %9187 = vmatpush2.bf16.msra.mxu0 0
      %9188 = vmatprep.subr.bf16.mxu0 0
      %9189 = vmatpush2.bf16.msra.mxu0 0
      %9190 = vmatprep.subr.bf16.mxu0 0
      %9191 = vmatpush2.bf16.msra.mxu0 0
      %9192 = vmatprep.subr.bf16.mxu0 0
      %9193 = vmatpush2.bf16.msra.mxu0 0
      %9194 = vmatprep.subr.bf16.mxu0 0
      %9195 = vmatpush2.bf16.msra.mxu0 0
      %9196 = vmatprep.subr.bf16.mxu0 0
      %9197 = vmatpush2.bf16.msra.mxu0 0
      %9198 = vmatprep.subr.bf16.mxu0 0
      %9199 = vmatpush2.bf16.msra.mxu0 0
      %9200 = vmatprep.mubr.bf16.mxu0 0
      %9201 = vmatmul.mubr.bf16.gmra.mxu0 %v9081
      %v9202 = vpop.f32.mrf.mxu0
      %v9203 = vadd.f32 %v9084, %v9202
      %v9204 = vpop.f32.mrf.mxu0
      %v9205 = vadd.f32 %v9084, %v9204
      %v9206 = vpop.f32.mrf.mxu0
      %v9207 = vpop.f32.mrf.mxu0
      %9208 = vdwg.mxu0
      %9209 = vmatprep.subr.bf16.mxu0 %v9079
      %9210 = vmatpush1.bf16.msra.mxu0 %v9078
      %9211 = vmatprep.subr.bf16.mxu0 %v9071
      %9212 = vmatpush1.bf16.msra.mxu0 %v9070
      %9213 = vmatprep.subr.bf16.mxu0 %v9063
      %9214 = vmatpush1.bf16.msra.mxu0 %v9062
      %9215 = vmatprep.subr.bf16.mxu0 %v9055
      %9216 = vmatpush1.bf16.msra.mxu0 %v9054
      %9217 = vmatprep.subr.bf16.mxu0 %v9047
      %9218 = vmatpush1.bf16.msra.mxu0 %v9046
      %9219 = vmatprep.subr.bf16.mxu0 %v9039
      %9220 = vmatpush1.bf16.msra.mxu0 %v9038
      %9221 = vmatprep.subr.bf16.mxu0 %v9031
      %9222 = vmatpush1.bf16.msra.mxu0 %v9030
      %9223 = vmatprep.subr.bf16.mxu0 %v9023
      %9224 = vmatpush1.bf16.msra.mxu0 %v9022
      %9225 = vmatprep.subr.bf16.mxu0 0
      %9226 = vmatpush2.bf16.msra.mxu0 0
      %9227 = vmatprep.subr.bf16.mxu0 0
      %9228 = vmatpush2.bf16.msra.mxu0 0
      %9229 = vmatprep.subr.bf16.mxu0 0
      %9230 = vmatpush2.bf16.msra.mxu0 0
      %9231 = vmatprep.subr.bf16.mxu0 0
      %9232 = vmatpush2.bf16.msra.mxu0 0
      %9233 = vmatprep.subr.bf16.mxu0 0
      %9234 = vmatpush2.bf16.msra.mxu0 0
      %9235 = vmatprep.subr.bf16.mxu0 0
      %9236 = vmatpush2.bf16.msra.mxu0 0
      %9237 = vmatprep.subr.bf16.mxu0 0
      %9238 = vmatpush2.bf16.msra.mxu0 0
      %9239 = vmatprep.subr.bf16.mxu0 0
      %9240 = vmatpush2.bf16.msra.mxu0 0
      %9241 = vmatprep.mubr.bf16.mxu0 0
      %9242 = vmatmul.mubr.bf16.gmra.mxu0 %v9081
      %v9243 = vpop.f32.mrf.mxu0
      %v9244 = vadd.f32 %v9084, %v9243
      %v9245 = vpop.f32.mrf.mxu0
      %v9246 = vadd.f32 %v9084, %v9245
      %v9247 = vpop.f32.mrf.mxu0
      %v9248 = vpop.f32.mrf.mxu0
      %9249 = vdwg.mxu0
      %v9250 = vadd.f32 %v9121, %v8567
      %v9251 = vadd.f32 %v9123, %v8569
      %v9252 = vadd.f32 %v9162, %v8608
      %v9253 = vadd.f32 %v9164, %v8610
      %v9254 = vadd.f32 %v9203, %v8649
      %v9255 = vadd.f32 %v9205, %v8651
      %v9256 = vadd.f32 %v9244, %v8690
      %v9257 = vadd.f32 %v9246, %v8692
      %9258 = vst [vmem:[%s604] sm:$0xff] %v9250
      %9259 = vst [vmem:[%s604 + $0x8] sm:$0xff] %v9251
      %9260 = vst [vmem:[%s604 + $0x10] sm:$0xff] %v9252
      %9261 = vst [vmem:[%s604 + $0x18] sm:$0xff] %v9253
      %9262 = vst [vmem:[%s604 + $0x20] sm:$0xff] %v9254
      %9263 = vst [vmem:[%s604 + $0x28] sm:$0xff] %v9255
      %9264 = vst [vmem:[%s604 + $0x30] sm:$0xff] %v9256
      %9265 = vst [vmem:[%s604 + $0x38] sm:$0xff] %v9257
      %p9266 = scmp.lt.s32.totalorder %s26, 1
      %s9267 = scalar_select %p9266, %s26, 1
      %s9268 = smul.addr %s9267, 8
      %s9269 = smul.addr %s9268, 8
      %s9270 = scalar_lea.vmem %s15, %s9269
      // Predicated region
      $region81: #{forward.3} parent=79 // pred_check
        %p9271 = pneg %p399
      $region82: #{forward.3} parent=79 // pred_check_branch
        %9273 = sbr.rel (%p9271) target = $region84
      $region83: #{forward.3} parent=79 // pred_region
        _
      $region84: #{forward.3} parent=79 // pred_fallthru
        _
    $region80: #{forward.3} parent=5 // pred_fallthru
      _
    %p9274 = scmp.le.s32.totalorder 2, %s21
    // Predicated region
    $region85: #{forward.3} parent=5 // pred_check
      %p9275 = pneg %p9274
    $region86: #{forward.3} parent=5 // pred_check_branch
      %9277 = sbr.rel (%p9275) target = $region88
    $region87: #{forward.3} parent=5 // pred_region
      %s9278 = ssub.s32 %s21, 2
      // Predicated region
      $region89: #{forward.3} parent=87 // pred_check
        %p9279 = pneg %p405
      $region90: #{forward.3} parent=87 // pred_check_branch
        %9281 = sbr.rel (%p9279) target = $region92
      $region91: #{forward.3} parent=87 // pred_region
        %p9282 = scmp.lt.s32.totalorder %s27, 1
        %s9283 = scalar_select %p9282, %s27, 1
        %s9284 = smul.addr %s9283, 8
        %s9285 = smul.addr %s9284, 8
        %s9286 = scalar_lea.vmem %s15, %s9285
      $region92: #{forward.3} parent=87 // pred_fallthru
        _
    $region88: #{forward.3} parent=5 // pred_fallthru
      _
  $region6: #{forward.3} parent=0 // loop_footer
    %s25 = sadd.s32 1, %s21
  $region7: #{forward.3} parent=0 // loop_footer_branch
    %20 = sbr.rel target = $region3
  $region8: #{forward.3} parent=0 // loop_exit
    _

</llo_original>
